<compile_context>
chip_gen: v6e
topology: v6e:2x2x1
jax: 0.10.0
libtpu: 0.0.40
codegen_flags: <defaults>
</compile_context>

<pallas_src>
import math

import jax
import jax.numpy as jnp
from jax.experimental import pallas as pl
from jax.experimental.pallas import tpu as pltpu  # noqa: F401  (TPU backend assumed)

# ---- small but lane-dense hyper-params, consistent with the module (d_model % n_heads == 0) ----
D_MODEL = 128                      # multiple of 128 -> lane-dense activations & output stores
N_HEADS = 4
HEAD_DIM = D_MODEL // N_HEADS      # 32
D_FFN = 256
SCALE = 1.0 / math.sqrt(HEAD_DIM)
LN_EPS = 1e-5


# ----------------------------- Pallas kernel ---------------------------------
def _encoder_layer_kernel(query_ref, refq_ref, qpos_ref, rpos_ref,
                          qkv_w_ref, qkv_b_ref, out_w_ref, ffn_ref, vec_ref,
                          out_ref):
    # ---- unpack packed parameter slabs (static, sublane-aligned slices) ----
    w1 = ffn_ref[:D_MODEL, :]                                   # (D, F)
    w2 = ffn_ref[D_MODEL:D_MODEL + D_FFN, :D_MODEL]             # (F, D)
    b1 = ffn_ref[D_MODEL + D_FFN:D_MODEL + D_FFN + 1, :]        # (1, F)

    sa_bo = vec_ref[0:1, :]
    ca_bo = vec_ref[1:2, :]
    ln2_g = vec_ref[2:3, :]
    ln2_b = vec_ref[3:4, :]
    ln1_g = vec_ref[4:5, :]
    ln1_b = vec_ref[5:6, :]
    ln3_g = vec_ref[6:7, :]
    ln3_b = vec_ref[7:8, :]
    b2 = vec_ref[8:9, :]

    def mha(q_in, k_in, v_in, wq, wk, wv, bq, bk, bv, wo, bo):
        # Heads are batched on the leading dim: one MXU stream, no per-head loop,
        # no lane-wise concatenate / relayout.
        lq, lk = q_in.shape[0], k_in.shape[0]
        qb = jnp.broadcast_to(q_in[None], (N_HEADS, lq, D_MODEL))
        kb = jnp.broadcast_to(k_in[None], (N_HEADS, lk, D_MODEL))
        vb = jnp.broadcast_to(v_in[None], (N_HEADS, lk, D_MODEL))
        qh = jnp.einsum('hld,hde->hle', qb, wq, preferred_element_type=jnp.float32) + bq
        kh = jnp.einsum('hld,hde->hle', kb, wk, preferred_element_type=jnp.float32) + bk
        vh = jnp.einsum('hld,hde->hle', vb, wv, preferred_element_type=jnp.float32) + bv
        logits = jnp.einsum('hqe,hke->hqk', qh, kh,
                            preferred_element_type=jnp.float32) * SCALE
        m = jnp.max(logits, axis=-1, keepdims=True)
        e = jnp.exp(logits - m)
        # softmax denominator on the EUP slot instead of the VALU divide
        p = e * pl.reciprocal(jnp.sum(e, axis=-1, keepdims=True), approx=True)
        ctx = jnp.einsum('hqk,hke->hqe', p, vh, preferred_element_type=jnp.float32)
        # per-head output projection, summed over heads == concat(heads) @ Wo
        proj = jnp.einsum('hqe,hed->hqd', ctx, wo, preferred_element_type=jnp.float32)
        return jnp.sum(proj, axis=0) + bo                        # (Lq, D)

    def layer_norm(x, g, b):
        mu = jnp.mean(x, axis=-1, keepdims=True)
        var = jnp.mean((x - mu) ** 2, axis=-1, keepdims=True)
        return (x - mu) * jax.lax.rsqrt(var + LN_EPS) * g + b

    for bi in range(query_ref.shape[0]):        # static unroll over the (small) batch
        query = query_ref[bi]                   # (L, D)
        refq = refq_ref[bi]                     # (Lr, D)
        qpos = qpos_ref[bi]
        rpos = rpos_ref[bi]

        # ---- self-attention block (dropout2 = identity, eval mode) ----
        qk = query + qpos
        tgt2 = mha(qk, qk, query,
                   qkv_w_ref[0], qkv_w_ref[1], qkv_w_ref[2],
                   qkv_b_ref[0], qkv_b_ref[1], qkv_b_ref[2],
                   out_w_ref[0], sa_bo)
        tgt = layer_norm(query + tgt2, ln2_g, ln2_b)

        # ---- cross-attention block (dropout1 = identity) ----
        tgt2 = mha(tgt + qpos, refq + rpos, refq,
                   qkv_w_ref[3], qkv_w_ref[4], qkv_w_ref[5],
                   qkv_b_ref[3], qkv_b_ref[4], qkv_b_ref[5],
                   out_w_ref[1], ca_bo)
        tgt = layer_norm(tgt + tgt2, ln1_g, ln1_b)

        # ---- FFN block (relu; dropout3/dropout4 = identity) ----
        hdn = jnp.maximum(
            jnp.dot(tgt, w1, preferred_element_type=jnp.float32) + b1, 0.0)
        tgt2 = jnp.dot(hdn, w2, preferred_element_type=jnp.float32) + b2
        out_ref[bi] = layer_norm(tgt + tgt2, ln3_g, ln3_b)       # (L, D) lane-dense store


# ------------------------------- wrapper --------------------------------------
def temporal_query_encoder_layer(query, ref_query, query_pos, ref_query_pos, p):
    B, L, D = query.shape
    assert D == D_MODEL

    # PyTorch nn.Linear computes x @ W.T ; split the projection into per-head slabs
    # with the head dim leading so the kernel can run a single batched matmul.
    def per_head_in(w):    # (out=D, in=D) -> (H, in=D, Hd)
        return jnp.transpose(w.T.reshape(D_MODEL, N_HEADS, HEAD_DIM), (1, 0, 2))

    def per_head_bias(b):  # (D,) -> (H, 1, Hd)
        return b.reshape(N_HEADS, 1, HEAD_DIM)

    def per_head_out(w):   # (out=D, in=D): w.T is (H*Hd, D) -> (H, Hd, D)
        return w.T.reshape(N_HEADS, HEAD_DIM, D_MODEL)

    # --- pack 26 parameter tensors into 5 slabs (5 DMAs instead of 26) ---
    qkv_w = jnp.stack([per_head_in(p['sa_wq']), per_head_in(p['sa_wk']), per_head_in(p['sa_wv']),
                       per_head_in(p['ca_wq']), per_head_in(p['ca_wk']), per_head_in(p['ca_wv'])])
    qkv_b = jnp.stack([per_head_bias(p['sa_bq']), per_head_bias(p['sa_bk']), per_head_bias(p['sa_bv']),
                       per_head_bias(p['ca_bq']), per_head_bias(p['ca_bk']), per_head_bias(p['ca_bv'])])
    out_w = jnp.stack([per_head_out(p['sa_wo']), per_head_out(p['ca_wo'])])

    ffn = jnp.zeros((D_MODEL + D_FFN + 1, D_FFN), jnp.float32)
    ffn = ffn.at[:D_MODEL, :].set(p['w1'].T)                       # (D, F)
    ffn = ffn.at[D_MODEL:D_MODEL + D_FFN, :D_MODEL].set(p['w2'].T)  # (F, D) zero-padded cols
    ffn = ffn.at[D_MODEL + D_FFN, :].set(p['b1'])                  # (F,)

    vec = jnp.stack([p['sa_bo'], p['ca_bo'],
                     p['ln2_g'], p['ln2_b'],
                     p['ln1_g'], p['ln1_b'],
                     p['ln3_g'], p['ln3_b'],
                     p['b2']])                                     # (9, D)

    # No grid: one fat step, everything resident in VMEM (few hundred KB), zero per-step
    # pipeline overhead and a single DMA per operand.
    return pl.pallas_call(
        _encoder_layer_kernel,
        out_shape=jax.ShapeDtypeStruct((B, L, D_MODEL), jnp.float32),
    )(query, ref_query, query_pos, ref_query_pos, qkv_w, qkv_b, out_w, ffn, vec)


# --------------------------- pure-JAX reference -------------------------------
def reference_forward(query, ref_query, query_pos, ref_query_pos, p):
    def mha(q_in, k_in, v_in, wq, wk, wv, bq, bk, bv, wo, bo):
        q = q_in @ wq.T + bq
        k = k_in @ wk.T + bk
        v = v_in @ wv.T + bv
        B, Lq, D = q.shape
        Lk = k.shape[1]
        q = q.reshape(B, Lq, N_HEADS, HEAD_DIM)
        k = k.reshape(B, Lk, N_HEADS, HEAD_DIM)
        v = v.reshape(B, Lk, N_HEADS, HEAD_DIM)
        logits = jnp.einsum('bqhd,bkhd->bhqk', q, k) * SCALE
        pr = jax.nn.softmax(logits, axis=-1)
        o = jnp.einsum('bhqk,bkhd->bqhd', pr, v).reshape(B, Lq, D)
        return o @ wo.T + bo

    def ln(x, g, b):
        mu = jnp.mean(x, -1, keepdims=True)
        var = jnp.mean((x - mu) ** 2, -1, keepdims=True)
        return (x - mu) * jax.lax.rsqrt(var + LN_EPS) * g + b

    qk = query + query_pos
    tgt2 = mha(qk, qk, query,
               p['sa_wq'], p['sa_wk'], p['sa_wv'], p['sa_bq'], p['sa_bk'], p['sa_bv'],
               p['sa_wo'], p['sa_bo'])
    tgt = ln(query + tgt2, p['ln2_g'], p['ln2_b'])
    tgt2 = mha(tgt + query_pos, ref_query + ref_query_pos, ref_query,
               p['ca_wq'], p['ca_wk'], p['ca_wv'], p['ca_bq'], p['ca_bk'], p['ca_bv'],
               p['ca_wo'], p['ca_bo'])
    tgt = ln(tgt + tgt2, p['ln1_g'], p['ln1_b'])
    h = jax.nn.relu(tgt @ p['w1'].T + p['b1'])
    tgt2 = h @ p['w2'].T + p['b2']
    return ln(tgt + tgt2, p['ln3_g'], p['ln3_b'])


# ------------------------- deterministic parameter init -----------------------
def init_params(key):
    ks = iter(jax.random.split(key, 32))

    def xavier(shape):
        fan_out, fan_in = shape
        lim = math.sqrt(6.0 / (fan_in + fan_out))
        return jax.random.uniform(next(ks), shape, jnp.float32, -lim, lim)

    def small(shape):
        return 0.02 * jax.random.normal(next(ks), shape, jnp.float32)

    p = {}
    for pre in ('sa', 'ca'):
        p[f'{pre}_wq'] = xavier((D_MODEL, D_MODEL))
        p[f'{pre}_wk'] = xavier((D_MODEL, D_MODEL))
        p[f'{pre}_wv'] = xavier((D_MODEL, D_MODEL))
        p[f'{pre}_bq'] = small((D_MODEL,))
        p[f'{pre}_bk'] = small((D_MODEL,))
        p[f'{pre}_bv'] = small((D_MODEL,))
        p[f'{pre}_wo'] = xavier((D_MODEL, D_MODEL))
        p[f'{pre}_bo'] = small((D_MODEL,))
    for n in ('ln1', 'ln2', 'ln3'):
        p[f'{n}_g'] = jnp.ones((D_MODEL,), jnp.float32) + small((D_MODEL,))
        p[f'{n}_b'] = small((D_MODEL,))
    p['w1'] = xavier((D_FFN, D_MODEL))
    p['b1'] = small((D_FFN,))
    p['w2'] = xavier((D_MODEL, D_FFN))
    p['b2'] = small((D_MODEL,))
    return p


if __name__ == "__main__":
    B, L, LR = 2, 8, 8
    key = jax.random.PRNGKey(0)
    kp, kq, kr, kqp, krp = jax.random.split(key, 5)
    params = init_params(kp)

    query = jax.random.normal(kq, (B, L, D_MODEL), jnp.float32)
    ref_query = jax.random.normal(kr, (B, LR, D_MODEL), jnp.float32)
    query_pos = jax.random.normal(kqp, (B, L, D_MODEL), jnp.float32)
    ref_query_pos = jax.random.normal(krp, (B, LR, D_MODEL), jnp.float32)

    out = temporal_query_encoder_layer(query, ref_query, query_pos, ref_query_pos, params)
    out = jax.block_until_ready(out)

    with jax.default_matmul_precision('highest'):
        ref = reference_forward(query, ref_query, query_pos, ref_query_pos, params)
    ref = jax.block_until_ready(ref)

    assert out.shape == (B, L, D_MODEL) and out.dtype == jnp.float32
    max_err = float(jnp.max(jnp.abs(out - ref)))
    assert max_err < 5e-2, f"max abs error vs reference = {max_err}"
    print("KERNEL_OK")
</pallas_src>

<mosaic_0001>
module attributes {stable_mosaic.version = 11 : i64} {
  func.func @_encoder_layer_kernel(%arg0: memref<2x8x128xf32, #tpu.memory_space<vmem>>, %arg1: memref<2x8x128xf32, #tpu.memory_space<vmem>>, %arg2: memref<2x8x128xf32, #tpu.memory_space<vmem>>, %arg3: memref<2x8x128xf32, #tpu.memory_space<vmem>>, %arg4: memref<6x4x128x32xf32, #tpu.memory_space<vmem>>, %arg5: memref<6x4x1x32xf32, #tpu.memory_space<vmem>>, %arg6: memref<2x4x32x128xf32, #tpu.memory_space<vmem>>, %arg7: memref<385x256xf32, #tpu.memory_space<vmem>>, %arg8: memref<9x128xf32, #tpu.memory_space<vmem>>, %arg9: memref<2x8x128xf32, #tpu.memory_space<vmem>>) attributes {dimension_semantics = [], scalar_prefetch = 0 : i64, scratch_operands = 0 : i64, tpu.core_type = #tpu.core_type<tc>} {
    %c0 = arith.constant 0 : index
    %c0_0 = arith.constant 0 : index
    %0 = vector.load %arg7[%c0, %c0_0] : memref<385x256xf32, #tpu.memory_space<vmem>>, vector<128x256xf32>
    %c128 = arith.constant 128 : index
    %c0_1 = arith.constant 0 : index
    %1 = vector.load %arg7[%c128, %c0_1] : memref<385x256xf32, #tpu.memory_space<vmem>>, vector<256x128xf32>
    %c384 = arith.constant 384 : index
    %c0_2 = arith.constant 0 : index
    %2 = vector.load %arg7[%c384, %c0_2] : memref<385x256xf32, #tpu.memory_space<vmem>>, vector<1x256xf32>
    %c0_3 = arith.constant 0 : index
    %c0_4 = arith.constant 0 : index
    %3 = vector.load %arg8[%c0_3, %c0_4] : memref<9x128xf32, #tpu.memory_space<vmem>>, vector<1x128xf32>
    %c1 = arith.constant 1 : index
    %c0_5 = arith.constant 0 : index
    %4 = vector.load %arg8[%c1, %c0_5] : memref<9x128xf32, #tpu.memory_space<vmem>>, vector<1x128xf32>
    %c2 = arith.constant 2 : index
    %c0_6 = arith.constant 0 : index
    %5 = vector.load %arg8[%c2, %c0_6] : memref<9x128xf32, #tpu.memory_space<vmem>>, vector<1x128xf32>
    %c3 = arith.constant 3 : index
    %c0_7 = arith.constant 0 : index
    %6 = vector.load %arg8[%c3, %c0_7] : memref<9x128xf32, #tpu.memory_space<vmem>>, vector<1x128xf32>
    %c4 = arith.constant 4 : index
    %c0_8 = arith.constant 0 : index
    %7 = vector.load %arg8[%c4, %c0_8] : memref<9x128xf32, #tpu.memory_space<vmem>>, vector<1x128xf32>
    %c5 = arith.constant 5 : index
    %c0_9 = arith.constant 0 : index
    %8 = vector.load %arg8[%c5, %c0_9] : memref<9x128xf32, #tpu.memory_space<vmem>>, vector<1x128xf32>
    %c6 = arith.constant 6 : index
    %c0_10 = arith.constant 0 : index
    %9 = vector.load %arg8[%c6, %c0_10] : memref<9x128xf32, #tpu.memory_space<vmem>>, vector<1x128xf32>
    %c7 = arith.constant 7 : index
    %c0_11 = arith.constant 0 : index
    %10 = vector.load %arg8[%c7, %c0_11] : memref<9x128xf32, #tpu.memory_space<vmem>>, vector<1x128xf32>
    %c8 = arith.constant 8 : index
    %c0_12 = arith.constant 0 : index
    %11 = vector.load %arg8[%c8, %c0_12] : memref<9x128xf32, #tpu.memory_space<vmem>>, vector<1x128xf32>
    %c0_13 = arith.constant 0 : index
    %c0_14 = arith.constant 0 : index
    %c0_15 = arith.constant 0 : index
    %12 = vector.load %arg0[%c0_13, %c0_14, %c0_15] : memref<2x8x128xf32, #tpu.memory_space<vmem>>, vector<1x8x128xf32>
    %13 = vector.shape_cast %12 : vector<1x8x128xf32> to vector<8x128xf32>
    %c0_16 = arith.constant 0 : index
    %c0_17 = arith.constant 0 : index
    %c0_18 = arith.constant 0 : index
    %14 = vector.load %arg1[%c0_16, %c0_17, %c0_18] : memref<2x8x128xf32, #tpu.memory_space<vmem>>, vector<1x8x128xf32>
    %15 = vector.shape_cast %14 : vector<1x8x128xf32> to vector<8x128xf32>
    %c0_19 = arith.constant 0 : index
    %c0_20 = arith.constant 0 : index
    %c0_21 = arith.constant 0 : index
    %16 = vector.load %arg2[%c0_19, %c0_20, %c0_21] : memref<2x8x128xf32, #tpu.memory_space<vmem>>, vector<1x8x128xf32>
    %17 = vector.shape_cast %16 : vector<1x8x128xf32> to vector<8x128xf32>
    %c0_22 = arith.constant 0 : index
    %c0_23 = arith.constant 0 : index
    %c0_24 = arith.constant 0 : index
    %18 = vector.load %arg3[%c0_22, %c0_23, %c0_24] : memref<2x8x128xf32, #tpu.memory_space<vmem>>, vector<1x8x128xf32>
    %19 = vector.shape_cast %18 : vector<1x8x128xf32> to vector<8x128xf32>
    %20 = arith.addf %13, %17 : vector<8x128xf32>
    %c0_25 = arith.constant 0 : index
    %c0_26 = arith.constant 0 : index
    %c0_27 = arith.constant 0 : index
    %c0_28 = arith.constant 0 : index
    %21 = vector.load %arg4[%c0_25, %c0_26, %c0_27, %c0_28] : memref<6x4x128x32xf32, #tpu.memory_space<vmem>>, vector<1x4x128x32xf32>
    %22 = vector.shape_cast %21 : vector<1x4x128x32xf32> to vector<4x128x32xf32>
    %c1_29 = arith.constant 1 : index
    %c0_30 = arith.constant 0 : index
    %c0_31 = arith.constant 0 : index
    %c0_32 = arith.constant 0 : index
    %23 = vector.load %arg4[%c1_29, %c0_30, %c0_31, %c0_32] : memref<6x4x128x32xf32, #tpu.memory_space<vmem>>, vector<1x4x128x32xf32>
    %24 = vector.shape_cast %23 : vector<1x4x128x32xf32> to vector<4x128x32xf32>
    %c2_33 = arith.constant 2 : index
    %c0_34 = arith.constant 0 : index
    %c0_35 = arith.constant 0 : index
    %c0_36 = arith.constant 0 : index
    %25 = vector.load %arg4[%c2_33, %c0_34, %c0_35, %c0_36] : memref<6x4x128x32xf32, #tpu.memory_space<vmem>>, vector<1x4x128x32xf32>
    %26 = vector.shape_cast %25 : vector<1x4x128x32xf32> to vector<4x128x32xf32>
    %c0_37 = arith.constant 0 : index
    %c0_38 = arith.constant 0 : index
    %c0_39 = arith.constant 0 : index
    %c0_40 = arith.constant 0 : index
    %27 = vector.load %arg5[%c0_37, %c0_38, %c0_39, %c0_40] : memref<6x4x1x32xf32, #tpu.memory_space<vmem>>, vector<1x4x1x32xf32>
    %28 = vector.shape_cast %27 : vector<1x4x1x32xf32> to vector<4x1x32xf32>
    %c1_41 = arith.constant 1 : index
    %c0_42 = arith.constant 0 : index
    %c0_43 = arith.constant 0 : index
    %c0_44 = arith.constant 0 : index
    %29 = vector.load %arg5[%c1_41, %c0_42, %c0_43, %c0_44] : memref<6x4x1x32xf32, #tpu.memory_space<vmem>>, vector<1x4x1x32xf32>
    %30 = vector.shape_cast %29 : vector<1x4x1x32xf32> to vector<4x1x32xf32>
    %c2_45 = arith.constant 2 : index
    %c0_46 = arith.constant 0 : index
    %c0_47 = arith.constant 0 : index
    %c0_48 = arith.constant 0 : index
    %31 = vector.load %arg5[%c2_45, %c0_46, %c0_47, %c0_48] : memref<6x4x1x32xf32, #tpu.memory_space<vmem>>, vector<1x4x1x32xf32>
    %32 = vector.shape_cast %31 : vector<1x4x1x32xf32> to vector<4x1x32xf32>
    %c0_49 = arith.constant 0 : index
    %c0_50 = arith.constant 0 : index
    %c0_51 = arith.constant 0 : index
    %c0_52 = arith.constant 0 : index
    %33 = vector.load %arg6[%c0_49, %c0_50, %c0_51, %c0_52] : memref<2x4x32x128xf32, #tpu.memory_space<vmem>>, vector<1x4x32x128xf32>
    %34 = vector.shape_cast %33 : vector<1x4x32x128xf32> to vector<4x32x128xf32>
    %35 = vector.shape_cast %20 : vector<8x128xf32> to vector<1x8x128xf32>
    %36 = vector.shape_cast %35 : vector<1x8x128xf32> to vector<1x8x128xf32>
    %37 = vector.broadcast %36 : vector<1x8x128xf32> to vector<4x8x128xf32>
    %38 = vector.shape_cast %20 : vector<8x128xf32> to vector<1x8x128xf32>
    %39 = vector.shape_cast %38 : vector<1x8x128xf32> to vector<1x8x128xf32>
    %40 = vector.broadcast %39 : vector<1x8x128xf32> to vector<4x8x128xf32>
    %41 = vector.shape_cast %13 : vector<8x128xf32> to vector<1x8x128xf32>
    %42 = vector.shape_cast %41 : vector<1x8x128xf32> to vector<1x8x128xf32>
    %43 = vector.broadcast %42 : vector<1x8x128xf32> to vector<4x8x128xf32>
    "tpu.trace_start"() <{level = 10 : i32, message = "hld,hde->hle"}> : () -> ()
    %cst = arith.constant dense<0.000000e+00> : vector<4x8x32xf32>
    %44 = tpu.matmul %37, %22, %cst {dimension_numbers = #tpu.dot_dimension_numbers<[2], [1], [1], [2], [0, 0, 0, 1, 1, 2], [0], [0]>} : vector<4x8x128xf32>, vector<4x128x32xf32>, vector<4x8x32xf32> -> vector<4x8x32xf32>
    "tpu.trace_stop"() : () -> ()
    %45 = vector.broadcast %28 : vector<4x1x32xf32> to vector<4x8x32xf32>
    %46 = arith.addf %44, %45 : vector<4x8x32xf32>
    "tpu.trace_start"() <{level = 10 : i32, message = "hld,hde->hle"}> : () -> ()
    %cst_53 = arith.constant dense<0.000000e+00> : vector<4x8x32xf32>
    %47 = tpu.matmul %40, %24, %cst_53 {dimension_numbers = #tpu.dot_dimension_numbers<[2], [1], [1], [2], [0, 0, 0, 1, 1, 2], [0], [0]>} : vector<4x8x128xf32>, vector<4x128x32xf32>, vector<4x8x32xf32> -> vector<4x8x32xf32>
    "tpu.trace_stop"() : () -> ()
    %48 = vector.broadcast %30 : vector<4x1x32xf32> to vector<4x8x32xf32>
    %49 = arith.addf %47, %48 : vector<4x8x32xf32>
    "tpu.trace_start"() <{level = 10 : i32, message = "hld,hde->hle"}> : () -> ()
    %cst_54 = arith.constant dense<0.000000e+00> : vector<4x8x32xf32>
    %50 = tpu.matmul %43, %26, %cst_54 {dimension_numbers = #tpu.dot_dimension_numbers<[2], [1], [1], [2], [0, 0, 0, 1, 1, 2], [0], [0]>} : vector<4x8x128xf32>, vector<4x128x32xf32>, vector<4x8x32xf32> -> vector<4x8x32xf32>
    "tpu.trace_stop"() : () -> ()
    %51 = vector.broadcast %32 : vector<4x1x32xf32> to vector<4x8x32xf32>
    %52 = arith.addf %50, %51 : vector<4x8x32xf32>
    "tpu.trace_start"() <{level = 10 : i32, message = "hqe,hke->hqk"}> : () -> ()
    %cst_55 = arith.constant dense<0.000000e+00> : vector<4x8x8xf32>
    %53 = tpu.matmul %46, %49, %cst_55 {dimension_numbers = #tpu.dot_dimension_numbers<[2], [2], [1], [1], [0, 0, 0, 1, 1, 1], [0], [0]>} : vector<4x8x32xf32>, vector<4x8x32xf32>, vector<4x8x8xf32> -> vector<4x8x8xf32>
    "tpu.trace_stop"() : () -> ()
    %cst_56 = arith.constant 0.176776692 : f32
    %54 = vector.broadcast %cst_56 : f32 to vector<4x8x8xf32>
    %55 = arith.mulf %53, %54 : vector<4x8x8xf32>
    %cst_57 = arith.constant dense<0xFF800000> : vector<4x8xf32>
    %56 = vector.multi_reduction <maximumf>, %55, %cst_57 [2] : vector<4x8x8xf32> to vector<4x8xf32>
    %57 = vector.shape_cast %56 : vector<4x8xf32> to vector<4x8x1xf32>
    %58 = vector.broadcast %57 : vector<4x8x1xf32> to vector<4x8x8xf32>
    %59 = arith.subf %55, %58 : vector<4x8x8xf32>
    %60 = math.exp %59 : vector<4x8x8xf32>
    %cst_58 = arith.constant dense<0.000000e+00> : vector<4x8xf32>
    %61 = vector.multi_reduction <add>, %60, %cst_58 [2] : vector<4x8x8xf32> to vector<4x8xf32>
    %62 = vector.shape_cast %61 : vector<4x8xf32> to vector<4x8x1xf32>
    %63 = tpu.reciprocal %62 {approx = true} : vector<4x8x1xf32> -> vector<4x8x1xf32>
    %64 = vector.broadcast %63 : vector<4x8x1xf32> to vector<4x8x8xf32>
    %65 = arith.mulf %60, %64 : vector<4x8x8xf32>
    "tpu.trace_start"() <{level = 10 : i32, message = "hqk,hke->hqe"}> : () -> ()
    %cst_59 = arith.constant dense<0.000000e+00> : vector<4x8x32xf32>
    %66 = tpu.matmul %65, %52, %cst_59 {dimension_numbers = #tpu.dot_dimension_numbers<[2], [1], [1], [2], [0, 0, 0, 1, 1, 2], [0], [0]>} : vector<4x8x8xf32>, vector<4x8x32xf32>, vector<4x8x32xf32> -> vector<4x8x32xf32>
    "tpu.trace_stop"() : () -> ()
    "tpu.trace_start"() <{level = 10 : i32, message = "hqe,hed->hqd"}> : () -> ()
    %cst_60 = arith.constant dense<0.000000e+00> : vector<4x8x128xf32>
    %67 = tpu.matmul %66, %34, %cst_60 {dimension_numbers = #tpu.dot_dimension_numbers<[2], [1], [1], [2], [0, 0, 0, 1, 1, 2], [0], [0]>} : vector<4x8x32xf32>, vector<4x32x128xf32>, vector<4x8x128xf32> -> vector<4x8x128xf32>
    "tpu.trace_stop"() : () -> ()
    %cst_61 = arith.constant dense<0.000000e+00> : vector<8x128xf32>
    %68 = vector.multi_reduction <add>, %67, %cst_61 [0] : vector<4x8x128xf32> to vector<8x128xf32>
    %69 = vector.broadcast %3 : vector<1x128xf32> to vector<8x128xf32>
    %70 = arith.addf %68, %69 : vector<8x128xf32>
    %71 = arith.addf %13, %70 : vector<8x128xf32>
    %cst_62 = arith.constant dense<0.000000e+00> : vector<8xf32>
    %72 = vector.multi_reduction <add>, %71, %cst_62 [1] : vector<8x128xf32> to vector<8xf32>
    %73 = vector.shape_cast %72 : vector<8xf32> to vector<8x1xf32>
    %cst_63 = arith.constant 1.280000e+02 : f32
    %74 = vector.broadcast %cst_63 : f32 to vector<8x1xf32>
    %75 = arith.divf %73, %74 : vector<8x1xf32>
    %76 = vector.broadcast %75 : vector<8x1xf32> to vector<8x128xf32>
    %77 = arith.subf %71, %76 : vector<8x128xf32>
    %78 = arith.mulf %77, %77 : vector<8x128xf32>
    %cst_64 = arith.constant dense<0.000000e+00> : vector<8xf32>
    %79 = vector.multi_reduction <add>, %78, %cst_64 [1] : vector<8x128xf32> to vector<8xf32>
    %80 = vector.shape_cast %79 : vector<8xf32> to vector<8x1xf32>
    %cst_65 = arith.constant 1.280000e+02 : f32
    %81 = vector.broadcast %cst_65 : f32 to vector<8x1xf32>
    %82 = arith.divf %80, %81 : vector<8x1xf32>
    %83 = vector.broadcast %75 : vector<8x1xf32> to vector<8x128xf32>
    %84 = arith.subf %71, %83 : vector<8x128xf32>
    %cst_66 = arith.constant 9.99999974E-6 : f32
    %85 = vector.broadcast %cst_66 : f32 to vector<8x1xf32>
    %86 = arith.addf %82, %85 : vector<8x1xf32>
    %87 = math.rsqrt %86 : vector<8x1xf32>
    %88 = vector.broadcast %87 : vector<8x1xf32> to vector<8x128xf32>
    %89 = arith.mulf %84, %88 : vector<8x128xf32>
    %90 = vector.broadcast %5 : vector<1x128xf32> to vector<8x128xf32>
    %91 = arith.mulf %89, %90 : vector<8x128xf32>
    %92 = vector.broadcast %6 : vector<1x128xf32> to vector<8x128xf32>
    %93 = arith.addf %91, %92 : vector<8x128xf32>
    %94 = arith.addf %93, %17 : vector<8x128xf32>
    %95 = arith.addf %15, %19 : vector<8x128xf32>
    %c3_67 = arith.constant 3 : index
    %c0_68 = arith.constant 0 : index
    %c0_69 = arith.constant 0 : index
    %c0_70 = arith.constant 0 : index
    %96 = vector.load %arg4[%c3_67, %c0_68, %c0_69, %c0_70] : memref<6x4x128x32xf32, #tpu.memory_space<vmem>>, vector<1x4x128x32xf32>
    %97 = vector.shape_cast %96 : vector<1x4x128x32xf32> to vector<4x128x32xf32>
    %c4_71 = arith.constant 4 : index
    %c0_72 = arith.constant 0 : index
    %c0_73 = arith.constant 0 : index
    %c0_74 = arith.constant 0 : index
    %98 = vector.load %arg4[%c4_71, %c0_72, %c0_73, %c0_74] : memref<6x4x128x32xf32, #tpu.memory_space<vmem>>, vector<1x4x128x32xf32>
    %99 = vector.shape_cast %98 : vector<1x4x128x32xf32> to vector<4x128x32xf32>
    %c5_75 = arith.constant 5 : index
    %c0_76 = arith.constant 0 : index
    %c0_77 = arith.constant 0 : index
    %c0_78 = arith.constant 0 : index
    %100 = vector.load %arg4[%c5_75, %c0_76, %c0_77, %c0_78] : memref<6x4x128x32xf32, #tpu.memory_space<vmem>>, vector<1x4x128x32xf32>
    %101 = vector.shape_cast %100 : vector<1x4x128x32xf32> to vector<4x128x32xf32>
    %c3_79 = arith.constant 3 : index
    %c0_80 = arith.constant 0 : index
    %c0_81 = arith.constant 0 : index
    %c0_82 = arith.constant 0 : index
    %102 = vector.load %arg5[%c3_79, %c0_80, %c0_81, %c0_82] : memref<6x4x1x32xf32, #tpu.memory_space<vmem>>, vector<1x4x1x32xf32>
    %103 = vector.shape_cast %102 : vector<1x4x1x32xf32> to vector<4x1x32xf32>
    %c4_83 = arith.constant 4 : index
    %c0_84 = arith.constant 0 : index
    %c0_85 = arith.constant 0 : index
    %c0_86 = arith.constant 0 : index
    %104 = vector.load %arg5[%c4_83, %c0_84, %c0_85, %c0_86] : memref<6x4x1x32xf32, #tpu.memory_space<vmem>>, vector<1x4x1x32xf32>
    %105 = vector.shape_cast %104 : vector<1x4x1x32xf32> to vector<4x1x32xf32>
    %c5_87 = arith.constant 5 : index
    %c0_88 = arith.constant 0 : index
    %c0_89 = arith.constant 0 : index
    %c0_90 = arith.constant 0 : index
    %106 = vector.load %arg5[%c5_87, %c0_88, %c0_89, %c0_90] : memref<6x4x1x32xf32, #tpu.memory_space<vmem>>, vector<1x4x1x32xf32>
    %107 = vector.shape_cast %106 : vector<1x4x1x32xf32> to vector<4x1x32xf32>
    %c1_91 = arith.constant 1 : index
    %c0_92 = arith.constant 0 : index
    %c0_93 = arith.constant 0 : index
    %c0_94 = arith.constant 0 : index
    %108 = vector.load %arg6[%c1_91, %c0_92, %c0_93, %c0_94] : memref<2x4x32x128xf32, #tpu.memory_space<vmem>>, vector<1x4x32x128xf32>
    %109 = vector.shape_cast %108 : vector<1x4x32x128xf32> to vector<4x32x128xf32>
    %110 = vector.shape_cast %94 : vector<8x128xf32> to vector<1x8x128xf32>
    %111 = vector.shape_cast %110 : vector<1x8x128xf32> to vector<1x8x128xf32>
    %112 = vector.broadcast %111 : vector<1x8x128xf32> to vector<4x8x128xf32>
    %113 = vector.shape_cast %95 : vector<8x128xf32> to vector<1x8x128xf32>
    %114 = vector.shape_cast %113 : vector<1x8x128xf32> to vector<1x8x128xf32>
    %115 = vector.broadcast %114 : vector<1x8x128xf32> to vector<4x8x128xf32>
    %116 = vector.shape_cast %15 : vector<8x128xf32> to vector<1x8x128xf32>
    %117 = vector.shape_cast %116 : vector<1x8x128xf32> to vector<1x8x128xf32>
    %118 = vector.broadcast %117 : vector<1x8x128xf32> to vector<4x8x128xf32>
    "tpu.trace_start"() <{level = 10 : i32, message = "hld,hde->hle"}> : () -> ()
    %cst_95 = arith.constant dense<0.000000e+00> : vector<4x8x32xf32>
    %119 = tpu.matmul %112, %97, %cst_95 {dimension_numbers = #tpu.dot_dimension_numbers<[2], [1], [1], [2], [0, 0, 0, 1, 1, 2], [0], [0]>} : vector<4x8x128xf32>, vector<4x128x32xf32>, vector<4x8x32xf32> -> vector<4x8x32xf32>
    "tpu.trace_stop"() : () -> ()
    %120 = vector.broadcast %103 : vector<4x1x32xf32> to vector<4x8x32xf32>
    %121 = arith.addf %119, %120 : vector<4x8x32xf32>
    "tpu.trace_start"() <{level = 10 : i32, message = "hld,hde->hle"}> : () -> ()
    %cst_96 = arith.constant dense<0.000000e+00> : vector<4x8x32xf32>
    %122 = tpu.matmul %115, %99, %cst_96 {dimension_numbers = #tpu.dot_dimension_numbers<[2], [1], [1], [2], [0, 0, 0, 1, 1, 2], [0], [0]>} : vector<4x8x128xf32>, vector<4x128x32xf32>, vector<4x8x32xf32> -> vector<4x8x32xf32>
    "tpu.trace_stop"() : () -> ()
    %123 = vector.broadcast %105 : vector<4x1x32xf32> to vector<4x8x32xf32>
    %124 = arith.addf %122, %123 : vector<4x8x32xf32>
    "tpu.trace_start"() <{level = 10 : i32, message = "hld,hde->hle"}> : () -> ()
    %cst_97 = arith.constant dense<0.000000e+00> : vector<4x8x32xf32>
    %125 = tpu.matmul %118, %101, %cst_97 {dimension_numbers = #tpu.dot_dimension_numbers<[2], [1], [1], [2], [0, 0, 0, 1, 1, 2], [0], [0]>} : vector<4x8x128xf32>, vector<4x128x32xf32>, vector<4x8x32xf32> -> vector<4x8x32xf32>
    "tpu.trace_stop"() : () -> ()
    %126 = vector.broadcast %107 : vector<4x1x32xf32> to vector<4x8x32xf32>
    %127 = arith.addf %125, %126 : vector<4x8x32xf32>
    "tpu.trace_start"() <{level = 10 : i32, message = "hqe,hke->hqk"}> : () -> ()
    %cst_98 = arith.constant dense<0.000000e+00> : vector<4x8x8xf32>
    %128 = tpu.matmul %121, %124, %cst_98 {dimension_numbers = #tpu.dot_dimension_numbers<[2], [2], [1], [1], [0, 0, 0, 1, 1, 1], [0], [0]>} : vector<4x8x32xf32>, vector<4x8x32xf32>, vector<4x8x8xf32> -> vector<4x8x8xf32>
    "tpu.trace_stop"() : () -> ()
    %cst_99 = arith.constant 0.176776692 : f32
    %129 = vector.broadcast %cst_99 : f32 to vector<4x8x8xf32>
    %130 = arith.mulf %128, %129 : vector<4x8x8xf32>
    %cst_100 = arith.constant dense<0xFF800000> : vector<4x8xf32>
    %131 = vector.multi_reduction <maximumf>, %130, %cst_100 [2] : vector<4x8x8xf32> to vector<4x8xf32>
    %132 = vector.shape_cast %131 : vector<4x8xf32> to vector<4x8x1xf32>
    %133 = vector.broadcast %132 : vector<4x8x1xf32> to vector<4x8x8xf32>
    %134 = arith.subf %130, %133 : vector<4x8x8xf32>
    %135 = math.exp %134 : vector<4x8x8xf32>
    %cst_101 = arith.constant dense<0.000000e+00> : vector<4x8xf32>
    %136 = vector.multi_reduction <add>, %135, %cst_101 [2] : vector<4x8x8xf32> to vector<4x8xf32>
    %137 = vector.shape_cast %136 : vector<4x8xf32> to vector<4x8x1xf32>
    %138 = tpu.reciprocal %137 {approx = true} : vector<4x8x1xf32> -> vector<4x8x1xf32>
    %139 = vector.broadcast %138 : vector<4x8x1xf32> to vector<4x8x8xf32>
    %140 = arith.mulf %135, %139 : vector<4x8x8xf32>
    "tpu.trace_start"() <{level = 10 : i32, message = "hqk,hke->hqe"}> : () -> ()
    %cst_102 = arith.constant dense<0.000000e+00> : vector<4x8x32xf32>
    %141 = tpu.matmul %140, %127, %cst_102 {dimension_numbers = #tpu.dot_dimension_numbers<[2], [1], [1], [2], [0, 0, 0, 1, 1, 2], [0], [0]>} : vector<4x8x8xf32>, vector<4x8x32xf32>, vector<4x8x32xf32> -> vector<4x8x32xf32>
    "tpu.trace_stop"() : () -> ()
    "tpu.trace_start"() <{level = 10 : i32, message = "hqe,hed->hqd"}> : () -> ()
    %cst_103 = arith.constant dense<0.000000e+00> : vector<4x8x128xf32>
    %142 = tpu.matmul %141, %109, %cst_103 {dimension_numbers = #tpu.dot_dimension_numbers<[2], [1], [1], [2], [0, 0, 0, 1, 1, 2], [0], [0]>} : vector<4x8x32xf32>, vector<4x32x128xf32>, vector<4x8x128xf32> -> vector<4x8x128xf32>
    "tpu.trace_stop"() : () -> ()
    %cst_104 = arith.constant dense<0.000000e+00> : vector<8x128xf32>
    %143 = vector.multi_reduction <add>, %142, %cst_104 [0] : vector<4x8x128xf32> to vector<8x128xf32>
    %144 = vector.broadcast %4 : vector<1x128xf32> to vector<8x128xf32>
    %145 = arith.addf %143, %144 : vector<8x128xf32>
    %146 = arith.addf %93, %145 : vector<8x128xf32>
    %cst_105 = arith.constant dense<0.000000e+00> : vector<8xf32>
    %147 = vector.multi_reduction <add>, %146, %cst_105 [1] : vector<8x128xf32> to vector<8xf32>
    %148 = vector.shape_cast %147 : vector<8xf32> to vector<8x1xf32>
    %cst_106 = arith.constant 1.280000e+02 : f32
    %149 = vector.broadcast %cst_106 : f32 to vector<8x1xf32>
    %150 = arith.divf %148, %149 : vector<8x1xf32>
    %151 = vector.broadcast %150 : vector<8x1xf32> to vector<8x128xf32>
    %152 = arith.subf %146, %151 : vector<8x128xf32>
    %153 = arith.mulf %152, %152 : vector<8x128xf32>
    %cst_107 = arith.constant dense<0.000000e+00> : vector<8xf32>
    %154 = vector.multi_reduction <add>, %153, %cst_107 [1] : vector<8x128xf32> to vector<8xf32>
    %155 = vector.shape_cast %154 : vector<8xf32> to vector<8x1xf32>
    %cst_108 = arith.constant 1.280000e+02 : f32
    %156 = vector.broadcast %cst_108 : f32 to vector<8x1xf32>
    %157 = arith.divf %155, %156 : vector<8x1xf32>
    %158 = vector.broadcast %150 : vector<8x1xf32> to vector<8x128xf32>
    %159 = arith.subf %146, %158 : vector<8x128xf32>
    %cst_109 = arith.constant 9.99999974E-6 : f32
    %160 = vector.broadcast %cst_109 : f32 to vector<8x1xf32>
    %161 = arith.addf %157, %160 : vector<8x1xf32>
    %162 = math.rsqrt %161 : vector<8x1xf32>
    %163 = vector.broadcast %162 : vector<8x1xf32> to vector<8x128xf32>
    %164 = arith.mulf %159, %163 : vector<8x128xf32>
    %165 = vector.broadcast %7 : vector<1x128xf32> to vector<8x128xf32>
    %166 = arith.mulf %164, %165 : vector<8x128xf32>
    %167 = vector.broadcast %8 : vector<1x128xf32> to vector<8x128xf32>
    %168 = arith.addf %166, %167 : vector<8x128xf32>
    %cst_110 = arith.constant dense<0.000000e+00> : vector<8x256xf32>
    %169 = tpu.matmul %168, %0, %cst_110 {dimension_numbers = #tpu.dot_dimension_numbers<[1], [0], [0], [1], [0, 0, 1, 1], [], []>} : vector<8x128xf32>, vector<128x256xf32>, vector<8x256xf32> -> vector<8x256xf32>
    %170 = vector.broadcast %2 : vector<1x256xf32> to vector<8x256xf32>
    %171 = arith.addf %169, %170 : vector<8x256xf32>
    %cst_111 = arith.constant 0.000000e+00 : f32
    %172 = vector.broadcast %cst_111 : f32 to vector<8x256xf32>
    %173 = arith.maximumf %171, %172 : vector<8x256xf32>
    %cst_112 = arith.constant dense<0.000000e+00> : vector<8x128xf32>
    %174 = tpu.matmul %173, %1, %cst_112 {dimension_numbers = #tpu.dot_dimension_numbers<[1], [0], [0], [1], [0, 0, 1, 1], [], []>} : vector<8x256xf32>, vector<256x128xf32>, vector<8x128xf32> -> vector<8x128xf32>
    %175 = vector.broadcast %11 : vector<1x128xf32> to vector<8x128xf32>
    %176 = arith.addf %174, %175 : vector<8x128xf32>
    %177 = arith.addf %168, %176 : vector<8x128xf32>
    %cst_113 = arith.constant dense<0.000000e+00> : vector<8xf32>
    %178 = vector.multi_reduction <add>, %177, %cst_113 [1] : vector<8x128xf32> to vector<8xf32>
    %179 = vector.shape_cast %178 : vector<8xf32> to vector<8x1xf32>
    %cst_114 = arith.constant 1.280000e+02 : f32
    %180 = vector.broadcast %cst_114 : f32 to vector<8x1xf32>
    %181 = arith.divf %179, %180 : vector<8x1xf32>
    %182 = vector.broadcast %181 : vector<8x1xf32> to vector<8x128xf32>
    %183 = arith.subf %177, %182 : vector<8x128xf32>
    %184 = arith.mulf %183, %183 : vector<8x128xf32>
    %cst_115 = arith.constant dense<0.000000e+00> : vector<8xf32>
    %185 = vector.multi_reduction <add>, %184, %cst_115 [1] : vector<8x128xf32> to vector<8xf32>
    %186 = vector.shape_cast %185 : vector<8xf32> to vector<8x1xf32>
    %cst_116 = arith.constant 1.280000e+02 : f32
    %187 = vector.broadcast %cst_116 : f32 to vector<8x1xf32>
    %188 = arith.divf %186, %187 : vector<8x1xf32>
    %189 = vector.broadcast %181 : vector<8x1xf32> to vector<8x128xf32>
    %190 = arith.subf %177, %189 : vector<8x128xf32>
    %cst_117 = arith.constant 9.99999974E-6 : f32
    %191 = vector.broadcast %cst_117 : f32 to vector<8x1xf32>
    %192 = arith.addf %188, %191 : vector<8x1xf32>
    %193 = math.rsqrt %192 : vector<8x1xf32>
    %194 = vector.broadcast %193 : vector<8x1xf32> to vector<8x128xf32>
    %195 = arith.mulf %190, %194 : vector<8x128xf32>
    %196 = vector.broadcast %9 : vector<1x128xf32> to vector<8x128xf32>
    %197 = arith.mulf %195, %196 : vector<8x128xf32>
    %198 = vector.broadcast %10 : vector<1x128xf32> to vector<8x128xf32>
    %199 = arith.addf %197, %198 : vector<8x128xf32>
    %c0_118 = arith.constant 0 : index
    %c0_119 = arith.constant 0 : index
    %c0_120 = arith.constant 0 : index
    %200 = vector.load %arg9[%c0_118, %c0_119, %c0_120] : memref<2x8x128xf32, #tpu.memory_space<vmem>>, vector<1x8x128xf32>
    %201 = vector.shape_cast %200 : vector<1x8x128xf32> to vector<8x128xf32>
    %202 = vector.shape_cast %199 : vector<8x128xf32> to vector<1x8x128xf32>
    tpu.vector_store %arg9[%c0_118, %c0_119, %c0_120], %202 {strides = array<i32>} : memref<2x8x128xf32, #tpu.memory_space<vmem>>, vector<1x8x128xf32>,
    %c1_121 = arith.constant 1 : index
    %c0_122 = arith.constant 0 : index
    %c0_123 = arith.constant 0 : index
    %203 = vector.load %arg0[%c1_121, %c0_122, %c0_123] : memref<2x8x128xf32, #tpu.memory_space<vmem>>, vector<1x8x128xf32>
    %204 = vector.shape_cast %203 : vector<1x8x128xf32> to vector<8x128xf32>
    %c1_124 = arith.constant 1 : index
    %c0_125 = arith.constant 0 : index
    %c0_126 = arith.constant 0 : index
    %205 = vector.load %arg1[%c1_124, %c0_125, %c0_126] : memref<2x8x128xf32, #tpu.memory_space<vmem>>, vector<1x8x128xf32>
    %206 = vector.shape_cast %205 : vector<1x8x128xf32> to vector<8x128xf32>
    %c1_127 = arith.constant 1 : index
    %c0_128 = arith.constant 0 : index
    %c0_129 = arith.constant 0 : index
    %207 = vector.load %arg2[%c1_127, %c0_128, %c0_129] : memref<2x8x128xf32, #tpu.memory_space<vmem>>, vector<1x8x128xf32>
    %208 = vector.shape_cast %207 : vector<1x8x128xf32> to vector<8x128xf32>
    %c1_130 = arith.constant 1 : index
    %c0_131 = arith.constant 0 : index
    %c0_132 = arith.constant 0 : index
    %209 = vector.load %arg3[%c1_130, %c0_131, %c0_132] : memref<2x8x128xf32, #tpu.memory_space<vmem>>, vector<1x8x128xf32>
    %210 = vector.shape_cast %209 : vector<1x8x128xf32> to vector<8x128xf32>
    %211 = arith.addf %204, %208 : vector<8x128xf32>
    %c0_133 = arith.constant 0 : index
    %c0_134 = arith.constant 0 : index
    %c0_135 = arith.constant 0 : index
    %c0_136 = arith.constant 0 : index
    %212 = vector.load %arg4[%c0_133, %c0_134, %c0_135, %c0_136] : memref<6x4x128x32xf32, #tpu.memory_space<vmem>>, vector<1x4x128x32xf32>
    %213 = vector.shape_cast %212 : vector<1x4x128x32xf32> to vector<4x128x32xf32>
    %c1_137 = arith.constant 1 : index
    %c0_138 = arith.constant 0 : index
    %c0_139 = arith.constant 0 : index
    %c0_140 = arith.constant 0 : index
    %214 = vector.load %arg4[%c1_137, %c0_138, %c0_139, %c0_140] : memref<6x4x128x32xf32, #tpu.memory_space<vmem>>, vector<1x4x128x32xf32>
    %215 = vector.shape_cast %214 : vector<1x4x128x32xf32> to vector<4x128x32xf32>
    %c2_141 = arith.constant 2 : index
    %c0_142 = arith.constant 0 : index
    %c0_143 = arith.constant 0 : index
    %c0_144 = arith.constant 0 : index
    %216 = vector.load %arg4[%c2_141, %c0_142, %c0_143, %c0_144] : memref<6x4x128x32xf32, #tpu.memory_space<vmem>>, vector<1x4x128x32xf32>
    %217 = vector.shape_cast %216 : vector<1x4x128x32xf32> to vector<4x128x32xf32>
    %c0_145 = arith.constant 0 : index
    %c0_146 = arith.constant 0 : index
    %c0_147 = arith.constant 0 : index
    %c0_148 = arith.constant 0 : index
    %218 = vector.load %arg5[%c0_145, %c0_146, %c0_147, %c0_148] : memref<6x4x1x32xf32, #tpu.memory_space<vmem>>, vector<1x4x1x32xf32>
    %219 = vector.shape_cast %218 : vector<1x4x1x32xf32> to vector<4x1x32xf32>
    %c1_149 = arith.constant 1 : index
    %c0_150 = arith.constant 0 : index
    %c0_151 = arith.constant 0 : index
    %c0_152 = arith.constant 0 : index
    %220 = vector.load %arg5[%c1_149, %c0_150, %c0_151, %c0_152] : memref<6x4x1x32xf32, #tpu.memory_space<vmem>>, vector<1x4x1x32xf32>
    %221 = vector.shape_cast %220 : vector<1x4x1x32xf32> to vector<4x1x32xf32>
    %c2_153 = arith.constant 2 : index
    %c0_154 = arith.constant 0 : index
    %c0_155 = arith.constant 0 : index
    %c0_156 = arith.constant 0 : index
    %222 = vector.load %arg5[%c2_153, %c0_154, %c0_155, %c0_156] : memref<6x4x1x32xf32, #tpu.memory_space<vmem>>, vector<1x4x1x32xf32>
    %223 = vector.shape_cast %222 : vector<1x4x1x32xf32> to vector<4x1x32xf32>
    %c0_157 = arith.constant 0 : index
    %c0_158 = arith.constant 0 : index
    %c0_159 = arith.constant 0 : index
    %c0_160 = arith.constant 0 : index
    %224 = vector.load %arg6[%c0_157, %c0_158, %c0_159, %c0_160] : memref<2x4x32x128xf32, #tpu.memory_space<vmem>>, vector<1x4x32x128xf32>
    %225 = vector.shape_cast %224 : vector<1x4x32x128xf32> to vector<4x32x128xf32>
    %226 = vector.shape_cast %211 : vector<8x128xf32> to vector<1x8x128xf32>
    %227 = vector.shape_cast %226 : vector<1x8x128xf32> to vector<1x8x128xf32>
    %228 = vector.broadcast %227 : vector<1x8x128xf32> to vector<4x8x128xf32>
    %229 = vector.shape_cast %211 : vector<8x128xf32> to vector<1x8x128xf32>
    %230 = vector.shape_cast %229 : vector<1x8x128xf32> to vector<1x8x128xf32>
    %231 = vector.broadcast %230 : vector<1x8x128xf32> to vector<4x8x128xf32>
    %232 = vector.shape_cast %204 : vector<8x128xf32> to vector<1x8x128xf32>
    %233 = vector.shape_cast %232 : vector<1x8x128xf32> to vector<1x8x128xf32>
    %234 = vector.broadcast %233 : vector<1x8x128xf32> to vector<4x8x128xf32>
    "tpu.trace_start"() <{level = 10 : i32, message = "hld,hde->hle"}> : () -> ()
    %cst_161 = arith.constant dense<0.000000e+00> : vector<4x8x32xf32>
    %235 = tpu.matmul %228, %213, %cst_161 {dimension_numbers = #tpu.dot_dimension_numbers<[2], [1], [1], [2], [0, 0, 0, 1, 1, 2], [0], [0]>} : vector<4x8x128xf32>, vector<4x128x32xf32>, vector<4x8x32xf32> -> vector<4x8x32xf32>
    "tpu.trace_stop"() : () -> ()
    %236 = vector.broadcast %219 : vector<4x1x32xf32> to vector<4x8x32xf32>
    %237 = arith.addf %235, %236 : vector<4x8x32xf32>
    "tpu.trace_start"() <{level = 10 : i32, message = "hld,hde->hle"}> : () -> ()
    %cst_162 = arith.constant dense<0.000000e+00> : vector<4x8x32xf32>
    %238 = tpu.matmul %231, %215, %cst_162 {dimension_numbers = #tpu.dot_dimension_numbers<[2], [1], [1], [2], [0, 0, 0, 1, 1, 2], [0], [0]>} : vector<4x8x128xf32>, vector<4x128x32xf32>, vector<4x8x32xf32> -> vector<4x8x32xf32>
    "tpu.trace_stop"() : () -> ()
    %239 = vector.broadcast %221 : vector<4x1x32xf32> to vector<4x8x32xf32>
    %240 = arith.addf %238, %239 : vector<4x8x32xf32>
    "tpu.trace_start"() <{level = 10 : i32, message = "hld,hde->hle"}> : () -> ()
    %cst_163 = arith.constant dense<0.000000e+00> : vector<4x8x32xf32>
    %241 = tpu.matmul %234, %217, %cst_163 {dimension_numbers = #tpu.dot_dimension_numbers<[2], [1], [1], [2], [0, 0, 0, 1, 1, 2], [0], [0]>} : vector<4x8x128xf32>, vector<4x128x32xf32>, vector<4x8x32xf32> -> vector<4x8x32xf32>
    "tpu.trace_stop"() : () -> ()
    %242 = vector.broadcast %223 : vector<4x1x32xf32> to vector<4x8x32xf32>
    %243 = arith.addf %241, %242 : vector<4x8x32xf32>
    "tpu.trace_start"() <{level = 10 : i32, message = "hqe,hke->hqk"}> : () -> ()
    %cst_164 = arith.constant dense<0.000000e+00> : vector<4x8x8xf32>
    %244 = tpu.matmul %237, %240, %cst_164 {dimension_numbers = #tpu.dot_dimension_numbers<[2], [2], [1], [1], [0, 0, 0, 1, 1, 1], [0], [0]>} : vector<4x8x32xf32>, vector<4x8x32xf32>, vector<4x8x8xf32> -> vector<4x8x8xf32>
    "tpu.trace_stop"() : () -> ()
    %cst_165 = arith.constant 0.176776692 : f32
    %245 = vector.broadcast %cst_165 : f32 to vector<4x8x8xf32>
    %246 = arith.mulf %244, %245 : vector<4x8x8xf32>
    %cst_166 = arith.constant dense<0xFF800000> : vector<4x8xf32>
    %247 = vector.multi_reduction <maximumf>, %246, %cst_166 [2] : vector<4x8x8xf32> to vector<4x8xf32>
    %248 = vector.shape_cast %247 : vector<4x8xf32> to vector<4x8x1xf32>
    %249 = vector.broadcast %248 : vector<4x8x1xf32> to vector<4x8x8xf32>
    %250 = arith.subf %246, %249 : vector<4x8x8xf32>
    %251 = math.exp %250 : vector<4x8x8xf32>
    %cst_167 = arith.constant dense<0.000000e+00> : vector<4x8xf32>
    %252 = vector.multi_reduction <add>, %251, %cst_167 [2] : vector<4x8x8xf32> to vector<4x8xf32>
    %253 = vector.shape_cast %252 : vector<4x8xf32> to vector<4x8x1xf32>
    %254 = tpu.reciprocal %253 {approx = true} : vector<4x8x1xf32> -> vector<4x8x1xf32>
    %255 = vector.broadcast %254 : vector<4x8x1xf32> to vector<4x8x8xf32>
    %256 = arith.mulf %251, %255 : vector<4x8x8xf32>
    "tpu.trace_start"() <{level = 10 : i32, message = "hqk,hke->hqe"}> : () -> ()
    %cst_168 = arith.constant dense<0.000000e+00> : vector<4x8x32xf32>
    %257 = tpu.matmul %256, %243, %cst_168 {dimension_numbers = #tpu.dot_dimension_numbers<[2], [1], [1], [2], [0, 0, 0, 1, 1, 2], [0], [0]>} : vector<4x8x8xf32>, vector<4x8x32xf32>, vector<4x8x32xf32> -> vector<4x8x32xf32>
    "tpu.trace_stop"() : () -> ()
    "tpu.trace_start"() <{level = 10 : i32, message = "hqe,hed->hqd"}> : () -> ()
    %cst_169 = arith.constant dense<0.000000e+00> : vector<4x8x128xf32>
    %258 = tpu.matmul %257, %225, %cst_169 {dimension_numbers = #tpu.dot_dimension_numbers<[2], [1], [1], [2], [0, 0, 0, 1, 1, 2], [0], [0]>} : vector<4x8x32xf32>, vector<4x32x128xf32>, vector<4x8x128xf32> -> vector<4x8x128xf32>
    "tpu.trace_stop"() : () -> ()
    %cst_170 = arith.constant dense<0.000000e+00> : vector<8x128xf32>
    %259 = vector.multi_reduction <add>, %258, %cst_170 [0] : vector<4x8x128xf32> to vector<8x128xf32>
    %260 = vector.broadcast %3 : vector<1x128xf32> to vector<8x128xf32>
    %261 = arith.addf %259, %260 : vector<8x128xf32>
    %262 = arith.addf %204, %261 : vector<8x128xf32>
    %cst_171 = arith.constant dense<0.000000e+00> : vector<8xf32>
    %263 = vector.multi_reduction <add>, %262, %cst_171 [1] : vector<8x128xf32> to vector<8xf32>
    %264 = vector.shape_cast %263 : vector<8xf32> to vector<8x1xf32>
    %cst_172 = arith.constant 1.280000e+02 : f32
    %265 = vector.broadcast %cst_172 : f32 to vector<8x1xf32>
    %266 = arith.divf %264, %265 : vector<8x1xf32>
    %267 = vector.broadcast %266 : vector<8x1xf32> to vector<8x128xf32>
    %268 = arith.subf %262, %267 : vector<8x128xf32>
    %269 = arith.mulf %268, %268 : vector<8x128xf32>
    %cst_173 = arith.constant dense<0.000000e+00> : vector<8xf32>
    %270 = vector.multi_reduction <add>, %269, %cst_173 [1] : vector<8x128xf32> to vector<8xf32>
    %271 = vector.shape_cast %270 : vector<8xf32> to vector<8x1xf32>
    %cst_174 = arith.constant 1.280000e+02 : f32
    %272 = vector.broadcast %cst_174 : f32 to vector<8x1xf32>
    %273 = arith.divf %271, %272 : vector<8x1xf32>
    %274 = vector.broadcast %266 : vector<8x1xf32> to vector<8x128xf32>
    %275 = arith.subf %262, %274 : vector<8x128xf32>
    %cst_175 = arith.constant 9.99999974E-6 : f32
    %276 = vector.broadcast %cst_175 : f32 to vector<8x1xf32>
    %277 = arith.addf %273, %276 : vector<8x1xf32>
    %278 = math.rsqrt %277 : vector<8x1xf32>
    %279 = vector.broadcast %278 : vector<8x1xf32> to vector<8x128xf32>
    %280 = arith.mulf %275, %279 : vector<8x128xf32>
    %281 = vector.broadcast %5 : vector<1x128xf32> to vector<8x128xf32>
    %282 = arith.mulf %280, %281 : vector<8x128xf32>
    %283 = vector.broadcast %6 : vector<1x128xf32> to vector<8x128xf32>
    %284 = arith.addf %282, %283 : vector<8x128xf32>
    %285 = arith.addf %284, %208 : vector<8x128xf32>
    %286 = arith.addf %206, %210 : vector<8x128xf32>
    %c3_176 = arith.constant 3 : index
    %c0_177 = arith.constant 0 : index
    %c0_178 = arith.constant 0 : index
    %c0_179 = arith.constant 0 : index
    %287 = vector.load %arg4[%c3_176, %c0_177, %c0_178, %c0_179] : memref<6x4x128x32xf32, #tpu.memory_space<vmem>>, vector<1x4x128x32xf32>
    %288 = vector.shape_cast %287 : vector<1x4x128x32xf32> to vector<4x128x32xf32>
    %c4_180 = arith.constant 4 : index
    %c0_181 = arith.constant 0 : index
    %c0_182 = arith.constant 0 : index
    %c0_183 = arith.constant 0 : index
    %289 = vector.load %arg4[%c4_180, %c0_181, %c0_182, %c0_183] : memref<6x4x128x32xf32, #tpu.memory_space<vmem>>, vector<1x4x128x32xf32>
    %290 = vector.shape_cast %289 : vector<1x4x128x32xf32> to vector<4x128x32xf32>
    %c5_184 = arith.constant 5 : index
    %c0_185 = arith.constant 0 : index
    %c0_186 = arith.constant 0 : index
    %c0_187 = arith.constant 0 : index
    %291 = vector.load %arg4[%c5_184, %c0_185, %c0_186, %c0_187] : memref<6x4x128x32xf32, #tpu.memory_space<vmem>>, vector<1x4x128x32xf32>
    %292 = vector.shape_cast %291 : vector<1x4x128x32xf32> to vector<4x128x32xf32>
    %c3_188 = arith.constant 3 : index
    %c0_189 = arith.constant 0 : index
    %c0_190 = arith.constant 0 : index
    %c0_191 = arith.constant 0 : index
    %293 = vector.load %arg5[%c3_188, %c0_189, %c0_190, %c0_191] : memref<6x4x1x32xf32, #tpu.memory_space<vmem>>, vector<1x4x1x32xf32>
    %294 = vector.shape_cast %293 : vector<1x4x1x32xf32> to vector<4x1x32xf32>
    %c4_192 = arith.constant 4 : index
    %c0_193 = arith.constant 0 : index
    %c0_194 = arith.constant 0 : index
    %c0_195 = arith.constant 0 : index
    %295 = vector.load %arg5[%c4_192, %c0_193, %c0_194, %c0_195] : memref<6x4x1x32xf32, #tpu.memory_space<vmem>>, vector<1x4x1x32xf32>
    %296 = vector.shape_cast %295 : vector<1x4x1x32xf32> to vector<4x1x32xf32>
    %c5_196 = arith.constant 5 : index
    %c0_197 = arith.constant 0 : index
    %c0_198 = arith.constant 0 : index
    %c0_199 = arith.constant 0 : index
    %297 = vector.load %arg5[%c5_196, %c0_197, %c0_198, %c0_199] : memref<6x4x1x32xf32, #tpu.memory_space<vmem>>, vector<1x4x1x32xf32>
    %298 = vector.shape_cast %297 : vector<1x4x1x32xf32> to vector<4x1x32xf32>
    %c1_200 = arith.constant 1 : index
    %c0_201 = arith.constant 0 : index
    %c0_202 = arith.constant 0 : index
    %c0_203 = arith.constant 0 : index
    %299 = vector.load %arg6[%c1_200, %c0_201, %c0_202, %c0_203] : memref<2x4x32x128xf32, #tpu.memory_space<vmem>>, vector<1x4x32x128xf32>
    %300 = vector.shape_cast %299 : vector<1x4x32x128xf32> to vector<4x32x128xf32>
    %301 = vector.shape_cast %285 : vector<8x128xf32> to vector<1x8x128xf32>
    %302 = vector.shape_cast %301 : vector<1x8x128xf32> to vector<1x8x128xf32>
    %303 = vector.broadcast %302 : vector<1x8x128xf32> to vector<4x8x128xf32>
    %304 = vector.shape_cast %286 : vector<8x128xf32> to vector<1x8x128xf32>
    %305 = vector.shape_cast %304 : vector<1x8x128xf32> to vector<1x8x128xf32>
    %306 = vector.broadcast %305 : vector<1x8x128xf32> to vector<4x8x128xf32>
    %307 = vector.shape_cast %206 : vector<8x128xf32> to vector<1x8x128xf32>
    %308 = vector.shape_cast %307 : vector<1x8x128xf32> to vector<1x8x128xf32>
    %309 = vector.broadcast %308 : vector<1x8x128xf32> to vector<4x8x128xf32>
    "tpu.trace_start"() <{level = 10 : i32, message = "hld,hde->hle"}> : () -> ()
    %cst_204 = arith.constant dense<0.000000e+00> : vector<4x8x32xf32>
    %310 = tpu.matmul %303, %288, %cst_204 {dimension_numbers = #tpu.dot_dimension_numbers<[2], [1], [1], [2], [0, 0, 0, 1, 1, 2], [0], [0]>} : vector<4x8x128xf32>, vector<4x128x32xf32>, vector<4x8x32xf32> -> vector<4x8x32xf32>
    "tpu.trace_stop"() : () -> ()
    %311 = vector.broadcast %294 : vector<4x1x32xf32> to vector<4x8x32xf32>
    %312 = arith.addf %310, %311 : vector<4x8x32xf32>
    "tpu.trace_start"() <{level = 10 : i32, message = "hld,hde->hle"}> : () -> ()
    %cst_205 = arith.constant dense<0.000000e+00> : vector<4x8x32xf32>
    %313 = tpu.matmul %306, %290, %cst_205 {dimension_numbers = #tpu.dot_dimension_numbers<[2], [1], [1], [2], [0, 0, 0, 1, 1, 2], [0], [0]>} : vector<4x8x128xf32>, vector<4x128x32xf32>, vector<4x8x32xf32> -> vector<4x8x32xf32>
    "tpu.trace_stop"() : () -> ()
    %314 = vector.broadcast %296 : vector<4x1x32xf32> to vector<4x8x32xf32>
    %315 = arith.addf %313, %314 : vector<4x8x32xf32>
    "tpu.trace_start"() <{level = 10 : i32, message = "hld,hde->hle"}> : () -> ()
    %cst_206 = arith.constant dense<0.000000e+00> : vector<4x8x32xf32>
    %316 = tpu.matmul %309, %292, %cst_206 {dimension_numbers = #tpu.dot_dimension_numbers<[2], [1], [1], [2], [0, 0, 0, 1, 1, 2], [0], [0]>} : vector<4x8x128xf32>, vector<4x128x32xf32>, vector<4x8x32xf32> -> vector<4x8x32xf32>
    "tpu.trace_stop"() : () -> ()
    %317 = vector.broadcast %298 : vector<4x1x32xf32> to vector<4x8x32xf32>
    %318 = arith.addf %316, %317 : vector<4x8x32xf32>
    "tpu.trace_start"() <{level = 10 : i32, message = "hqe,hke->hqk"}> : () -> ()
    %cst_207 = arith.constant dense<0.000000e+00> : vector<4x8x8xf32>
    %319 = tpu.matmul %312, %315, %cst_207 {dimension_numbers = #tpu.dot_dimension_numbers<[2], [2], [1], [1], [0, 0, 0, 1, 1, 1], [0], [0]>} : vector<4x8x32xf32>, vector<4x8x32xf32>, vector<4x8x8xf32> -> vector<4x8x8xf32>
    "tpu.trace_stop"() : () -> ()
    %cst_208 = arith.constant 0.176776692 : f32
    %320 = vector.broadcast %cst_208 : f32 to vector<4x8x8xf32>
    %321 = arith.mulf %319, %320 : vector<4x8x8xf32>
    %cst_209 = arith.constant dense<0xFF800000> : vector<4x8xf32>
    %322 = vector.multi_reduction <maximumf>, %321, %cst_209 [2] : vector<4x8x8xf32> to vector<4x8xf32>
    %323 = vector.shape_cast %322 : vector<4x8xf32> to vector<4x8x1xf32>
    %324 = vector.broadcast %323 : vector<4x8x1xf32> to vector<4x8x8xf32>
    %325 = arith.subf %321, %324 : vector<4x8x8xf32>
    %326 = math.exp %325 : vector<4x8x8xf32>
    %cst_210 = arith.constant dense<0.000000e+00> : vector<4x8xf32>
    %327 = vector.multi_reduction <add>, %326, %cst_210 [2] : vector<4x8x8xf32> to vector<4x8xf32>
    %328 = vector.shape_cast %327 : vector<4x8xf32> to vector<4x8x1xf32>
    %329 = tpu.reciprocal %328 {approx = true} : vector<4x8x1xf32> -> vector<4x8x1xf32>
    %330 = vector.broadcast %329 : vector<4x8x1xf32> to vector<4x8x8xf32>
    %331 = arith.mulf %326, %330 : vector<4x8x8xf32>
    "tpu.trace_start"() <{level = 10 : i32, message = "hqk,hke->hqe"}> : () -> ()
    %cst_211 = arith.constant dense<0.000000e+00> : vector<4x8x32xf32>
    %332 = tpu.matmul %331, %318, %cst_211 {dimension_numbers = #tpu.dot_dimension_numbers<[2], [1], [1], [2], [0, 0, 0, 1, 1, 2], [0], [0]>} : vector<4x8x8xf32>, vector<4x8x32xf32>, vector<4x8x32xf32> -> vector<4x8x32xf32>
    "tpu.trace_stop"() : () -> ()
    "tpu.trace_start"() <{level = 10 : i32, message = "hqe,hed->hqd"}> : () -> ()
    %cst_212 = arith.constant dense<0.000000e+00> : vector<4x8x128xf32>
    %333 = tpu.matmul %332, %300, %cst_212 {dimension_numbers = #tpu.dot_dimension_numbers<[2], [1], [1], [2], [0, 0, 0, 1, 1, 2], [0], [0]>} : vector<4x8x32xf32>, vector<4x32x128xf32>, vector<4x8x128xf32> -> vector<4x8x128xf32>
    "tpu.trace_stop"() : () -> ()
    %cst_213 = arith.constant dense<0.000000e+00> : vector<8x128xf32>
    %334 = vector.multi_reduction <add>, %333, %cst_213 [0] : vector<4x8x128xf32> to vector<8x128xf32>
    %335 = vector.broadcast %4 : vector<1x128xf32> to vector<8x128xf32>
    %336 = arith.addf %334, %335 : vector<8x128xf32>
    %337 = arith.addf %284, %336 : vector<8x128xf32>
    %cst_214 = arith.constant dense<0.000000e+00> : vector<8xf32>
    %338 = vector.multi_reduction <add>, %337, %cst_214 [1] : vector<8x128xf32> to vector<8xf32>
    %339 = vector.shape_cast %338 : vector<8xf32> to vector<8x1xf32>
    %cst_215 = arith.constant 1.280000e+02 : f32
    %340 = vector.broadcast %cst_215 : f32 to vector<8x1xf32>
    %341 = arith.divf %339, %340 : vector<8x1xf32>
    %342 = vector.broadcast %341 : vector<8x1xf32> to vector<8x128xf32>
    %343 = arith.subf %337, %342 : vector<8x128xf32>
    %344 = arith.mulf %343, %343 : vector<8x128xf32>
    %cst_216 = arith.constant dense<0.000000e+00> : vector<8xf32>
    %345 = vector.multi_reduction <add>, %344, %cst_216 [1] : vector<8x128xf32> to vector<8xf32>
    %346 = vector.shape_cast %345 : vector<8xf32> to vector<8x1xf32>
    %cst_217 = arith.constant 1.280000e+02 : f32
    %347 = vector.broadcast %cst_217 : f32 to vector<8x1xf32>
    %348 = arith.divf %346, %347 : vector<8x1xf32>
    %349 = vector.broadcast %341 : vector<8x1xf32> to vector<8x128xf32>
    %350 = arith.subf %337, %349 : vector<8x128xf32>
    %cst_218 = arith.constant 9.99999974E-6 : f32
    %351 = vector.broadcast %cst_218 : f32 to vector<8x1xf32>
    %352 = arith.addf %348, %351 : vector<8x1xf32>
    %353 = math.rsqrt %352 : vector<8x1xf32>
    %354 = vector.broadcast %353 : vector<8x1xf32> to vector<8x128xf32>
    %355 = arith.mulf %350, %354 : vector<8x128xf32>
    %356 = vector.broadcast %7 : vector<1x128xf32> to vector<8x128xf32>
    %357 = arith.mulf %355, %356 : vector<8x128xf32>
    %358 = vector.broadcast %8 : vector<1x128xf32> to vector<8x128xf32>
    %359 = arith.addf %357, %358 : vector<8x128xf32>
    %cst_219 = arith.constant dense<0.000000e+00> : vector<8x256xf32>
    %360 = tpu.matmul %359, %0, %cst_219 {dimension_numbers = #tpu.dot_dimension_numbers<[1], [0], [0], [1], [0, 0, 1, 1], [], []>} : vector<8x128xf32>, vector<128x256xf32>, vector<8x256xf32> -> vector<8x256xf32>
    %361 = vector.broadcast %2 : vector<1x256xf32> to vector<8x256xf32>
    %362 = arith.addf %360, %361 : vector<8x256xf32>
    %cst_220 = arith.constant 0.000000e+00 : f32
    %363 = vector.broadcast %cst_220 : f32 to vector<8x256xf32>
    %364 = arith.maximumf %362, %363 : vector<8x256xf32>
    %cst_221 = arith.constant dense<0.000000e+00> : vector<8x128xf32>
    %365 = tpu.matmul %364, %1, %cst_221 {dimension_numbers = #tpu.dot_dimension_numbers<[1], [0], [0], [1], [0, 0, 1, 1], [], []>} : vector<8x256xf32>, vector<256x128xf32>, vector<8x128xf32> -> vector<8x128xf32>
    %366 = vector.broadcast %11 : vector<1x128xf32> to vector<8x128xf32>
    %367 = arith.addf %365, %366 : vector<8x128xf32>
    %368 = arith.addf %359, %367 : vector<8x128xf32>
    %cst_222 = arith.constant dense<0.000000e+00> : vector<8xf32>
    %369 = vector.multi_reduction <add>, %368, %cst_222 [1] : vector<8x128xf32> to vector<8xf32>
    %370 = vector.shape_cast %369 : vector<8xf32> to vector<8x1xf32>
    %cst_223 = arith.constant 1.280000e+02 : f32
    %371 = vector.broadcast %cst_223 : f32 to vector<8x1xf32>
    %372 = arith.divf %370, %371 : vector<8x1xf32>
    %373 = vector.broadcast %372 : vector<8x1xf32> to vector<8x128xf32>
    %374 = arith.subf %368, %373 : vector<8x128xf32>
    %375 = arith.mulf %374, %374 : vector<8x128xf32>
    %cst_224 = arith.constant dense<0.000000e+00> : vector<8xf32>
    %376 = vector.multi_reduction <add>, %375, %cst_224 [1] : vector<8x128xf32> to vector<8xf32>
    %377 = vector.shape_cast %376 : vector<8xf32> to vector<8x1xf32>
    %cst_225 = arith.constant 1.280000e+02 : f32
    %378 = vector.broadcast %cst_225 : f32 to vector<8x1xf32>
    %379 = arith.divf %377, %378 : vector<8x1xf32>
    %380 = vector.broadcast %372 : vector<8x1xf32> to vector<8x128xf32>
    %381 = arith.subf %368, %380 : vector<8x128xf32>
    %cst_226 = arith.constant 9.99999974E-6 : f32
    %382 = vector.broadcast %cst_226 : f32 to vector<8x1xf32>
    %383 = arith.addf %379, %382 : vector<8x1xf32>
    %384 = math.rsqrt %383 : vector<8x1xf32>
    %385 = vector.broadcast %384 : vector<8x1xf32> to vector<8x128xf32>
    %386 = arith.mulf %381, %385 : vector<8x128xf32>
    %387 = vector.broadcast %9 : vector<1x128xf32> to vector<8x128xf32>
    %388 = arith.mulf %386, %387 : vector<8x128xf32>
    %389 = vector.broadcast %10 : vector<1x128xf32> to vector<8x128xf32>
    %390 = arith.addf %388, %389 : vector<8x128xf32>
    %c1_227 = arith.constant 1 : index
    %c0_228 = arith.constant 0 : index
    %c0_229 = arith.constant 0 : index
    %391 = vector.load %arg9[%c1_227, %c0_228, %c0_229] : memref<2x8x128xf32, #tpu.memory_space<vmem>>, vector<1x8x128xf32>
    %392 = vector.shape_cast %391 : vector<1x8x128xf32> to vector<8x128xf32>
    %393 = vector.shape_cast %390 : vector<8x128xf32> to vector<1x8x128xf32>
    tpu.vector_store %arg9[%c1_227, %c0_228, %c0_229], %393 {strides = array<i32>} : memref<2x8x128xf32, #tpu.memory_space<vmem>>, vector<1x8x128xf32>,
    return
  }
}

</mosaic_0001>

<llo_original>
// kernel: tpu_custom_call.1
$region0: #{tpu_custom_call.1}
  #allocation0 [shape = 'u32[]', space=smem, size = 0x4, offset = 0x4, fixed_abs, tag = 'smem constant byte address 0x4 - core index']
  #allocation1 [shape = 'u32[144,128]{1,0:T(1,128)}', space=vmem, size = 0x12000, scoped, tag = 'internal scratch']
  %s0 = inlined_call_operand.vmem [shape: f32[2,8,128], index: 0, kind: input, shape index: {}]
  %s1 = inlined_call_operand.vmem [shape: f32[2,8,128], index: 1, kind: input, shape index: {}]
  %s2 = inlined_call_operand.vmem [shape: f32[2,8,128], index: 2, kind: input, shape index: {}]
  %s3 = inlined_call_operand.vmem [shape: f32[2,8,128], index: 3, kind: input, shape index: {}]
  %s4 = inlined_call_operand.vmem [shape: f32[6,4,128,32], index: 4, kind: input, shape index: {}]
  %s5 = inlined_call_operand.vmem [shape: f32[6,4,1,32], index: 5, kind: input, shape index: {}]
  %s6 = inlined_call_operand.vmem [shape: f32[2,4,32,128], index: 6, kind: input, shape index: {}]
  %s7 = inlined_call_operand.vmem [shape: f32[385,256], index: 7, kind: input, shape index: {}]
  %s8 = inlined_call_operand.vmem [shape: f32[9,128], index: 8, kind: input, shape index: {}]
  %s9 = inlined_call_operand.hbm [shape: f32[2,8,128], index: 9, kind: output, shape index: {}]
  %s10 = sld [smem:[#allocation0]]
  $region46: #{tpu_custom_call.1} parent=0
    _
  %s12 = ssub.s32 1, %s10
  %s13 = scalar_select 0, %s12, %s10
  $region1: #{tpu_custom_call.1} parent=0
    #allocation2 [shape = 'u8[8192]{0}', space=vmem, size = 0x2000, scoped, tag = 'output window, operand 0, single buffered']
    #allocation3 [shape = 's32[1]{0}', space=sflag, size = 0x4, scoped, tag = 'scoped memory for tpu_custom_call.1']
    %14 = vsyncpa [#allocation3], 0
    // Predicated region
    $region2: #{tpu_custom_call.1} parent=1 // pred_check
      _
    $region3: #{tpu_custom_call.1} parent=1 // pred_check_branch
      %16 = sbr.rel (0) target = $region5
    $region4: #{tpu_custom_call.1} parent=1 // pred_region
      _
    $region5: #{tpu_custom_call.1} parent=1 // pred_fallthru
      _
    // Predicated region
    $region6: #{tpu_custom_call.1} parent=1 // pred_check
      _
    $region7: #{tpu_custom_call.1} parent=1 // pred_check_branch
      %18 = sbr.rel (0) target = $region9
    $region8: #{tpu_custom_call.1} parent=1 // pred_region
      _
    $region9: #{tpu_custom_call.1} parent=1 // pred_fallthru
      _
    // Predicated region
    $region10: #{tpu_custom_call.1} parent=1 // pred_check
      _
    $region11: #{tpu_custom_call.1} parent=1 // pred_check_branch
      %20 = sbr.rel (0) target = $region13
    $region12: #{tpu_custom_call.1} parent=1 // pred_region
      _
    $region13: #{tpu_custom_call.1} parent=1 // pred_fallthru
      _
    // Predicated region
    $region14: #{tpu_custom_call.1} parent=1 // pred_check
      _
    $region15: #{tpu_custom_call.1} parent=1 // pred_check_branch
      %22 = sbr.rel (0) target = $region17
    $region16: #{tpu_custom_call.1} parent=1 // pred_region
      _
    $region17: #{tpu_custom_call.1} parent=1 // pred_fallthru
      _
    // Predicated region
    $region18: #{tpu_custom_call.1} parent=1 // pred_check
      _
    $region19: #{tpu_custom_call.1} parent=1 // pred_check_branch
      %24 = sbr.rel (0) target = $region21
    $region20: #{tpu_custom_call.1} parent=1 // pred_region
      _
    $region21: #{tpu_custom_call.1} parent=1 // pred_fallthru
      _
    // Predicated region
    $region22: #{tpu_custom_call.1} parent=1 // pred_check
      _
    $region23: #{tpu_custom_call.1} parent=1 // pred_check_branch
      %26 = sbr.rel (0) target = $region25
    $region24: #{tpu_custom_call.1} parent=1 // pred_region
      _
    $region25: #{tpu_custom_call.1} parent=1 // pred_fallthru
      _
    // Predicated region
    $region26: #{tpu_custom_call.1} parent=1 // pred_check
      _
    $region27: #{tpu_custom_call.1} parent=1 // pred_check_branch
      %28 = sbr.rel (0) target = $region29
    $region28: #{tpu_custom_call.1} parent=1 // pred_region
      _
    $region29: #{tpu_custom_call.1} parent=1 // pred_fallthru
      _
    // Predicated region
    $region30: #{tpu_custom_call.1} parent=1 // pred_check
      _
    $region31: #{tpu_custom_call.1} parent=1 // pred_check_branch
      %30 = sbr.rel (0) target = $region33
    $region32: #{tpu_custom_call.1} parent=1 // pred_region
      _
    $region33: #{tpu_custom_call.1} parent=1 // pred_fallthru
      _
    // Predicated region
    $region34: #{tpu_custom_call.1} parent=1 // pred_check
      _
    $region35: #{tpu_custom_call.1} parent=1 // pred_check_branch
      %32 = sbr.rel (0) target = $region37
    $region36: #{tpu_custom_call.1} parent=1 // pred_region
      _
    $region37: #{tpu_custom_call.1} parent=1 // pred_fallthru
      _
    %v33 = vld [vmem:[%s7] sm:$0xff]
    %v34 = vld [vmem:[%s7 + $0x8] sm:$0xff]
    %v35 = vld [vmem:[%s7 + $0x10] sm:$0xff]
    %v36 = vld [vmem:[%s7 + $0x18] sm:$0xff]
    %v37 = vld [vmem:[%s7 + $0x20] sm:$0xff]
    %v38 = vld [vmem:[%s7 + $0x28] sm:$0xff]
    %v39 = vld [vmem:[%s7 + $0x30] sm:$0xff]
    %v40 = vld [vmem:[%s7 + $0x38] sm:$0xff]
    %v41 = vld [vmem:[%s7 + $0x40] sm:$0xff]
    %v42 = vld [vmem:[%s7 + $0x48] sm:$0xff]
    %v43 = vld [vmem:[%s7 + $0x50] sm:$0xff]
    %v44 = vld [vmem:[%s7 + $0x58] sm:$0xff]
    %v45 = vld [vmem:[%s7 + $0x60] sm:$0xff]
    %v46 = vld [vmem:[%s7 + $0x68] sm:$0xff]
    %v47 = vld [vmem:[%s7 + $0x70] sm:$0xff]
    %v48 = vld [vmem:[%s7 + $0x78] sm:$0xff]
    %v49 = vld [vmem:[%s7 + $0x80] sm:$0xff]
    %v50 = vld [vmem:[%s7 + $0x88] sm:$0xff]
    %v51 = vld [vmem:[%s7 + $0x90] sm:$0xff]
    %v52 = vld [vmem:[%s7 + $0x98] sm:$0xff]
    %v53 = vld [vmem:[%s7 + $0xa0] sm:$0xff]
    %v54 = vld [vmem:[%s7 + $0xa8] sm:$0xff]
    %v55 = vld [vmem:[%s7 + $0xb0] sm:$0xff]
    %v56 = vld [vmem:[%s7 + $0xb8] sm:$0xff]
    %v57 = vld [vmem:[%s7 + $0xc0] sm:$0xff]
    %v58 = vld [vmem:[%s7 + $0xc8] sm:$0xff]
    %v59 = vld [vmem:[%s7 + $0xd0] sm:$0xff]
    %v60 = vld [vmem:[%s7 + $0xd8] sm:$0xff]
    %v61 = vld [vmem:[%s7 + $0xe0] sm:$0xff]
    %v62 = vld [vmem:[%s7 + $0xe8] sm:$0xff]
    %v63 = vld [vmem:[%s7 + $0xf0] sm:$0xff]
    %v64 = vld [vmem:[%s7 + $0xf8] sm:$0xff]
    %v65 = vld [vmem:[%s7 + $0x100] sm:$0xff]
    %v66 = vld [vmem:[%s7 + $0x110] sm:$0xff]
    %v67 = vld [vmem:[%s7 + $0x120] sm:$0xff]
    %v68 = vld [vmem:[%s7 + $0x130] sm:$0xff]
    %v69 = vld [vmem:[%s7 + $0x140] sm:$0xff]
    %v70 = vld [vmem:[%s7 + $0x150] sm:$0xff]
    %v71 = vld [vmem:[%s7 + $0x160] sm:$0xff]
    %v72 = vld [vmem:[%s7 + $0x170] sm:$0xff]
    %v73 = vld [vmem:[%s7 + $0x180] sm:$0xff]
    %v74 = vld [vmem:[%s7 + $0x190] sm:$0xff]
    %v75 = vld [vmem:[%s7 + $0x1a0] sm:$0xff]
    %v76 = vld [vmem:[%s7 + $0x1b0] sm:$0xff]
    %v77 = vld [vmem:[%s7 + $0x1c0] sm:$0xff]
    %v78 = vld [vmem:[%s7 + $0x1d0] sm:$0xff]
    %v79 = vld [vmem:[%s7 + $0x1e0] sm:$0xff]
    %v80 = vld [vmem:[%s7 + $0x1f0] sm:$0xff]
    %v81 = vld [vmem:[%s7 + $0x200] sm:$0xff]
    %v82 = vld [vmem:[%s7 + $0x210] sm:$0xff]
    %v83 = vld [vmem:[%s7 + $0x220] sm:$0xff]
    %v84 = vld [vmem:[%s7 + $0x230] sm:$0xff]
    %v85 = vld [vmem:[%s7 + $0x240] sm:$0xff]
    %v86 = vld [vmem:[%s7 + $0x250] sm:$0xff]
    %v87 = vld [vmem:[%s7 + $0x260] sm:$0xff]
    %v88 = vld [vmem:[%s7 + $0x270] sm:$0xff]
    %v89 = vld [vmem:[%s7 + $0x280] sm:$0xff]
    %v90 = vld [vmem:[%s7 + $0x290] sm:$0xff]
    %v91 = vld [vmem:[%s7 + $0x2a0] sm:$0xff]
    %v92 = vld [vmem:[%s7 + $0x2b0] sm:$0xff]
    %v93 = vld [vmem:[%s7 + $0x2c0] sm:$0xff]
    %v94 = vld [vmem:[%s7 + $0x2d0] sm:$0xff]
    %v95 = vld [vmem:[%s7 + $0x2e0] sm:$0xff]
    %v96 = vld [vmem:[%s7 + $0x2f0] sm:$0xff]
    %s97 = scalar_lea.vmem %s7, 768
    %v98 = vld [vmem:[%s97] ss:$8 sm:$0x3]
    %v99 = vld [vmem:[%s8] sm:$0x1]
    %v100 = vld [vmem:[%s8 + $0x1] sm:$0x1]
    %v101 = vld [vmem:[%s8 + $0x2] sm:$0x1]
    %v102 = vld [vmem:[%s8 + $0x3] sm:$0x1]
    %v103 = vld [vmem:[%s8 + $0x4] sm:$0x1]
    %v104 = vld [vmem:[%s8 + $0x5] sm:$0x1]
    %v105 = vld [vmem:[%s8 + $0x6] sm:$0x1]
    %v106 = vld [vmem:[%s8 + $0x7] sm:$0x1]
    %v107 = vld [vmem:[%s8 + $0x8] sm:$0x1]
    %v108 = vld [vmem:[%s0] sm:$0xff]
    %v109 = vld [vmem:[%s1] sm:$0xff]
    %v110 = vld [vmem:[%s2] sm:$0xff]
    %v111 = vld [vmem:[%s3] sm:$0xff]
    %v112 = vadd.f32 %v108, %v110
    %v113 = vld [vmem:[%s4] sm:$0xff]
    %v114 = vld [vmem:[%s4 + $0x8] sm:$0xff]
    %v115 = vld [vmem:[%s4 + $0x10] sm:$0xff]
    %v116 = vld [vmem:[%s4 + $0x18] sm:$0xff]
    %v117 = vld [vmem:[%s4 + $0x20] sm:$0xff]
    %v118 = vld [vmem:[%s4 + $0x28] sm:$0xff]
    %v119 = vld [vmem:[%s4 + $0x30] sm:$0xff]
    %v120 = vld [vmem:[%s4 + $0x38] sm:$0xff]
    %v121 = vld [vmem:[%s4 + $0x40] sm:$0xff]
    %v122 = vld [vmem:[%s4 + $0x48] sm:$0xff]
    %v123 = vld [vmem:[%s4 + $0x50] sm:$0xff]
    %v124 = vld [vmem:[%s4 + $0x58] sm:$0xff]
    %v125 = vld [vmem:[%s4 + $0x60] sm:$0xff]
    %v126 = vld [vmem:[%s4 + $0x68] sm:$0xff]
    %v127 = vld [vmem:[%s4 + $0x70] sm:$0xff]
    %v128 = vld [vmem:[%s4 + $0x78] sm:$0xff]
    %v129 = vld [vmem:[%s4 + $0x80] sm:$0xff]
    %v130 = vld [vmem:[%s4 + $0x88] sm:$0xff]
    %v131 = vld [vmem:[%s4 + $0x90] sm:$0xff]
    %v132 = vld [vmem:[%s4 + $0x98] sm:$0xff]
    %v133 = vld [vmem:[%s4 + $0xa0] sm:$0xff]
    %v134 = vld [vmem:[%s4 + $0xa8] sm:$0xff]
    %v135 = vld [vmem:[%s4 + $0xb0] sm:$0xff]
    %v136 = vld [vmem:[%s4 + $0xb8] sm:$0xff]
    %v137 = vld [vmem:[%s4 + $0xc0] sm:$0xff]
    %v138 = vld [vmem:[%s4 + $0xc8] sm:$0xff]
    %v139 = vld [vmem:[%s4 + $0xd0] sm:$0xff]
    %v140 = vld [vmem:[%s4 + $0xd8] sm:$0xff]
    %v141 = vld [vmem:[%s4 + $0xe0] sm:$0xff]
    %v142 = vld [vmem:[%s4 + $0xe8] sm:$0xff]
    %v143 = vld [vmem:[%s4 + $0xf0] sm:$0xff]
    %v144 = vld [vmem:[%s4 + $0xf8] sm:$0xff]
    %v145 = vld [vmem:[%s4 + $0x100] sm:$0xff]
    %v146 = vld [vmem:[%s4 + $0x108] sm:$0xff]
    %v147 = vld [vmem:[%s4 + $0x110] sm:$0xff]
    %v148 = vld [vmem:[%s4 + $0x118] sm:$0xff]
    %v149 = vld [vmem:[%s4 + $0x120] sm:$0xff]
    %v150 = vld [vmem:[%s4 + $0x128] sm:$0xff]
    %v151 = vld [vmem:[%s4 + $0x130] sm:$0xff]
    %v152 = vld [vmem:[%s4 + $0x138] sm:$0xff]
    %v153 = vld [vmem:[%s4 + $0x140] sm:$0xff]
    %v154 = vld [vmem:[%s4 + $0x148] sm:$0xff]
    %v155 = vld [vmem:[%s4 + $0x150] sm:$0xff]
    %v156 = vld [vmem:[%s4 + $0x158] sm:$0xff]
    %v157 = vld [vmem:[%s4 + $0x160] sm:$0xff]
    %v158 = vld [vmem:[%s4 + $0x168] sm:$0xff]
    %v159 = vld [vmem:[%s4 + $0x170] sm:$0xff]
    %v160 = vld [vmem:[%s4 + $0x178] sm:$0xff]
    %v161 = vld [vmem:[%s4 + $0x180] sm:$0xff]
    %v162 = vld [vmem:[%s4 + $0x188] sm:$0xff]
    %v163 = vld [vmem:[%s4 + $0x190] sm:$0xff]
    %v164 = vld [vmem:[%s4 + $0x198] sm:$0xff]
    %v165 = vld [vmem:[%s4 + $0x1a0] sm:$0xff]
    %v166 = vld [vmem:[%s4 + $0x1a8] sm:$0xff]
    %v167 = vld [vmem:[%s4 + $0x1b0] sm:$0xff]
    %v168 = vld [vmem:[%s4 + $0x1b8] sm:$0xff]
    %v169 = vld [vmem:[%s4 + $0x1c0] sm:$0xff]
    %v170 = vld [vmem:[%s4 + $0x1c8] sm:$0xff]
    %v171 = vld [vmem:[%s4 + $0x1d0] sm:$0xff]
    %v172 = vld [vmem:[%s4 + $0x1d8] sm:$0xff]
    %v173 = vld [vmem:[%s4 + $0x1e0] sm:$0xff]
    %v174 = vld [vmem:[%s4 + $0x1e8] sm:$0xff]
    %v175 = vld [vmem:[%s4 + $0x1f0] sm:$0xff]
    %v176 = vld [vmem:[%s4 + $0x1f8] sm:$0xff]
    %s177 = scalar_lea.vmem %s4, 512
    %v178 = vld [vmem:[%s177] sm:$0xff]
    %v179 = vld [vmem:[%s177 + $0x8] sm:$0xff]
    %v180 = vld [vmem:[%s177 + $0x10] sm:$0xff]
    %v181 = vld [vmem:[%s177 + $0x18] sm:$0xff]
    %v182 = vld [vmem:[%s177 + $0x20] sm:$0xff]
    %v183 = vld [vmem:[%s177 + $0x28] sm:$0xff]
    %v184 = vld [vmem:[%s177 + $0x30] sm:$0xff]
    %v185 = vld [vmem:[%s177 + $0x38] sm:$0xff]
    %v186 = vld [vmem:[%s177 + $0x40] sm:$0xff]
    %v187 = vld [vmem:[%s177 + $0x48] sm:$0xff]
    %v188 = vld [vmem:[%s177 + $0x50] sm:$0xff]
    %v189 = vld [vmem:[%s177 + $0x58] sm:$0xff]
    %v190 = vld [vmem:[%s177 + $0x60] sm:$0xff]
    %v191 = vld [vmem:[%s177 + $0x68] sm:$0xff]
    %v192 = vld [vmem:[%s177 + $0x70] sm:$0xff]
    %v193 = vld [vmem:[%s177 + $0x78] sm:$0xff]
    %v194 = vld [vmem:[%s177 + $0x80] sm:$0xff]
    %v195 = vld [vmem:[%s177 + $0x88] sm:$0xff]
    %v196 = vld [vmem:[%s177 + $0x90] sm:$0xff]
    %v197 = vld [vmem:[%s177 + $0x98] sm:$0xff]
    %v198 = vld [vmem:[%s177 + $0xa0] sm:$0xff]
    %v199 = vld [vmem:[%s177 + $0xa8] sm:$0xff]
    %v200 = vld [vmem:[%s177 + $0xb0] sm:$0xff]
    %v201 = vld [vmem:[%s177 + $0xb8] sm:$0xff]
    %v202 = vld [vmem:[%s177 + $0xc0] sm:$0xff]
    %v203 = vld [vmem:[%s177 + $0xc8] sm:$0xff]
    %v204 = vld [vmem:[%s177 + $0xd0] sm:$0xff]
    %v205 = vld [vmem:[%s177 + $0xd8] sm:$0xff]
    %v206 = vld [vmem:[%s177 + $0xe0] sm:$0xff]
    %v207 = vld [vmem:[%s177 + $0xe8] sm:$0xff]
    %v208 = vld [vmem:[%s177 + $0xf0] sm:$0xff]
    %v209 = vld [vmem:[%s177 + $0xf8] sm:$0xff]
    %v210 = vld [vmem:[%s177 + $0x100] sm:$0xff]
    %v211 = vld [vmem:[%s177 + $0x108] sm:$0xff]
    %v212 = vld [vmem:[%s177 + $0x110] sm:$0xff]
    %v213 = vld [vmem:[%s177 + $0x118] sm:$0xff]
    %v214 = vld [vmem:[%s177 + $0x120] sm:$0xff]
    %v215 = vld [vmem:[%s177 + $0x128] sm:$0xff]
    %v216 = vld [vmem:[%s177 + $0x130] sm:$0xff]
    %v217 = vld [vmem:[%s177 + $0x138] sm:$0xff]
    %v218 = vld [vmem:[%s177 + $0x140] sm:$0xff]
    %v219 = vld [vmem:[%s177 + $0x148] sm:$0xff]
    %v220 = vld [vmem:[%s177 + $0x150] sm:$0xff]
    %v221 = vld [vmem:[%s177 + $0x158] sm:$0xff]
    %v222 = vld [vmem:[%s177 + $0x160] sm:$0xff]
    %v223 = vld [vmem:[%s177 + $0x168] sm:$0xff]
    %v224 = vld [vmem:[%s177 + $0x170] sm:$0xff]
    %v225 = vld [vmem:[%s177 + $0x178] sm:$0xff]
    %v226 = vld [vmem:[%s177 + $0x180] sm:$0xff]
    %v227 = vld [vmem:[%s177 + $0x188] sm:$0xff]
    %v228 = vld [vmem:[%s177 + $0x190] sm:$0xff]
    %v229 = vld [vmem:[%s177 + $0x198] sm:$0xff]
    %v230 = vld [vmem:[%s177 + $0x1a0] sm:$0xff]
    %v231 = vld [vmem:[%s177 + $0x1a8] sm:$0xff]
    %v232 = vld [vmem:[%s177 + $0x1b0] sm:$0xff]
    %v233 = vld [vmem:[%s177 + $0x1b8] sm:$0xff]
    %v234 = vld [vmem:[%s177 + $0x1c0] sm:$0xff]
    %v235 = vld [vmem:[%s177 + $0x1c8] sm:$0xff]
    %v236 = vld [vmem:[%s177 + $0x1d0] sm:$0xff]
    %v237 = vld [vmem:[%s177 + $0x1d8] sm:$0xff]
    %v238 = vld [vmem:[%s177 + $0x1e0] sm:$0xff]
    %v239 = vld [vmem:[%s177 + $0x1e8] sm:$0xff]
    %v240 = vld [vmem:[%s177 + $0x1f0] sm:$0xff]
    %v241 = vld [vmem:[%s177 + $0x1f8] sm:$0xff]
    %s242 = scalar_lea.vmem %s4, 1024
    %v243 = vld [vmem:[%s242] sm:$0xff]
    %v244 = vld [vmem:[%s242 + $0x8] sm:$0xff]
    %v245 = vld [vmem:[%s242 + $0x10] sm:$0xff]
    %v246 = vld [vmem:[%s242 + $0x18] sm:$0xff]
    %v247 = vld [vmem:[%s242 + $0x20] sm:$0xff]
    %v248 = vld [vmem:[%s242 + $0x28] sm:$0xff]
    %v249 = vld [vmem:[%s242 + $0x30] sm:$0xff]
    %v250 = vld [vmem:[%s242 + $0x38] sm:$0xff]
    %v251 = vld [vmem:[%s242 + $0x40] sm:$0xff]
    %v252 = vld [vmem:[%s242 + $0x48] sm:$0xff]
    %v253 = vld [vmem:[%s242 + $0x50] sm:$0xff]
    %v254 = vld [vmem:[%s242 + $0x58] sm:$0xff]
    %v255 = vld [vmem:[%s242 + $0x60] sm:$0xff]
    %v256 = vld [vmem:[%s242 + $0x68] sm:$0xff]
    %v257 = vld [vmem:[%s242 + $0x70] sm:$0xff]
    %v258 = vld [vmem:[%s242 + $0x78] sm:$0xff]
    %v259 = vld [vmem:[%s242 + $0x80] sm:$0xff]
    %v260 = vld [vmem:[%s242 + $0x88] sm:$0xff]
    %v261 = vld [vmem:[%s242 + $0x90] sm:$0xff]
    %v262 = vld [vmem:[%s242 + $0x98] sm:$0xff]
    %v263 = vld [vmem:[%s242 + $0xa0] sm:$0xff]
    %v264 = vld [vmem:[%s242 + $0xa8] sm:$0xff]
    %v265 = vld [vmem:[%s242 + $0xb0] sm:$0xff]
    %v266 = vld [vmem:[%s242 + $0xb8] sm:$0xff]
    %v267 = vld [vmem:[%s242 + $0xc0] sm:$0xff]
    %v268 = vld [vmem:[%s242 + $0xc8] sm:$0xff]
    %v269 = vld [vmem:[%s242 + $0xd0] sm:$0xff]
    %v270 = vld [vmem:[%s242 + $0xd8] sm:$0xff]
    %v271 = vld [vmem:[%s242 + $0xe0] sm:$0xff]
    %v272 = vld [vmem:[%s242 + $0xe8] sm:$0xff]
    %v273 = vld [vmem:[%s242 + $0xf0] sm:$0xff]
    %v274 = vld [vmem:[%s242 + $0xf8] sm:$0xff]
    %v275 = vld [vmem:[%s242 + $0x100] sm:$0xff]
    %v276 = vld [vmem:[%s242 + $0x108] sm:$0xff]
    %v277 = vld [vmem:[%s242 + $0x110] sm:$0xff]
    %v278 = vld [vmem:[%s242 + $0x118] sm:$0xff]
    %v279 = vld [vmem:[%s242 + $0x120] sm:$0xff]
    %v280 = vld [vmem:[%s242 + $0x128] sm:$0xff]
    %v281 = vld [vmem:[%s242 + $0x130] sm:$0xff]
    %v282 = vld [vmem:[%s242 + $0x138] sm:$0xff]
    %v283 = vld [vmem:[%s242 + $0x140] sm:$0xff]
    %v284 = vld [vmem:[%s242 + $0x148] sm:$0xff]
    %v285 = vld [vmem:[%s242 + $0x150] sm:$0xff]
    %v286 = vld [vmem:[%s242 + $0x158] sm:$0xff]
    %v287 = vld [vmem:[%s242 + $0x160] sm:$0xff]
    %v288 = vld [vmem:[%s242 + $0x168] sm:$0xff]
    %v289 = vld [vmem:[%s242 + $0x170] sm:$0xff]
    %v290 = vld [vmem:[%s242 + $0x178] sm:$0xff]
    %v291 = vld [vmem:[%s242 + $0x180] sm:$0xff]
    %v292 = vld [vmem:[%s242 + $0x188] sm:$0xff]
    %v293 = vld [vmem:[%s242 + $0x190] sm:$0xff]
    %v294 = vld [vmem:[%s242 + $0x198] sm:$0xff]
    %v295 = vld [vmem:[%s242 + $0x1a0] sm:$0xff]
    %v296 = vld [vmem:[%s242 + $0x1a8] sm:$0xff]
    %v297 = vld [vmem:[%s242 + $0x1b0] sm:$0xff]
    %v298 = vld [vmem:[%s242 + $0x1b8] sm:$0xff]
    %v299 = vld [vmem:[%s242 + $0x1c0] sm:$0xff]
    %v300 = vld [vmem:[%s242 + $0x1c8] sm:$0xff]
    %v301 = vld [vmem:[%s242 + $0x1d0] sm:$0xff]
    %v302 = vld [vmem:[%s242 + $0x1d8] sm:$0xff]
    %v303 = vld [vmem:[%s242 + $0x1e0] sm:$0xff]
    %v304 = vld [vmem:[%s242 + $0x1e8] sm:$0xff]
    %v305 = vld [vmem:[%s242 + $0x1f0] sm:$0xff]
    %v306 = vld [vmem:[%s242 + $0x1f8] sm:$0xff]
    %v307 = vld [vmem:[%s5] sm:$0x1]
    %v308 = vld [vmem:[%s5 + $0x1] sm:$0x1]
    %v309 = vld [vmem:[%s5 + $0x2] sm:$0x1]
    %v310 = vld [vmem:[%s5 + $0x3] sm:$0x1]
    %s311 = scalar_lea.vmem %s5, 4
    %v312 = vld [vmem:[%s311] sm:$0x1]
    %v313 = vld [vmem:[%s311 + $0x1] sm:$0x1]
    %v314 = vld [vmem:[%s311 + $0x2] sm:$0x1]
    %v315 = vld [vmem:[%s311 + $0x3] sm:$0x1]
    %s316 = scalar_lea.vmem %s5, 8
    %v317 = vld [vmem:[%s316] sm:$0x1]
    %v318 = vld [vmem:[%s316 + $0x1] sm:$0x1]
    %v319 = vld [vmem:[%s316 + $0x2] sm:$0x1]
    %v320 = vld [vmem:[%s316 + $0x3] sm:$0x1]
    %v321 = vld [vmem:[%s6] sm:$0xff]
    %v322 = vld [vmem:[%s6 + $0x8] sm:$0xff]
    %v323 = vld [vmem:[%s6 + $0x10] sm:$0xff]
    %v324 = vld [vmem:[%s6 + $0x18] sm:$0xff]
    %v325 = vld [vmem:[%s6 + $0x20] sm:$0xff]
    %v326 = vld [vmem:[%s6 + $0x28] sm:$0xff]
    %v327 = vld [vmem:[%s6 + $0x30] sm:$0xff]
    %v328 = vld [vmem:[%s6 + $0x38] sm:$0xff]
    %v329 = vld [vmem:[%s6 + $0x40] sm:$0xff]
    %v330 = vld [vmem:[%s6 + $0x48] sm:$0xff]
    %v331 = vld [vmem:[%s6 + $0x50] sm:$0xff]
    %v332 = vld [vmem:[%s6 + $0x58] sm:$0xff]
    %v333 = vld [vmem:[%s6 + $0x60] sm:$0xff]
    %v334 = vld [vmem:[%s6 + $0x68] sm:$0xff]
    %v335 = vld [vmem:[%s6 + $0x70] sm:$0xff]
    %v336 = vld [vmem:[%s6 + $0x78] sm:$0xff]
    %v341 = vlaneseq
    %v342 = vshrl.u32 %v341, 7
    %v343 = vsub.s32 0, %v342
    %v344 = vrot.slane %v307, %v343
    %v345 = vlaneseq
    %v346 = vshrl.u32 %v345, 7
    %v347 = vsub.s32 0, %v346
    %v348 = vrot.slane %v308, %v347
    %v349 = vlaneseq
    %v350 = vshrl.u32 %v349, 7
    %v351 = vsub.s32 0, %v350
    %v352 = vrot.slane %v309, %v351
    %v353 = vlaneseq
    %v354 = vshrl.u32 %v353, 7
    %v355 = vsub.s32 0, %v354
    %v356 = vrot.slane %v310, %v355
    %361 = vmatprep.subr.mxu0 0.0
    %362 = vmatpush1.msra.mxu0 %v128
    %363 = vmatprep.subr.mxu0 0.0
    %364 = vmatpush1.msra.mxu0 %v127
    %365 = vmatprep.subr.mxu0 0.0
    %366 = vmatpush1.msra.mxu0 %v126
    %367 = vmatprep.subr.mxu0 0.0
    %368 = vmatpush1.msra.mxu0 %v125
    %369 = vmatprep.subr.mxu0 0.0
    %370 = vmatpush1.msra.mxu0 %v124
    %371 = vmatprep.subr.mxu0 0.0
    %372 = vmatpush1.msra.mxu0 %v123
    %373 = vmatprep.subr.mxu0 0.0
    %374 = vmatpush1.msra.mxu0 %v122
    %375 = vmatprep.subr.mxu0 0.0
    %376 = vmatpush1.msra.mxu0 %v121
    %377 = vmatprep.subr.mxu0 0.0
    %378 = vmatpush1.msra.mxu0 %v120
    %379 = vmatprep.subr.mxu0 0.0
    %380 = vmatpush1.msra.mxu0 %v119
    %381 = vmatprep.subr.mxu0 0.0
    %382 = vmatpush1.msra.mxu0 %v118
    %383 = vmatprep.subr.mxu0 0.0
    %384 = vmatpush1.msra.mxu0 %v117
    %385 = vmatprep.subr.mxu0 0.0
    %386 = vmatpush1.msra.mxu0 %v116
    %387 = vmatprep.subr.mxu0 0.0
    %388 = vmatpush1.msra.mxu0 %v115
    %389 = vmatprep.subr.mxu0 0.0
    %390 = vmatpush1.msra.mxu0 %v114
    %391 = vmatprep.subr.mxu0 0.0
    %392 = vmatpush1.msra.mxu0 %v113
    %393 = vmatprep.subr.mxu0 0.0
    %394 = vmatpush2.msra.mxu0 0.0
    %395 = vmatprep.subr.mxu0 0.0
    %396 = vmatpush2.msra.mxu0 0.0
    %397 = vmatprep.subr.mxu0 0.0
    %398 = vmatpush2.msra.mxu0 0.0
    %399 = vmatprep.subr.mxu0 0.0
    %400 = vmatpush2.msra.mxu0 0.0
    %401 = vmatprep.subr.mxu0 0.0
    %402 = vmatpush2.msra.mxu0 0.0
    %403 = vmatprep.subr.mxu0 0.0
    %404 = vmatpush2.msra.mxu0 0.0
    %405 = vmatprep.subr.mxu0 0.0
    %406 = vmatpush2.msra.mxu0 0.0
    %407 = vmatprep.subr.mxu0 0.0
    %408 = vmatpush2.msra.mxu0 0.0
    %409 = vmatprep.subr.mxu0 0.0
    %410 = vmatpush2.msra.mxu0 0.0
    %411 = vmatprep.subr.mxu0 0.0
    %412 = vmatpush2.msra.mxu0 0.0
    %413 = vmatprep.subr.mxu0 0.0
    %414 = vmatpush2.msra.mxu0 0.0
    %415 = vmatprep.subr.mxu0 0.0
    %416 = vmatpush2.msra.mxu0 0.0
    %417 = vmatprep.subr.mxu0 0.0
    %418 = vmatpush2.msra.mxu0 0.0
    %419 = vmatprep.subr.mxu0 0.0
    %420 = vmatpush2.msra.mxu0 0.0
    %421 = vmatprep.subr.mxu0 0.0
    %422 = vmatpush2.msra.mxu0 0.0
    %423 = vmatprep.subr.mxu0 0.0
    %424 = vmatpush2.msra.mxu0 0.0
    %425 = vmatprep.mubr.f32.mxu0 0.0
    %426 = vmatmul.mubr.f32.gmra.mxu0 %v112
    %v427 = vpop.f32.mrf.mxu0
    %v428 = vadd.f32 %v344, %v427
    %v429 = vpop.f32.mrf.mxu0
    %430 = vdwg.mxu0
    %431 = vmatprep.subr.mxu0 0.0
    %432 = vmatpush1.msra.mxu0 %v144
    %433 = vmatprep.subr.mxu0 0.0
    %434 = vmatpush1.msra.mxu0 %v143
    %435 = vmatprep.subr.mxu0 0.0
    %436 = vmatpush1.msra.mxu0 %v142
    %437 = vmatprep.subr.mxu0 0.0
    %438 = vmatpush1.msra.mxu0 %v141
    %439 = vmatprep.subr.mxu0 0.0
    %440 = vmatpush1.msra.mxu0 %v140
    %441 = vmatprep.subr.mxu0 0.0
    %442 = vmatpush1.msra.mxu0 %v139
    %443 = vmatprep.subr.mxu0 0.0
    %444 = vmatpush1.msra.mxu0 %v138
    %445 = vmatprep.subr.mxu0 0.0
    %446 = vmatpush1.msra.mxu0 %v137
    %447 = vmatprep.subr.mxu0 0.0
    %448 = vmatpush1.msra.mxu0 %v136
    %449 = vmatprep.subr.mxu0 0.0
    %450 = vmatpush1.msra.mxu0 %v135
    %451 = vmatprep.subr.mxu0 0.0
    %452 = vmatpush1.msra.mxu0 %v134
    %453 = vmatprep.subr.mxu0 0.0
    %454 = vmatpush1.msra.mxu0 %v133
    %455 = vmatprep.subr.mxu0 0.0
    %456 = vmatpush1.msra.mxu0 %v132
    %457 = vmatprep.subr.mxu0 0.0
    %458 = vmatpush1.msra.mxu0 %v131
    %459 = vmatprep.subr.mxu0 0.0
    %460 = vmatpush1.msra.mxu0 %v130
    %461 = vmatprep.subr.mxu0 0.0
    %462 = vmatpush1.msra.mxu0 %v129
    %463 = vmatprep.subr.mxu0 0.0
    %464 = vmatpush2.msra.mxu0 0.0
    %465 = vmatprep.subr.mxu0 0.0
    %466 = vmatpush2.msra.mxu0 0.0
    %467 = vmatprep.subr.mxu0 0.0
    %468 = vmatpush2.msra.mxu0 0.0
    %469 = vmatprep.subr.mxu0 0.0
    %470 = vmatpush2.msra.mxu0 0.0
    %471 = vmatprep.subr.mxu0 0.0
    %472 = vmatpush2.msra.mxu0 0.0
    %473 = vmatprep.subr.mxu0 0.0
    %474 = vmatpush2.msra.mxu0 0.0
    %475 = vmatprep.subr.mxu0 0.0
    %476 = vmatpush2.msra.mxu0 0.0
    %477 = vmatprep.subr.mxu0 0.0
    %478 = vmatpush2.msra.mxu0 0.0
    %479 = vmatprep.subr.mxu0 0.0
    %480 = vmatpush2.msra.mxu0 0.0
    %481 = vmatprep.subr.mxu0 0.0
    %482 = vmatpush2.msra.mxu0 0.0
    %483 = vmatprep.subr.mxu0 0.0
    %484 = vmatpush2.msra.mxu0 0.0
    %485 = vmatprep.subr.mxu0 0.0
    %486 = vmatpush2.msra.mxu0 0.0
    %487 = vmatprep.subr.mxu0 0.0
    %488 = vmatpush2.msra.mxu0 0.0
    %489 = vmatprep.subr.mxu0 0.0
    %490 = vmatpush2.msra.mxu0 0.0
    %491 = vmatprep.subr.mxu0 0.0
    %492 = vmatpush2.msra.mxu0 0.0
    %493 = vmatprep.subr.mxu0 0.0
    %494 = vmatpush2.msra.mxu0 0.0
    %495 = vmatprep.mubr.f32.mxu0 0.0
    %496 = vmatmul.mubr.f32.gmra.mxu0 %v112
    %v497 = vpop.f32.mrf.mxu0
    %v498 = vadd.f32 %v348, %v497
    %v499 = vpop.f32.mrf.mxu0
    %500 = vdwg.mxu0
    %501 = vmatprep.subr.mxu0 0.0
    %502 = vmatpush1.msra.mxu0 %v160
    %503 = vmatprep.subr.mxu0 0.0
    %504 = vmatpush1.msra.mxu0 %v159
    %505 = vmatprep.subr.mxu0 0.0
    %506 = vmatpush1.msra.mxu0 %v158
    %507 = vmatprep.subr.mxu0 0.0
    %508 = vmatpush1.msra.mxu0 %v157
    %509 = vmatprep.subr.mxu0 0.0
    %510 = vmatpush1.msra.mxu0 %v156
    %511 = vmatprep.subr.mxu0 0.0
    %512 = vmatpush1.msra.mxu0 %v155
    %513 = vmatprep.subr.mxu0 0.0
    %514 = vmatpush1.msra.mxu0 %v154
    %515 = vmatprep.subr.mxu0 0.0
    %516 = vmatpush1.msra.mxu0 %v153
    %517 = vmatprep.subr.mxu0 0.0
    %518 = vmatpush1.msra.mxu0 %v152
    %519 = vmatprep.subr.mxu0 0.0
    %520 = vmatpush1.msra.mxu0 %v151
    %521 = vmatprep.subr.mxu0 0.0
    %522 = vmatpush1.msra.mxu0 %v150
    %523 = vmatprep.subr.mxu0 0.0
    %524 = vmatpush1.msra.mxu0 %v149
    %525 = vmatprep.subr.mxu0 0.0
    %526 = vmatpush1.msra.mxu0 %v148
    %527 = vmatprep.subr.mxu0 0.0
    %528 = vmatpush1.msra.mxu0 %v147
    %529 = vmatprep.subr.mxu0 0.0
    %530 = vmatpush1.msra.mxu0 %v146
    %531 = vmatprep.subr.mxu0 0.0
    %532 = vmatpush1.msra.mxu0 %v145
    %533 = vmatprep.subr.mxu0 0.0
    %534 = vmatpush2.msra.mxu0 0.0
    %535 = vmatprep.subr.mxu0 0.0
    %536 = vmatpush2.msra.mxu0 0.0
    %537 = vmatprep.subr.mxu0 0.0
    %538 = vmatpush2.msra.mxu0 0.0
    %539 = vmatprep.subr.mxu0 0.0
    %540 = vmatpush2.msra.mxu0 0.0
    %541 = vmatprep.subr.mxu0 0.0
    %542 = vmatpush2.msra.mxu0 0.0
    %543 = vmatprep.subr.mxu0 0.0
    %544 = vmatpush2.msra.mxu0 0.0
    %545 = vmatprep.subr.mxu0 0.0
    %546 = vmatpush2.msra.mxu0 0.0
    %547 = vmatprep.subr.mxu0 0.0
    %548 = vmatpush2.msra.mxu0 0.0
    %549 = vmatprep.subr.mxu0 0.0
    %550 = vmatpush2.msra.mxu0 0.0
    %551 = vmatprep.subr.mxu0 0.0
    %552 = vmatpush2.msra.mxu0 0.0
    %553 = vmatprep.subr.mxu0 0.0
    %554 = vmatpush2.msra.mxu0 0.0
    %555 = vmatprep.subr.mxu0 0.0
    %556 = vmatpush2.msra.mxu0 0.0
    %557 = vmatprep.subr.mxu0 0.0
    %558 = vmatpush2.msra.mxu0 0.0
    %559 = vmatprep.subr.mxu0 0.0
    %560 = vmatpush2.msra.mxu0 0.0
    %561 = vmatprep.subr.mxu0 0.0
    %562 = vmatpush2.msra.mxu0 0.0
    %563 = vmatprep.subr.mxu0 0.0
    %564 = vmatpush2.msra.mxu0 0.0
    %565 = vmatprep.mubr.f32.mxu0 0.0
    %566 = vmatmul.mubr.f32.gmra.mxu0 %v112
    %v567 = vpop.f32.mrf.mxu0
    %v568 = vadd.f32 %v352, %v567
    %v569 = vpop.f32.mrf.mxu0
    %570 = vdwg.mxu0
    %571 = vmatprep.subr.mxu0 0.0
    %572 = vmatpush1.msra.mxu0 %v176
    %573 = vmatprep.subr.mxu0 0.0
    %574 = vmatpush1.msra.mxu0 %v175
    %575 = vmatprep.subr.mxu0 0.0
    %576 = vmatpush1.msra.mxu0 %v174
    %577 = vmatprep.subr.mxu0 0.0
    %578 = vmatpush1.msra.mxu0 %v173
    %579 = vmatprep.subr.mxu0 0.0
    %580 = vmatpush1.msra.mxu0 %v172
    %581 = vmatprep.subr.mxu0 0.0
    %582 = vmatpush1.msra.mxu0 %v171
    %583 = vmatprep.subr.mxu0 0.0
    %584 = vmatpush1.msra.mxu0 %v170
    %585 = vmatprep.subr.mxu0 0.0
    %586 = vmatpush1.msra.mxu0 %v169
    %587 = vmatprep.subr.mxu0 0.0
    %588 = vmatpush1.msra.mxu0 %v168
    %589 = vmatprep.subr.mxu0 0.0
    %590 = vmatpush1.msra.mxu0 %v167
    %591 = vmatprep.subr.mxu0 0.0
    %592 = vmatpush1.msra.mxu0 %v166
    %593 = vmatprep.subr.mxu0 0.0
    %594 = vmatpush1.msra.mxu0 %v165
    %595 = vmatprep.subr.mxu0 0.0
    %596 = vmatpush1.msra.mxu0 %v164
    %597 = vmatprep.subr.mxu0 0.0
    %598 = vmatpush1.msra.mxu0 %v163
    %599 = vmatprep.subr.mxu0 0.0
    %600 = vmatpush1.msra.mxu0 %v162
    %601 = vmatprep.subr.mxu0 0.0
    %602 = vmatpush1.msra.mxu0 %v161
    %603 = vmatprep.subr.mxu0 0.0
    %604 = vmatpush2.msra.mxu0 0.0
    %605 = vmatprep.subr.mxu0 0.0
    %606 = vmatpush2.msra.mxu0 0.0
    %607 = vmatprep.subr.mxu0 0.0
    %608 = vmatpush2.msra.mxu0 0.0
    %609 = vmatprep.subr.mxu0 0.0
    %610 = vmatpush2.msra.mxu0 0.0
    %611 = vmatprep.subr.mxu0 0.0
    %612 = vmatpush2.msra.mxu0 0.0
    %613 = vmatprep.subr.mxu0 0.0
    %614 = vmatpush2.msra.mxu0 0.0
    %615 = vmatprep.subr.mxu0 0.0
    %616 = vmatpush2.msra.mxu0 0.0
    %617 = vmatprep.subr.mxu0 0.0
    %618 = vmatpush2.msra.mxu0 0.0
    %619 = vmatprep.subr.mxu0 0.0
    %620 = vmatpush2.msra.mxu0 0.0
    %621 = vmatprep.subr.mxu0 0.0
    %622 = vmatpush2.msra.mxu0 0.0
    %623 = vmatprep.subr.mxu0 0.0
    %624 = vmatpush2.msra.mxu0 0.0
    %625 = vmatprep.subr.mxu0 0.0
    %626 = vmatpush2.msra.mxu0 0.0
    %627 = vmatprep.subr.mxu0 0.0
    %628 = vmatpush2.msra.mxu0 0.0
    %629 = vmatprep.subr.mxu0 0.0
    %630 = vmatpush2.msra.mxu0 0.0
    %631 = vmatprep.subr.mxu0 0.0
    %632 = vmatpush2.msra.mxu0 0.0
    %633 = vmatprep.subr.mxu0 0.0
    %634 = vmatpush2.msra.mxu0 0.0
    %635 = vmatprep.mubr.f32.mxu0 0.0
    %636 = vmatmul.mubr.f32.gmra.mxu0 %v112
    %v637 = vpop.f32.mrf.mxu0
    %v638 = vadd.f32 %v356, %v637
    %v639 = vpop.f32.mrf.mxu0
    %640 = vdwg.mxu0
    %v645 = vlaneseq
    %v646 = vshrl.u32 %v645, 7
    %v647 = vsub.s32 0, %v646
    %v648 = vrot.slane %v312, %v647
    %v649 = vlaneseq
    %v650 = vshrl.u32 %v649, 7
    %v651 = vsub.s32 0, %v650
    %v652 = vrot.slane %v313, %v651
    %v653 = vlaneseq
    %v654 = vshrl.u32 %v653, 7
    %v655 = vsub.s32 0, %v654
    %v656 = vrot.slane %v314, %v655
    %v657 = vlaneseq
    %v658 = vshrl.u32 %v657, 7
    %v659 = vsub.s32 0, %v658
    %v660 = vrot.slane %v315, %v659
    %665 = vmatprep.subr.mxu0 0.0
    %666 = vmatpush1.msra.mxu0 %v193
    %667 = vmatprep.subr.mxu0 0.0
    %668 = vmatpush1.msra.mxu0 %v192
    %669 = vmatprep.subr.mxu0 0.0
    %670 = vmatpush1.msra.mxu0 %v191
    %671 = vmatprep.subr.mxu0 0.0
    %672 = vmatpush1.msra.mxu0 %v190
    %673 = vmatprep.subr.mxu0 0.0
    %674 = vmatpush1.msra.mxu0 %v189
    %675 = vmatprep.subr.mxu0 0.0
    %676 = vmatpush1.msra.mxu0 %v188
    %677 = vmatprep.subr.mxu0 0.0
    %678 = vmatpush1.msra.mxu0 %v187
    %679 = vmatprep.subr.mxu0 0.0
    %680 = vmatpush1.msra.mxu0 %v186
    %681 = vmatprep.subr.mxu0 0.0
    %682 = vmatpush1.msra.mxu0 %v185
    %683 = vmatprep.subr.mxu0 0.0
    %684 = vmatpush1.msra.mxu0 %v184
    %685 = vmatprep.subr.mxu0 0.0
    %686 = vmatpush1.msra.mxu0 %v183
    %687 = vmatprep.subr.mxu0 0.0
    %688 = vmatpush1.msra.mxu0 %v182
    %689 = vmatprep.subr.mxu0 0.0
    %690 = vmatpush1.msra.mxu0 %v181
    %691 = vmatprep.subr.mxu0 0.0
    %692 = vmatpush1.msra.mxu0 %v180
    %693 = vmatprep.subr.mxu0 0.0
    %694 = vmatpush1.msra.mxu0 %v179
    %695 = vmatprep.subr.mxu0 0.0
    %696 = vmatpush1.msra.mxu0 %v178
    %697 = vmatprep.subr.mxu0 0.0
    %698 = vmatpush2.msra.mxu0 0.0
    %699 = vmatprep.subr.mxu0 0.0
    %700 = vmatpush2.msra.mxu0 0.0
    %701 = vmatprep.subr.mxu0 0.0
    %702 = vmatpush2.msra.mxu0 0.0
    %703 = vmatprep.subr.mxu0 0.0
    %704 = vmatpush2.msra.mxu0 0.0
    %705 = vmatprep.subr.mxu0 0.0
    %706 = vmatpush2.msra.mxu0 0.0
    %707 = vmatprep.subr.mxu0 0.0
    %708 = vmatpush2.msra.mxu0 0.0
    %709 = vmatprep.subr.mxu0 0.0
    %710 = vmatpush2.msra.mxu0 0.0
    %711 = vmatprep.subr.mxu0 0.0
    %712 = vmatpush2.msra.mxu0 0.0
    %713 = vmatprep.subr.mxu0 0.0
    %714 = vmatpush2.msra.mxu0 0.0
    %715 = vmatprep.subr.mxu0 0.0
    %716 = vmatpush2.msra.mxu0 0.0
    %717 = vmatprep.subr.mxu0 0.0
    %718 = vmatpush2.msra.mxu0 0.0
    %719 = vmatprep.subr.mxu0 0.0
    %720 = vmatpush2.msra.mxu0 0.0
    %721 = vmatprep.subr.mxu0 0.0
    %722 = vmatpush2.msra.mxu0 0.0
    %723 = vmatprep.subr.mxu0 0.0
    %724 = vmatpush2.msra.mxu0 0.0
    %725 = vmatprep.subr.mxu0 0.0
    %726 = vmatpush2.msra.mxu0 0.0
    %727 = vmatprep.subr.mxu0 0.0
    %728 = vmatpush2.msra.mxu0 0.0
    %729 = vmatprep.mubr.f32.mxu0 0.0
    %730 = vmatmul.mubr.f32.gmra.mxu0 %v112
    %v731 = vpop.f32.mrf.mxu0
    %v732 = vadd.f32 %v648, %v731
    %v733 = vpop.f32.mrf.mxu0
    %734 = vdwg.mxu0
    %735 = vmatprep.subr.mxu0 0.0
    %736 = vmatpush1.msra.mxu0 %v209
    %737 = vmatprep.subr.mxu0 0.0
    %738 = vmatpush1.msra.mxu0 %v208
    %739 = vmatprep.subr.mxu0 0.0
    %740 = vmatpush1.msra.mxu0 %v207
    %741 = vmatprep.subr.mxu0 0.0
    %742 = vmatpush1.msra.mxu0 %v206
    %743 = vmatprep.subr.mxu0 0.0
    %744 = vmatpush1.msra.mxu0 %v205
    %745 = vmatprep.subr.mxu0 0.0
    %746 = vmatpush1.msra.mxu0 %v204
    %747 = vmatprep.subr.mxu0 0.0
    %748 = vmatpush1.msra.mxu0 %v203
    %749 = vmatprep.subr.mxu0 0.0
    %750 = vmatpush1.msra.mxu0 %v202
    %751 = vmatprep.subr.mxu0 0.0
    %752 = vmatpush1.msra.mxu0 %v201
    %753 = vmatprep.subr.mxu0 0.0
    %754 = vmatpush1.msra.mxu0 %v200
    %755 = vmatprep.subr.mxu0 0.0
    %756 = vmatpush1.msra.mxu0 %v199
    %757 = vmatprep.subr.mxu0 0.0
    %758 = vmatpush1.msra.mxu0 %v198
    %759 = vmatprep.subr.mxu0 0.0
    %760 = vmatpush1.msra.mxu0 %v197
    %761 = vmatprep.subr.mxu0 0.0
    %762 = vmatpush1.msra.mxu0 %v196
    %763 = vmatprep.subr.mxu0 0.0
    %764 = vmatpush1.msra.mxu0 %v195
    %765 = vmatprep.subr.mxu0 0.0
    %766 = vmatpush1.msra.mxu0 %v194
    %767 = vmatprep.subr.mxu0 0.0
    %768 = vmatpush2.msra.mxu0 0.0
    %769 = vmatprep.subr.mxu0 0.0
    %770 = vmatpush2.msra.mxu0 0.0
    %771 = vmatprep.subr.mxu0 0.0
    %772 = vmatpush2.msra.mxu0 0.0
    %773 = vmatprep.subr.mxu0 0.0
    %774 = vmatpush2.msra.mxu0 0.0
    %775 = vmatprep.subr.mxu0 0.0
    %776 = vmatpush2.msra.mxu0 0.0
    %777 = vmatprep.subr.mxu0 0.0
    %778 = vmatpush2.msra.mxu0 0.0
    %779 = vmatprep.subr.mxu0 0.0
    %780 = vmatpush2.msra.mxu0 0.0
    %781 = vmatprep.subr.mxu0 0.0
    %782 = vmatpush2.msra.mxu0 0.0
    %783 = vmatprep.subr.mxu0 0.0
    %784 = vmatpush2.msra.mxu0 0.0
    %785 = vmatprep.subr.mxu0 0.0
    %786 = vmatpush2.msra.mxu0 0.0
    %787 = vmatprep.subr.mxu0 0.0
    %788 = vmatpush2.msra.mxu0 0.0
    %789 = vmatprep.subr.mxu0 0.0
    %790 = vmatpush2.msra.mxu0 0.0
    %791 = vmatprep.subr.mxu0 0.0
    %792 = vmatpush2.msra.mxu0 0.0
    %793 = vmatprep.subr.mxu0 0.0
    %794 = vmatpush2.msra.mxu0 0.0
    %795 = vmatprep.subr.mxu0 0.0
    %796 = vmatpush2.msra.mxu0 0.0
    %797 = vmatprep.subr.mxu0 0.0
    %798 = vmatpush2.msra.mxu0 0.0
    %799 = vmatprep.mubr.f32.mxu0 0.0
    %800 = vmatmul.mubr.f32.gmra.mxu0 %v112
    %v801 = vpop.f32.mrf.mxu0
    %v802 = vadd.f32 %v652, %v801
    %v803 = vpop.f32.mrf.mxu0
    %804 = vdwg.mxu0
    %805 = vmatprep.subr.mxu0 0.0
    %806 = vmatpush1.msra.mxu0 %v225
    %807 = vmatprep.subr.mxu0 0.0
    %808 = vmatpush1.msra.mxu0 %v224
    %809 = vmatprep.subr.mxu0 0.0
    %810 = vmatpush1.msra.mxu0 %v223
    %811 = vmatprep.subr.mxu0 0.0
    %812 = vmatpush1.msra.mxu0 %v222
    %813 = vmatprep.subr.mxu0 0.0
    %814 = vmatpush1.msra.mxu0 %v221
    %815 = vmatprep.subr.mxu0 0.0
    %816 = vmatpush1.msra.mxu0 %v220
    %817 = vmatprep.subr.mxu0 0.0
    %818 = vmatpush1.msra.mxu0 %v219
    %819 = vmatprep.subr.mxu0 0.0
    %820 = vmatpush1.msra.mxu0 %v218
    %821 = vmatprep.subr.mxu0 0.0
    %822 = vmatpush1.msra.mxu0 %v217
    %823 = vmatprep.subr.mxu0 0.0
    %824 = vmatpush1.msra.mxu0 %v216
    %825 = vmatprep.subr.mxu0 0.0
    %826 = vmatpush1.msra.mxu0 %v215
    %827 = vmatprep.subr.mxu0 0.0
    %828 = vmatpush1.msra.mxu0 %v214
    %829 = vmatprep.subr.mxu0 0.0
    %830 = vmatpush1.msra.mxu0 %v213
    %831 = vmatprep.subr.mxu0 0.0
    %832 = vmatpush1.msra.mxu0 %v212
    %833 = vmatprep.subr.mxu0 0.0
    %834 = vmatpush1.msra.mxu0 %v211
    %835 = vmatprep.subr.mxu0 0.0
    %836 = vmatpush1.msra.mxu0 %v210
    %837 = vmatprep.subr.mxu0 0.0
    %838 = vmatpush2.msra.mxu0 0.0
    %839 = vmatprep.subr.mxu0 0.0
    %840 = vmatpush2.msra.mxu0 0.0
    %841 = vmatprep.subr.mxu0 0.0
    %842 = vmatpush2.msra.mxu0 0.0
    %843 = vmatprep.subr.mxu0 0.0
    %844 = vmatpush2.msra.mxu0 0.0
    %845 = vmatprep.subr.mxu0 0.0
    %846 = vmatpush2.msra.mxu0 0.0
    %847 = vmatprep.subr.mxu0 0.0
    %848 = vmatpush2.msra.mxu0 0.0
    %849 = vmatprep.subr.mxu0 0.0
    %850 = vmatpush2.msra.mxu0 0.0
    %851 = vmatprep.subr.mxu0 0.0
    %852 = vmatpush2.msra.mxu0 0.0
    %853 = vmatprep.subr.mxu0 0.0
    %854 = vmatpush2.msra.mxu0 0.0
    %855 = vmatprep.subr.mxu0 0.0
    %856 = vmatpush2.msra.mxu0 0.0
    %857 = vmatprep.subr.mxu0 0.0
    %858 = vmatpush2.msra.mxu0 0.0
    %859 = vmatprep.subr.mxu0 0.0
    %860 = vmatpush2.msra.mxu0 0.0
    %861 = vmatprep.subr.mxu0 0.0
    %862 = vmatpush2.msra.mxu0 0.0
    %863 = vmatprep.subr.mxu0 0.0
    %864 = vmatpush2.msra.mxu0 0.0
    %865 = vmatprep.subr.mxu0 0.0
    %866 = vmatpush2.msra.mxu0 0.0
    %867 = vmatprep.subr.mxu0 0.0
    %868 = vmatpush2.msra.mxu0 0.0
    %869 = vmatprep.mubr.f32.mxu0 0.0
    %870 = vmatmul.mubr.f32.gmra.mxu0 %v112
    %v871 = vpop.f32.mrf.mxu0
    %v872 = vadd.f32 %v656, %v871
    %v873 = vpop.f32.mrf.mxu0
    %874 = vdwg.mxu0
    %875 = vmatprep.subr.mxu0 0.0
    %876 = vmatpush1.msra.mxu0 %v241
    %877 = vmatprep.subr.mxu0 0.0
    %878 = vmatpush1.msra.mxu0 %v240
    %879 = vmatprep.subr.mxu0 0.0
    %880 = vmatpush1.msra.mxu0 %v239
    %881 = vmatprep.subr.mxu0 0.0
    %882 = vmatpush1.msra.mxu0 %v238
    %883 = vmatprep.subr.mxu0 0.0
    %884 = vmatpush1.msra.mxu0 %v237
    %885 = vmatprep.subr.mxu0 0.0
    %886 = vmatpush1.msra.mxu0 %v236
    %887 = vmatprep.subr.mxu0 0.0
    %888 = vmatpush1.msra.mxu0 %v235
    %889 = vmatprep.subr.mxu0 0.0
    %890 = vmatpush1.msra.mxu0 %v234
    %891 = vmatprep.subr.mxu0 0.0
    %892 = vmatpush1.msra.mxu0 %v233
    %893 = vmatprep.subr.mxu0 0.0
    %894 = vmatpush1.msra.mxu0 %v232
    %895 = vmatprep.subr.mxu0 0.0
    %896 = vmatpush1.msra.mxu0 %v231
    %897 = vmatprep.subr.mxu0 0.0
    %898 = vmatpush1.msra.mxu0 %v230
    %899 = vmatprep.subr.mxu0 0.0
    %900 = vmatpush1.msra.mxu0 %v229
    %901 = vmatprep.subr.mxu0 0.0
    %902 = vmatpush1.msra.mxu0 %v228
    %903 = vmatprep.subr.mxu0 0.0
    %904 = vmatpush1.msra.mxu0 %v227
    %905 = vmatprep.subr.mxu0 0.0
    %906 = vmatpush1.msra.mxu0 %v226
    %907 = vmatprep.subr.mxu0 0.0
    %908 = vmatpush2.msra.mxu0 0.0
    %909 = vmatprep.subr.mxu0 0.0
    %910 = vmatpush2.msra.mxu0 0.0
    %911 = vmatprep.subr.mxu0 0.0
    %912 = vmatpush2.msra.mxu0 0.0
    %913 = vmatprep.subr.mxu0 0.0
    %914 = vmatpush2.msra.mxu0 0.0
    %915 = vmatprep.subr.mxu0 0.0
    %916 = vmatpush2.msra.mxu0 0.0
    %917 = vmatprep.subr.mxu0 0.0
    %918 = vmatpush2.msra.mxu0 0.0
    %919 = vmatprep.subr.mxu0 0.0
    %920 = vmatpush2.msra.mxu0 0.0
    %921 = vmatprep.subr.mxu0 0.0
    %922 = vmatpush2.msra.mxu0 0.0
    %923 = vmatprep.subr.mxu0 0.0
    %924 = vmatpush2.msra.mxu0 0.0
    %925 = vmatprep.subr.mxu0 0.0
    %926 = vmatpush2.msra.mxu0 0.0
    %927 = vmatprep.subr.mxu0 0.0
    %928 = vmatpush2.msra.mxu0 0.0
    %929 = vmatprep.subr.mxu0 0.0
    %930 = vmatpush2.msra.mxu0 0.0
    %931 = vmatprep.subr.mxu0 0.0
    %932 = vmatpush2.msra.mxu0 0.0
    %933 = vmatprep.subr.mxu0 0.0
    %934 = vmatpush2.msra.mxu0 0.0
    %935 = vmatprep.subr.mxu0 0.0
    %936 = vmatpush2.msra.mxu0 0.0
    %937 = vmatprep.subr.mxu0 0.0
    %938 = vmatpush2.msra.mxu0 0.0
    %939 = vmatprep.mubr.f32.mxu0 0.0
    %940 = vmatmul.mubr.f32.gmra.mxu0 %v112
    %v941 = vpop.f32.mrf.mxu0
    %v942 = vadd.f32 %v660, %v941
    %v943 = vpop.f32.mrf.mxu0
    %944 = vdwg.mxu0
    %v949 = vlaneseq
    %v950 = vshrl.u32 %v949, 7
    %v951 = vsub.s32 0, %v950
    %v952 = vrot.slane %v317, %v951
    %v953 = vlaneseq
    %v954 = vshrl.u32 %v953, 7
    %v955 = vsub.s32 0, %v954
    %v956 = vrot.slane %v318, %v955
    %v957 = vlaneseq
    %v958 = vshrl.u32 %v957, 7
    %v959 = vsub.s32 0, %v958
    %v960 = vrot.slane %v319, %v959
    %v961 = vlaneseq
    %v962 = vshrl.u32 %v961, 7
    %v963 = vsub.s32 0, %v962
    %v964 = vrot.slane %v320, %v963
    %969 = vmatprep.subr.mxu0 0.0
    %970 = vmatpush1.msra.mxu0 %v258
    %971 = vmatprep.subr.mxu0 0.0
    %972 = vmatpush1.msra.mxu0 %v257
    %973 = vmatprep.subr.mxu0 0.0
    %974 = vmatpush1.msra.mxu0 %v256
    %975 = vmatprep.subr.mxu0 0.0
    %976 = vmatpush1.msra.mxu0 %v255
    %977 = vmatprep.subr.mxu0 0.0
    %978 = vmatpush1.msra.mxu0 %v254
    %979 = vmatprep.subr.mxu0 0.0
    %980 = vmatpush1.msra.mxu0 %v253
    %981 = vmatprep.subr.mxu0 0.0
    %982 = vmatpush1.msra.mxu0 %v252
    %983 = vmatprep.subr.mxu0 0.0
    %984 = vmatpush1.msra.mxu0 %v251
    %985 = vmatprep.subr.mxu0 0.0
    %986 = vmatpush1.msra.mxu0 %v250
    %987 = vmatprep.subr.mxu0 0.0
    %988 = vmatpush1.msra.mxu0 %v249
    %989 = vmatprep.subr.mxu0 0.0
    %990 = vmatpush1.msra.mxu0 %v248
    %991 = vmatprep.subr.mxu0 0.0
    %992 = vmatpush1.msra.mxu0 %v247
    %993 = vmatprep.subr.mxu0 0.0
    %994 = vmatpush1.msra.mxu0 %v246
    %995 = vmatprep.subr.mxu0 0.0
    %996 = vmatpush1.msra.mxu0 %v245
    %997 = vmatprep.subr.mxu0 0.0
    %998 = vmatpush1.msra.mxu0 %v244
    %999 = vmatprep.subr.mxu0 0.0
    %1000 = vmatpush1.msra.mxu0 %v243
    %1001 = vmatprep.subr.mxu0 0.0
    %1002 = vmatpush2.msra.mxu0 0.0
    %1003 = vmatprep.subr.mxu0 0.0
    %1004 = vmatpush2.msra.mxu0 0.0
    %1005 = vmatprep.subr.mxu0 0.0
    %1006 = vmatpush2.msra.mxu0 0.0
    %1007 = vmatprep.subr.mxu0 0.0
    %1008 = vmatpush2.msra.mxu0 0.0
    %1009 = vmatprep.subr.mxu0 0.0
    %1010 = vmatpush2.msra.mxu0 0.0
    %1011 = vmatprep.subr.mxu0 0.0
    %1012 = vmatpush2.msra.mxu0 0.0
    %1013 = vmatprep.subr.mxu0 0.0
    %1014 = vmatpush2.msra.mxu0 0.0
    %1015 = vmatprep.subr.mxu0 0.0
    %1016 = vmatpush2.msra.mxu0 0.0
    %1017 = vmatprep.subr.mxu0 0.0
    %1018 = vmatpush2.msra.mxu0 0.0
    %1019 = vmatprep.subr.mxu0 0.0
    %1020 = vmatpush2.msra.mxu0 0.0
    %1021 = vmatprep.subr.mxu0 0.0
    %1022 = vmatpush2.msra.mxu0 0.0
    %1023 = vmatprep.subr.mxu0 0.0
    %1024 = vmatpush2.msra.mxu0 0.0
    %1025 = vmatprep.subr.mxu0 0.0
    %1026 = vmatpush2.msra.mxu0 0.0
    %1027 = vmatprep.subr.mxu0 0.0
    %1028 = vmatpush2.msra.mxu0 0.0
    %1029 = vmatprep.subr.mxu0 0.0
    %1030 = vmatpush2.msra.mxu0 0.0
    %1031 = vmatprep.subr.mxu0 0.0
    %1032 = vmatpush2.msra.mxu0 0.0
    %1033 = vmatprep.mubr.f32.mxu0 0.0
    %1034 = vmatmul.mubr.f32.gmra.mxu0 %v108
    %v1035 = vpop.f32.mrf.mxu0
    %v1036 = vadd.f32 %v952, %v1035
    %v1037 = vpop.f32.mrf.mxu0
    %1038 = vdwg.mxu0
    %1039 = vmatprep.subr.mxu0 0.0
    %1040 = vmatpush1.msra.mxu0 %v274
    %1041 = vmatprep.subr.mxu0 0.0
    %1042 = vmatpush1.msra.mxu0 %v273
    %1043 = vmatprep.subr.mxu0 0.0
    %1044 = vmatpush1.msra.mxu0 %v272
    %1045 = vmatprep.subr.mxu0 0.0
    %1046 = vmatpush1.msra.mxu0 %v271
    %1047 = vmatprep.subr.mxu0 0.0
    %1048 = vmatpush1.msra.mxu0 %v270
    %1049 = vmatprep.subr.mxu0 0.0
    %1050 = vmatpush1.msra.mxu0 %v269
    %1051 = vmatprep.subr.mxu0 0.0
    %1052 = vmatpush1.msra.mxu0 %v268
    %1053 = vmatprep.subr.mxu0 0.0
    %1054 = vmatpush1.msra.mxu0 %v267
    %1055 = vmatprep.subr.mxu0 0.0
    %1056 = vmatpush1.msra.mxu0 %v266
    %1057 = vmatprep.subr.mxu0 0.0
    %1058 = vmatpush1.msra.mxu0 %v265
    %1059 = vmatprep.subr.mxu0 0.0
    %1060 = vmatpush1.msra.mxu0 %v264
    %1061 = vmatprep.subr.mxu0 0.0
    %1062 = vmatpush1.msra.mxu0 %v263
    %1063 = vmatprep.subr.mxu0 0.0
    %1064 = vmatpush1.msra.mxu0 %v262
    %1065 = vmatprep.subr.mxu0 0.0
    %1066 = vmatpush1.msra.mxu0 %v261
    %1067 = vmatprep.subr.mxu0 0.0
    %1068 = vmatpush1.msra.mxu0 %v260
    %1069 = vmatprep.subr.mxu0 0.0
    %1070 = vmatpush1.msra.mxu0 %v259
    %1071 = vmatprep.subr.mxu0 0.0
    %1072 = vmatpush2.msra.mxu0 0.0
    %1073 = vmatprep.subr.mxu0 0.0
    %1074 = vmatpush2.msra.mxu0 0.0
    %1075 = vmatprep.subr.mxu0 0.0
    %1076 = vmatpush2.msra.mxu0 0.0
    %1077 = vmatprep.subr.mxu0 0.0
    %1078 = vmatpush2.msra.mxu0 0.0
    %1079 = vmatprep.subr.mxu0 0.0
    %1080 = vmatpush2.msra.mxu0 0.0
    %1081 = vmatprep.subr.mxu0 0.0
    %1082 = vmatpush2.msra.mxu0 0.0
    %1083 = vmatprep.subr.mxu0 0.0
    %1084 = vmatpush2.msra.mxu0 0.0
    %1085 = vmatprep.subr.mxu0 0.0
    %1086 = vmatpush2.msra.mxu0 0.0
    %1087 = vmatprep.subr.mxu0 0.0
    %1088 = vmatpush2.msra.mxu0 0.0
    %1089 = vmatprep.subr.mxu0 0.0
    %1090 = vmatpush2.msra.mxu0 0.0
    %1091 = vmatprep.subr.mxu0 0.0
    %1092 = vmatpush2.msra.mxu0 0.0
    %1093 = vmatprep.subr.mxu0 0.0
    %1094 = vmatpush2.msra.mxu0 0.0
    %1095 = vmatprep.subr.mxu0 0.0
    %1096 = vmatpush2.msra.mxu0 0.0
    %1097 = vmatprep.subr.mxu0 0.0
    %1098 = vmatpush2.msra.mxu0 0.0
    %1099 = vmatprep.subr.mxu0 0.0
    %1100 = vmatpush2.msra.mxu0 0.0
    %1101 = vmatprep.subr.mxu0 0.0
    %1102 = vmatpush2.msra.mxu0 0.0
    %1103 = vmatprep.mubr.f32.mxu0 0.0
    %1104 = vmatmul.mubr.f32.gmra.mxu0 %v108
    %v1105 = vpop.f32.mrf.mxu0
    %v1106 = vadd.f32 %v956, %v1105
    %v1107 = vpop.f32.mrf.mxu0
    %1108 = vdwg.mxu0
    %1109 = vmatprep.subr.mxu0 0.0
    %1110 = vmatpush1.msra.mxu0 %v290
    %1111 = vmatprep.subr.mxu0 0.0
    %1112 = vmatpush1.msra.mxu0 %v289
    %1113 = vmatprep.subr.mxu0 0.0
    %1114 = vmatpush1.msra.mxu0 %v288
    %1115 = vmatprep.subr.mxu0 0.0
    %1116 = vmatpush1.msra.mxu0 %v287
    %1117 = vmatprep.subr.mxu0 0.0
    %1118 = vmatpush1.msra.mxu0 %v286
    %1119 = vmatprep.subr.mxu0 0.0
    %1120 = vmatpush1.msra.mxu0 %v285
    %1121 = vmatprep.subr.mxu0 0.0
    %1122 = vmatpush1.msra.mxu0 %v284
    %1123 = vmatprep.subr.mxu0 0.0
    %1124 = vmatpush1.msra.mxu0 %v283
    %1125 = vmatprep.subr.mxu0 0.0
    %1126 = vmatpush1.msra.mxu0 %v282
    %1127 = vmatprep.subr.mxu0 0.0
    %1128 = vmatpush1.msra.mxu0 %v281
    %1129 = vmatprep.subr.mxu0 0.0
    %1130 = vmatpush1.msra.mxu0 %v280
    %1131 = vmatprep.subr.mxu0 0.0
    %1132 = vmatpush1.msra.mxu0 %v279
    %1133 = vmatprep.subr.mxu0 0.0
    %1134 = vmatpush1.msra.mxu0 %v278
    %1135 = vmatprep.subr.mxu0 0.0
    %1136 = vmatpush1.msra.mxu0 %v277
    %1137 = vmatprep.subr.mxu0 0.0
    %1138 = vmatpush1.msra.mxu0 %v276
    %1139 = vmatprep.subr.mxu0 0.0
    %1140 = vmatpush1.msra.mxu0 %v275
    %1141 = vmatprep.subr.mxu0 0.0
    %1142 = vmatpush2.msra.mxu0 0.0
    %1143 = vmatprep.subr.mxu0 0.0
    %1144 = vmatpush2.msra.mxu0 0.0
    %1145 = vmatprep.subr.mxu0 0.0
    %1146 = vmatpush2.msra.mxu0 0.0
    %1147 = vmatprep.subr.mxu0 0.0
    %1148 = vmatpush2.msra.mxu0 0.0
    %1149 = vmatprep.subr.mxu0 0.0
    %1150 = vmatpush2.msra.mxu0 0.0
    %1151 = vmatprep.subr.mxu0 0.0
    %1152 = vmatpush2.msra.mxu0 0.0
    %1153 = vmatprep.subr.mxu0 0.0
    %1154 = vmatpush2.msra.mxu0 0.0
    %1155 = vmatprep.subr.mxu0 0.0
    %1156 = vmatpush2.msra.mxu0 0.0
    %1157 = vmatprep.subr.mxu0 0.0
    %1158 = vmatpush2.msra.mxu0 0.0
    %1159 = vmatprep.subr.mxu0 0.0
    %1160 = vmatpush2.msra.mxu0 0.0
    %1161 = vmatprep.subr.mxu0 0.0
    %1162 = vmatpush2.msra.mxu0 0.0
    %1163 = vmatprep.subr.mxu0 0.0
    %1164 = vmatpush2.msra.mxu0 0.0
    %1165 = vmatprep.subr.mxu0 0.0
    %1166 = vmatpush2.msra.mxu0 0.0
    %1167 = vmatprep.subr.mxu0 0.0
    %1168 = vmatpush2.msra.mxu0 0.0
    %1169 = vmatprep.subr.mxu0 0.0
    %1170 = vmatpush2.msra.mxu0 0.0
    %1171 = vmatprep.subr.mxu0 0.0
    %1172 = vmatpush2.msra.mxu0 0.0
    %1173 = vmatprep.mubr.f32.mxu0 0.0
    %1174 = vmatmul.mubr.f32.gmra.mxu0 %v108
    %v1175 = vpop.f32.mrf.mxu0
    %v1176 = vadd.f32 %v960, %v1175
    %v1177 = vpop.f32.mrf.mxu0
    %1178 = vdwg.mxu0
    %1179 = vmatprep.subr.mxu0 0.0
    %1180 = vmatpush1.msra.mxu0 %v306
    %1181 = vmatprep.subr.mxu0 0.0
    %1182 = vmatpush1.msra.mxu0 %v305
    %1183 = vmatprep.subr.mxu0 0.0
    %1184 = vmatpush1.msra.mxu0 %v304
    %1185 = vmatprep.subr.mxu0 0.0
    %1186 = vmatpush1.msra.mxu0 %v303
    %1187 = vmatprep.subr.mxu0 0.0
    %1188 = vmatpush1.msra.mxu0 %v302
    %1189 = vmatprep.subr.mxu0 0.0
    %1190 = vmatpush1.msra.mxu0 %v301
    %1191 = vmatprep.subr.mxu0 0.0
    %1192 = vmatpush1.msra.mxu0 %v300
    %1193 = vmatprep.subr.mxu0 0.0
    %1194 = vmatpush1.msra.mxu0 %v299
    %1195 = vmatprep.subr.mxu0 0.0
    %1196 = vmatpush1.msra.mxu0 %v298
    %1197 = vmatprep.subr.mxu0 0.0
    %1198 = vmatpush1.msra.mxu0 %v297
    %1199 = vmatprep.subr.mxu0 0.0
    %1200 = vmatpush1.msra.mxu0 %v296
    %1201 = vmatprep.subr.mxu0 0.0
    %1202 = vmatpush1.msra.mxu0 %v295
    %1203 = vmatprep.subr.mxu0 0.0
    %1204 = vmatpush1.msra.mxu0 %v294
    %1205 = vmatprep.subr.mxu0 0.0
    %1206 = vmatpush1.msra.mxu0 %v293
    %1207 = vmatprep.subr.mxu0 0.0
    %1208 = vmatpush1.msra.mxu0 %v292
    %1209 = vmatprep.subr.mxu0 0.0
    %1210 = vmatpush1.msra.mxu0 %v291
    %1211 = vmatprep.subr.mxu0 0.0
    %1212 = vmatpush2.msra.mxu0 0.0
    %1213 = vmatprep.subr.mxu0 0.0
    %1214 = vmatpush2.msra.mxu0 0.0
    %1215 = vmatprep.subr.mxu0 0.0
    %1216 = vmatpush2.msra.mxu0 0.0
    %1217 = vmatprep.subr.mxu0 0.0
    %1218 = vmatpush2.msra.mxu0 0.0
    %1219 = vmatprep.subr.mxu0 0.0
    %1220 = vmatpush2.msra.mxu0 0.0
    %1221 = vmatprep.subr.mxu0 0.0
    %1222 = vmatpush2.msra.mxu0 0.0
    %1223 = vmatprep.subr.mxu0 0.0
    %1224 = vmatpush2.msra.mxu0 0.0
    %1225 = vmatprep.subr.mxu0 0.0
    %1226 = vmatpush2.msra.mxu0 0.0
    %1227 = vmatprep.subr.mxu0 0.0
    %1228 = vmatpush2.msra.mxu0 0.0
    %1229 = vmatprep.subr.mxu0 0.0
    %1230 = vmatpush2.msra.mxu0 0.0
    %1231 = vmatprep.subr.mxu0 0.0
    %1232 = vmatpush2.msra.mxu0 0.0
    %1233 = vmatprep.subr.mxu0 0.0
    %1234 = vmatpush2.msra.mxu0 0.0
    %1235 = vmatprep.subr.mxu0 0.0
    %1236 = vmatpush2.msra.mxu0 0.0
    %1237 = vmatprep.subr.mxu0 0.0
    %1238 = vmatpush2.msra.mxu0 0.0
    %1239 = vmatprep.subr.mxu0 0.0
    %1240 = vmatpush2.msra.mxu0 0.0
    %1241 = vmatprep.subr.mxu0 0.0
    %1242 = vmatpush2.msra.mxu0 0.0
    %1243 = vmatprep.mubr.f32.mxu0 0.0
    %1244 = vmatmul.mubr.f32.gmra.mxu0 %v108
    %v1245 = vpop.f32.mrf.mxu0
    %v1246 = vadd.f32 %v964, %v1245
    %v1247 = vpop.f32.mrf.mxu0
    %1248 = vdwg.mxu0
    %vm1249 = vcmask 261120
    %v1251 = vsel %vm1249, %v428, 0
    %v1254 = vsel %vm1249, %v732, 0
    %1256 = vmatprep.subr.mxu0 0.0
    %1257 = vmatpush1.xpose.msra.mxu0 0.0
    %1258 = vmatprep.subr.mxu0 0.0
    %1259 = vmatpush1.xpose.msra.mxu0 0.0
    %1260 = vmatprep.subr.mxu0 0.0
    %1261 = vmatpush1.xpose.msra.mxu0 0.0
    %1262 = vmatprep.subr.mxu0 0.0
    %1263 = vmatpush1.xpose.msra.mxu0 0.0
    %1264 = vmatprep.subr.mxu0 0.0
    %1265 = vmatpush1.xpose.msra.mxu0 0.0
    %1266 = vmatprep.subr.mxu0 0.0
    %1267 = vmatpush1.xpose.msra.mxu0 0.0
    %1268 = vmatprep.subr.mxu0 0.0
    %1269 = vmatpush1.xpose.msra.mxu0 0.0
    %1270 = vmatprep.subr.mxu0 0.0
    %1271 = vmatpush1.xpose.msra.mxu0 0.0
    %1272 = vmatprep.subr.mxu0 0.0
    %1273 = vmatpush1.xpose.msra.mxu0 0.0
    %1274 = vmatprep.subr.mxu0 0.0
    %1275 = vmatpush1.xpose.msra.mxu0 0.0
    %1276 = vmatprep.subr.mxu0 0.0
    %1277 = vmatpush1.xpose.msra.mxu0 0.0
    %1278 = vmatprep.subr.mxu0 0.0
    %1279 = vmatpush1.xpose.msra.mxu0 0.0
    %1280 = vmatprep.subr.mxu0 0.0
    %1281 = vmatpush1.xpose.msra.mxu0 0.0
    %1282 = vmatprep.subr.mxu0 0.0
    %1283 = vmatpush1.xpose.msra.mxu0 0.0
    %1284 = vmatprep.subr.mxu0 0.0
    %1285 = vmatpush1.xpose.msra.mxu0 0.0
    %1286 = vmatprep.subr.mxu0 0.0
    %1287 = vmatpush1.xpose.msra.mxu0 %v1254
    %1288 = vmatprep.subr.mxu0 0.0
    %1289 = vmatpush2.xpose.msra.mxu0 0.0
    %1290 = vmatprep.subr.mxu0 0.0
    %1291 = vmatpush2.xpose.msra.mxu0 0.0
    %1292 = vmatprep.subr.mxu0 0.0
    %1293 = vmatpush2.xpose.msra.mxu0 0.0
    %1294 = vmatprep.subr.mxu0 0.0
    %1295 = vmatpush2.xpose.msra.mxu0 0.0
    %1296 = vmatprep.subr.mxu0 0.0
    %1297 = vmatpush2.xpose.msra.mxu0 0.0
    %1298 = vmatprep.subr.mxu0 0.0
    %1299 = vmatpush2.xpose.msra.mxu0 0.0
    %1300 = vmatprep.subr.mxu0 0.0
    %1301 = vmatpush2.xpose.msra.mxu0 0.0
    %1302 = vmatprep.subr.mxu0 0.0
    %1303 = vmatpush2.xpose.msra.mxu0 0.0
    %1304 = vmatprep.subr.mxu0 0.0
    %1305 = vmatpush2.xpose.msra.mxu0 0.0
    %1306 = vmatprep.subr.mxu0 0.0
    %1307 = vmatpush2.xpose.msra.mxu0 0.0
    %1308 = vmatprep.subr.mxu0 0.0
    %1309 = vmatpush2.xpose.msra.mxu0 0.0
    %1310 = vmatprep.subr.mxu0 0.0
    %1311 = vmatpush2.xpose.msra.mxu0 0.0
    %1312 = vmatprep.subr.mxu0 0.0
    %1313 = vmatpush2.xpose.msra.mxu0 0.0
    %1314 = vmatprep.subr.mxu0 0.0
    %1315 = vmatpush2.xpose.msra.mxu0 0.0
    %1316 = vmatprep.subr.mxu0 0.0
    %1317 = vmatpush2.xpose.msra.mxu0 0.0
    %1318 = vmatprep.subr.mxu0 0.0
    %1319 = vmatpush2.xpose.msra.mxu0 0.0
    %1320 = vmatprep.mubr.f32.mxu0 0.0
    %1321 = vmatmul.mubr.f32.gmra.mxu0 %v1251
    %v1322 = vpop.f32.mrf.mxu0
    %v1323 = vadd.f32 0.0, %v1322
    %v1324 = vpop.f32.mrf.mxu0
    %1325 = vdwg.mxu0
    %v1327 = vsel %vm1249, %v498, 0
    %v1330 = vsel %vm1249, %v802, 0
    %1332 = vmatprep.subr.mxu0 0.0
    %1333 = vmatpush1.xpose.msra.mxu0 0.0
    %1334 = vmatprep.subr.mxu0 0.0
    %1335 = vmatpush1.xpose.msra.mxu0 0.0
    %1336 = vmatprep.subr.mxu0 0.0
    %1337 = vmatpush1.xpose.msra.mxu0 0.0
    %1338 = vmatprep.subr.mxu0 0.0
    %1339 = vmatpush1.xpose.msra.mxu0 0.0
    %1340 = vmatprep.subr.mxu0 0.0
    %1341 = vmatpush1.xpose.msra.mxu0 0.0
    %1342 = vmatprep.subr.mxu0 0.0
    %1343 = vmatpush1.xpose.msra.mxu0 0.0
    %1344 = vmatprep.subr.mxu0 0.0
    %1345 = vmatpush1.xpose.msra.mxu0 0.0
    %1346 = vmatprep.subr.mxu0 0.0
    %1347 = vmatpush1.xpose.msra.mxu0 0.0
    %1348 = vmatprep.subr.mxu0 0.0
    %1349 = vmatpush1.xpose.msra.mxu0 0.0
    %1350 = vmatprep.subr.mxu0 0.0
    %1351 = vmatpush1.xpose.msra.mxu0 0.0
    %1352 = vmatprep.subr.mxu0 0.0
    %1353 = vmatpush1.xpose.msra.mxu0 0.0
    %1354 = vmatprep.subr.mxu0 0.0
    %1355 = vmatpush1.xpose.msra.mxu0 0.0
    %1356 = vmatprep.subr.mxu0 0.0
    %1357 = vmatpush1.xpose.msra.mxu0 0.0
    %1358 = vmatprep.subr.mxu0 0.0
    %1359 = vmatpush1.xpose.msra.mxu0 0.0
    %1360 = vmatprep.subr.mxu0 0.0
    %1361 = vmatpush1.xpose.msra.mxu0 0.0
    %1362 = vmatprep.subr.mxu0 0.0
    %1363 = vmatpush1.xpose.msra.mxu0 %v1330
    %1364 = vmatprep.subr.mxu0 0.0
    %1365 = vmatpush2.xpose.msra.mxu0 0.0
    %1366 = vmatprep.subr.mxu0 0.0
    %1367 = vmatpush2.xpose.msra.mxu0 0.0
    %1368 = vmatprep.subr.mxu0 0.0
    %1369 = vmatpush2.xpose.msra.mxu0 0.0
    %1370 = vmatprep.subr.mxu0 0.0
    %1371 = vmatpush2.xpose.msra.mxu0 0.0
    %1372 = vmatprep.subr.mxu0 0.0
    %1373 = vmatpush2.xpose.msra.mxu0 0.0
    %1374 = vmatprep.subr.mxu0 0.0
    %1375 = vmatpush2.xpose.msra.mxu0 0.0
    %1376 = vmatprep.subr.mxu0 0.0
    %1377 = vmatpush2.xpose.msra.mxu0 0.0
    %1378 = vmatprep.subr.mxu0 0.0
    %1379 = vmatpush2.xpose.msra.mxu0 0.0
    %1380 = vmatprep.subr.mxu0 0.0
    %1381 = vmatpush2.xpose.msra.mxu0 0.0
    %1382 = vmatprep.subr.mxu0 0.0
    %1383 = vmatpush2.xpose.msra.mxu0 0.0
    %1384 = vmatprep.subr.mxu0 0.0
    %1385 = vmatpush2.xpose.msra.mxu0 0.0
    %1386 = vmatprep.subr.mxu0 0.0
    %1387 = vmatpush2.xpose.msra.mxu0 0.0
    %1388 = vmatprep.subr.mxu0 0.0
    %1389 = vmatpush2.xpose.msra.mxu0 0.0
    %1390 = vmatprep.subr.mxu0 0.0
    %1391 = vmatpush2.xpose.msra.mxu0 0.0
    %1392 = vmatprep.subr.mxu0 0.0
    %1393 = vmatpush2.xpose.msra.mxu0 0.0
    %1394 = vmatprep.subr.mxu0 0.0
    %1395 = vmatpush2.xpose.msra.mxu0 0.0
    %1396 = vmatprep.mubr.f32.mxu0 0.0
    %1397 = vmatmul.mubr.f32.gmra.mxu0 %v1327
    %v1398 = vpop.f32.mrf.mxu0
    %v1399 = vadd.f32 0.0, %v1398
    %v1400 = vpop.f32.mrf.mxu0
    %1401 = vdwg.mxu0
    %v1403 = vsel %vm1249, %v568, 0
    %v1406 = vsel %vm1249, %v872, 0
    %1408 = vmatprep.subr.mxu0 0.0
    %1409 = vmatpush1.xpose.msra.mxu0 0.0
    %1410 = vmatprep.subr.mxu0 0.0
    %1411 = vmatpush1.xpose.msra.mxu0 0.0
    %1412 = vmatprep.subr.mxu0 0.0
    %1413 = vmatpush1.xpose.msra.mxu0 0.0
    %1414 = vmatprep.subr.mxu0 0.0
    %1415 = vmatpush1.xpose.msra.mxu0 0.0
    %1416 = vmatprep.subr.mxu0 0.0
    %1417 = vmatpush1.xpose.msra.mxu0 0.0
    %1418 = vmatprep.subr.mxu0 0.0
    %1419 = vmatpush1.xpose.msra.mxu0 0.0
    %1420 = vmatprep.subr.mxu0 0.0
    %1421 = vmatpush1.xpose.msra.mxu0 0.0
    %1422 = vmatprep.subr.mxu0 0.0
    %1423 = vmatpush1.xpose.msra.mxu0 0.0
    %1424 = vmatprep.subr.mxu0 0.0
    %1425 = vmatpush1.xpose.msra.mxu0 0.0
    %1426 = vmatprep.subr.mxu0 0.0
    %1427 = vmatpush1.xpose.msra.mxu0 0.0
    %1428 = vmatprep.subr.mxu0 0.0
    %1429 = vmatpush1.xpose.msra.mxu0 0.0
    %1430 = vmatprep.subr.mxu0 0.0
    %1431 = vmatpush1.xpose.msra.mxu0 0.0
    %1432 = vmatprep.subr.mxu0 0.0
    %1433 = vmatpush1.xpose.msra.mxu0 0.0
    %1434 = vmatprep.subr.mxu0 0.0
    %1435 = vmatpush1.xpose.msra.mxu0 0.0
    %1436 = vmatprep.subr.mxu0 0.0
    %1437 = vmatpush1.xpose.msra.mxu0 0.0
    %1438 = vmatprep.subr.mxu0 0.0
    %1439 = vmatpush1.xpose.msra.mxu0 %v1406
    %1440 = vmatprep.subr.mxu0 0.0
    %1441 = vmatpush2.xpose.msra.mxu0 0.0
    %1442 = vmatprep.subr.mxu0 0.0
    %1443 = vmatpush2.xpose.msra.mxu0 0.0
    %1444 = vmatprep.subr.mxu0 0.0
    %1445 = vmatpush2.xpose.msra.mxu0 0.0
    %1446 = vmatprep.subr.mxu0 0.0
    %1447 = vmatpush2.xpose.msra.mxu0 0.0
    %1448 = vmatprep.subr.mxu0 0.0
    %1449 = vmatpush2.xpose.msra.mxu0 0.0
    %1450 = vmatprep.subr.mxu0 0.0
    %1451 = vmatpush2.xpose.msra.mxu0 0.0
    %1452 = vmatprep.subr.mxu0 0.0
    %1453 = vmatpush2.xpose.msra.mxu0 0.0
    %1454 = vmatprep.subr.mxu0 0.0
    %1455 = vmatpush2.xpose.msra.mxu0 0.0
    %1456 = vmatprep.subr.mxu0 0.0
    %1457 = vmatpush2.xpose.msra.mxu0 0.0
    %1458 = vmatprep.subr.mxu0 0.0
    %1459 = vmatpush2.xpose.msra.mxu0 0.0
    %1460 = vmatprep.subr.mxu0 0.0
    %1461 = vmatpush2.xpose.msra.mxu0 0.0
    %1462 = vmatprep.subr.mxu0 0.0
    %1463 = vmatpush2.xpose.msra.mxu0 0.0
    %1464 = vmatprep.subr.mxu0 0.0
    %1465 = vmatpush2.xpose.msra.mxu0 0.0
    %1466 = vmatprep.subr.mxu0 0.0
    %1467 = vmatpush2.xpose.msra.mxu0 0.0
    %1468 = vmatprep.subr.mxu0 0.0
    %1469 = vmatpush2.xpose.msra.mxu0 0.0
    %1470 = vmatprep.subr.mxu0 0.0
    %1471 = vmatpush2.xpose.msra.mxu0 0.0
    %1472 = vmatprep.mubr.f32.mxu0 0.0
    %1473 = vmatmul.mubr.f32.gmra.mxu0 %v1403
    %v1474 = vpop.f32.mrf.mxu0
    %v1475 = vadd.f32 0.0, %v1474
    %v1476 = vpop.f32.mrf.mxu0
    %1477 = vdwg.mxu0
    %v1479 = vsel %vm1249, %v638, 0
    %v1482 = vsel %vm1249, %v942, 0
    %1484 = vmatprep.subr.mxu0 0.0
    %1485 = vmatpush1.xpose.msra.mxu0 0.0
    %1486 = vmatprep.subr.mxu0 0.0
    %1487 = vmatpush1.xpose.msra.mxu0 0.0
    %1488 = vmatprep.subr.mxu0 0.0
    %1489 = vmatpush1.xpose.msra.mxu0 0.0
    %1490 = vmatprep.subr.mxu0 0.0
    %1491 = vmatpush1.xpose.msra.mxu0 0.0
    %1492 = vmatprep.subr.mxu0 0.0
    %1493 = vmatpush1.xpose.msra.mxu0 0.0
    %1494 = vmatprep.subr.mxu0 0.0
    %1495 = vmatpush1.xpose.msra.mxu0 0.0
    %1496 = vmatprep.subr.mxu0 0.0
    %1497 = vmatpush1.xpose.msra.mxu0 0.0
    %1498 = vmatprep.subr.mxu0 0.0
    %1499 = vmatpush1.xpose.msra.mxu0 0.0
    %1500 = vmatprep.subr.mxu0 0.0
    %1501 = vmatpush1.xpose.msra.mxu0 0.0
    %1502 = vmatprep.subr.mxu0 0.0
    %1503 = vmatpush1.xpose.msra.mxu0 0.0
    %1504 = vmatprep.subr.mxu0 0.0
    %1505 = vmatpush1.xpose.msra.mxu0 0.0
    %1506 = vmatprep.subr.mxu0 0.0
    %1507 = vmatpush1.xpose.msra.mxu0 0.0
    %1508 = vmatprep.subr.mxu0 0.0
    %1509 = vmatpush1.xpose.msra.mxu0 0.0
    %1510 = vmatprep.subr.mxu0 0.0
    %1511 = vmatpush1.xpose.msra.mxu0 0.0
    %1512 = vmatprep.subr.mxu0 0.0
    %1513 = vmatpush1.xpose.msra.mxu0 0.0
    %1514 = vmatprep.subr.mxu0 0.0
    %1515 = vmatpush1.xpose.msra.mxu0 %v1482
    %1516 = vmatprep.subr.mxu0 0.0
    %1517 = vmatpush2.xpose.msra.mxu0 0.0
    %1518 = vmatprep.subr.mxu0 0.0
    %1519 = vmatpush2.xpose.msra.mxu0 0.0
    %1520 = vmatprep.subr.mxu0 0.0
    %1521 = vmatpush2.xpose.msra.mxu0 0.0
    %1522 = vmatprep.subr.mxu0 0.0
    %1523 = vmatpush2.xpose.msra.mxu0 0.0
    %1524 = vmatprep.subr.mxu0 0.0
    %1525 = vmatpush2.xpose.msra.mxu0 0.0
    %1526 = vmatprep.subr.mxu0 0.0
    %1527 = vmatpush2.xpose.msra.mxu0 0.0
    %1528 = vmatprep.subr.mxu0 0.0
    %1529 = vmatpush2.xpose.msra.mxu0 0.0
    %1530 = vmatprep.subr.mxu0 0.0
    %1531 = vmatpush2.xpose.msra.mxu0 0.0
    %1532 = vmatprep.subr.mxu0 0.0
    %1533 = vmatpush2.xpose.msra.mxu0 0.0
    %1534 = vmatprep.subr.mxu0 0.0
    %1535 = vmatpush2.xpose.msra.mxu0 0.0
    %1536 = vmatprep.subr.mxu0 0.0
    %1537 = vmatpush2.xpose.msra.mxu0 0.0
    %1538 = vmatprep.subr.mxu0 0.0
    %1539 = vmatpush2.xpose.msra.mxu0 0.0
    %1540 = vmatprep.subr.mxu0 0.0
    %1541 = vmatpush2.xpose.msra.mxu0 0.0
    %1542 = vmatprep.subr.mxu0 0.0
    %1543 = vmatpush2.xpose.msra.mxu0 0.0
    %1544 = vmatprep.subr.mxu0 0.0
    %1545 = vmatpush2.xpose.msra.mxu0 0.0
    %1546 = vmatprep.subr.mxu0 0.0
    %1547 = vmatpush2.xpose.msra.mxu0 0.0
    %1548 = vmatprep.mubr.f32.mxu0 0.0
    %1549 = vmatmul.mubr.f32.gmra.mxu0 %v1479
    %v1550 = vpop.f32.mrf.mxu0
    %v1551 = vadd.f32 0.0, %v1550
    %v1552 = vpop.f32.mrf.mxu0
    %1553 = vdwg.mxu0
    %v1554 = vmul.f32 %v1323, 0.17677669
    %v1555 = vmul.f32 %v1399, 0.17677669
    %v1556 = vmul.f32 %v1475, 0.17677669
    %v1557 = vmul.f32 %v1551, 0.17677669
    %vm1558 = vcmask 64512
    %v1559 = vsel %vm1558, %v1554, -inf
    %1560 = vmax.xlane.f32.xlu0 %v1559
    %v1561 = vpop.xlane.xlu0 %1560
    %v1562 = vsel %vm1558, %v1555, -inf
    %1563 = vmax.xlane.f32.xlu0 %v1562
    %v1564 = vpop.xlane.xlu0 %1563
    %v1565 = vsel %vm1558, %v1556, -inf
    %1566 = vmax.xlane.f32.xlu0 %v1565
    %v1567 = vpop.xlane.xlu0 %1566
    %v1568 = vsel %vm1558, %v1557, -inf
    %1569 = vmax.xlane.f32.xlu0 %v1568
    %v1570 = vpop.xlane.xlu0 %1569
    %v1571 = vsub.f32 %v1554, %v1561
    %v1572 = vsub.f32 %v1555, %v1564
    %v1573 = vsub.f32 %v1556, %v1567
    %v1574 = vsub.f32 %v1557, %v1570
    %v1575 = vmul.f32 %v1571, 1.442695
    %v1576 = vpow.pop %v1575
    %v1577 = vmul.f32 %v1572, 1.442695
    %v1578 = vpow.pop %v1577
    %v1579 = vmul.f32 %v1573, 1.442695
    %v1580 = vpow.pop %v1579
    %v1581 = vmul.f32 %v1574, 1.442695
    %v1582 = vpow.pop %v1581
    %v1583 = vsel %vm1558, %v1576, 0.0
    %1584 = vadd.xlane.f32.xlu0 %v1583
    %v1585 = vpop.xlane.xlu0 %1584
    %v1586 = vsel %vm1558, %v1578, 0.0
    %1587 = vadd.xlane.f32.xlu0 %v1586
    %v1588 = vpop.xlane.xlu0 %1587
    %v1589 = vsel %vm1558, %v1580, 0.0
    %1590 = vadd.xlane.f32.xlu0 %v1589
    %v1591 = vpop.xlane.xlu0 %1590
    %v1592 = vsel %vm1558, %v1582, 0.0
    %1593 = vadd.xlane.f32.xlu0 %v1592
    %v1594 = vpop.xlane.xlu0 %1593
    %v1595 = vrcp.pop %v1585
    %v1596 = vrcp.pop %v1588
    %v1597 = vrcp.pop %v1591
    %v1598 = vrcp.pop %v1594
    %v1599 = vmul.f32 %v1576, %v1595
    %v1600 = vmul.f32 %v1578, %v1596
    %v1601 = vmul.f32 %v1580, %v1597
    %v1602 = vmul.f32 %v1582, %v1598
    %v1604 = vsel %vm1558, %v1599, 0
    %1606 = vmatprep.subr.mxu0 0.0
    %1607 = vmatpush1.msra.mxu0 0.0
    %1608 = vmatprep.subr.mxu0 0.0
    %1609 = vmatpush1.msra.mxu0 0.0
    %1610 = vmatprep.subr.mxu0 0.0
    %1611 = vmatpush1.msra.mxu0 0.0
    %1612 = vmatprep.subr.mxu0 0.0
    %1613 = vmatpush1.msra.mxu0 0.0
    %1614 = vmatprep.subr.mxu0 0.0
    %1615 = vmatpush1.msra.mxu0 0.0
    %1616 = vmatprep.subr.mxu0 0.0
    %1617 = vmatpush1.msra.mxu0 0.0
    %1618 = vmatprep.subr.mxu0 0.0
    %1619 = vmatpush1.msra.mxu0 0.0
    %1620 = vmatprep.subr.mxu0 0.0
    %1621 = vmatpush1.msra.mxu0 0.0
    %1622 = vmatprep.subr.mxu0 0.0
    %1623 = vmatpush1.msra.mxu0 0.0
    %1624 = vmatprep.subr.mxu0 0.0
    %1625 = vmatpush1.msra.mxu0 0.0
    %1626 = vmatprep.subr.mxu0 0.0
    %1627 = vmatpush1.msra.mxu0 0.0
    %1628 = vmatprep.subr.mxu0 0.0
    %1629 = vmatpush1.msra.mxu0 0.0
    %1630 = vmatprep.subr.mxu0 0.0
    %1631 = vmatpush1.msra.mxu0 0.0
    %1632 = vmatprep.subr.mxu0 0.0
    %1633 = vmatpush1.msra.mxu0 0.0
    %1634 = vmatprep.subr.mxu0 0.0
    %1635 = vmatpush1.msra.mxu0 0.0
    %1636 = vmatprep.subr.mxu0 0.0
    %1637 = vmatpush1.msra.mxu0 %v1036
    %1638 = vmatprep.subr.mxu0 0.0
    %1639 = vmatpush2.msra.mxu0 0.0
    %1640 = vmatprep.subr.mxu0 0.0
    %1641 = vmatpush2.msra.mxu0 0.0
    %1642 = vmatprep.subr.mxu0 0.0
    %1643 = vmatpush2.msra.mxu0 0.0
    %1644 = vmatprep.subr.mxu0 0.0
    %1645 = vmatpush2.msra.mxu0 0.0
    %1646 = vmatprep.subr.mxu0 0.0
    %1647 = vmatpush2.msra.mxu0 0.0
    %1648 = vmatprep.subr.mxu0 0.0
    %1649 = vmatpush2.msra.mxu0 0.0
    %1650 = vmatprep.subr.mxu0 0.0
    %1651 = vmatpush2.msra.mxu0 0.0
    %1652 = vmatprep.subr.mxu0 0.0
    %1653 = vmatpush2.msra.mxu0 0.0
    %1654 = vmatprep.subr.mxu0 0.0
    %1655 = vmatpush2.msra.mxu0 0.0
    %1656 = vmatprep.subr.mxu0 0.0
    %1657 = vmatpush2.msra.mxu0 0.0
    %1658 = vmatprep.subr.mxu0 0.0
    %1659 = vmatpush2.msra.mxu0 0.0
    %1660 = vmatprep.subr.mxu0 0.0
    %1661 = vmatpush2.msra.mxu0 0.0
    %1662 = vmatprep.subr.mxu0 0.0
    %1663 = vmatpush2.msra.mxu0 0.0
    %1664 = vmatprep.subr.mxu0 0.0
    %1665 = vmatpush2.msra.mxu0 0.0
    %1666 = vmatprep.subr.mxu0 0.0
    %1667 = vmatpush2.msra.mxu0 0.0
    %1668 = vmatprep.subr.mxu0 0.0
    %1669 = vmatpush2.msra.mxu0 0.0
    %1670 = vmatprep.mubr.f32.mxu0 0.0
    %1671 = vmatmul.mubr.f32.gmra.mxu0 %v1604
    %v1672 = vpop.f32.mrf.mxu0
    %v1673 = vadd.f32 0.0, %v1672
    %v1674 = vpop.f32.mrf.mxu0
    %1675 = vdwg.mxu0
    %v1677 = vsel %vm1558, %v1600, 0
    %1679 = vmatprep.subr.mxu0 0.0
    %1680 = vmatpush1.msra.mxu0 0.0
    %1681 = vmatprep.subr.mxu0 0.0
    %1682 = vmatpush1.msra.mxu0 0.0
    %1683 = vmatprep.subr.mxu0 0.0
    %1684 = vmatpush1.msra.mxu0 0.0
    %1685 = vmatprep.subr.mxu0 0.0
    %1686 = vmatpush1.msra.mxu0 0.0
    %1687 = vmatprep.subr.mxu0 0.0
    %1688 = vmatpush1.msra.mxu0 0.0
    %1689 = vmatprep.subr.mxu0 0.0
    %1690 = vmatpush1.msra.mxu0 0.0
    %1691 = vmatprep.subr.mxu0 0.0
    %1692 = vmatpush1.msra.mxu0 0.0
    %1693 = vmatprep.subr.mxu0 0.0
    %1694 = vmatpush1.msra.mxu0 0.0
    %1695 = vmatprep.subr.mxu0 0.0
    %1696 = vmatpush1.msra.mxu0 0.0
    %1697 = vmatprep.subr.mxu0 0.0
    %1698 = vmatpush1.msra.mxu0 0.0
    %1699 = vmatprep.subr.mxu0 0.0
    %1700 = vmatpush1.msra.mxu0 0.0
    %1701 = vmatprep.subr.mxu0 0.0
    %1702 = vmatpush1.msra.mxu0 0.0
    %1703 = vmatprep.subr.mxu0 0.0
    %1704 = vmatpush1.msra.mxu0 0.0
    %1705 = vmatprep.subr.mxu0 0.0
    %1706 = vmatpush1.msra.mxu0 0.0
    %1707 = vmatprep.subr.mxu0 0.0
    %1708 = vmatpush1.msra.mxu0 0.0
    %1709 = vmatprep.subr.mxu0 0.0
    %1710 = vmatpush1.msra.mxu0 %v1106
    %1711 = vmatprep.subr.mxu0 0.0
    %1712 = vmatpush2.msra.mxu0 0.0
    %1713 = vmatprep.subr.mxu0 0.0
    %1714 = vmatpush2.msra.mxu0 0.0
    %1715 = vmatprep.subr.mxu0 0.0
    %1716 = vmatpush2.msra.mxu0 0.0
    %1717 = vmatprep.subr.mxu0 0.0
    %1718 = vmatpush2.msra.mxu0 0.0
    %1719 = vmatprep.subr.mxu0 0.0
    %1720 = vmatpush2.msra.mxu0 0.0
    %1721 = vmatprep.subr.mxu0 0.0
    %1722 = vmatpush2.msra.mxu0 0.0
    %1723 = vmatprep.subr.mxu0 0.0
    %1724 = vmatpush2.msra.mxu0 0.0
    %1725 = vmatprep.subr.mxu0 0.0
    %1726 = vmatpush2.msra.mxu0 0.0
    %1727 = vmatprep.subr.mxu0 0.0
    %1728 = vmatpush2.msra.mxu0 0.0
    %1729 = vmatprep.subr.mxu0 0.0
    %1730 = vmatpush2.msra.mxu0 0.0
    %1731 = vmatprep.subr.mxu0 0.0
    %1732 = vmatpush2.msra.mxu0 0.0
    %1733 = vmatprep.subr.mxu0 0.0
    %1734 = vmatpush2.msra.mxu0 0.0
    %1735 = vmatprep.subr.mxu0 0.0
    %1736 = vmatpush2.msra.mxu0 0.0
    %1737 = vmatprep.subr.mxu0 0.0
    %1738 = vmatpush2.msra.mxu0 0.0
    %1739 = vmatprep.subr.mxu0 0.0
    %1740 = vmatpush2.msra.mxu0 0.0
    %1741 = vmatprep.subr.mxu0 0.0
    %1742 = vmatpush2.msra.mxu0 0.0
    %1743 = vmatprep.mubr.f32.mxu0 0.0
    %1744 = vmatmul.mubr.f32.gmra.mxu0 %v1677
    %v1745 = vpop.f32.mrf.mxu0
    %v1746 = vadd.f32 0.0, %v1745
    %v1747 = vpop.f32.mrf.mxu0
    %1748 = vdwg.mxu0
    %v1750 = vsel %vm1558, %v1601, 0
    %1752 = vmatprep.subr.mxu0 0.0
    %1753 = vmatpush1.msra.mxu0 0.0
    %1754 = vmatprep.subr.mxu0 0.0
    %1755 = vmatpush1.msra.mxu0 0.0
    %1756 = vmatprep.subr.mxu0 0.0
    %1757 = vmatpush1.msra.mxu0 0.0
    %1758 = vmatprep.subr.mxu0 0.0
    %1759 = vmatpush1.msra.mxu0 0.0
    %1760 = vmatprep.subr.mxu0 0.0
    %1761 = vmatpush1.msra.mxu0 0.0
    %1762 = vmatprep.subr.mxu0 0.0
    %1763 = vmatpush1.msra.mxu0 0.0
    %1764 = vmatprep.subr.mxu0 0.0
    %1765 = vmatpush1.msra.mxu0 0.0
    %1766 = vmatprep.subr.mxu0 0.0
    %1767 = vmatpush1.msra.mxu0 0.0
    %1768 = vmatprep.subr.mxu0 0.0
    %1769 = vmatpush1.msra.mxu0 0.0
    %1770 = vmatprep.subr.mxu0 0.0
    %1771 = vmatpush1.msra.mxu0 0.0
    %1772 = vmatprep.subr.mxu0 0.0
    %1773 = vmatpush1.msra.mxu0 0.0
    %1774 = vmatprep.subr.mxu0 0.0
    %1775 = vmatpush1.msra.mxu0 0.0
    %1776 = vmatprep.subr.mxu0 0.0
    %1777 = vmatpush1.msra.mxu0 0.0
    %1778 = vmatprep.subr.mxu0 0.0
    %1779 = vmatpush1.msra.mxu0 0.0
    %1780 = vmatprep.subr.mxu0 0.0
    %1781 = vmatpush1.msra.mxu0 0.0
    %1782 = vmatprep.subr.mxu0 0.0
    %1783 = vmatpush1.msra.mxu0 %v1176
    %1784 = vmatprep.subr.mxu0 0.0
    %1785 = vmatpush2.msra.mxu0 0.0
    %1786 = vmatprep.subr.mxu0 0.0
    %1787 = vmatpush2.msra.mxu0 0.0
    %1788 = vmatprep.subr.mxu0 0.0
    %1789 = vmatpush2.msra.mxu0 0.0
    %1790 = vmatprep.subr.mxu0 0.0
    %1791 = vmatpush2.msra.mxu0 0.0
    %1792 = vmatprep.subr.mxu0 0.0
    %1793 = vmatpush2.msra.mxu0 0.0
    %1794 = vmatprep.subr.mxu0 0.0
    %1795 = vmatpush2.msra.mxu0 0.0
    %1796 = vmatprep.subr.mxu0 0.0
    %1797 = vmatpush2.msra.mxu0 0.0
    %1798 = vmatprep.subr.mxu0 0.0
    %1799 = vmatpush2.msra.mxu0 0.0
    %1800 = vmatprep.subr.mxu0 0.0
    %1801 = vmatpush2.msra.mxu0 0.0
    %1802 = vmatprep.subr.mxu0 0.0
    %1803 = vmatpush2.msra.mxu0 0.0
    %1804 = vmatprep.subr.mxu0 0.0
    %1805 = vmatpush2.msra.mxu0 0.0
    %1806 = vmatprep.subr.mxu0 0.0
    %1807 = vmatpush2.msra.mxu0 0.0
    %1808 = vmatprep.subr.mxu0 0.0
    %1809 = vmatpush2.msra.mxu0 0.0
    %1810 = vmatprep.subr.mxu0 0.0
    %1811 = vmatpush2.msra.mxu0 0.0
    %1812 = vmatprep.subr.mxu0 0.0
    %1813 = vmatpush2.msra.mxu0 0.0
    %1814 = vmatprep.subr.mxu0 0.0
    %1815 = vmatpush2.msra.mxu0 0.0
    %1816 = vmatprep.mubr.f32.mxu0 0.0
    %1817 = vmatmul.mubr.f32.gmra.mxu0 %v1750
    %v1818 = vpop.f32.mrf.mxu0
    %v1819 = vadd.f32 0.0, %v1818
    %v1820 = vpop.f32.mrf.mxu0
    %1821 = vdwg.mxu0
    %v1823 = vsel %vm1558, %v1602, 0
    %1825 = vmatprep.subr.mxu0 0.0
    %1826 = vmatpush1.msra.mxu0 0.0
    %1827 = vmatprep.subr.mxu0 0.0
    %1828 = vmatpush1.msra.mxu0 0.0
    %1829 = vmatprep.subr.mxu0 0.0
    %1830 = vmatpush1.msra.mxu0 0.0
    %1831 = vmatprep.subr.mxu0 0.0
    %1832 = vmatpush1.msra.mxu0 0.0
    %1833 = vmatprep.subr.mxu0 0.0
    %1834 = vmatpush1.msra.mxu0 0.0
    %1835 = vmatprep.subr.mxu0 0.0
    %1836 = vmatpush1.msra.mxu0 0.0
    %1837 = vmatprep.subr.mxu0 0.0
    %1838 = vmatpush1.msra.mxu0 0.0
    %1839 = vmatprep.subr.mxu0 0.0
    %1840 = vmatpush1.msra.mxu0 0.0
    %1841 = vmatprep.subr.mxu0 0.0
    %1842 = vmatpush1.msra.mxu0 0.0
    %1843 = vmatprep.subr.mxu0 0.0
    %1844 = vmatpush1.msra.mxu0 0.0
    %1845 = vmatprep.subr.mxu0 0.0
    %1846 = vmatpush1.msra.mxu0 0.0
    %1847 = vmatprep.subr.mxu0 0.0
    %1848 = vmatpush1.msra.mxu0 0.0
    %1849 = vmatprep.subr.mxu0 0.0
    %1850 = vmatpush1.msra.mxu0 0.0
    %1851 = vmatprep.subr.mxu0 0.0
    %1852 = vmatpush1.msra.mxu0 0.0
    %1853 = vmatprep.subr.mxu0 0.0
    %1854 = vmatpush1.msra.mxu0 0.0
    %1855 = vmatprep.subr.mxu0 0.0
    %1856 = vmatpush1.msra.mxu0 %v1246
    %1857 = vmatprep.subr.mxu0 0.0
    %1858 = vmatpush2.msra.mxu0 0.0
    %1859 = vmatprep.subr.mxu0 0.0
    %1860 = vmatpush2.msra.mxu0 0.0
    %1861 = vmatprep.subr.mxu0 0.0
    %1862 = vmatpush2.msra.mxu0 0.0
    %1863 = vmatprep.subr.mxu0 0.0
    %1864 = vmatpush2.msra.mxu0 0.0
    %1865 = vmatprep.subr.mxu0 0.0
    %1866 = vmatpush2.msra.mxu0 0.0
    %1867 = vmatprep.subr.mxu0 0.0
    %1868 = vmatpush2.msra.mxu0 0.0
    %1869 = vmatprep.subr.mxu0 0.0
    %1870 = vmatpush2.msra.mxu0 0.0
    %1871 = vmatprep.subr.mxu0 0.0
    %1872 = vmatpush2.msra.mxu0 0.0
    %1873 = vmatprep.subr.mxu0 0.0
    %1874 = vmatpush2.msra.mxu0 0.0
    %1875 = vmatprep.subr.mxu0 0.0
    %1876 = vmatpush2.msra.mxu0 0.0
    %1877 = vmatprep.subr.mxu0 0.0
    %1878 = vmatpush2.msra.mxu0 0.0
    %1879 = vmatprep.subr.mxu0 0.0
    %1880 = vmatpush2.msra.mxu0 0.0
    %1881 = vmatprep.subr.mxu0 0.0
    %1882 = vmatpush2.msra.mxu0 0.0
    %1883 = vmatprep.subr.mxu0 0.0
    %1884 = vmatpush2.msra.mxu0 0.0
    %1885 = vmatprep.subr.mxu0 0.0
    %1886 = vmatpush2.msra.mxu0 0.0
    %1887 = vmatprep.subr.mxu0 0.0
    %1888 = vmatpush2.msra.mxu0 0.0
    %1889 = vmatprep.mubr.f32.mxu0 0.0
    %1890 = vmatmul.mubr.f32.gmra.mxu0 %v1823
    %v1891 = vpop.f32.mrf.mxu0
    %v1892 = vadd.f32 0.0, %v1891
    %v1893 = vpop.f32.mrf.mxu0
    %1894 = vdwg.mxu0
    %v1896 = vsel %vm1249, %v1673, 0
    %1898 = vmatprep.subr.mxu0 0.0
    %1899 = vmatpush1.msra.mxu0 0.0
    %1900 = vmatprep.subr.mxu0 0.0
    %1901 = vmatpush1.msra.mxu0 0.0
    %1902 = vmatprep.subr.mxu0 0.0
    %1903 = vmatpush1.msra.mxu0 0.0
    %1904 = vmatprep.subr.mxu0 0.0
    %1905 = vmatpush1.msra.mxu0 0.0
    %1906 = vmatprep.subr.mxu0 0.0
    %1907 = vmatpush1.msra.mxu0 0.0
    %1908 = vmatprep.subr.mxu0 0.0
    %1909 = vmatpush1.msra.mxu0 0.0
    %1910 = vmatprep.subr.mxu0 0.0
    %1911 = vmatpush1.msra.mxu0 0.0
    %1912 = vmatprep.subr.mxu0 0.0
    %1913 = vmatpush1.msra.mxu0 0.0
    %1914 = vmatprep.subr.mxu0 0.0
    %1915 = vmatpush1.msra.mxu0 0.0
    %1916 = vmatprep.subr.mxu0 0.0
    %1917 = vmatpush1.msra.mxu0 0.0
    %1918 = vmatprep.subr.mxu0 0.0
    %1919 = vmatpush1.msra.mxu0 0.0
    %1920 = vmatprep.subr.mxu0 0.0
    %1921 = vmatpush1.msra.mxu0 0.0
    %1922 = vmatprep.subr.mxu0 0.0
    %1923 = vmatpush1.msra.mxu0 %v324
    %1924 = vmatprep.subr.mxu0 0.0
    %1925 = vmatpush1.msra.mxu0 %v323
    %1926 = vmatprep.subr.mxu0 0.0
    %1927 = vmatpush1.msra.mxu0 %v322
    %1928 = vmatprep.subr.mxu0 0.0
    %1929 = vmatpush1.msra.mxu0 %v321
    %1930 = vmatprep.subr.mxu0 0.0
    %1931 = vmatpush2.msra.mxu0 0.0
    %1932 = vmatprep.subr.mxu0 0.0
    %1933 = vmatpush2.msra.mxu0 0.0
    %1934 = vmatprep.subr.mxu0 0.0
    %1935 = vmatpush2.msra.mxu0 0.0
    %1936 = vmatprep.subr.mxu0 0.0
    %1937 = vmatpush2.msra.mxu0 0.0
    %1938 = vmatprep.subr.mxu0 0.0
    %1939 = vmatpush2.msra.mxu0 0.0
    %1940 = vmatprep.subr.mxu0 0.0
    %1941 = vmatpush2.msra.mxu0 0.0
    %1942 = vmatprep.subr.mxu0 0.0
    %1943 = vmatpush2.msra.mxu0 0.0
    %1944 = vmatprep.subr.mxu0 0.0
    %1945 = vmatpush2.msra.mxu0 0.0
    %1946 = vmatprep.subr.mxu0 0.0
    %1947 = vmatpush2.msra.mxu0 0.0
    %1948 = vmatprep.subr.mxu0 0.0
    %1949 = vmatpush2.msra.mxu0 0.0
    %1950 = vmatprep.subr.mxu0 0.0
    %1951 = vmatpush2.msra.mxu0 0.0
    %1952 = vmatprep.subr.mxu0 0.0
    %1953 = vmatpush2.msra.mxu0 0.0
    %1954 = vmatprep.subr.mxu0 0.0
    %1955 = vmatpush2.msra.mxu0 0.0
    %1956 = vmatprep.subr.mxu0 0.0
    %1957 = vmatpush2.msra.mxu0 0.0
    %1958 = vmatprep.subr.mxu0 0.0
    %1959 = vmatpush2.msra.mxu0 0.0
    %1960 = vmatprep.subr.mxu0 0.0
    %1961 = vmatpush2.msra.mxu0 0.0
    %1962 = vmatprep.mubr.f32.mxu0 0.0
    %1963 = vmatmul.mubr.f32.gmra.mxu0 %v1896
    %v1964 = vpop.f32.mrf.mxu0
    %v1965 = vadd.f32 0.0, %v1964
    %v1966 = vpop.f32.mrf.mxu0
    %1967 = vdwg.mxu0
    %v1969 = vsel %vm1249, %v1746, 0
    %1971 = vmatprep.subr.mxu0 0.0
    %1972 = vmatpush1.msra.mxu0 0.0
    %1973 = vmatprep.subr.mxu0 0.0
    %1974 = vmatpush1.msra.mxu0 0.0
    %1975 = vmatprep.subr.mxu0 0.0
    %1976 = vmatpush1.msra.mxu0 0.0
    %1977 = vmatprep.subr.mxu0 0.0
    %1978 = vmatpush1.msra.mxu0 0.0
    %1979 = vmatprep.subr.mxu0 0.0
    %1980 = vmatpush1.msra.mxu0 0.0
    %1981 = vmatprep.subr.mxu0 0.0
    %1982 = vmatpush1.msra.mxu0 0.0
    %1983 = vmatprep.subr.mxu0 0.0
    %1984 = vmatpush1.msra.mxu0 0.0
    %1985 = vmatprep.subr.mxu0 0.0
    %1986 = vmatpush1.msra.mxu0 0.0
    %1987 = vmatprep.subr.mxu0 0.0
    %1988 = vmatpush1.msra.mxu0 0.0
    %1989 = vmatprep.subr.mxu0 0.0
    %1990 = vmatpush1.msra.mxu0 0.0
    %1991 = vmatprep.subr.mxu0 0.0
    %1992 = vmatpush1.msra.mxu0 0.0
    %1993 = vmatprep.subr.mxu0 0.0
    %1994 = vmatpush1.msra.mxu0 0.0
    %1995 = vmatprep.subr.mxu0 0.0
    %1996 = vmatpush1.msra.mxu0 %v328
    %1997 = vmatprep.subr.mxu0 0.0
    %1998 = vmatpush1.msra.mxu0 %v327
    %1999 = vmatprep.subr.mxu0 0.0
    %2000 = vmatpush1.msra.mxu0 %v326
    %2001 = vmatprep.subr.mxu0 0.0
    %2002 = vmatpush1.msra.mxu0 %v325
    %2003 = vmatprep.subr.mxu0 0.0
    %2004 = vmatpush2.msra.mxu0 0.0
    %2005 = vmatprep.subr.mxu0 0.0
    %2006 = vmatpush2.msra.mxu0 0.0
    %2007 = vmatprep.subr.mxu0 0.0
    %2008 = vmatpush2.msra.mxu0 0.0
    %2009 = vmatprep.subr.mxu0 0.0
    %2010 = vmatpush2.msra.mxu0 0.0
    %2011 = vmatprep.subr.mxu0 0.0
    %2012 = vmatpush2.msra.mxu0 0.0
    %2013 = vmatprep.subr.mxu0 0.0
    %2014 = vmatpush2.msra.mxu0 0.0
    %2015 = vmatprep.subr.mxu0 0.0
    %2016 = vmatpush2.msra.mxu0 0.0
    %2017 = vmatprep.subr.mxu0 0.0
    %2018 = vmatpush2.msra.mxu0 0.0
    %2019 = vmatprep.subr.mxu0 0.0
    %2020 = vmatpush2.msra.mxu0 0.0
    %2021 = vmatprep.subr.mxu0 0.0
    %2022 = vmatpush2.msra.mxu0 0.0
    %2023 = vmatprep.subr.mxu0 0.0
    %2024 = vmatpush2.msra.mxu0 0.0
    %2025 = vmatprep.subr.mxu0 0.0
    %2026 = vmatpush2.msra.mxu0 0.0
    %2027 = vmatprep.subr.mxu0 0.0
    %2028 = vmatpush2.msra.mxu0 0.0
    %2029 = vmatprep.subr.mxu0 0.0
    %2030 = vmatpush2.msra.mxu0 0.0
    %2031 = vmatprep.subr.mxu0 0.0
    %2032 = vmatpush2.msra.mxu0 0.0
    %2033 = vmatprep.subr.mxu0 0.0
    %2034 = vmatpush2.msra.mxu0 0.0
    %2035 = vmatprep.mubr.f32.mxu0 0.0
    %2036 = vmatmul.mubr.f32.gmra.mxu0 %v1969
    %v2037 = vpop.f32.mrf.mxu0
    %v2038 = vadd.f32 0.0, %v2037
    %v2039 = vpop.f32.mrf.mxu0
    %2040 = vdwg.mxu0
    %v2042 = vsel %vm1249, %v1819, 0
    %2044 = vmatprep.subr.mxu0 0.0
    %2045 = vmatpush1.msra.mxu0 0.0
    %2046 = vmatprep.subr.mxu0 0.0
    %2047 = vmatpush1.msra.mxu0 0.0
    %2048 = vmatprep.subr.mxu0 0.0
    %2049 = vmatpush1.msra.mxu0 0.0
    %2050 = vmatprep.subr.mxu0 0.0
    %2051 = vmatpush1.msra.mxu0 0.0
    %2052 = vmatprep.subr.mxu0 0.0
    %2053 = vmatpush1.msra.mxu0 0.0
    %2054 = vmatprep.subr.mxu0 0.0
    %2055 = vmatpush1.msra.mxu0 0.0
    %2056 = vmatprep.subr.mxu0 0.0
    %2057 = vmatpush1.msra.mxu0 0.0
    %2058 = vmatprep.subr.mxu0 0.0
    %2059 = vmatpush1.msra.mxu0 0.0
    %2060 = vmatprep.subr.mxu0 0.0
    %2061 = vmatpush1.msra.mxu0 0.0
    %2062 = vmatprep.subr.mxu0 0.0
    %2063 = vmatpush1.msra.mxu0 0.0
    %2064 = vmatprep.subr.mxu0 0.0
    %2065 = vmatpush1.msra.mxu0 0.0
    %2066 = vmatprep.subr.mxu0 0.0
    %2067 = vmatpush1.msra.mxu0 0.0
    %2068 = vmatprep.subr.mxu0 0.0
    %2069 = vmatpush1.msra.mxu0 %v332
    %2070 = vmatprep.subr.mxu0 0.0
    %2071 = vmatpush1.msra.mxu0 %v331
    %2072 = vmatprep.subr.mxu0 0.0
    %2073 = vmatpush1.msra.mxu0 %v330
    %2074 = vmatprep.subr.mxu0 0.0
    %2075 = vmatpush1.msra.mxu0 %v329
    %2076 = vmatprep.subr.mxu0 0.0
    %2077 = vmatpush2.msra.mxu0 0.0
    %2078 = vmatprep.subr.mxu0 0.0
    %2079 = vmatpush2.msra.mxu0 0.0
    %2080 = vmatprep.subr.mxu0 0.0
    %2081 = vmatpush2.msra.mxu0 0.0
    %2082 = vmatprep.subr.mxu0 0.0
    %2083 = vmatpush2.msra.mxu0 0.0
    %2084 = vmatprep.subr.mxu0 0.0
    %2085 = vmatpush2.msra.mxu0 0.0
    %2086 = vmatprep.subr.mxu0 0.0
    %2087 = vmatpush2.msra.mxu0 0.0
    %2088 = vmatprep.subr.mxu0 0.0
    %2089 = vmatpush2.msra.mxu0 0.0
    %2090 = vmatprep.subr.mxu0 0.0
    %2091 = vmatpush2.msra.mxu0 0.0
    %2092 = vmatprep.subr.mxu0 0.0
    %2093 = vmatpush2.msra.mxu0 0.0
    %2094 = vmatprep.subr.mxu0 0.0
    %2095 = vmatpush2.msra.mxu0 0.0
    %2096 = vmatprep.subr.mxu0 0.0
    %2097 = vmatpush2.msra.mxu0 0.0
    %2098 = vmatprep.subr.mxu0 0.0
    %2099 = vmatpush2.msra.mxu0 0.0
    %2100 = vmatprep.subr.mxu0 0.0
    %2101 = vmatpush2.msra.mxu0 0.0
    %2102 = vmatprep.subr.mxu0 0.0
    %2103 = vmatpush2.msra.mxu0 0.0
    %2104 = vmatprep.subr.mxu0 0.0
    %2105 = vmatpush2.msra.mxu0 0.0
    %2106 = vmatprep.subr.mxu0 0.0
    %2107 = vmatpush2.msra.mxu0 0.0
    %2108 = vmatprep.mubr.f32.mxu0 0.0
    %2109 = vmatmul.mubr.f32.gmra.mxu0 %v2042
    %v2110 = vpop.f32.mrf.mxu0
    %v2111 = vadd.f32 0.0, %v2110
    %v2112 = vpop.f32.mrf.mxu0
    %2113 = vdwg.mxu0
    %v2115 = vsel %vm1249, %v1892, 0
    %2117 = vmatprep.subr.mxu0 0.0
    %2118 = vmatpush1.msra.mxu0 0.0
    %2119 = vmatprep.subr.mxu0 0.0
    %2120 = vmatpush1.msra.mxu0 0.0
    %2121 = vmatprep.subr.mxu0 0.0
    %2122 = vmatpush1.msra.mxu0 0.0
    %2123 = vmatprep.subr.mxu0 0.0
    %2124 = vmatpush1.msra.mxu0 0.0
    %2125 = vmatprep.subr.mxu0 0.0
    %2126 = vmatpush1.msra.mxu0 0.0
    %2127 = vmatprep.subr.mxu0 0.0
    %2128 = vmatpush1.msra.mxu0 0.0
    %2129 = vmatprep.subr.mxu0 0.0
    %2130 = vmatpush1.msra.mxu0 0.0
    %2131 = vmatprep.subr.mxu0 0.0
    %2132 = vmatpush1.msra.mxu0 0.0
    %2133 = vmatprep.subr.mxu0 0.0
    %2134 = vmatpush1.msra.mxu0 0.0
    %2135 = vmatprep.subr.mxu0 0.0
    %2136 = vmatpush1.msra.mxu0 0.0
    %2137 = vmatprep.subr.mxu0 0.0
    %2138 = vmatpush1.msra.mxu0 0.0
    %2139 = vmatprep.subr.mxu0 0.0
    %2140 = vmatpush1.msra.mxu0 0.0
    %2141 = vmatprep.subr.mxu0 0.0
    %2142 = vmatpush1.msra.mxu0 %v336
    %2143 = vmatprep.subr.mxu0 0.0
    %2144 = vmatpush1.msra.mxu0 %v335
    %2145 = vmatprep.subr.mxu0 0.0
    %2146 = vmatpush1.msra.mxu0 %v334
    %2147 = vmatprep.subr.mxu0 0.0
    %2148 = vmatpush1.msra.mxu0 %v333
    %2149 = vmatprep.subr.mxu0 0.0
    %2150 = vmatpush2.msra.mxu0 0.0
    %2151 = vmatprep.subr.mxu0 0.0
    %2152 = vmatpush2.msra.mxu0 0.0
    %2153 = vmatprep.subr.mxu0 0.0
    %2154 = vmatpush2.msra.mxu0 0.0
    %2155 = vmatprep.subr.mxu0 0.0
    %2156 = vmatpush2.msra.mxu0 0.0
    %2157 = vmatprep.subr.mxu0 0.0
    %2158 = vmatpush2.msra.mxu0 0.0
    %2159 = vmatprep.subr.mxu0 0.0
    %2160 = vmatpush2.msra.mxu0 0.0
    %2161 = vmatprep.subr.mxu0 0.0
    %2162 = vmatpush2.msra.mxu0 0.0
    %2163 = vmatprep.subr.mxu0 0.0
    %2164 = vmatpush2.msra.mxu0 0.0
    %2165 = vmatprep.subr.mxu0 0.0
    %2166 = vmatpush2.msra.mxu0 0.0
    %2167 = vmatprep.subr.mxu0 0.0
    %2168 = vmatpush2.msra.mxu0 0.0
    %2169 = vmatprep.subr.mxu0 0.0
    %2170 = vmatpush2.msra.mxu0 0.0
    %2171 = vmatprep.subr.mxu0 0.0
    %2172 = vmatpush2.msra.mxu0 0.0
    %2173 = vmatprep.subr.mxu0 0.0
    %2174 = vmatpush2.msra.mxu0 0.0
    %2175 = vmatprep.subr.mxu0 0.0
    %2176 = vmatpush2.msra.mxu0 0.0
    %2177 = vmatprep.subr.mxu0 0.0
    %2178 = vmatpush2.msra.mxu0 0.0
    %2179 = vmatprep.subr.mxu0 0.0
    %2180 = vmatpush2.msra.mxu0 0.0
    %2181 = vmatprep.mubr.f32.mxu0 0.0
    %2182 = vmatmul.mubr.f32.gmra.mxu0 %v2115
    %v2183 = vpop.f32.mrf.mxu0
    %v2184 = vadd.f32 0.0, %v2183
    %v2185 = vpop.f32.mrf.mxu0
    %2186 = vdwg.mxu0
    %v2187 = vadd.f32 %v1965, %v2038
    %v2188 = vadd.f32 %v2187, %v2111
    %v2189 = vadd.f32 %v2188, %v2184
    %v2190 = vlaneseq
    %v2191 = vshrl.u32 %v2190, 7
    %v2192 = vsub.s32 0, %v2191
    %v2193 = vrot.slane %v99, %v2192
    %v2194 = vadd.f32 %v2189, %v2193
    %v2195 = vadd.f32 %v108, %v2194
    %2196 = vadd.xlane.f32.xlu0 %v2195
    %v2197 = vpop.xlane.xlu0 %2196
    %v2198 = vrcp.pop 128.0
    %v2199 = vmul.f32 %v2197, %v2198
    %v2200 = vsub.f32 %v2195, %v2199
    %v2201 = vmul.f32 %v2200, %v2200
    %2202 = vadd.xlane.f32.xlu0 %v2201
    %v2203 = vpop.xlane.xlu0 %2202
    %v2204 = vmul.f32 %v2203, %v2198
    %v2205 = vadd.f32 %v2204, 1e-05
    %v2206 = vrsqrt.pop %v2205
    %v2207 = vmul.f32 %v2200, %v2206
    %v2208 = vlaneseq
    %v2209 = vshrl.u32 %v2208, 7
    %v2210 = vsub.s32 0, %v2209
    %v2211 = vrot.slane %v101, %v2210
    %v2212 = vmul.f32 %v2207, %v2211
    %v2213 = vlaneseq
    %v2214 = vshrl.u32 %v2213, 7
    %v2215 = vsub.s32 0, %v2214
    %v2216 = vrot.slane %v102, %v2215
    %v2217 = vadd.f32 %v2212, %v2216
    %v2218 = vadd.f32 %v2217, %v110
    %v2219 = vadd.f32 %v109, %v111
    %s2220 = scalar_lea.vmem %s4, 1536
    %v2221 = vld [vmem:[%s2220] sm:$0xff]
    %v2222 = vld [vmem:[%s2220 + $0x8] sm:$0xff]
    %v2223 = vld [vmem:[%s2220 + $0x10] sm:$0xff]
    %v2224 = vld [vmem:[%s2220 + $0x18] sm:$0xff]
    %v2225 = vld [vmem:[%s2220 + $0x20] sm:$0xff]
    %v2226 = vld [vmem:[%s2220 + $0x28] sm:$0xff]
    %v2227 = vld [vmem:[%s2220 + $0x30] sm:$0xff]
    %v2228 = vld [vmem:[%s2220 + $0x38] sm:$0xff]
    %v2229 = vld [vmem:[%s2220 + $0x40] sm:$0xff]
    %v2230 = vld [vmem:[%s2220 + $0x48] sm:$0xff]
    %v2231 = vld [vmem:[%s2220 + $0x50] sm:$0xff]
    %v2232 = vld [vmem:[%s2220 + $0x58] sm:$0xff]
    %v2233 = vld [vmem:[%s2220 + $0x60] sm:$0xff]
    %v2234 = vld [vmem:[%s2220 + $0x68] sm:$0xff]
    %v2235 = vld [vmem:[%s2220 + $0x70] sm:$0xff]
    %v2236 = vld [vmem:[%s2220 + $0x78] sm:$0xff]
    %v2237 = vld [vmem:[%s2220 + $0x80] sm:$0xff]
    %v2238 = vld [vmem:[%s2220 + $0x88] sm:$0xff]
    %v2239 = vld [vmem:[%s2220 + $0x90] sm:$0xff]
    %v2240 = vld [vmem:[%s2220 + $0x98] sm:$0xff]
    %v2241 = vld [vmem:[%s2220 + $0xa0] sm:$0xff]
    %v2242 = vld [vmem:[%s2220 + $0xa8] sm:$0xff]
    %v2243 = vld [vmem:[%s2220 + $0xb0] sm:$0xff]
    %v2244 = vld [vmem:[%s2220 + $0xb8] sm:$0xff]
    %v2245 = vld [vmem:[%s2220 + $0xc0] sm:$0xff]
    %v2246 = vld [vmem:[%s2220 + $0xc8] sm:$0xff]
    %v2247 = vld [vmem:[%s2220 + $0xd0] sm:$0xff]
    %v2248 = vld [vmem:[%s2220 + $0xd8] sm:$0xff]
    %v2249 = vld [vmem:[%s2220 + $0xe0] sm:$0xff]
    %v2250 = vld [vmem:[%s2220 + $0xe8] sm:$0xff]
    %v2251 = vld [vmem:[%s2220 + $0xf0] sm:$0xff]
    %v2252 = vld [vmem:[%s2220 + $0xf8] sm:$0xff]
    %v2253 = vld [vmem:[%s2220 + $0x100] sm:$0xff]
    %v2254 = vld [vmem:[%s2220 + $0x108] sm:$0xff]
    %v2255 = vld [vmem:[%s2220 + $0x110] sm:$0xff]
    %v2256 = vld [vmem:[%s2220 + $0x118] sm:$0xff]
    %v2257 = vld [vmem:[%s2220 + $0x120] sm:$0xff]
    %v2258 = vld [vmem:[%s2220 + $0x128] sm:$0xff]
    %v2259 = vld [vmem:[%s2220 + $0x130] sm:$0xff]
    %v2260 = vld [vmem:[%s2220 + $0x138] sm:$0xff]
    %v2261 = vld [vmem:[%s2220 + $0x140] sm:$0xff]
    %v2262 = vld [vmem:[%s2220 + $0x148] sm:$0xff]
    %v2263 = vld [vmem:[%s2220 + $0x150] sm:$0xff]
    %v2264 = vld [vmem:[%s2220 + $0x158] sm:$0xff]
    %v2265 = vld [vmem:[%s2220 + $0x160] sm:$0xff]
    %v2266 = vld [vmem:[%s2220 + $0x168] sm:$0xff]
    %v2267 = vld [vmem:[%s2220 + $0x170] sm:$0xff]
    %v2268 = vld [vmem:[%s2220 + $0x178] sm:$0xff]
    %v2269 = vld [vmem:[%s2220 + $0x180] sm:$0xff]
    %v2270 = vld [vmem:[%s2220 + $0x188] sm:$0xff]
    %v2271 = vld [vmem:[%s2220 + $0x190] sm:$0xff]
    %v2272 = vld [vmem:[%s2220 + $0x198] sm:$0xff]
    %v2273 = vld [vmem:[%s2220 + $0x1a0] sm:$0xff]
    %v2274 = vld [vmem:[%s2220 + $0x1a8] sm:$0xff]
    %v2275 = vld [vmem:[%s2220 + $0x1b0] sm:$0xff]
    %v2276 = vld [vmem:[%s2220 + $0x1b8] sm:$0xff]
    %v2277 = vld [vmem:[%s2220 + $0x1c0] sm:$0xff]
    %v2278 = vld [vmem:[%s2220 + $0x1c8] sm:$0xff]
    %v2279 = vld [vmem:[%s2220 + $0x1d0] sm:$0xff]
    %v2280 = vld [vmem:[%s2220 + $0x1d8] sm:$0xff]
    %v2281 = vld [vmem:[%s2220 + $0x1e0] sm:$0xff]
    %v2282 = vld [vmem:[%s2220 + $0x1e8] sm:$0xff]
    %v2283 = vld [vmem:[%s2220 + $0x1f0] sm:$0xff]
    %v2284 = vld [vmem:[%s2220 + $0x1f8] sm:$0xff]
    %s2285 = scalar_lea.vmem %s4, 2048
    %v2286 = vld [vmem:[%s2285] sm:$0xff]
    %v2287 = vld [vmem:[%s2285 + $0x8] sm:$0xff]
    %v2288 = vld [vmem:[%s2285 + $0x10] sm:$0xff]
    %v2289 = vld [vmem:[%s2285 + $0x18] sm:$0xff]
    %v2290 = vld [vmem:[%s2285 + $0x20] sm:$0xff]
    %v2291 = vld [vmem:[%s2285 + $0x28] sm:$0xff]
    %v2292 = vld [vmem:[%s2285 + $0x30] sm:$0xff]
    %v2293 = vld [vmem:[%s2285 + $0x38] sm:$0xff]
    %v2294 = vld [vmem:[%s2285 + $0x40] sm:$0xff]
    %v2295 = vld [vmem:[%s2285 + $0x48] sm:$0xff]
    %v2296 = vld [vmem:[%s2285 + $0x50] sm:$0xff]
    %v2297 = vld [vmem:[%s2285 + $0x58] sm:$0xff]
    %v2298 = vld [vmem:[%s2285 + $0x60] sm:$0xff]
    %v2299 = vld [vmem:[%s2285 + $0x68] sm:$0xff]
    %v2300 = vld [vmem:[%s2285 + $0x70] sm:$0xff]
    %v2301 = vld [vmem:[%s2285 + $0x78] sm:$0xff]
    %v2302 = vld [vmem:[%s2285 + $0x80] sm:$0xff]
    %v2303 = vld [vmem:[%s2285 + $0x88] sm:$0xff]
    %v2304 = vld [vmem:[%s2285 + $0x90] sm:$0xff]
    %v2305 = vld [vmem:[%s2285 + $0x98] sm:$0xff]
    %v2306 = vld [vmem:[%s2285 + $0xa0] sm:$0xff]
    %v2307 = vld [vmem:[%s2285 + $0xa8] sm:$0xff]
    %v2308 = vld [vmem:[%s2285 + $0xb0] sm:$0xff]
    %v2309 = vld [vmem:[%s2285 + $0xb8] sm:$0xff]
    %v2310 = vld [vmem:[%s2285 + $0xc0] sm:$0xff]
    %v2311 = vld [vmem:[%s2285 + $0xc8] sm:$0xff]
    %v2312 = vld [vmem:[%s2285 + $0xd0] sm:$0xff]
    %v2313 = vld [vmem:[%s2285 + $0xd8] sm:$0xff]
    %v2314 = vld [vmem:[%s2285 + $0xe0] sm:$0xff]
    %v2315 = vld [vmem:[%s2285 + $0xe8] sm:$0xff]
    %v2316 = vld [vmem:[%s2285 + $0xf0] sm:$0xff]
    %v2317 = vld [vmem:[%s2285 + $0xf8] sm:$0xff]
    %v2318 = vld [vmem:[%s2285 + $0x100] sm:$0xff]
    %v2319 = vld [vmem:[%s2285 + $0x108] sm:$0xff]
    %v2320 = vld [vmem:[%s2285 + $0x110] sm:$0xff]
    %v2321 = vld [vmem:[%s2285 + $0x118] sm:$0xff]
    %v2322 = vld [vmem:[%s2285 + $0x120] sm:$0xff]
    %v2323 = vld [vmem:[%s2285 + $0x128] sm:$0xff]
    %v2324 = vld [vmem:[%s2285 + $0x130] sm:$0xff]
    %v2325 = vld [vmem:[%s2285 + $0x138] sm:$0xff]
    %v2326 = vld [vmem:[%s2285 + $0x140] sm:$0xff]
    %v2327 = vld [vmem:[%s2285 + $0x148] sm:$0xff]
    %v2328 = vld [vmem:[%s2285 + $0x150] sm:$0xff]
    %v2329 = vld [vmem:[%s2285 + $0x158] sm:$0xff]
    %v2330 = vld [vmem:[%s2285 + $0x160] sm:$0xff]
    %v2331 = vld [vmem:[%s2285 + $0x168] sm:$0xff]
    %v2332 = vld [vmem:[%s2285 + $0x170] sm:$0xff]
    %v2333 = vld [vmem:[%s2285 + $0x178] sm:$0xff]
    %v2334 = vld [vmem:[%s2285 + $0x180] sm:$0xff]
    %v2335 = vld [vmem:[%s2285 + $0x188] sm:$0xff]
    %v2336 = vld [vmem:[%s2285 + $0x190] sm:$0xff]
    %v2337 = vld [vmem:[%s2285 + $0x198] sm:$0xff]
    %v2338 = vld [vmem:[%s2285 + $0x1a0] sm:$0xff]
    %v2339 = vld [vmem:[%s2285 + $0x1a8] sm:$0xff]
    %v2340 = vld [vmem:[%s2285 + $0x1b0] sm:$0xff]
    %v2341 = vld [vmem:[%s2285 + $0x1b8] sm:$0xff]
    %v2342 = vld [vmem:[%s2285 + $0x1c0] sm:$0xff]
    %v2343 = vld [vmem:[%s2285 + $0x1c8] sm:$0xff]
    %v2344 = vld [vmem:[%s2285 + $0x1d0] sm:$0xff]
    %v2345 = vld [vmem:[%s2285 + $0x1d8] sm:$0xff]
    %v2346 = vld [vmem:[%s2285 + $0x1e0] sm:$0xff]
    %v2347 = vld [vmem:[%s2285 + $0x1e8] sm:$0xff]
    %v2348 = vld [vmem:[%s2285 + $0x1f0] sm:$0xff]
    %v2349 = vld [vmem:[%s2285 + $0x1f8] sm:$0xff]
    %s2350 = scalar_lea.vmem %s4, 2560
    %v2351 = vld [vmem:[%s2350] sm:$0xff]
    %v2352 = vld [vmem:[%s2350 + $0x8] sm:$0xff]
    %v2353 = vld [vmem:[%s2350 + $0x10] sm:$0xff]
    %v2354 = vld [vmem:[%s2350 + $0x18] sm:$0xff]
    %v2355 = vld [vmem:[%s2350 + $0x20] sm:$0xff]
    %v2356 = vld [vmem:[%s2350 + $0x28] sm:$0xff]
    %v2357 = vld [vmem:[%s2350 + $0x30] sm:$0xff]
    %v2358 = vld [vmem:[%s2350 + $0x38] sm:$0xff]
    %v2359 = vld [vmem:[%s2350 + $0x40] sm:$0xff]
    %v2360 = vld [vmem:[%s2350 + $0x48] sm:$0xff]
    %v2361 = vld [vmem:[%s2350 + $0x50] sm:$0xff]
    %v2362 = vld [vmem:[%s2350 + $0x58] sm:$0xff]
    %v2363 = vld [vmem:[%s2350 + $0x60] sm:$0xff]
    %v2364 = vld [vmem:[%s2350 + $0x68] sm:$0xff]
    %v2365 = vld [vmem:[%s2350 + $0x70] sm:$0xff]
    %v2366 = vld [vmem:[%s2350 + $0x78] sm:$0xff]
    %v2367 = vld [vmem:[%s2350 + $0x80] sm:$0xff]
    %v2368 = vld [vmem:[%s2350 + $0x88] sm:$0xff]
    %v2369 = vld [vmem:[%s2350 + $0x90] sm:$0xff]
    %v2370 = vld [vmem:[%s2350 + $0x98] sm:$0xff]
    %v2371 = vld [vmem:[%s2350 + $0xa0] sm:$0xff]
    %v2372 = vld [vmem:[%s2350 + $0xa8] sm:$0xff]
    %v2373 = vld [vmem:[%s2350 + $0xb0] sm:$0xff]
    %v2374 = vld [vmem:[%s2350 + $0xb8] sm:$0xff]
    %v2375 = vld [vmem:[%s2350 + $0xc0] sm:$0xff]
    %v2376 = vld [vmem:[%s2350 + $0xc8] sm:$0xff]
    %v2377 = vld [vmem:[%s2350 + $0xd0] sm:$0xff]
    %v2378 = vld [vmem:[%s2350 + $0xd8] sm:$0xff]
    %v2379 = vld [vmem:[%s2350 + $0xe0] sm:$0xff]
    %v2380 = vld [vmem:[%s2350 + $0xe8] sm:$0xff]
    %v2381 = vld [vmem:[%s2350 + $0xf0] sm:$0xff]
    %v2382 = vld [vmem:[%s2350 + $0xf8] sm:$0xff]
    %v2383 = vld [vmem:[%s2350 + $0x100] sm:$0xff]
    %v2384 = vld [vmem:[%s2350 + $0x108] sm:$0xff]
    %v2385 = vld [vmem:[%s2350 + $0x110] sm:$0xff]
    %v2386 = vld [vmem:[%s2350 + $0x118] sm:$0xff]
    %v2387 = vld [vmem:[%s2350 + $0x120] sm:$0xff]
    %v2388 = vld [vmem:[%s2350 + $0x128] sm:$0xff]
    %v2389 = vld [vmem:[%s2350 + $0x130] sm:$0xff]
    %v2390 = vld [vmem:[%s2350 + $0x138] sm:$0xff]
    %v2391 = vld [vmem:[%s2350 + $0x140] sm:$0xff]
    %v2392 = vld [vmem:[%s2350 + $0x148] sm:$0xff]
    %v2393 = vld [vmem:[%s2350 + $0x150] sm:$0xff]
    %v2394 = vld [vmem:[%s2350 + $0x158] sm:$0xff]
    %v2395 = vld [vmem:[%s2350 + $0x160] sm:$0xff]
    %v2396 = vld [vmem:[%s2350 + $0x168] sm:$0xff]
    %v2397 = vld [vmem:[%s2350 + $0x170] sm:$0xff]
    %v2398 = vld [vmem:[%s2350 + $0x178] sm:$0xff]
    %v2399 = vld [vmem:[%s2350 + $0x180] sm:$0xff]
    %v2400 = vld [vmem:[%s2350 + $0x188] sm:$0xff]
    %v2401 = vld [vmem:[%s2350 + $0x190] sm:$0xff]
    %v2402 = vld [vmem:[%s2350 + $0x198] sm:$0xff]
    %v2403 = vld [vmem:[%s2350 + $0x1a0] sm:$0xff]
    %v2404 = vld [vmem:[%s2350 + $0x1a8] sm:$0xff]
    %v2405 = vld [vmem:[%s2350 + $0x1b0] sm:$0xff]
    %v2406 = vld [vmem:[%s2350 + $0x1b8] sm:$0xff]
    %v2407 = vld [vmem:[%s2350 + $0x1c0] sm:$0xff]
    %v2408 = vld [vmem:[%s2350 + $0x1c8] sm:$0xff]
    %v2409 = vld [vmem:[%s2350 + $0x1d0] sm:$0xff]
    %v2410 = vld [vmem:[%s2350 + $0x1d8] sm:$0xff]
    %v2411 = vld [vmem:[%s2350 + $0x1e0] sm:$0xff]
    %v2412 = vld [vmem:[%s2350 + $0x1e8] sm:$0xff]
    %v2413 = vld [vmem:[%s2350 + $0x1f0] sm:$0xff]
    %v2414 = vld [vmem:[%s2350 + $0x1f8] sm:$0xff]
    %s2415 = scalar_lea.vmem %s5, 12
    %v2416 = vld [vmem:[%s2415] sm:$0x1]
    %v2417 = vld [vmem:[%s2415 + $0x1] sm:$0x1]
    %v2418 = vld [vmem:[%s2415 + $0x2] sm:$0x1]
    %v2419 = vld [vmem:[%s2415 + $0x3] sm:$0x1]
    %s2420 = scalar_lea.vmem %s5, 16
    %v2421 = vld [vmem:[%s2420] sm:$0x1]
    %v2422 = vld [vmem:[%s2420 + $0x1] sm:$0x1]
    %v2423 = vld [vmem:[%s2420 + $0x2] sm:$0x1]
    %v2424 = vld [vmem:[%s2420 + $0x3] sm:$0x1]
    %s2425 = scalar_lea.vmem %s5, 20
    %v2426 = vld [vmem:[%s2425] sm:$0x1]
    %v2427 = vld [vmem:[%s2425 + $0x1] sm:$0x1]
    %v2428 = vld [vmem:[%s2425 + $0x2] sm:$0x1]
    %v2429 = vld [vmem:[%s2425 + $0x3] sm:$0x1]
    %s2430 = scalar_lea.vmem %s6, 128
    %v2431 = vld [vmem:[%s2430] sm:$0xff]
    %v2432 = vld [vmem:[%s2430 + $0x8] sm:$0xff]
    %v2433 = vld [vmem:[%s2430 + $0x10] sm:$0xff]
    %v2434 = vld [vmem:[%s2430 + $0x18] sm:$0xff]
    %v2435 = vld [vmem:[%s2430 + $0x20] sm:$0xff]
    %v2436 = vld [vmem:[%s2430 + $0x28] sm:$0xff]
    %v2437 = vld [vmem:[%s2430 + $0x30] sm:$0xff]
    %v2438 = vld [vmem:[%s2430 + $0x38] sm:$0xff]
    %v2439 = vld [vmem:[%s2430 + $0x40] sm:$0xff]
    %v2440 = vld [vmem:[%s2430 + $0x48] sm:$0xff]
    %v2441 = vld [vmem:[%s2430 + $0x50] sm:$0xff]
    %v2442 = vld [vmem:[%s2430 + $0x58] sm:$0xff]
    %v2443 = vld [vmem:[%s2430 + $0x60] sm:$0xff]
    %v2444 = vld [vmem:[%s2430 + $0x68] sm:$0xff]
    %v2445 = vld [vmem:[%s2430 + $0x70] sm:$0xff]
    %v2446 = vld [vmem:[%s2430 + $0x78] sm:$0xff]
    %v2451 = vlaneseq
    %v2452 = vshrl.u32 %v2451, 7
    %v2453 = vsub.s32 0, %v2452
    %v2454 = vrot.slane %v2416, %v2453
    %v2455 = vlaneseq
    %v2456 = vshrl.u32 %v2455, 7
    %v2457 = vsub.s32 0, %v2456
    %v2458 = vrot.slane %v2417, %v2457
    %v2459 = vlaneseq
    %v2460 = vshrl.u32 %v2459, 7
    %v2461 = vsub.s32 0, %v2460
    %v2462 = vrot.slane %v2418, %v2461
    %v2463 = vlaneseq
    %v2464 = vshrl.u32 %v2463, 7
    %v2465 = vsub.s32 0, %v2464
    %v2466 = vrot.slane %v2419, %v2465
    %2471 = vmatprep.subr.mxu0 0.0
    %2472 = vmatpush1.msra.mxu0 %v2236
    %2473 = vmatprep.subr.mxu0 0.0
    %2474 = vmatpush1.msra.mxu0 %v2235
    %2475 = vmatprep.subr.mxu0 0.0
    %2476 = vmatpush1.msra.mxu0 %v2234
    %2477 = vmatprep.subr.mxu0 0.0
    %2478 = vmatpush1.msra.mxu0 %v2233
    %2479 = vmatprep.subr.mxu0 0.0
    %2480 = vmatpush1.msra.mxu0 %v2232
    %2481 = vmatprep.subr.mxu0 0.0
    %2482 = vmatpush1.msra.mxu0 %v2231
    %2483 = vmatprep.subr.mxu0 0.0
    %2484 = vmatpush1.msra.mxu0 %v2230
    %2485 = vmatprep.subr.mxu0 0.0
    %2486 = vmatpush1.msra.mxu0 %v2229
    %2487 = vmatprep.subr.mxu0 0.0
    %2488 = vmatpush1.msra.mxu0 %v2228
    %2489 = vmatprep.subr.mxu0 0.0
    %2490 = vmatpush1.msra.mxu0 %v2227
    %2491 = vmatprep.subr.mxu0 0.0
    %2492 = vmatpush1.msra.mxu0 %v2226
    %2493 = vmatprep.subr.mxu0 0.0
    %2494 = vmatpush1.msra.mxu0 %v2225
    %2495 = vmatprep.subr.mxu0 0.0
    %2496 = vmatpush1.msra.mxu0 %v2224
    %2497 = vmatprep.subr.mxu0 0.0
    %2498 = vmatpush1.msra.mxu0 %v2223
    %2499 = vmatprep.subr.mxu0 0.0
    %2500 = vmatpush1.msra.mxu0 %v2222
    %2501 = vmatprep.subr.mxu0 0.0
    %2502 = vmatpush1.msra.mxu0 %v2221
    %2503 = vmatprep.subr.mxu0 0.0
    %2504 = vmatpush2.msra.mxu0 0.0
    %2505 = vmatprep.subr.mxu0 0.0
    %2506 = vmatpush2.msra.mxu0 0.0
    %2507 = vmatprep.subr.mxu0 0.0
    %2508 = vmatpush2.msra.mxu0 0.0
    %2509 = vmatprep.subr.mxu0 0.0
    %2510 = vmatpush2.msra.mxu0 0.0
    %2511 = vmatprep.subr.mxu0 0.0
    %2512 = vmatpush2.msra.mxu0 0.0
    %2513 = vmatprep.subr.mxu0 0.0
    %2514 = vmatpush2.msra.mxu0 0.0
    %2515 = vmatprep.subr.mxu0 0.0
    %2516 = vmatpush2.msra.mxu0 0.0
    %2517 = vmatprep.subr.mxu0 0.0
    %2518 = vmatpush2.msra.mxu0 0.0
    %2519 = vmatprep.subr.mxu0 0.0
    %2520 = vmatpush2.msra.mxu0 0.0
    %2521 = vmatprep.subr.mxu0 0.0
    %2522 = vmatpush2.msra.mxu0 0.0
    %2523 = vmatprep.subr.mxu0 0.0
    %2524 = vmatpush2.msra.mxu0 0.0
    %2525 = vmatprep.subr.mxu0 0.0
    %2526 = vmatpush2.msra.mxu0 0.0
    %2527 = vmatprep.subr.mxu0 0.0
    %2528 = vmatpush2.msra.mxu0 0.0
    %2529 = vmatprep.subr.mxu0 0.0
    %2530 = vmatpush2.msra.mxu0 0.0
    %2531 = vmatprep.subr.mxu0 0.0
    %2532 = vmatpush2.msra.mxu0 0.0
    %2533 = vmatprep.subr.mxu0 0.0
    %2534 = vmatpush2.msra.mxu0 0.0
    %2535 = vmatprep.mubr.f32.mxu0 0.0
    %2536 = vmatmul.mubr.f32.gmra.mxu0 %v2218
    %v2537 = vpop.f32.mrf.mxu0
    %v2538 = vadd.f32 %v2454, %v2537
    %v2539 = vpop.f32.mrf.mxu0
    %2540 = vdwg.mxu0
    %2541 = vmatprep.subr.mxu0 0.0
    %2542 = vmatpush1.msra.mxu0 %v2252
    %2543 = vmatprep.subr.mxu0 0.0
    %2544 = vmatpush1.msra.mxu0 %v2251
    %2545 = vmatprep.subr.mxu0 0.0
    %2546 = vmatpush1.msra.mxu0 %v2250
    %2547 = vmatprep.subr.mxu0 0.0
    %2548 = vmatpush1.msra.mxu0 %v2249
    %2549 = vmatprep.subr.mxu0 0.0
    %2550 = vmatpush1.msra.mxu0 %v2248
    %2551 = vmatprep.subr.mxu0 0.0
    %2552 = vmatpush1.msra.mxu0 %v2247
    %2553 = vmatprep.subr.mxu0 0.0
    %2554 = vmatpush1.msra.mxu0 %v2246
    %2555 = vmatprep.subr.mxu0 0.0
    %2556 = vmatpush1.msra.mxu0 %v2245
    %2557 = vmatprep.subr.mxu0 0.0
    %2558 = vmatpush1.msra.mxu0 %v2244
    %2559 = vmatprep.subr.mxu0 0.0
    %2560 = vmatpush1.msra.mxu0 %v2243
    %2561 = vmatprep.subr.mxu0 0.0
    %2562 = vmatpush1.msra.mxu0 %v2242
    %2563 = vmatprep.subr.mxu0 0.0
    %2564 = vmatpush1.msra.mxu0 %v2241
    %2565 = vmatprep.subr.mxu0 0.0
    %2566 = vmatpush1.msra.mxu0 %v2240
    %2567 = vmatprep.subr.mxu0 0.0
    %2568 = vmatpush1.msra.mxu0 %v2239
    %2569 = vmatprep.subr.mxu0 0.0
    %2570 = vmatpush1.msra.mxu0 %v2238
    %2571 = vmatprep.subr.mxu0 0.0
    %2572 = vmatpush1.msra.mxu0 %v2237
    %2573 = vmatprep.subr.mxu0 0.0
    %2574 = vmatpush2.msra.mxu0 0.0
    %2575 = vmatprep.subr.mxu0 0.0
    %2576 = vmatpush2.msra.mxu0 0.0
    %2577 = vmatprep.subr.mxu0 0.0
    %2578 = vmatpush2.msra.mxu0 0.0
    %2579 = vmatprep.subr.mxu0 0.0
    %2580 = vmatpush2.msra.mxu0 0.0
    %2581 = vmatprep.subr.mxu0 0.0
    %2582 = vmatpush2.msra.mxu0 0.0
    %2583 = vmatprep.subr.mxu0 0.0
    %2584 = vmatpush2.msra.mxu0 0.0
    %2585 = vmatprep.subr.mxu0 0.0
    %2586 = vmatpush2.msra.mxu0 0.0
    %2587 = vmatprep.subr.mxu0 0.0
    %2588 = vmatpush2.msra.mxu0 0.0
    %2589 = vmatprep.subr.mxu0 0.0
    %2590 = vmatpush2.msra.mxu0 0.0
    %2591 = vmatprep.subr.mxu0 0.0
    %2592 = vmatpush2.msra.mxu0 0.0
    %2593 = vmatprep.subr.mxu0 0.0
    %2594 = vmatpush2.msra.mxu0 0.0
    %2595 = vmatprep.subr.mxu0 0.0
    %2596 = vmatpush2.msra.mxu0 0.0
    %2597 = vmatprep.subr.mxu0 0.0
    %2598 = vmatpush2.msra.mxu0 0.0
    %2599 = vmatprep.subr.mxu0 0.0
    %2600 = vmatpush2.msra.mxu0 0.0
    %2601 = vmatprep.subr.mxu0 0.0
    %2602 = vmatpush2.msra.mxu0 0.0
    %2603 = vmatprep.subr.mxu0 0.0
    %2604 = vmatpush2.msra.mxu0 0.0
    %2605 = vmatprep.mubr.f32.mxu0 0.0
    %2606 = vmatmul.mubr.f32.gmra.mxu0 %v2218
    %v2607 = vpop.f32.mrf.mxu0
    %v2608 = vadd.f32 %v2458, %v2607
    %v2609 = vpop.f32.mrf.mxu0
    %2610 = vdwg.mxu0
    %2611 = vmatprep.subr.mxu0 0.0
    %2612 = vmatpush1.msra.mxu0 %v2268
    %2613 = vmatprep.subr.mxu0 0.0
    %2614 = vmatpush1.msra.mxu0 %v2267
    %2615 = vmatprep.subr.mxu0 0.0
    %2616 = vmatpush1.msra.mxu0 %v2266
    %2617 = vmatprep.subr.mxu0 0.0
    %2618 = vmatpush1.msra.mxu0 %v2265
    %2619 = vmatprep.subr.mxu0 0.0
    %2620 = vmatpush1.msra.mxu0 %v2264
    %2621 = vmatprep.subr.mxu0 0.0
    %2622 = vmatpush1.msra.mxu0 %v2263
    %2623 = vmatprep.subr.mxu0 0.0
    %2624 = vmatpush1.msra.mxu0 %v2262
    %2625 = vmatprep.subr.mxu0 0.0
    %2626 = vmatpush1.msra.mxu0 %v2261
    %2627 = vmatprep.subr.mxu0 0.0
    %2628 = vmatpush1.msra.mxu0 %v2260
    %2629 = vmatprep.subr.mxu0 0.0
    %2630 = vmatpush1.msra.mxu0 %v2259
    %2631 = vmatprep.subr.mxu0 0.0
    %2632 = vmatpush1.msra.mxu0 %v2258
    %2633 = vmatprep.subr.mxu0 0.0
    %2634 = vmatpush1.msra.mxu0 %v2257
    %2635 = vmatprep.subr.mxu0 0.0
    %2636 = vmatpush1.msra.mxu0 %v2256
    %2637 = vmatprep.subr.mxu0 0.0
    %2638 = vmatpush1.msra.mxu0 %v2255
    %2639 = vmatprep.subr.mxu0 0.0
    %2640 = vmatpush1.msra.mxu0 %v2254
    %2641 = vmatprep.subr.mxu0 0.0
    %2642 = vmatpush1.msra.mxu0 %v2253
    %2643 = vmatprep.subr.mxu0 0.0
    %2644 = vmatpush2.msra.mxu0 0.0
    %2645 = vmatprep.subr.mxu0 0.0
    %2646 = vmatpush2.msra.mxu0 0.0
    %2647 = vmatprep.subr.mxu0 0.0
    %2648 = vmatpush2.msra.mxu0 0.0
    %2649 = vmatprep.subr.mxu0 0.0
    %2650 = vmatpush2.msra.mxu0 0.0
    %2651 = vmatprep.subr.mxu0 0.0
    %2652 = vmatpush2.msra.mxu0 0.0
    %2653 = vmatprep.subr.mxu0 0.0
    %2654 = vmatpush2.msra.mxu0 0.0
    %2655 = vmatprep.subr.mxu0 0.0
    %2656 = vmatpush2.msra.mxu0 0.0
    %2657 = vmatprep.subr.mxu0 0.0
    %2658 = vmatpush2.msra.mxu0 0.0
    %2659 = vmatprep.subr.mxu0 0.0
    %2660 = vmatpush2.msra.mxu0 0.0
    %2661 = vmatprep.subr.mxu0 0.0
    %2662 = vmatpush2.msra.mxu0 0.0
    %2663 = vmatprep.subr.mxu0 0.0
    %2664 = vmatpush2.msra.mxu0 0.0
    %2665 = vmatprep.subr.mxu0 0.0
    %2666 = vmatpush2.msra.mxu0 0.0
    %2667 = vmatprep.subr.mxu0 0.0
    %2668 = vmatpush2.msra.mxu0 0.0
    %2669 = vmatprep.subr.mxu0 0.0
    %2670 = vmatpush2.msra.mxu0 0.0
    %2671 = vmatprep.subr.mxu0 0.0
    %2672 = vmatpush2.msra.mxu0 0.0
    %2673 = vmatprep.subr.mxu0 0.0
    %2674 = vmatpush2.msra.mxu0 0.0
    %2675 = vmatprep.mubr.f32.mxu0 0.0
    %2676 = vmatmul.mubr.f32.gmra.mxu0 %v2218
    %v2677 = vpop.f32.mrf.mxu0
    %v2678 = vadd.f32 %v2462, %v2677
    %v2679 = vpop.f32.mrf.mxu0
    %2680 = vdwg.mxu0
    %2681 = vmatprep.subr.mxu0 0.0
    %2682 = vmatpush1.msra.mxu0 %v2284
    %2683 = vmatprep.subr.mxu0 0.0
    %2684 = vmatpush1.msra.mxu0 %v2283
    %2685 = vmatprep.subr.mxu0 0.0
    %2686 = vmatpush1.msra.mxu0 %v2282
    %2687 = vmatprep.subr.mxu0 0.0
    %2688 = vmatpush1.msra.mxu0 %v2281
    %2689 = vmatprep.subr.mxu0 0.0
    %2690 = vmatpush1.msra.mxu0 %v2280
    %2691 = vmatprep.subr.mxu0 0.0
    %2692 = vmatpush1.msra.mxu0 %v2279
    %2693 = vmatprep.subr.mxu0 0.0
    %2694 = vmatpush1.msra.mxu0 %v2278
    %2695 = vmatprep.subr.mxu0 0.0
    %2696 = vmatpush1.msra.mxu0 %v2277
    %2697 = vmatprep.subr.mxu0 0.0
    %2698 = vmatpush1.msra.mxu0 %v2276
    %2699 = vmatprep.subr.mxu0 0.0
    %2700 = vmatpush1.msra.mxu0 %v2275
    %2701 = vmatprep.subr.mxu0 0.0
    %2702 = vmatpush1.msra.mxu0 %v2274
    %2703 = vmatprep.subr.mxu0 0.0
    %2704 = vmatpush1.msra.mxu0 %v2273
    %2705 = vmatprep.subr.mxu0 0.0
    %2706 = vmatpush1.msra.mxu0 %v2272
    %2707 = vmatprep.subr.mxu0 0.0
    %2708 = vmatpush1.msra.mxu0 %v2271
    %2709 = vmatprep.subr.mxu0 0.0
    %2710 = vmatpush1.msra.mxu0 %v2270
    %2711 = vmatprep.subr.mxu0 0.0
    %2712 = vmatpush1.msra.mxu0 %v2269
    %2713 = vmatprep.subr.mxu0 0.0
    %2714 = vmatpush2.msra.mxu0 0.0
    %2715 = vmatprep.subr.mxu0 0.0
    %2716 = vmatpush2.msra.mxu0 0.0
    %2717 = vmatprep.subr.mxu0 0.0
    %2718 = vmatpush2.msra.mxu0 0.0
    %2719 = vmatprep.subr.mxu0 0.0
    %2720 = vmatpush2.msra.mxu0 0.0
    %2721 = vmatprep.subr.mxu0 0.0
    %2722 = vmatpush2.msra.mxu0 0.0
    %2723 = vmatprep.subr.mxu0 0.0
    %2724 = vmatpush2.msra.mxu0 0.0
    %2725 = vmatprep.subr.mxu0 0.0
    %2726 = vmatpush2.msra.mxu0 0.0
    %2727 = vmatprep.subr.mxu0 0.0
    %2728 = vmatpush2.msra.mxu0 0.0
    %2729 = vmatprep.subr.mxu0 0.0
    %2730 = vmatpush2.msra.mxu0 0.0
    %2731 = vmatprep.subr.mxu0 0.0
    %2732 = vmatpush2.msra.mxu0 0.0
    %2733 = vmatprep.subr.mxu0 0.0
    %2734 = vmatpush2.msra.mxu0 0.0
    %2735 = vmatprep.subr.mxu0 0.0
    %2736 = vmatpush2.msra.mxu0 0.0
    %2737 = vmatprep.subr.mxu0 0.0
    %2738 = vmatpush2.msra.mxu0 0.0
    %2739 = vmatprep.subr.mxu0 0.0
    %2740 = vmatpush2.msra.mxu0 0.0
    %2741 = vmatprep.subr.mxu0 0.0
    %2742 = vmatpush2.msra.mxu0 0.0
    %2743 = vmatprep.subr.mxu0 0.0
    %2744 = vmatpush2.msra.mxu0 0.0
    %2745 = vmatprep.mubr.f32.mxu0 0.0
    %2746 = vmatmul.mubr.f32.gmra.mxu0 %v2218
    %v2747 = vpop.f32.mrf.mxu0
    %v2748 = vadd.f32 %v2466, %v2747
    %v2749 = vpop.f32.mrf.mxu0
    %2750 = vdwg.mxu0
    %v2755 = vlaneseq
    %v2756 = vshrl.u32 %v2755, 7
    %v2757 = vsub.s32 0, %v2756
    %v2758 = vrot.slane %v2421, %v2757
    %v2759 = vlaneseq
    %v2760 = vshrl.u32 %v2759, 7
    %v2761 = vsub.s32 0, %v2760
    %v2762 = vrot.slane %v2422, %v2761
    %v2763 = vlaneseq
    %v2764 = vshrl.u32 %v2763, 7
    %v2765 = vsub.s32 0, %v2764
    %v2766 = vrot.slane %v2423, %v2765
    %v2767 = vlaneseq
    %v2768 = vshrl.u32 %v2767, 7
    %v2769 = vsub.s32 0, %v2768
    %v2770 = vrot.slane %v2424, %v2769
    %2775 = vmatprep.subr.mxu0 0.0
    %2776 = vmatpush1.msra.mxu0 %v2301
    %2777 = vmatprep.subr.mxu0 0.0
    %2778 = vmatpush1.msra.mxu0 %v2300
    %2779 = vmatprep.subr.mxu0 0.0
    %2780 = vmatpush1.msra.mxu0 %v2299
    %2781 = vmatprep.subr.mxu0 0.0
    %2782 = vmatpush1.msra.mxu0 %v2298
    %2783 = vmatprep.subr.mxu0 0.0
    %2784 = vmatpush1.msra.mxu0 %v2297
    %2785 = vmatprep.subr.mxu0 0.0
    %2786 = vmatpush1.msra.mxu0 %v2296
    %2787 = vmatprep.subr.mxu0 0.0
    %2788 = vmatpush1.msra.mxu0 %v2295
    %2789 = vmatprep.subr.mxu0 0.0
    %2790 = vmatpush1.msra.mxu0 %v2294
    %2791 = vmatprep.subr.mxu0 0.0
    %2792 = vmatpush1.msra.mxu0 %v2293
    %2793 = vmatprep.subr.mxu0 0.0
    %2794 = vmatpush1.msra.mxu0 %v2292
    %2795 = vmatprep.subr.mxu0 0.0
    %2796 = vmatpush1.msra.mxu0 %v2291
    %2797 = vmatprep.subr.mxu0 0.0
    %2798 = vmatpush1.msra.mxu0 %v2290
    %2799 = vmatprep.subr.mxu0 0.0
    %2800 = vmatpush1.msra.mxu0 %v2289
    %2801 = vmatprep.subr.mxu0 0.0
    %2802 = vmatpush1.msra.mxu0 %v2288
    %2803 = vmatprep.subr.mxu0 0.0
    %2804 = vmatpush1.msra.mxu0 %v2287
    %2805 = vmatprep.subr.mxu0 0.0
    %2806 = vmatpush1.msra.mxu0 %v2286
    %2807 = vmatprep.subr.mxu0 0.0
    %2808 = vmatpush2.msra.mxu0 0.0
    %2809 = vmatprep.subr.mxu0 0.0
    %2810 = vmatpush2.msra.mxu0 0.0
    %2811 = vmatprep.subr.mxu0 0.0
    %2812 = vmatpush2.msra.mxu0 0.0
    %2813 = vmatprep.subr.mxu0 0.0
    %2814 = vmatpush2.msra.mxu0 0.0
    %2815 = vmatprep.subr.mxu0 0.0
    %2816 = vmatpush2.msra.mxu0 0.0
    %2817 = vmatprep.subr.mxu0 0.0
    %2818 = vmatpush2.msra.mxu0 0.0
    %2819 = vmatprep.subr.mxu0 0.0
    %2820 = vmatpush2.msra.mxu0 0.0
    %2821 = vmatprep.subr.mxu0 0.0
    %2822 = vmatpush2.msra.mxu0 0.0
    %2823 = vmatprep.subr.mxu0 0.0
    %2824 = vmatpush2.msra.mxu0 0.0
    %2825 = vmatprep.subr.mxu0 0.0
    %2826 = vmatpush2.msra.mxu0 0.0
    %2827 = vmatprep.subr.mxu0 0.0
    %2828 = vmatpush2.msra.mxu0 0.0
    %2829 = vmatprep.subr.mxu0 0.0
    %2830 = vmatpush2.msra.mxu0 0.0
    %2831 = vmatprep.subr.mxu0 0.0
    %2832 = vmatpush2.msra.mxu0 0.0
    %2833 = vmatprep.subr.mxu0 0.0
    %2834 = vmatpush2.msra.mxu0 0.0
    %2835 = vmatprep.subr.mxu0 0.0
    %2836 = vmatpush2.msra.mxu0 0.0
    %2837 = vmatprep.subr.mxu0 0.0
    %2838 = vmatpush2.msra.mxu0 0.0
    %2839 = vmatprep.mubr.f32.mxu0 0.0
    %2840 = vmatmul.mubr.f32.gmra.mxu0 %v2219
    %v2841 = vpop.f32.mrf.mxu0
    %v2842 = vadd.f32 %v2758, %v2841
    %v2843 = vpop.f32.mrf.mxu0
    %2844 = vdwg.mxu0
    %2845 = vmatprep.subr.mxu0 0.0
    %2846 = vmatpush1.msra.mxu0 %v2317
    %2847 = vmatprep.subr.mxu0 0.0
    %2848 = vmatpush1.msra.mxu0 %v2316
    %2849 = vmatprep.subr.mxu0 0.0
    %2850 = vmatpush1.msra.mxu0 %v2315
    %2851 = vmatprep.subr.mxu0 0.0
    %2852 = vmatpush1.msra.mxu0 %v2314
    %2853 = vmatprep.subr.mxu0 0.0
    %2854 = vmatpush1.msra.mxu0 %v2313
    %2855 = vmatprep.subr.mxu0 0.0
    %2856 = vmatpush1.msra.mxu0 %v2312
    %2857 = vmatprep.subr.mxu0 0.0
    %2858 = vmatpush1.msra.mxu0 %v2311
    %2859 = vmatprep.subr.mxu0 0.0
    %2860 = vmatpush1.msra.mxu0 %v2310
    %2861 = vmatprep.subr.mxu0 0.0
    %2862 = vmatpush1.msra.mxu0 %v2309
    %2863 = vmatprep.subr.mxu0 0.0
    %2864 = vmatpush1.msra.mxu0 %v2308
    %2865 = vmatprep.subr.mxu0 0.0
    %2866 = vmatpush1.msra.mxu0 %v2307
    %2867 = vmatprep.subr.mxu0 0.0
    %2868 = vmatpush1.msra.mxu0 %v2306
    %2869 = vmatprep.subr.mxu0 0.0
    %2870 = vmatpush1.msra.mxu0 %v2305
    %2871 = vmatprep.subr.mxu0 0.0
    %2872 = vmatpush1.msra.mxu0 %v2304
    %2873 = vmatprep.subr.mxu0 0.0
    %2874 = vmatpush1.msra.mxu0 %v2303
    %2875 = vmatprep.subr.mxu0 0.0
    %2876 = vmatpush1.msra.mxu0 %v2302
    %2877 = vmatprep.subr.mxu0 0.0
    %2878 = vmatpush2.msra.mxu0 0.0
    %2879 = vmatprep.subr.mxu0 0.0
    %2880 = vmatpush2.msra.mxu0 0.0
    %2881 = vmatprep.subr.mxu0 0.0
    %2882 = vmatpush2.msra.mxu0 0.0
    %2883 = vmatprep.subr.mxu0 0.0
    %2884 = vmatpush2.msra.mxu0 0.0
    %2885 = vmatprep.subr.mxu0 0.0
    %2886 = vmatpush2.msra.mxu0 0.0
    %2887 = vmatprep.subr.mxu0 0.0
    %2888 = vmatpush2.msra.mxu0 0.0
    %2889 = vmatprep.subr.mxu0 0.0
    %2890 = vmatpush2.msra.mxu0 0.0
    %2891 = vmatprep.subr.mxu0 0.0
    %2892 = vmatpush2.msra.mxu0 0.0
    %2893 = vmatprep.subr.mxu0 0.0
    %2894 = vmatpush2.msra.mxu0 0.0
    %2895 = vmatprep.subr.mxu0 0.0
    %2896 = vmatpush2.msra.mxu0 0.0
    %2897 = vmatprep.subr.mxu0 0.0
    %2898 = vmatpush2.msra.mxu0 0.0
    %2899 = vmatprep.subr.mxu0 0.0
    %2900 = vmatpush2.msra.mxu0 0.0
    %2901 = vmatprep.subr.mxu0 0.0
    %2902 = vmatpush2.msra.mxu0 0.0
    %2903 = vmatprep.subr.mxu0 0.0
    %2904 = vmatpush2.msra.mxu0 0.0
    %2905 = vmatprep.subr.mxu0 0.0
    %2906 = vmatpush2.msra.mxu0 0.0
    %2907 = vmatprep.subr.mxu0 0.0
    %2908 = vmatpush2.msra.mxu0 0.0
    %2909 = vmatprep.mubr.f32.mxu0 0.0
    %2910 = vmatmul.mubr.f32.gmra.mxu0 %v2219
    %v2911 = vpop.f32.mrf.mxu0
    %v2912 = vadd.f32 %v2762, %v2911
    %v2913 = vpop.f32.mrf.mxu0
    %2914 = vdwg.mxu0
    %2915 = vmatprep.subr.mxu0 0.0
    %2916 = vmatpush1.msra.mxu0 %v2333
    %2917 = vmatprep.subr.mxu0 0.0
    %2918 = vmatpush1.msra.mxu0 %v2332
    %2919 = vmatprep.subr.mxu0 0.0
    %2920 = vmatpush1.msra.mxu0 %v2331
    %2921 = vmatprep.subr.mxu0 0.0
    %2922 = vmatpush1.msra.mxu0 %v2330
    %2923 = vmatprep.subr.mxu0 0.0
    %2924 = vmatpush1.msra.mxu0 %v2329
    %2925 = vmatprep.subr.mxu0 0.0
    %2926 = vmatpush1.msra.mxu0 %v2328
    %2927 = vmatprep.subr.mxu0 0.0
    %2928 = vmatpush1.msra.mxu0 %v2327
    %2929 = vmatprep.subr.mxu0 0.0
    %2930 = vmatpush1.msra.mxu0 %v2326
    %2931 = vmatprep.subr.mxu0 0.0
    %2932 = vmatpush1.msra.mxu0 %v2325
    %2933 = vmatprep.subr.mxu0 0.0
    %2934 = vmatpush1.msra.mxu0 %v2324
    %2935 = vmatprep.subr.mxu0 0.0
    %2936 = vmatpush1.msra.mxu0 %v2323
    %2937 = vmatprep.subr.mxu0 0.0
    %2938 = vmatpush1.msra.mxu0 %v2322
    %2939 = vmatprep.subr.mxu0 0.0
    %2940 = vmatpush1.msra.mxu0 %v2321
    %2941 = vmatprep.subr.mxu0 0.0
    %2942 = vmatpush1.msra.mxu0 %v2320
    %2943 = vmatprep.subr.mxu0 0.0
    %2944 = vmatpush1.msra.mxu0 %v2319
    %2945 = vmatprep.subr.mxu0 0.0
    %2946 = vmatpush1.msra.mxu0 %v2318
    %2947 = vmatprep.subr.mxu0 0.0
    %2948 = vmatpush2.msra.mxu0 0.0
    %2949 = vmatprep.subr.mxu0 0.0
    %2950 = vmatpush2.msra.mxu0 0.0
    %2951 = vmatprep.subr.mxu0 0.0
    %2952 = vmatpush2.msra.mxu0 0.0
    %2953 = vmatprep.subr.mxu0 0.0
    %2954 = vmatpush2.msra.mxu0 0.0
    %2955 = vmatprep.subr.mxu0 0.0
    %2956 = vmatpush2.msra.mxu0 0.0
    %2957 = vmatprep.subr.mxu0 0.0
    %2958 = vmatpush2.msra.mxu0 0.0
    %2959 = vmatprep.subr.mxu0 0.0
    %2960 = vmatpush2.msra.mxu0 0.0
    %2961 = vmatprep.subr.mxu0 0.0
    %2962 = vmatpush2.msra.mxu0 0.0
    %2963 = vmatprep.subr.mxu0 0.0
    %2964 = vmatpush2.msra.mxu0 0.0
    %2965 = vmatprep.subr.mxu0 0.0
    %2966 = vmatpush2.msra.mxu0 0.0
    %2967 = vmatprep.subr.mxu0 0.0
    %2968 = vmatpush2.msra.mxu0 0.0
    %2969 = vmatprep.subr.mxu0 0.0
    %2970 = vmatpush2.msra.mxu0 0.0
    %2971 = vmatprep.subr.mxu0 0.0
    %2972 = vmatpush2.msra.mxu0 0.0
    %2973 = vmatprep.subr.mxu0 0.0
    %2974 = vmatpush2.msra.mxu0 0.0
    %2975 = vmatprep.subr.mxu0 0.0
    %2976 = vmatpush2.msra.mxu0 0.0
    %2977 = vmatprep.subr.mxu0 0.0
    %2978 = vmatpush2.msra.mxu0 0.0
    %2979 = vmatprep.mubr.f32.mxu0 0.0
    %2980 = vmatmul.mubr.f32.gmra.mxu0 %v2219
    %v2981 = vpop.f32.mrf.mxu0
    %v2982 = vadd.f32 %v2766, %v2981
    %v2983 = vpop.f32.mrf.mxu0
    %2984 = vdwg.mxu0
    %2985 = vmatprep.subr.mxu0 0.0
    %2986 = vmatpush1.msra.mxu0 %v2349
    %2987 = vmatprep.subr.mxu0 0.0
    %2988 = vmatpush1.msra.mxu0 %v2348
    %2989 = vmatprep.subr.mxu0 0.0
    %2990 = vmatpush1.msra.mxu0 %v2347
    %2991 = vmatprep.subr.mxu0 0.0
    %2992 = vmatpush1.msra.mxu0 %v2346
    %2993 = vmatprep.subr.mxu0 0.0
    %2994 = vmatpush1.msra.mxu0 %v2345
    %2995 = vmatprep.subr.mxu0 0.0
    %2996 = vmatpush1.msra.mxu0 %v2344
    %2997 = vmatprep.subr.mxu0 0.0
    %2998 = vmatpush1.msra.mxu0 %v2343
    %2999 = vmatprep.subr.mxu0 0.0
    %3000 = vmatpush1.msra.mxu0 %v2342
    %3001 = vmatprep.subr.mxu0 0.0
    %3002 = vmatpush1.msra.mxu0 %v2341
    %3003 = vmatprep.subr.mxu0 0.0
    %3004 = vmatpush1.msra.mxu0 %v2340
    %3005 = vmatprep.subr.mxu0 0.0
    %3006 = vmatpush1.msra.mxu0 %v2339
    %3007 = vmatprep.subr.mxu0 0.0
    %3008 = vmatpush1.msra.mxu0 %v2338
    %3009 = vmatprep.subr.mxu0 0.0
    %3010 = vmatpush1.msra.mxu0 %v2337
    %3011 = vmatprep.subr.mxu0 0.0
    %3012 = vmatpush1.msra.mxu0 %v2336
    %3013 = vmatprep.subr.mxu0 0.0
    %3014 = vmatpush1.msra.mxu0 %v2335
    %3015 = vmatprep.subr.mxu0 0.0
    %3016 = vmatpush1.msra.mxu0 %v2334
    %3017 = vmatprep.subr.mxu0 0.0
    %3018 = vmatpush2.msra.mxu0 0.0
    %3019 = vmatprep.subr.mxu0 0.0
    %3020 = vmatpush2.msra.mxu0 0.0
    %3021 = vmatprep.subr.mxu0 0.0
    %3022 = vmatpush2.msra.mxu0 0.0
    %3023 = vmatprep.subr.mxu0 0.0
    %3024 = vmatpush2.msra.mxu0 0.0
    %3025 = vmatprep.subr.mxu0 0.0
    %3026 = vmatpush2.msra.mxu0 0.0
    %3027 = vmatprep.subr.mxu0 0.0
    %3028 = vmatpush2.msra.mxu0 0.0
    %3029 = vmatprep.subr.mxu0 0.0
    %3030 = vmatpush2.msra.mxu0 0.0
    %3031 = vmatprep.subr.mxu0 0.0
    %3032 = vmatpush2.msra.mxu0 0.0
    %3033 = vmatprep.subr.mxu0 0.0
    %3034 = vmatpush2.msra.mxu0 0.0
    %3035 = vmatprep.subr.mxu0 0.0
    %3036 = vmatpush2.msra.mxu0 0.0
    %3037 = vmatprep.subr.mxu0 0.0
    %3038 = vmatpush2.msra.mxu0 0.0
    %3039 = vmatprep.subr.mxu0 0.0
    %3040 = vmatpush2.msra.mxu0 0.0
    %3041 = vmatprep.subr.mxu0 0.0
    %3042 = vmatpush2.msra.mxu0 0.0
    %3043 = vmatprep.subr.mxu0 0.0
    %3044 = vmatpush2.msra.mxu0 0.0
    %3045 = vmatprep.subr.mxu0 0.0
    %3046 = vmatpush2.msra.mxu0 0.0
    %3047 = vmatprep.subr.mxu0 0.0
    %3048 = vmatpush2.msra.mxu0 0.0
    %3049 = vmatprep.mubr.f32.mxu0 0.0
    %3050 = vmatmul.mubr.f32.gmra.mxu0 %v2219
    %v3051 = vpop.f32.mrf.mxu0
    %v3052 = vadd.f32 %v2770, %v3051
    %v3053 = vpop.f32.mrf.mxu0
    %3054 = vdwg.mxu0
    %v3059 = vlaneseq
    %v3060 = vshrl.u32 %v3059, 7
    %v3061 = vsub.s32 0, %v3060
    %v3062 = vrot.slane %v2426, %v3061
    %v3063 = vlaneseq
    %v3064 = vshrl.u32 %v3063, 7
    %v3065 = vsub.s32 0, %v3064
    %v3066 = vrot.slane %v2427, %v3065
    %v3067 = vlaneseq
    %v3068 = vshrl.u32 %v3067, 7
    %v3069 = vsub.s32 0, %v3068
    %v3070 = vrot.slane %v2428, %v3069
    %v3071 = vlaneseq
    %v3072 = vshrl.u32 %v3071, 7
    %v3073 = vsub.s32 0, %v3072
    %v3074 = vrot.slane %v2429, %v3073
    %3079 = vmatprep.subr.mxu0 0.0
    %3080 = vmatpush1.msra.mxu0 %v2366
    %3081 = vmatprep.subr.mxu0 0.0
    %3082 = vmatpush1.msra.mxu0 %v2365
    %3083 = vmatprep.subr.mxu0 0.0
    %3084 = vmatpush1.msra.mxu0 %v2364
    %3085 = vmatprep.subr.mxu0 0.0
    %3086 = vmatpush1.msra.mxu0 %v2363
    %3087 = vmatprep.subr.mxu0 0.0
    %3088 = vmatpush1.msra.mxu0 %v2362
    %3089 = vmatprep.subr.mxu0 0.0
    %3090 = vmatpush1.msra.mxu0 %v2361
    %3091 = vmatprep.subr.mxu0 0.0
    %3092 = vmatpush1.msra.mxu0 %v2360
    %3093 = vmatprep.subr.mxu0 0.0
    %3094 = vmatpush1.msra.mxu0 %v2359
    %3095 = vmatprep.subr.mxu0 0.0
    %3096 = vmatpush1.msra.mxu0 %v2358
    %3097 = vmatprep.subr.mxu0 0.0
    %3098 = vmatpush1.msra.mxu0 %v2357
    %3099 = vmatprep.subr.mxu0 0.0
    %3100 = vmatpush1.msra.mxu0 %v2356
    %3101 = vmatprep.subr.mxu0 0.0
    %3102 = vmatpush1.msra.mxu0 %v2355
    %3103 = vmatprep.subr.mxu0 0.0
    %3104 = vmatpush1.msra.mxu0 %v2354
    %3105 = vmatprep.subr.mxu0 0.0
    %3106 = vmatpush1.msra.mxu0 %v2353
    %3107 = vmatprep.subr.mxu0 0.0
    %3108 = vmatpush1.msra.mxu0 %v2352
    %3109 = vmatprep.subr.mxu0 0.0
    %3110 = vmatpush1.msra.mxu0 %v2351
    %3111 = vmatprep.subr.mxu0 0.0
    %3112 = vmatpush2.msra.mxu0 0.0
    %3113 = vmatprep.subr.mxu0 0.0
    %3114 = vmatpush2.msra.mxu0 0.0
    %3115 = vmatprep.subr.mxu0 0.0
    %3116 = vmatpush2.msra.mxu0 0.0
    %3117 = vmatprep.subr.mxu0 0.0
    %3118 = vmatpush2.msra.mxu0 0.0
    %3119 = vmatprep.subr.mxu0 0.0
    %3120 = vmatpush2.msra.mxu0 0.0
    %3121 = vmatprep.subr.mxu0 0.0
    %3122 = vmatpush2.msra.mxu0 0.0
    %3123 = vmatprep.subr.mxu0 0.0
    %3124 = vmatpush2.msra.mxu0 0.0
    %3125 = vmatprep.subr.mxu0 0.0
    %3126 = vmatpush2.msra.mxu0 0.0
    %3127 = vmatprep.subr.mxu0 0.0
    %3128 = vmatpush2.msra.mxu0 0.0
    %3129 = vmatprep.subr.mxu0 0.0
    %3130 = vmatpush2.msra.mxu0 0.0
    %3131 = vmatprep.subr.mxu0 0.0
    %3132 = vmatpush2.msra.mxu0 0.0
    %3133 = vmatprep.subr.mxu0 0.0
    %3134 = vmatpush2.msra.mxu0 0.0
    %3135 = vmatprep.subr.mxu0 0.0
    %3136 = vmatpush2.msra.mxu0 0.0
    %3137 = vmatprep.subr.mxu0 0.0
    %3138 = vmatpush2.msra.mxu0 0.0
    %3139 = vmatprep.subr.mxu0 0.0
    %3140 = vmatpush2.msra.mxu0 0.0
    %3141 = vmatprep.subr.mxu0 0.0
    %3142 = vmatpush2.msra.mxu0 0.0
    %3143 = vmatprep.mubr.f32.mxu0 0.0
    %3144 = vmatmul.mubr.f32.gmra.mxu0 %v109
    %v3145 = vpop.f32.mrf.mxu0
    %v3146 = vadd.f32 %v3062, %v3145
    %v3147 = vpop.f32.mrf.mxu0
    %3148 = vdwg.mxu0
    %3149 = vmatprep.subr.mxu0 0.0
    %3150 = vmatpush1.msra.mxu0 %v2382
    %3151 = vmatprep.subr.mxu0 0.0
    %3152 = vmatpush1.msra.mxu0 %v2381
    %3153 = vmatprep.subr.mxu0 0.0
    %3154 = vmatpush1.msra.mxu0 %v2380
    %3155 = vmatprep.subr.mxu0 0.0
    %3156 = vmatpush1.msra.mxu0 %v2379
    %3157 = vmatprep.subr.mxu0 0.0
    %3158 = vmatpush1.msra.mxu0 %v2378
    %3159 = vmatprep.subr.mxu0 0.0
    %3160 = vmatpush1.msra.mxu0 %v2377
    %3161 = vmatprep.subr.mxu0 0.0
    %3162 = vmatpush1.msra.mxu0 %v2376
    %3163 = vmatprep.subr.mxu0 0.0
    %3164 = vmatpush1.msra.mxu0 %v2375
    %3165 = vmatprep.subr.mxu0 0.0
    %3166 = vmatpush1.msra.mxu0 %v2374
    %3167 = vmatprep.subr.mxu0 0.0
    %3168 = vmatpush1.msra.mxu0 %v2373
    %3169 = vmatprep.subr.mxu0 0.0
    %3170 = vmatpush1.msra.mxu0 %v2372
    %3171 = vmatprep.subr.mxu0 0.0
    %3172 = vmatpush1.msra.mxu0 %v2371
    %3173 = vmatprep.subr.mxu0 0.0
    %3174 = vmatpush1.msra.mxu0 %v2370
    %3175 = vmatprep.subr.mxu0 0.0
    %3176 = vmatpush1.msra.mxu0 %v2369
    %3177 = vmatprep.subr.mxu0 0.0
    %3178 = vmatpush1.msra.mxu0 %v2368
    %3179 = vmatprep.subr.mxu0 0.0
    %3180 = vmatpush1.msra.mxu0 %v2367
    %3181 = vmatprep.subr.mxu0 0.0
    %3182 = vmatpush2.msra.mxu0 0.0
    %3183 = vmatprep.subr.mxu0 0.0
    %3184 = vmatpush2.msra.mxu0 0.0
    %3185 = vmatprep.subr.mxu0 0.0
    %3186 = vmatpush2.msra.mxu0 0.0
    %3187 = vmatprep.subr.mxu0 0.0
    %3188 = vmatpush2.msra.mxu0 0.0
    %3189 = vmatprep.subr.mxu0 0.0
    %3190 = vmatpush2.msra.mxu0 0.0
    %3191 = vmatprep.subr.mxu0 0.0
    %3192 = vmatpush2.msra.mxu0 0.0
    %3193 = vmatprep.subr.mxu0 0.0
    %3194 = vmatpush2.msra.mxu0 0.0
    %3195 = vmatprep.subr.mxu0 0.0
    %3196 = vmatpush2.msra.mxu0 0.0
    %3197 = vmatprep.subr.mxu0 0.0
    %3198 = vmatpush2.msra.mxu0 0.0
    %3199 = vmatprep.subr.mxu0 0.0
    %3200 = vmatpush2.msra.mxu0 0.0
    %3201 = vmatprep.subr.mxu0 0.0
    %3202 = vmatpush2.msra.mxu0 0.0
    %3203 = vmatprep.subr.mxu0 0.0
    %3204 = vmatpush2.msra.mxu0 0.0
    %3205 = vmatprep.subr.mxu0 0.0
    %3206 = vmatpush2.msra.mxu0 0.0
    %3207 = vmatprep.subr.mxu0 0.0
    %3208 = vmatpush2.msra.mxu0 0.0
    %3209 = vmatprep.subr.mxu0 0.0
    %3210 = vmatpush2.msra.mxu0 0.0
    %3211 = vmatprep.subr.mxu0 0.0
    %3212 = vmatpush2.msra.mxu0 0.0
    %3213 = vmatprep.mubr.f32.mxu0 0.0
    %3214 = vmatmul.mubr.f32.gmra.mxu0 %v109
    %v3215 = vpop.f32.mrf.mxu0
    %v3216 = vadd.f32 %v3066, %v3215
    %v3217 = vpop.f32.mrf.mxu0
    %3218 = vdwg.mxu0
    %3219 = vmatprep.subr.mxu0 0.0
    %3220 = vmatpush1.msra.mxu0 %v2398
    %3221 = vmatprep.subr.mxu0 0.0
    %3222 = vmatpush1.msra.mxu0 %v2397
    %3223 = vmatprep.subr.mxu0 0.0
    %3224 = vmatpush1.msra.mxu0 %v2396
    %3225 = vmatprep.subr.mxu0 0.0
    %3226 = vmatpush1.msra.mxu0 %v2395
    %3227 = vmatprep.subr.mxu0 0.0
    %3228 = vmatpush1.msra.mxu0 %v2394
    %3229 = vmatprep.subr.mxu0 0.0
    %3230 = vmatpush1.msra.mxu0 %v2393
    %3231 = vmatprep.subr.mxu0 0.0
    %3232 = vmatpush1.msra.mxu0 %v2392
    %3233 = vmatprep.subr.mxu0 0.0
    %3234 = vmatpush1.msra.mxu0 %v2391
    %3235 = vmatprep.subr.mxu0 0.0
    %3236 = vmatpush1.msra.mxu0 %v2390
    %3237 = vmatprep.subr.mxu0 0.0
    %3238 = vmatpush1.msra.mxu0 %v2389
    %3239 = vmatprep.subr.mxu0 0.0
    %3240 = vmatpush1.msra.mxu0 %v2388
    %3241 = vmatprep.subr.mxu0 0.0
    %3242 = vmatpush1.msra.mxu0 %v2387
    %3243 = vmatprep.subr.mxu0 0.0
    %3244 = vmatpush1.msra.mxu0 %v2386
    %3245 = vmatprep.subr.mxu0 0.0
    %3246 = vmatpush1.msra.mxu0 %v2385
    %3247 = vmatprep.subr.mxu0 0.0
    %3248 = vmatpush1.msra.mxu0 %v2384
    %3249 = vmatprep.subr.mxu0 0.0
    %3250 = vmatpush1.msra.mxu0 %v2383
    %3251 = vmatprep.subr.mxu0 0.0
    %3252 = vmatpush2.msra.mxu0 0.0
    %3253 = vmatprep.subr.mxu0 0.0
    %3254 = vmatpush2.msra.mxu0 0.0
    %3255 = vmatprep.subr.mxu0 0.0
    %3256 = vmatpush2.msra.mxu0 0.0
    %3257 = vmatprep.subr.mxu0 0.0
    %3258 = vmatpush2.msra.mxu0 0.0
    %3259 = vmatprep.subr.mxu0 0.0
    %3260 = vmatpush2.msra.mxu0 0.0
    %3261 = vmatprep.subr.mxu0 0.0
    %3262 = vmatpush2.msra.mxu0 0.0
    %3263 = vmatprep.subr.mxu0 0.0
    %3264 = vmatpush2.msra.mxu0 0.0
    %3265 = vmatprep.subr.mxu0 0.0
    %3266 = vmatpush2.msra.mxu0 0.0
    %3267 = vmatprep.subr.mxu0 0.0
    %3268 = vmatpush2.msra.mxu0 0.0
    %3269 = vmatprep.subr.mxu0 0.0
    %3270 = vmatpush2.msra.mxu0 0.0
    %3271 = vmatprep.subr.mxu0 0.0
    %3272 = vmatpush2.msra.mxu0 0.0
    %3273 = vmatprep.subr.mxu0 0.0
    %3274 = vmatpush2.msra.mxu0 0.0
    %3275 = vmatprep.subr.mxu0 0.0
    %3276 = vmatpush2.msra.mxu0 0.0
    %3277 = vmatprep.subr.mxu0 0.0
    %3278 = vmatpush2.msra.mxu0 0.0
    %3279 = vmatprep.subr.mxu0 0.0
    %3280 = vmatpush2.msra.mxu0 0.0
    %3281 = vmatprep.subr.mxu0 0.0
    %3282 = vmatpush2.msra.mxu0 0.0
    %3283 = vmatprep.mubr.f32.mxu0 0.0
    %3284 = vmatmul.mubr.f32.gmra.mxu0 %v109
    %v3285 = vpop.f32.mrf.mxu0
    %v3286 = vadd.f32 %v3070, %v3285
    %v3287 = vpop.f32.mrf.mxu0
    %3288 = vdwg.mxu0
    %3289 = vmatprep.subr.mxu0 0.0
    %3290 = vmatpush1.msra.mxu0 %v2414
    %3291 = vmatprep.subr.mxu0 0.0
    %3292 = vmatpush1.msra.mxu0 %v2413
    %3293 = vmatprep.subr.mxu0 0.0
    %3294 = vmatpush1.msra.mxu0 %v2412
    %3295 = vmatprep.subr.mxu0 0.0
    %3296 = vmatpush1.msra.mxu0 %v2411
    %3297 = vmatprep.subr.mxu0 0.0
    %3298 = vmatpush1.msra.mxu0 %v2410
    %3299 = vmatprep.subr.mxu0 0.0
    %3300 = vmatpush1.msra.mxu0 %v2409
    %3301 = vmatprep.subr.mxu0 0.0
    %3302 = vmatpush1.msra.mxu0 %v2408
    %3303 = vmatprep.subr.mxu0 0.0
    %3304 = vmatpush1.msra.mxu0 %v2407
    %3305 = vmatprep.subr.mxu0 0.0
    %3306 = vmatpush1.msra.mxu0 %v2406
    %3307 = vmatprep.subr.mxu0 0.0
    %3308 = vmatpush1.msra.mxu0 %v2405
    %3309 = vmatprep.subr.mxu0 0.0
    %3310 = vmatpush1.msra.mxu0 %v2404
    %3311 = vmatprep.subr.mxu0 0.0
    %3312 = vmatpush1.msra.mxu0 %v2403
    %3313 = vmatprep.subr.mxu0 0.0
    %3314 = vmatpush1.msra.mxu0 %v2402
    %3315 = vmatprep.subr.mxu0 0.0
    %3316 = vmatpush1.msra.mxu0 %v2401
    %3317 = vmatprep.subr.mxu0 0.0
    %3318 = vmatpush1.msra.mxu0 %v2400
    %3319 = vmatprep.subr.mxu0 0.0
    %3320 = vmatpush1.msra.mxu0 %v2399
    %3321 = vmatprep.subr.mxu0 0.0
    %3322 = vmatpush2.msra.mxu0 0.0
    %3323 = vmatprep.subr.mxu0 0.0
    %3324 = vmatpush2.msra.mxu0 0.0
    %3325 = vmatprep.subr.mxu0 0.0
    %3326 = vmatpush2.msra.mxu0 0.0
    %3327 = vmatprep.subr.mxu0 0.0
    %3328 = vmatpush2.msra.mxu0 0.0
    %3329 = vmatprep.subr.mxu0 0.0
    %3330 = vmatpush2.msra.mxu0 0.0
    %3331 = vmatprep.subr.mxu0 0.0
    %3332 = vmatpush2.msra.mxu0 0.0
    %3333 = vmatprep.subr.mxu0 0.0
    %3334 = vmatpush2.msra.mxu0 0.0
    %3335 = vmatprep.subr.mxu0 0.0
    %3336 = vmatpush2.msra.mxu0 0.0
    %3337 = vmatprep.subr.mxu0 0.0
    %3338 = vmatpush2.msra.mxu0 0.0
    %3339 = vmatprep.subr.mxu0 0.0
    %3340 = vmatpush2.msra.mxu0 0.0
    %3341 = vmatprep.subr.mxu0 0.0
    %3342 = vmatpush2.msra.mxu0 0.0
    %3343 = vmatprep.subr.mxu0 0.0
    %3344 = vmatpush2.msra.mxu0 0.0
    %3345 = vmatprep.subr.mxu0 0.0
    %3346 = vmatpush2.msra.mxu0 0.0
    %3347 = vmatprep.subr.mxu0 0.0
    %3348 = vmatpush2.msra.mxu0 0.0
    %3349 = vmatprep.subr.mxu0 0.0
    %3350 = vmatpush2.msra.mxu0 0.0
    %3351 = vmatprep.subr.mxu0 0.0
    %3352 = vmatpush2.msra.mxu0 0.0
    %3353 = vmatprep.mubr.f32.mxu0 0.0
    %3354 = vmatmul.mubr.f32.gmra.mxu0 %v109
    %v3355 = vpop.f32.mrf.mxu0
    %v3356 = vadd.f32 %v3074, %v3355
    %v3357 = vpop.f32.mrf.mxu0
    %3358 = vdwg.mxu0
    %v3360 = vsel %vm1249, %v2538, 0
    %v3363 = vsel %vm1249, %v2842, 0
    %3365 = vmatprep.subr.mxu0 0.0
    %3366 = vmatpush1.xpose.msra.mxu0 0.0
    %3367 = vmatprep.subr.mxu0 0.0
    %3368 = vmatpush1.xpose.msra.mxu0 0.0
    %3369 = vmatprep.subr.mxu0 0.0
    %3370 = vmatpush1.xpose.msra.mxu0 0.0
    %3371 = vmatprep.subr.mxu0 0.0
    %3372 = vmatpush1.xpose.msra.mxu0 0.0
    %3373 = vmatprep.subr.mxu0 0.0
    %3374 = vmatpush1.xpose.msra.mxu0 0.0
    %3375 = vmatprep.subr.mxu0 0.0
    %3376 = vmatpush1.xpose.msra.mxu0 0.0
    %3377 = vmatprep.subr.mxu0 0.0
    %3378 = vmatpush1.xpose.msra.mxu0 0.0
    %3379 = vmatprep.subr.mxu0 0.0
    %3380 = vmatpush1.xpose.msra.mxu0 0.0
    %3381 = vmatprep.subr.mxu0 0.0
    %3382 = vmatpush1.xpose.msra.mxu0 0.0
    %3383 = vmatprep.subr.mxu0 0.0
    %3384 = vmatpush1.xpose.msra.mxu0 0.0
    %3385 = vmatprep.subr.mxu0 0.0
    %3386 = vmatpush1.xpose.msra.mxu0 0.0
    %3387 = vmatprep.subr.mxu0 0.0
    %3388 = vmatpush1.xpose.msra.mxu0 0.0
    %3389 = vmatprep.subr.mxu0 0.0
    %3390 = vmatpush1.xpose.msra.mxu0 0.0
    %3391 = vmatprep.subr.mxu0 0.0
    %3392 = vmatpush1.xpose.msra.mxu0 0.0
    %3393 = vmatprep.subr.mxu0 0.0
    %3394 = vmatpush1.xpose.msra.mxu0 0.0
    %3395 = vmatprep.subr.mxu0 0.0
    %3396 = vmatpush1.xpose.msra.mxu0 %v3363
    %3397 = vmatprep.subr.mxu0 0.0
    %3398 = vmatpush2.xpose.msra.mxu0 0.0
    %3399 = vmatprep.subr.mxu0 0.0
    %3400 = vmatpush2.xpose.msra.mxu0 0.0
    %3401 = vmatprep.subr.mxu0 0.0
    %3402 = vmatpush2.xpose.msra.mxu0 0.0
    %3403 = vmatprep.subr.mxu0 0.0
    %3404 = vmatpush2.xpose.msra.mxu0 0.0
    %3405 = vmatprep.subr.mxu0 0.0
    %3406 = vmatpush2.xpose.msra.mxu0 0.0
    %3407 = vmatprep.subr.mxu0 0.0
    %3408 = vmatpush2.xpose.msra.mxu0 0.0
    %3409 = vmatprep.subr.mxu0 0.0
    %3410 = vmatpush2.xpose.msra.mxu0 0.0
    %3411 = vmatprep.subr.mxu0 0.0
    %3412 = vmatpush2.xpose.msra.mxu0 0.0
    %3413 = vmatprep.subr.mxu0 0.0
    %3414 = vmatpush2.xpose.msra.mxu0 0.0
    %3415 = vmatprep.subr.mxu0 0.0
    %3416 = vmatpush2.xpose.msra.mxu0 0.0
    %3417 = vmatprep.subr.mxu0 0.0
    %3418 = vmatpush2.xpose.msra.mxu0 0.0
    %3419 = vmatprep.subr.mxu0 0.0
    %3420 = vmatpush2.xpose.msra.mxu0 0.0
    %3421 = vmatprep.subr.mxu0 0.0
    %3422 = vmatpush2.xpose.msra.mxu0 0.0
    %3423 = vmatprep.subr.mxu0 0.0
    %3424 = vmatpush2.xpose.msra.mxu0 0.0
    %3425 = vmatprep.subr.mxu0 0.0
    %3426 = vmatpush2.xpose.msra.mxu0 0.0
    %3427 = vmatprep.subr.mxu0 0.0
    %3428 = vmatpush2.xpose.msra.mxu0 0.0
    %3429 = vmatprep.mubr.f32.mxu0 0.0
    %3430 = vmatmul.mubr.f32.gmra.mxu0 %v3360
    %v3431 = vpop.f32.mrf.mxu0
    %v3432 = vadd.f32 0.0, %v3431
    %v3433 = vpop.f32.mrf.mxu0
    %3434 = vdwg.mxu0
    %v3436 = vsel %vm1249, %v2608, 0
    %v3439 = vsel %vm1249, %v2912, 0
    %3441 = vmatprep.subr.mxu0 0.0
    %3442 = vmatpush1.xpose.msra.mxu0 0.0
    %3443 = vmatprep.subr.mxu0 0.0
    %3444 = vmatpush1.xpose.msra.mxu0 0.0
    %3445 = vmatprep.subr.mxu0 0.0
    %3446 = vmatpush1.xpose.msra.mxu0 0.0
    %3447 = vmatprep.subr.mxu0 0.0
    %3448 = vmatpush1.xpose.msra.mxu0 0.0
    %3449 = vmatprep.subr.mxu0 0.0
    %3450 = vmatpush1.xpose.msra.mxu0 0.0
    %3451 = vmatprep.subr.mxu0 0.0
    %3452 = vmatpush1.xpose.msra.mxu0 0.0
    %3453 = vmatprep.subr.mxu0 0.0
    %3454 = vmatpush1.xpose.msra.mxu0 0.0
    %3455 = vmatprep.subr.mxu0 0.0
    %3456 = vmatpush1.xpose.msra.mxu0 0.0
    %3457 = vmatprep.subr.mxu0 0.0
    %3458 = vmatpush1.xpose.msra.mxu0 0.0
    %3459 = vmatprep.subr.mxu0 0.0
    %3460 = vmatpush1.xpose.msra.mxu0 0.0
    %3461 = vmatprep.subr.mxu0 0.0
    %3462 = vmatpush1.xpose.msra.mxu0 0.0
    %3463 = vmatprep.subr.mxu0 0.0
    %3464 = vmatpush1.xpose.msra.mxu0 0.0
    %3465 = vmatprep.subr.mxu0 0.0
    %3466 = vmatpush1.xpose.msra.mxu0 0.0
    %3467 = vmatprep.subr.mxu0 0.0
    %3468 = vmatpush1.xpose.msra.mxu0 0.0
    %3469 = vmatprep.subr.mxu0 0.0
    %3470 = vmatpush1.xpose.msra.mxu0 0.0
    %3471 = vmatprep.subr.mxu0 0.0
    %3472 = vmatpush1.xpose.msra.mxu0 %v3439
    %3473 = vmatprep.subr.mxu0 0.0
    %3474 = vmatpush2.xpose.msra.mxu0 0.0
    %3475 = vmatprep.subr.mxu0 0.0
    %3476 = vmatpush2.xpose.msra.mxu0 0.0
    %3477 = vmatprep.subr.mxu0 0.0
    %3478 = vmatpush2.xpose.msra.mxu0 0.0
    %3479 = vmatprep.subr.mxu0 0.0
    %3480 = vmatpush2.xpose.msra.mxu0 0.0
    %3481 = vmatprep.subr.mxu0 0.0
    %3482 = vmatpush2.xpose.msra.mxu0 0.0
    %3483 = vmatprep.subr.mxu0 0.0
    %3484 = vmatpush2.xpose.msra.mxu0 0.0
    %3485 = vmatprep.subr.mxu0 0.0
    %3486 = vmatpush2.xpose.msra.mxu0 0.0
    %3487 = vmatprep.subr.mxu0 0.0
    %3488 = vmatpush2.xpose.msra.mxu0 0.0
    %3489 = vmatprep.subr.mxu0 0.0
    %3490 = vmatpush2.xpose.msra.mxu0 0.0
    %3491 = vmatprep.subr.mxu0 0.0
    %3492 = vmatpush2.xpose.msra.mxu0 0.0
    %3493 = vmatprep.subr.mxu0 0.0
    %3494 = vmatpush2.xpose.msra.mxu0 0.0
    %3495 = vmatprep.subr.mxu0 0.0
    %3496 = vmatpush2.xpose.msra.mxu0 0.0
    %3497 = vmatprep.subr.mxu0 0.0
    %3498 = vmatpush2.xpose.msra.mxu0 0.0
    %3499 = vmatprep.subr.mxu0 0.0
    %3500 = vmatpush2.xpose.msra.mxu0 0.0
    %3501 = vmatprep.subr.mxu0 0.0
    %3502 = vmatpush2.xpose.msra.mxu0 0.0
    %3503 = vmatprep.subr.mxu0 0.0
    %3504 = vmatpush2.xpose.msra.mxu0 0.0
    %3505 = vmatprep.mubr.f32.mxu0 0.0
    %3506 = vmatmul.mubr.f32.gmra.mxu0 %v3436
    %v3507 = vpop.f32.mrf.mxu0
    %v3508 = vadd.f32 0.0, %v3507
    %v3509 = vpop.f32.mrf.mxu0
    %3510 = vdwg.mxu0
    %v3512 = vsel %vm1249, %v2678, 0
    %v3515 = vsel %vm1249, %v2982, 0
    %3517 = vmatprep.subr.mxu0 0.0
    %3518 = vmatpush1.xpose.msra.mxu0 0.0
    %3519 = vmatprep.subr.mxu0 0.0
    %3520 = vmatpush1.xpose.msra.mxu0 0.0
    %3521 = vmatprep.subr.mxu0 0.0
    %3522 = vmatpush1.xpose.msra.mxu0 0.0
    %3523 = vmatprep.subr.mxu0 0.0
    %3524 = vmatpush1.xpose.msra.mxu0 0.0
    %3525 = vmatprep.subr.mxu0 0.0
    %3526 = vmatpush1.xpose.msra.mxu0 0.0
    %3527 = vmatprep.subr.mxu0 0.0
    %3528 = vmatpush1.xpose.msra.mxu0 0.0
    %3529 = vmatprep.subr.mxu0 0.0
    %3530 = vmatpush1.xpose.msra.mxu0 0.0
    %3531 = vmatprep.subr.mxu0 0.0
    %3532 = vmatpush1.xpose.msra.mxu0 0.0
    %3533 = vmatprep.subr.mxu0 0.0
    %3534 = vmatpush1.xpose.msra.mxu0 0.0
    %3535 = vmatprep.subr.mxu0 0.0
    %3536 = vmatpush1.xpose.msra.mxu0 0.0
    %3537 = vmatprep.subr.mxu0 0.0
    %3538 = vmatpush1.xpose.msra.mxu0 0.0
    %3539 = vmatprep.subr.mxu0 0.0
    %3540 = vmatpush1.xpose.msra.mxu0 0.0
    %3541 = vmatprep.subr.mxu0 0.0
    %3542 = vmatpush1.xpose.msra.mxu0 0.0
    %3543 = vmatprep.subr.mxu0 0.0
    %3544 = vmatpush1.xpose.msra.mxu0 0.0
    %3545 = vmatprep.subr.mxu0 0.0
    %3546 = vmatpush1.xpose.msra.mxu0 0.0
    %3547 = vmatprep.subr.mxu0 0.0
    %3548 = vmatpush1.xpose.msra.mxu0 %v3515
    %3549 = vmatprep.subr.mxu0 0.0
    %3550 = vmatpush2.xpose.msra.mxu0 0.0
    %3551 = vmatprep.subr.mxu0 0.0
    %3552 = vmatpush2.xpose.msra.mxu0 0.0
    %3553 = vmatprep.subr.mxu0 0.0
    %3554 = vmatpush2.xpose.msra.mxu0 0.0
    %3555 = vmatprep.subr.mxu0 0.0
    %3556 = vmatpush2.xpose.msra.mxu0 0.0
    %3557 = vmatprep.subr.mxu0 0.0
    %3558 = vmatpush2.xpose.msra.mxu0 0.0
    %3559 = vmatprep.subr.mxu0 0.0
    %3560 = vmatpush2.xpose.msra.mxu0 0.0
    %3561 = vmatprep.subr.mxu0 0.0
    %3562 = vmatpush2.xpose.msra.mxu0 0.0
    %3563 = vmatprep.subr.mxu0 0.0
    %3564 = vmatpush2.xpose.msra.mxu0 0.0
    %3565 = vmatprep.subr.mxu0 0.0
    %3566 = vmatpush2.xpose.msra.mxu0 0.0
    %3567 = vmatprep.subr.mxu0 0.0
    %3568 = vmatpush2.xpose.msra.mxu0 0.0
    %3569 = vmatprep.subr.mxu0 0.0
    %3570 = vmatpush2.xpose.msra.mxu0 0.0
    %3571 = vmatprep.subr.mxu0 0.0
    %3572 = vmatpush2.xpose.msra.mxu0 0.0
    %3573 = vmatprep.subr.mxu0 0.0
    %3574 = vmatpush2.xpose.msra.mxu0 0.0
    %3575 = vmatprep.subr.mxu0 0.0
    %3576 = vmatpush2.xpose.msra.mxu0 0.0
    %3577 = vmatprep.subr.mxu0 0.0
    %3578 = vmatpush2.xpose.msra.mxu0 0.0
    %3579 = vmatprep.subr.mxu0 0.0
    %3580 = vmatpush2.xpose.msra.mxu0 0.0
    %3581 = vmatprep.mubr.f32.mxu0 0.0
    %3582 = vmatmul.mubr.f32.gmra.mxu0 %v3512
    %v3583 = vpop.f32.mrf.mxu0
    %v3584 = vadd.f32 0.0, %v3583
    %v3585 = vpop.f32.mrf.mxu0
    %3586 = vdwg.mxu0
    %v3588 = vsel %vm1249, %v2748, 0
    %v3591 = vsel %vm1249, %v3052, 0
    %3593 = vmatprep.subr.mxu0 0.0
    %3594 = vmatpush1.xpose.msra.mxu0 0.0
    %3595 = vmatprep.subr.mxu0 0.0
    %3596 = vmatpush1.xpose.msra.mxu0 0.0
    %3597 = vmatprep.subr.mxu0 0.0
    %3598 = vmatpush1.xpose.msra.mxu0 0.0
    %3599 = vmatprep.subr.mxu0 0.0
    %3600 = vmatpush1.xpose.msra.mxu0 0.0
    %3601 = vmatprep.subr.mxu0 0.0
    %3602 = vmatpush1.xpose.msra.mxu0 0.0
    %3603 = vmatprep.subr.mxu0 0.0
    %3604 = vmatpush1.xpose.msra.mxu0 0.0
    %3605 = vmatprep.subr.mxu0 0.0
    %3606 = vmatpush1.xpose.msra.mxu0 0.0
    %3607 = vmatprep.subr.mxu0 0.0
    %3608 = vmatpush1.xpose.msra.mxu0 0.0
    %3609 = vmatprep.subr.mxu0 0.0
    %3610 = vmatpush1.xpose.msra.mxu0 0.0
    %3611 = vmatprep.subr.mxu0 0.0
    %3612 = vmatpush1.xpose.msra.mxu0 0.0
    %3613 = vmatprep.subr.mxu0 0.0
    %3614 = vmatpush1.xpose.msra.mxu0 0.0
    %3615 = vmatprep.subr.mxu0 0.0
    %3616 = vmatpush1.xpose.msra.mxu0 0.0
    %3617 = vmatprep.subr.mxu0 0.0
    %3618 = vmatpush1.xpose.msra.mxu0 0.0
    %3619 = vmatprep.subr.mxu0 0.0
    %3620 = vmatpush1.xpose.msra.mxu0 0.0
    %3621 = vmatprep.subr.mxu0 0.0
    %3622 = vmatpush1.xpose.msra.mxu0 0.0
    %3623 = vmatprep.subr.mxu0 0.0
    %3624 = vmatpush1.xpose.msra.mxu0 %v3591
    %3625 = vmatprep.subr.mxu0 0.0
    %3626 = vmatpush2.xpose.msra.mxu0 0.0
    %3627 = vmatprep.subr.mxu0 0.0
    %3628 = vmatpush2.xpose.msra.mxu0 0.0
    %3629 = vmatprep.subr.mxu0 0.0
    %3630 = vmatpush2.xpose.msra.mxu0 0.0
    %3631 = vmatprep.subr.mxu0 0.0
    %3632 = vmatpush2.xpose.msra.mxu0 0.0
    %3633 = vmatprep.subr.mxu0 0.0
    %3634 = vmatpush2.xpose.msra.mxu0 0.0
    %3635 = vmatprep.subr.mxu0 0.0
    %3636 = vmatpush2.xpose.msra.mxu0 0.0
    %3637 = vmatprep.subr.mxu0 0.0
    %3638 = vmatpush2.xpose.msra.mxu0 0.0
    %3639 = vmatprep.subr.mxu0 0.0
    %3640 = vmatpush2.xpose.msra.mxu0 0.0
    %3641 = vmatprep.subr.mxu0 0.0
    %3642 = vmatpush2.xpose.msra.mxu0 0.0
    %3643 = vmatprep.subr.mxu0 0.0
    %3644 = vmatpush2.xpose.msra.mxu0 0.0
    %3645 = vmatprep.subr.mxu0 0.0
    %3646 = vmatpush2.xpose.msra.mxu0 0.0
    %3647 = vmatprep.subr.mxu0 0.0
    %3648 = vmatpush2.xpose.msra.mxu0 0.0
    %3649 = vmatprep.subr.mxu0 0.0
    %3650 = vmatpush2.xpose.msra.mxu0 0.0
    %3651 = vmatprep.subr.mxu0 0.0
    %3652 = vmatpush2.xpose.msra.mxu0 0.0
    %3653 = vmatprep.subr.mxu0 0.0
    %3654 = vmatpush2.xpose.msra.mxu0 0.0
    %3655 = vmatprep.subr.mxu0 0.0
    %3656 = vmatpush2.xpose.msra.mxu0 0.0
    %3657 = vmatprep.mubr.f32.mxu0 0.0
    %3658 = vmatmul.mubr.f32.gmra.mxu0 %v3588
    %v3659 = vpop.f32.mrf.mxu0
    %v3660 = vadd.f32 0.0, %v3659
    %v3661 = vpop.f32.mrf.mxu0
    %3662 = vdwg.mxu0
    %v3663 = vmul.f32 %v3432, 0.17677669
    %v3664 = vmul.f32 %v3508, 0.17677669
    %v3665 = vmul.f32 %v3584, 0.17677669
    %v3666 = vmul.f32 %v3660, 0.17677669
    %v3667 = vsel %vm1558, %v3663, -inf
    %3668 = vmax.xlane.f32.xlu0 %v3667
    %v3669 = vpop.xlane.xlu0 %3668
    %v3670 = vsel %vm1558, %v3664, -inf
    %3671 = vmax.xlane.f32.xlu0 %v3670
    %v3672 = vpop.xlane.xlu0 %3671
    %v3673 = vsel %vm1558, %v3665, -inf
    %3674 = vmax.xlane.f32.xlu0 %v3673
    %v3675 = vpop.xlane.xlu0 %3674
    %v3676 = vsel %vm1558, %v3666, -inf
    %3677 = vmax.xlane.f32.xlu0 %v3676
    %v3678 = vpop.xlane.xlu0 %3677
    %v3679 = vsub.f32 %v3663, %v3669
    %v3680 = vsub.f32 %v3664, %v3672
    %v3681 = vsub.f32 %v3665, %v3675
    %v3682 = vsub.f32 %v3666, %v3678
    %v3683 = vmul.f32 %v3679, 1.442695
    %v3684 = vpow.pop %v3683
    %v3685 = vmul.f32 %v3680, 1.442695
    %v3686 = vpow.pop %v3685
    %v3687 = vmul.f32 %v3681, 1.442695
    %v3688 = vpow.pop %v3687
    %v3689 = vmul.f32 %v3682, 1.442695
    %v3690 = vpow.pop %v3689
    %v3691 = vsel %vm1558, %v3684, 0.0
    %3692 = vadd.xlane.f32.xlu0 %v3691
    %v3693 = vpop.xlane.xlu0 %3692
    %v3694 = vsel %vm1558, %v3686, 0.0
    %3695 = vadd.xlane.f32.xlu0 %v3694
    %v3696 = vpop.xlane.xlu0 %3695
    %v3697 = vsel %vm1558, %v3688, 0.0
    %3698 = vadd.xlane.f32.xlu0 %v3697
    %v3699 = vpop.xlane.xlu0 %3698
    %v3700 = vsel %vm1558, %v3690, 0.0
    %3701 = vadd.xlane.f32.xlu0 %v3700
    %v3702 = vpop.xlane.xlu0 %3701
    %v3703 = vrcp.pop %v3693
    %v3704 = vrcp.pop %v3696
    %v3705 = vrcp.pop %v3699
    %v3706 = vrcp.pop %v3702
    %v3707 = vmul.f32 %v3684, %v3703
    %v3708 = vmul.f32 %v3686, %v3704
    %v3709 = vmul.f32 %v3688, %v3705
    %v3710 = vmul.f32 %v3690, %v3706
    %v3712 = vsel %vm1558, %v3707, 0
    %3714 = vmatprep.subr.mxu0 0.0
    %3715 = vmatpush1.msra.mxu0 0.0
    %3716 = vmatprep.subr.mxu0 0.0
    %3717 = vmatpush1.msra.mxu0 0.0
    %3718 = vmatprep.subr.mxu0 0.0
    %3719 = vmatpush1.msra.mxu0 0.0
    %3720 = vmatprep.subr.mxu0 0.0
    %3721 = vmatpush1.msra.mxu0 0.0
    %3722 = vmatprep.subr.mxu0 0.0
    %3723 = vmatpush1.msra.mxu0 0.0
    %3724 = vmatprep.subr.mxu0 0.0
    %3725 = vmatpush1.msra.mxu0 0.0
    %3726 = vmatprep.subr.mxu0 0.0
    %3727 = vmatpush1.msra.mxu0 0.0
    %3728 = vmatprep.subr.mxu0 0.0
    %3729 = vmatpush1.msra.mxu0 0.0
    %3730 = vmatprep.subr.mxu0 0.0
    %3731 = vmatpush1.msra.mxu0 0.0
    %3732 = vmatprep.subr.mxu0 0.0
    %3733 = vmatpush1.msra.mxu0 0.0
    %3734 = vmatprep.subr.mxu0 0.0
    %3735 = vmatpush1.msra.mxu0 0.0
    %3736 = vmatprep.subr.mxu0 0.0
    %3737 = vmatpush1.msra.mxu0 0.0
    %3738 = vmatprep.subr.mxu0 0.0
    %3739 = vmatpush1.msra.mxu0 0.0
    %3740 = vmatprep.subr.mxu0 0.0
    %3741 = vmatpush1.msra.mxu0 0.0
    %3742 = vmatprep.subr.mxu0 0.0
    %3743 = vmatpush1.msra.mxu0 0.0
    %3744 = vmatprep.subr.mxu0 0.0
    %3745 = vmatpush1.msra.mxu0 %v3146
    %3746 = vmatprep.subr.mxu0 0.0
    %3747 = vmatpush2.msra.mxu0 0.0
    %3748 = vmatprep.subr.mxu0 0.0
    %3749 = vmatpush2.msra.mxu0 0.0
    %3750 = vmatprep.subr.mxu0 0.0
    %3751 = vmatpush2.msra.mxu0 0.0
    %3752 = vmatprep.subr.mxu0 0.0
    %3753 = vmatpush2.msra.mxu0 0.0
    %3754 = vmatprep.subr.mxu0 0.0
    %3755 = vmatpush2.msra.mxu0 0.0
    %3756 = vmatprep.subr.mxu0 0.0
    %3757 = vmatpush2.msra.mxu0 0.0
    %3758 = vmatprep.subr.mxu0 0.0
    %3759 = vmatpush2.msra.mxu0 0.0
    %3760 = vmatprep.subr.mxu0 0.0
    %3761 = vmatpush2.msra.mxu0 0.0
    %3762 = vmatprep.subr.mxu0 0.0
    %3763 = vmatpush2.msra.mxu0 0.0
    %3764 = vmatprep.subr.mxu0 0.0
    %3765 = vmatpush2.msra.mxu0 0.0
    %3766 = vmatprep.subr.mxu0 0.0
    %3767 = vmatpush2.msra.mxu0 0.0
    %3768 = vmatprep.subr.mxu0 0.0
    %3769 = vmatpush2.msra.mxu0 0.0
    %3770 = vmatprep.subr.mxu0 0.0
    %3771 = vmatpush2.msra.mxu0 0.0
    %3772 = vmatprep.subr.mxu0 0.0
    %3773 = vmatpush2.msra.mxu0 0.0
    %3774 = vmatprep.subr.mxu0 0.0
    %3775 = vmatpush2.msra.mxu0 0.0
    %3776 = vmatprep.subr.mxu0 0.0
    %3777 = vmatpush2.msra.mxu0 0.0
    %3778 = vmatprep.mubr.f32.mxu0 0.0
    %3779 = vmatmul.mubr.f32.gmra.mxu0 %v3712
    %v3780 = vpop.f32.mrf.mxu0
    %v3781 = vadd.f32 0.0, %v3780
    %v3782 = vpop.f32.mrf.mxu0
    %3783 = vdwg.mxu0
    %v3785 = vsel %vm1558, %v3708, 0
    %3787 = vmatprep.subr.mxu0 0.0
    %3788 = vmatpush1.msra.mxu0 0.0
    %3789 = vmatprep.subr.mxu0 0.0
    %3790 = vmatpush1.msra.mxu0 0.0
    %3791 = vmatprep.subr.mxu0 0.0
    %3792 = vmatpush1.msra.mxu0 0.0
    %3793 = vmatprep.subr.mxu0 0.0
    %3794 = vmatpush1.msra.mxu0 0.0
    %3795 = vmatprep.subr.mxu0 0.0
    %3796 = vmatpush1.msra.mxu0 0.0
    %3797 = vmatprep.subr.mxu0 0.0
    %3798 = vmatpush1.msra.mxu0 0.0
    %3799 = vmatprep.subr.mxu0 0.0
    %3800 = vmatpush1.msra.mxu0 0.0
    %3801 = vmatprep.subr.mxu0 0.0
    %3802 = vmatpush1.msra.mxu0 0.0
    %3803 = vmatprep.subr.mxu0 0.0
    %3804 = vmatpush1.msra.mxu0 0.0
    %3805 = vmatprep.subr.mxu0 0.0
    %3806 = vmatpush1.msra.mxu0 0.0
    %3807 = vmatprep.subr.mxu0 0.0
    %3808 = vmatpush1.msra.mxu0 0.0
    %3809 = vmatprep.subr.mxu0 0.0
    %3810 = vmatpush1.msra.mxu0 0.0
    %3811 = vmatprep.subr.mxu0 0.0
    %3812 = vmatpush1.msra.mxu0 0.0
    %3813 = vmatprep.subr.mxu0 0.0
    %3814 = vmatpush1.msra.mxu0 0.0
    %3815 = vmatprep.subr.mxu0 0.0
    %3816 = vmatpush1.msra.mxu0 0.0
    %3817 = vmatprep.subr.mxu0 0.0
    %3818 = vmatpush1.msra.mxu0 %v3216
    %3819 = vmatprep.subr.mxu0 0.0
    %3820 = vmatpush2.msra.mxu0 0.0
    %3821 = vmatprep.subr.mxu0 0.0
    %3822 = vmatpush2.msra.mxu0 0.0
    %3823 = vmatprep.subr.mxu0 0.0
    %3824 = vmatpush2.msra.mxu0 0.0
    %3825 = vmatprep.subr.mxu0 0.0
    %3826 = vmatpush2.msra.mxu0 0.0
    %3827 = vmatprep.subr.mxu0 0.0
    %3828 = vmatpush2.msra.mxu0 0.0
    %3829 = vmatprep.subr.mxu0 0.0
    %3830 = vmatpush2.msra.mxu0 0.0
    %3831 = vmatprep.subr.mxu0 0.0
    %3832 = vmatpush2.msra.mxu0 0.0
    %3833 = vmatprep.subr.mxu0 0.0
    %3834 = vmatpush2.msra.mxu0 0.0
    %3835 = vmatprep.subr.mxu0 0.0
    %3836 = vmatpush2.msra.mxu0 0.0
    %3837 = vmatprep.subr.mxu0 0.0
    %3838 = vmatpush2.msra.mxu0 0.0
    %3839 = vmatprep.subr.mxu0 0.0
    %3840 = vmatpush2.msra.mxu0 0.0
    %3841 = vmatprep.subr.mxu0 0.0
    %3842 = vmatpush2.msra.mxu0 0.0
    %3843 = vmatprep.subr.mxu0 0.0
    %3844 = vmatpush2.msra.mxu0 0.0
    %3845 = vmatprep.subr.mxu0 0.0
    %3846 = vmatpush2.msra.mxu0 0.0
    %3847 = vmatprep.subr.mxu0 0.0
    %3848 = vmatpush2.msra.mxu0 0.0
    %3849 = vmatprep.subr.mxu0 0.0
    %3850 = vmatpush2.msra.mxu0 0.0
    %3851 = vmatprep.mubr.f32.mxu0 0.0
    %3852 = vmatmul.mubr.f32.gmra.mxu0 %v3785
    %v3853 = vpop.f32.mrf.mxu0
    %v3854 = vadd.f32 0.0, %v3853
    %v3855 = vpop.f32.mrf.mxu0
    %3856 = vdwg.mxu0
    %v3858 = vsel %vm1558, %v3709, 0
    %3860 = vmatprep.subr.mxu0 0.0
    %3861 = vmatpush1.msra.mxu0 0.0
    %3862 = vmatprep.subr.mxu0 0.0
    %3863 = vmatpush1.msra.mxu0 0.0
    %3864 = vmatprep.subr.mxu0 0.0
    %3865 = vmatpush1.msra.mxu0 0.0
    %3866 = vmatprep.subr.mxu0 0.0
    %3867 = vmatpush1.msra.mxu0 0.0
    %3868 = vmatprep.subr.mxu0 0.0
    %3869 = vmatpush1.msra.mxu0 0.0
    %3870 = vmatprep.subr.mxu0 0.0
    %3871 = vmatpush1.msra.mxu0 0.0
    %3872 = vmatprep.subr.mxu0 0.0
    %3873 = vmatpush1.msra.mxu0 0.0
    %3874 = vmatprep.subr.mxu0 0.0
    %3875 = vmatpush1.msra.mxu0 0.0
    %3876 = vmatprep.subr.mxu0 0.0
    %3877 = vmatpush1.msra.mxu0 0.0
    %3878 = vmatprep.subr.mxu0 0.0
    %3879 = vmatpush1.msra.mxu0 0.0
    %3880 = vmatprep.subr.mxu0 0.0
    %3881 = vmatpush1.msra.mxu0 0.0
    %3882 = vmatprep.subr.mxu0 0.0
    %3883 = vmatpush1.msra.mxu0 0.0
    %3884 = vmatprep.subr.mxu0 0.0
    %3885 = vmatpush1.msra.mxu0 0.0
    %3886 = vmatprep.subr.mxu0 0.0
    %3887 = vmatpush1.msra.mxu0 0.0
    %3888 = vmatprep.subr.mxu0 0.0
    %3889 = vmatpush1.msra.mxu0 0.0
    %3890 = vmatprep.subr.mxu0 0.0
    %3891 = vmatpush1.msra.mxu0 %v3286
    %3892 = vmatprep.subr.mxu0 0.0
    %3893 = vmatpush2.msra.mxu0 0.0
    %3894 = vmatprep.subr.mxu0 0.0
    %3895 = vmatpush2.msra.mxu0 0.0
    %3896 = vmatprep.subr.mxu0 0.0
    %3897 = vmatpush2.msra.mxu0 0.0
    %3898 = vmatprep.subr.mxu0 0.0
    %3899 = vmatpush2.msra.mxu0 0.0
    %3900 = vmatprep.subr.mxu0 0.0
    %3901 = vmatpush2.msra.mxu0 0.0
    %3902 = vmatprep.subr.mxu0 0.0
    %3903 = vmatpush2.msra.mxu0 0.0
    %3904 = vmatprep.subr.mxu0 0.0
    %3905 = vmatpush2.msra.mxu0 0.0
    %3906 = vmatprep.subr.mxu0 0.0
    %3907 = vmatpush2.msra.mxu0 0.0
    %3908 = vmatprep.subr.mxu0 0.0
    %3909 = vmatpush2.msra.mxu0 0.0
    %3910 = vmatprep.subr.mxu0 0.0
    %3911 = vmatpush2.msra.mxu0 0.0
    %3912 = vmatprep.subr.mxu0 0.0
    %3913 = vmatpush2.msra.mxu0 0.0
    %3914 = vmatprep.subr.mxu0 0.0
    %3915 = vmatpush2.msra.mxu0 0.0
    %3916 = vmatprep.subr.mxu0 0.0
    %3917 = vmatpush2.msra.mxu0 0.0
    %3918 = vmatprep.subr.mxu0 0.0
    %3919 = vmatpush2.msra.mxu0 0.0
    %3920 = vmatprep.subr.mxu0 0.0
    %3921 = vmatpush2.msra.mxu0 0.0
    %3922 = vmatprep.subr.mxu0 0.0
    %3923 = vmatpush2.msra.mxu0 0.0
    %3924 = vmatprep.mubr.f32.mxu0 0.0
    %3925 = vmatmul.mubr.f32.gmra.mxu0 %v3858
    %v3926 = vpop.f32.mrf.mxu0
    %v3927 = vadd.f32 0.0, %v3926
    %v3928 = vpop.f32.mrf.mxu0
    %3929 = vdwg.mxu0
    %v3931 = vsel %vm1558, %v3710, 0
    %3933 = vmatprep.subr.mxu0 0.0
    %3934 = vmatpush1.msra.mxu0 0.0
    %3935 = vmatprep.subr.mxu0 0.0
    %3936 = vmatpush1.msra.mxu0 0.0
    %3937 = vmatprep.subr.mxu0 0.0
    %3938 = vmatpush1.msra.mxu0 0.0
    %3939 = vmatprep.subr.mxu0 0.0
    %3940 = vmatpush1.msra.mxu0 0.0
    %3941 = vmatprep.subr.mxu0 0.0
    %3942 = vmatpush1.msra.mxu0 0.0
    %3943 = vmatprep.subr.mxu0 0.0
    %3944 = vmatpush1.msra.mxu0 0.0
    %3945 = vmatprep.subr.mxu0 0.0
    %3946 = vmatpush1.msra.mxu0 0.0
    %3947 = vmatprep.subr.mxu0 0.0
    %3948 = vmatpush1.msra.mxu0 0.0
    %3949 = vmatprep.subr.mxu0 0.0
    %3950 = vmatpush1.msra.mxu0 0.0
    %3951 = vmatprep.subr.mxu0 0.0
    %3952 = vmatpush1.msra.mxu0 0.0
    %3953 = vmatprep.subr.mxu0 0.0
    %3954 = vmatpush1.msra.mxu0 0.0
    %3955 = vmatprep.subr.mxu0 0.0
    %3956 = vmatpush1.msra.mxu0 0.0
    %3957 = vmatprep.subr.mxu0 0.0
    %3958 = vmatpush1.msra.mxu0 0.0
    %3959 = vmatprep.subr.mxu0 0.0
    %3960 = vmatpush1.msra.mxu0 0.0
    %3961 = vmatprep.subr.mxu0 0.0
    %3962 = vmatpush1.msra.mxu0 0.0
    %3963 = vmatprep.subr.mxu0 0.0
    %3964 = vmatpush1.msra.mxu0 %v3356
    %3965 = vmatprep.subr.mxu0 0.0
    %3966 = vmatpush2.msra.mxu0 0.0
    %3967 = vmatprep.subr.mxu0 0.0
    %3968 = vmatpush2.msra.mxu0 0.0
    %3969 = vmatprep.subr.mxu0 0.0
    %3970 = vmatpush2.msra.mxu0 0.0
    %3971 = vmatprep.subr.mxu0 0.0
    %3972 = vmatpush2.msra.mxu0 0.0
    %3973 = vmatprep.subr.mxu0 0.0
    %3974 = vmatpush2.msra.mxu0 0.0
    %3975 = vmatprep.subr.mxu0 0.0
    %3976 = vmatpush2.msra.mxu0 0.0
    %3977 = vmatprep.subr.mxu0 0.0
    %3978 = vmatpush2.msra.mxu0 0.0
    %3979 = vmatprep.subr.mxu0 0.0
    %3980 = vmatpush2.msra.mxu0 0.0
    %3981 = vmatprep.subr.mxu0 0.0
    %3982 = vmatpush2.msra.mxu0 0.0
    %3983 = vmatprep.subr.mxu0 0.0
    %3984 = vmatpush2.msra.mxu0 0.0
    %3985 = vmatprep.subr.mxu0 0.0
    %3986 = vmatpush2.msra.mxu0 0.0
    %3987 = vmatprep.subr.mxu0 0.0
    %3988 = vmatpush2.msra.mxu0 0.0
    %3989 = vmatprep.subr.mxu0 0.0
    %3990 = vmatpush2.msra.mxu0 0.0
    %3991 = vmatprep.subr.mxu0 0.0
    %3992 = vmatpush2.msra.mxu0 0.0
    %3993 = vmatprep.subr.mxu0 0.0
    %3994 = vmatpush2.msra.mxu0 0.0
    %3995 = vmatprep.subr.mxu0 0.0
    %3996 = vmatpush2.msra.mxu0 0.0
    %3997 = vmatprep.mubr.f32.mxu0 0.0
    %3998 = vmatmul.mubr.f32.gmra.mxu0 %v3931
    %v3999 = vpop.f32.mrf.mxu0
    %v4000 = vadd.f32 0.0, %v3999
    %v4001 = vpop.f32.mrf.mxu0
    %4002 = vdwg.mxu0
    %v4004 = vsel %vm1249, %v3781, 0
    %4006 = vmatprep.subr.mxu0 0.0
    %4007 = vmatpush1.msra.mxu0 0.0
    %4008 = vmatprep.subr.mxu0 0.0
    %4009 = vmatpush1.msra.mxu0 0.0
    %4010 = vmatprep.subr.mxu0 0.0
    %4011 = vmatpush1.msra.mxu0 0.0
    %4012 = vmatprep.subr.mxu0 0.0
    %4013 = vmatpush1.msra.mxu0 0.0
    %4014 = vmatprep.subr.mxu0 0.0
    %4015 = vmatpush1.msra.mxu0 0.0
    %4016 = vmatprep.subr.mxu0 0.0
    %4017 = vmatpush1.msra.mxu0 0.0
    %4018 = vmatprep.subr.mxu0 0.0
    %4019 = vmatpush1.msra.mxu0 0.0
    %4020 = vmatprep.subr.mxu0 0.0
    %4021 = vmatpush1.msra.mxu0 0.0
    %4022 = vmatprep.subr.mxu0 0.0
    %4023 = vmatpush1.msra.mxu0 0.0
    %4024 = vmatprep.subr.mxu0 0.0
    %4025 = vmatpush1.msra.mxu0 0.0
    %4026 = vmatprep.subr.mxu0 0.0
    %4027 = vmatpush1.msra.mxu0 0.0
    %4028 = vmatprep.subr.mxu0 0.0
    %4029 = vmatpush1.msra.mxu0 0.0
    %4030 = vmatprep.subr.mxu0 0.0
    %4031 = vmatpush1.msra.mxu0 %v2434
    %4032 = vmatprep.subr.mxu0 0.0
    %4033 = vmatpush1.msra.mxu0 %v2433
    %4034 = vmatprep.subr.mxu0 0.0
    %4035 = vmatpush1.msra.mxu0 %v2432
    %4036 = vmatprep.subr.mxu0 0.0
    %4037 = vmatpush1.msra.mxu0 %v2431
    %4038 = vmatprep.subr.mxu0 0.0
    %4039 = vmatpush2.msra.mxu0 0.0
    %4040 = vmatprep.subr.mxu0 0.0
    %4041 = vmatpush2.msra.mxu0 0.0
    %4042 = vmatprep.subr.mxu0 0.0
    %4043 = vmatpush2.msra.mxu0 0.0
    %4044 = vmatprep.subr.mxu0 0.0
    %4045 = vmatpush2.msra.mxu0 0.0
    %4046 = vmatprep.subr.mxu0 0.0
    %4047 = vmatpush2.msra.mxu0 0.0
    %4048 = vmatprep.subr.mxu0 0.0
    %4049 = vmatpush2.msra.mxu0 0.0
    %4050 = vmatprep.subr.mxu0 0.0
    %4051 = vmatpush2.msra.mxu0 0.0
    %4052 = vmatprep.subr.mxu0 0.0
    %4053 = vmatpush2.msra.mxu0 0.0
    %4054 = vmatprep.subr.mxu0 0.0
    %4055 = vmatpush2.msra.mxu0 0.0
    %4056 = vmatprep.subr.mxu0 0.0
    %4057 = vmatpush2.msra.mxu0 0.0
    %4058 = vmatprep.subr.mxu0 0.0
    %4059 = vmatpush2.msra.mxu0 0.0
    %4060 = vmatprep.subr.mxu0 0.0
    %4061 = vmatpush2.msra.mxu0 0.0
    %4062 = vmatprep.subr.mxu0 0.0
    %4063 = vmatpush2.msra.mxu0 0.0
    %4064 = vmatprep.subr.mxu0 0.0
    %4065 = vmatpush2.msra.mxu0 0.0
    %4066 = vmatprep.subr.mxu0 0.0
    %4067 = vmatpush2.msra.mxu0 0.0
    %4068 = vmatprep.subr.mxu0 0.0
    %4069 = vmatpush2.msra.mxu0 0.0
    %4070 = vmatprep.mubr.f32.mxu0 0.0
    %4071 = vmatmul.mubr.f32.gmra.mxu0 %v4004
    %v4072 = vpop.f32.mrf.mxu0
    %v4073 = vadd.f32 0.0, %v4072
    %v4074 = vpop.f32.mrf.mxu0
    %4075 = vdwg.mxu0
    %v4077 = vsel %vm1249, %v3854, 0
    %4079 = vmatprep.subr.mxu0 0.0
    %4080 = vmatpush1.msra.mxu0 0.0
    %4081 = vmatprep.subr.mxu0 0.0
    %4082 = vmatpush1.msra.mxu0 0.0
    %4083 = vmatprep.subr.mxu0 0.0
    %4084 = vmatpush1.msra.mxu0 0.0
    %4085 = vmatprep.subr.mxu0 0.0
    %4086 = vmatpush1.msra.mxu0 0.0
    %4087 = vmatprep.subr.mxu0 0.0
    %4088 = vmatpush1.msra.mxu0 0.0
    %4089 = vmatprep.subr.mxu0 0.0
    %4090 = vmatpush1.msra.mxu0 0.0
    %4091 = vmatprep.subr.mxu0 0.0
    %4092 = vmatpush1.msra.mxu0 0.0
    %4093 = vmatprep.subr.mxu0 0.0
    %4094 = vmatpush1.msra.mxu0 0.0
    %4095 = vmatprep.subr.mxu0 0.0
    %4096 = vmatpush1.msra.mxu0 0.0
    %4097 = vmatprep.subr.mxu0 0.0
    %4098 = vmatpush1.msra.mxu0 0.0
    %4099 = vmatprep.subr.mxu0 0.0
    %4100 = vmatpush1.msra.mxu0 0.0
    %4101 = vmatprep.subr.mxu0 0.0
    %4102 = vmatpush1.msra.mxu0 0.0
    %4103 = vmatprep.subr.mxu0 0.0
    %4104 = vmatpush1.msra.mxu0 %v2438
    %4105 = vmatprep.subr.mxu0 0.0
    %4106 = vmatpush1.msra.mxu0 %v2437
    %4107 = vmatprep.subr.mxu0 0.0
    %4108 = vmatpush1.msra.mxu0 %v2436
    %4109 = vmatprep.subr.mxu0 0.0
    %4110 = vmatpush1.msra.mxu0 %v2435
    %4111 = vmatprep.subr.mxu0 0.0
    %4112 = vmatpush2.msra.mxu0 0.0
    %4113 = vmatprep.subr.mxu0 0.0
    %4114 = vmatpush2.msra.mxu0 0.0
    %4115 = vmatprep.subr.mxu0 0.0
    %4116 = vmatpush2.msra.mxu0 0.0
    %4117 = vmatprep.subr.mxu0 0.0
    %4118 = vmatpush2.msra.mxu0 0.0
    %4119 = vmatprep.subr.mxu0 0.0
    %4120 = vmatpush2.msra.mxu0 0.0
    %4121 = vmatprep.subr.mxu0 0.0
    %4122 = vmatpush2.msra.mxu0 0.0
    %4123 = vmatprep.subr.mxu0 0.0
    %4124 = vmatpush2.msra.mxu0 0.0
    %4125 = vmatprep.subr.mxu0 0.0
    %4126 = vmatpush2.msra.mxu0 0.0
    %4127 = vmatprep.subr.mxu0 0.0
    %4128 = vmatpush2.msra.mxu0 0.0
    %4129 = vmatprep.subr.mxu0 0.0
    %4130 = vmatpush2.msra.mxu0 0.0
    %4131 = vmatprep.subr.mxu0 0.0
    %4132 = vmatpush2.msra.mxu0 0.0
    %4133 = vmatprep.subr.mxu0 0.0
    %4134 = vmatpush2.msra.mxu0 0.0
    %4135 = vmatprep.subr.mxu0 0.0
    %4136 = vmatpush2.msra.mxu0 0.0
    %4137 = vmatprep.subr.mxu0 0.0
    %4138 = vmatpush2.msra.mxu0 0.0
    %4139 = vmatprep.subr.mxu0 0.0
    %4140 = vmatpush2.msra.mxu0 0.0
    %4141 = vmatprep.subr.mxu0 0.0
    %4142 = vmatpush2.msra.mxu0 0.0
    %4143 = vmatprep.mubr.f32.mxu0 0.0
    %4144 = vmatmul.mubr.f32.gmra.mxu0 %v4077
    %v4145 = vpop.f32.mrf.mxu0
    %v4146 = vadd.f32 0.0, %v4145
    %v4147 = vpop.f32.mrf.mxu0
    %4148 = vdwg.mxu0
    %v4150 = vsel %vm1249, %v3927, 0
    %4152 = vmatprep.subr.mxu0 0.0
    %4153 = vmatpush1.msra.mxu0 0.0
    %4154 = vmatprep.subr.mxu0 0.0
    %4155 = vmatpush1.msra.mxu0 0.0
    %4156 = vmatprep.subr.mxu0 0.0
    %4157 = vmatpush1.msra.mxu0 0.0
    %4158 = vmatprep.subr.mxu0 0.0
    %4159 = vmatpush1.msra.mxu0 0.0
    %4160 = vmatprep.subr.mxu0 0.0
    %4161 = vmatpush1.msra.mxu0 0.0
    %4162 = vmatprep.subr.mxu0 0.0
    %4163 = vmatpush1.msra.mxu0 0.0
    %4164 = vmatprep.subr.mxu0 0.0
    %4165 = vmatpush1.msra.mxu0 0.0
    %4166 = vmatprep.subr.mxu0 0.0
    %4167 = vmatpush1.msra.mxu0 0.0
    %4168 = vmatprep.subr.mxu0 0.0
    %4169 = vmatpush1.msra.mxu0 0.0
    %4170 = vmatprep.subr.mxu0 0.0
    %4171 = vmatpush1.msra.mxu0 0.0
    %4172 = vmatprep.subr.mxu0 0.0
    %4173 = vmatpush1.msra.mxu0 0.0
    %4174 = vmatprep.subr.mxu0 0.0
    %4175 = vmatpush1.msra.mxu0 0.0
    %4176 = vmatprep.subr.mxu0 0.0
    %4177 = vmatpush1.msra.mxu0 %v2442
    %4178 = vmatprep.subr.mxu0 0.0
    %4179 = vmatpush1.msra.mxu0 %v2441
    %4180 = vmatprep.subr.mxu0 0.0
    %4181 = vmatpush1.msra.mxu0 %v2440
    %4182 = vmatprep.subr.mxu0 0.0
    %4183 = vmatpush1.msra.mxu0 %v2439
    %4184 = vmatprep.subr.mxu0 0.0
    %4185 = vmatpush2.msra.mxu0 0.0
    %4186 = vmatprep.subr.mxu0 0.0
    %4187 = vmatpush2.msra.mxu0 0.0
    %4188 = vmatprep.subr.mxu0 0.0
    %4189 = vmatpush2.msra.mxu0 0.0
    %4190 = vmatprep.subr.mxu0 0.0
    %4191 = vmatpush2.msra.mxu0 0.0
    %4192 = vmatprep.subr.mxu0 0.0
    %4193 = vmatpush2.msra.mxu0 0.0
    %4194 = vmatprep.subr.mxu0 0.0
    %4195 = vmatpush2.msra.mxu0 0.0
    %4196 = vmatprep.subr.mxu0 0.0
    %4197 = vmatpush2.msra.mxu0 0.0
    %4198 = vmatprep.subr.mxu0 0.0
    %4199 = vmatpush2.msra.mxu0 0.0
    %4200 = vmatprep.subr.mxu0 0.0
    %4201 = vmatpush2.msra.mxu0 0.0
    %4202 = vmatprep.subr.mxu0 0.0
    %4203 = vmatpush2.msra.mxu0 0.0
    %4204 = vmatprep.subr.mxu0 0.0
    %4205 = vmatpush2.msra.mxu0 0.0
    %4206 = vmatprep.subr.mxu0 0.0
    %4207 = vmatpush2.msra.mxu0 0.0
    %4208 = vmatprep.subr.mxu0 0.0
    %4209 = vmatpush2.msra.mxu0 0.0
    %4210 = vmatprep.subr.mxu0 0.0
    %4211 = vmatpush2.msra.mxu0 0.0
    %4212 = vmatprep.subr.mxu0 0.0
    %4213 = vmatpush2.msra.mxu0 0.0
    %4214 = vmatprep.subr.mxu0 0.0
    %4215 = vmatpush2.msra.mxu0 0.0
    %4216 = vmatprep.mubr.f32.mxu0 0.0
    %4217 = vmatmul.mubr.f32.gmra.mxu0 %v4150
    %v4218 = vpop.f32.mrf.mxu0
    %v4219 = vadd.f32 0.0, %v4218
    %v4220 = vpop.f32.mrf.mxu0
    %4221 = vdwg.mxu0
    %v4223 = vsel %vm1249, %v4000, 0
    %4225 = vmatprep.subr.mxu0 0.0
    %4226 = vmatpush1.msra.mxu0 0.0
    %4227 = vmatprep.subr.mxu0 0.0
    %4228 = vmatpush1.msra.mxu0 0.0
    %4229 = vmatprep.subr.mxu0 0.0
    %4230 = vmatpush1.msra.mxu0 0.0
    %4231 = vmatprep.subr.mxu0 0.0
    %4232 = vmatpush1.msra.mxu0 0.0
    %4233 = vmatprep.subr.mxu0 0.0
    %4234 = vmatpush1.msra.mxu0 0.0
    %4235 = vmatprep.subr.mxu0 0.0
    %4236 = vmatpush1.msra.mxu0 0.0
    %4237 = vmatprep.subr.mxu0 0.0
    %4238 = vmatpush1.msra.mxu0 0.0
    %4239 = vmatprep.subr.mxu0 0.0
    %4240 = vmatpush1.msra.mxu0 0.0
    %4241 = vmatprep.subr.mxu0 0.0
    %4242 = vmatpush1.msra.mxu0 0.0
    %4243 = vmatprep.subr.mxu0 0.0
    %4244 = vmatpush1.msra.mxu0 0.0
    %4245 = vmatprep.subr.mxu0 0.0
    %4246 = vmatpush1.msra.mxu0 0.0
    %4247 = vmatprep.subr.mxu0 0.0
    %4248 = vmatpush1.msra.mxu0 0.0
    %4249 = vmatprep.subr.mxu0 0.0
    %4250 = vmatpush1.msra.mxu0 %v2446
    %4251 = vmatprep.subr.mxu0 0.0
    %4252 = vmatpush1.msra.mxu0 %v2445
    %4253 = vmatprep.subr.mxu0 0.0
    %4254 = vmatpush1.msra.mxu0 %v2444
    %4255 = vmatprep.subr.mxu0 0.0
    %4256 = vmatpush1.msra.mxu0 %v2443
    %4257 = vmatprep.subr.mxu0 0.0
    %4258 = vmatpush2.msra.mxu0 0.0
    %4259 = vmatprep.subr.mxu0 0.0
    %4260 = vmatpush2.msra.mxu0 0.0
    %4261 = vmatprep.subr.mxu0 0.0
    %4262 = vmatpush2.msra.mxu0 0.0
    %4263 = vmatprep.subr.mxu0 0.0
    %4264 = vmatpush2.msra.mxu0 0.0
    %4265 = vmatprep.subr.mxu0 0.0
    %4266 = vmatpush2.msra.mxu0 0.0
    %4267 = vmatprep.subr.mxu0 0.0
    %4268 = vmatpush2.msra.mxu0 0.0
    %4269 = vmatprep.subr.mxu0 0.0
    %4270 = vmatpush2.msra.mxu0 0.0
    %4271 = vmatprep.subr.mxu0 0.0
    %4272 = vmatpush2.msra.mxu0 0.0
    %4273 = vmatprep.subr.mxu0 0.0
    %4274 = vmatpush2.msra.mxu0 0.0
    %4275 = vmatprep.subr.mxu0 0.0
    %4276 = vmatpush2.msra.mxu0 0.0
    %4277 = vmatprep.subr.mxu0 0.0
    %4278 = vmatpush2.msra.mxu0 0.0
    %4279 = vmatprep.subr.mxu0 0.0
    %4280 = vmatpush2.msra.mxu0 0.0
    %4281 = vmatprep.subr.mxu0 0.0
    %4282 = vmatpush2.msra.mxu0 0.0
    %4283 = vmatprep.subr.mxu0 0.0
    %4284 = vmatpush2.msra.mxu0 0.0
    %4285 = vmatprep.subr.mxu0 0.0
    %4286 = vmatpush2.msra.mxu0 0.0
    %4287 = vmatprep.subr.mxu0 0.0
    %4288 = vmatpush2.msra.mxu0 0.0
    %4289 = vmatprep.mubr.f32.mxu0 0.0
    %4290 = vmatmul.mubr.f32.gmra.mxu0 %v4223
    %v4291 = vpop.f32.mrf.mxu0
    %v4292 = vadd.f32 0.0, %v4291
    %v4293 = vpop.f32.mrf.mxu0
    %4294 = vdwg.mxu0
    %v4295 = vadd.f32 %v4073, %v4146
    %v4296 = vadd.f32 %v4295, %v4219
    %v4297 = vadd.f32 %v4296, %v4292
    %v4298 = vlaneseq
    %v4299 = vshrl.u32 %v4298, 7
    %v4300 = vsub.s32 0, %v4299
    %v4301 = vrot.slane %v100, %v4300
    %v4302 = vadd.f32 %v4297, %v4301
    %v4303 = vadd.f32 %v2217, %v4302
    %4304 = vadd.xlane.f32.xlu0 %v4303
    %v4305 = vpop.xlane.xlu0 %4304
    %v4306 = vmul.f32 %v4305, %v2198
    %v4307 = vsub.f32 %v4303, %v4306
    %v4308 = vmul.f32 %v4307, %v4307
    %4309 = vadd.xlane.f32.xlu0 %v4308
    %v4310 = vpop.xlane.xlu0 %4309
    %v4311 = vmul.f32 %v4310, %v2198
    %v4312 = vadd.f32 %v4311, 1e-05
    %v4313 = vrsqrt.pop %v4312
    %v4314 = vmul.f32 %v4307, %v4313
    %v4315 = vlaneseq
    %v4316 = vshrl.u32 %v4315, 7
    %v4317 = vsub.s32 0, %v4316
    %v4318 = vrot.slane %v103, %v4317
    %v4319 = vmul.f32 %v4314, %v4318
    %v4320 = vlaneseq
    %v4321 = vshrl.u32 %v4320, 7
    %v4322 = vsub.s32 0, %v4321
    %v4323 = vrot.slane %v104, %v4322
    %v4324 = vadd.f32 %v4319, %v4323
    %v4326 = vlaneseq
    %v4327 = vshrl.u32 %v4326, 7
    %v4328 = vsub.s32 0, %v4327
    %v4329 = vrot.slane %v98, %v4328
    %v4330 = vlaneseq
    %v4331 = vshrl.u32 %v4330, 7
    %v4332 = vsub.s32 1, %v4331
    %v4333 = vrot.slane %v98, %v4332
    %4336 = vmatprep.subr.mxu0 %v64
    %4337 = vmatpush1.msra.mxu0 %v63
    %4338 = vmatprep.subr.mxu0 %v62
    %4339 = vmatpush1.msra.mxu0 %v61
    %4340 = vmatprep.subr.mxu0 %v60
    %4341 = vmatpush1.msra.mxu0 %v59
    %4342 = vmatprep.subr.mxu0 %v58
    %4343 = vmatpush1.msra.mxu0 %v57
    %4344 = vmatprep.subr.mxu0 %v56
    %4345 = vmatpush1.msra.mxu0 %v55
    %4346 = vmatprep.subr.mxu0 %v54
    %4347 = vmatpush1.msra.mxu0 %v53
    %4348 = vmatprep.subr.mxu0 %v52
    %4349 = vmatpush1.msra.mxu0 %v51
    %4350 = vmatprep.subr.mxu0 %v50
    %4351 = vmatpush1.msra.mxu0 %v49
    %4352 = vmatprep.subr.mxu0 %v48
    %4353 = vmatpush1.msra.mxu0 %v47
    %4354 = vmatprep.subr.mxu0 %v46
    %4355 = vmatpush1.msra.mxu0 %v45
    %4356 = vmatprep.subr.mxu0 %v44
    %4357 = vmatpush1.msra.mxu0 %v43
    %4358 = vmatprep.subr.mxu0 %v42
    %4359 = vmatpush1.msra.mxu0 %v41
    %4360 = vmatprep.subr.mxu0 %v40
    %4361 = vmatpush1.msra.mxu0 %v39
    %4362 = vmatprep.subr.mxu0 %v38
    %4363 = vmatpush1.msra.mxu0 %v37
    %4364 = vmatprep.subr.mxu0 %v36
    %4365 = vmatpush1.msra.mxu0 %v35
    %4366 = vmatprep.subr.mxu0 %v34
    %4367 = vmatpush1.msra.mxu0 %v33
    %4368 = vmatprep.subr.mxu0 0.0
    %4369 = vmatpush2.msra.mxu0 0.0
    %4370 = vmatprep.subr.mxu0 0.0
    %4371 = vmatpush2.msra.mxu0 0.0
    %4372 = vmatprep.subr.mxu0 0.0
    %4373 = vmatpush2.msra.mxu0 0.0
    %4374 = vmatprep.subr.mxu0 0.0
    %4375 = vmatpush2.msra.mxu0 0.0
    %4376 = vmatprep.subr.mxu0 0.0
    %4377 = vmatpush2.msra.mxu0 0.0
    %4378 = vmatprep.subr.mxu0 0.0
    %4379 = vmatpush2.msra.mxu0 0.0
    %4380 = vmatprep.subr.mxu0 0.0
    %4381 = vmatpush2.msra.mxu0 0.0
    %4382 = vmatprep.subr.mxu0 0.0
    %4383 = vmatpush2.msra.mxu0 0.0
    %4384 = vmatprep.subr.mxu0 0.0
    %4385 = vmatpush2.msra.mxu0 0.0
    %4386 = vmatprep.subr.mxu0 0.0
    %4387 = vmatpush2.msra.mxu0 0.0
    %4388 = vmatprep.subr.mxu0 0.0
    %4389 = vmatpush2.msra.mxu0 0.0
    %4390 = vmatprep.subr.mxu0 0.0
    %4391 = vmatpush2.msra.mxu0 0.0
    %4392 = vmatprep.subr.mxu0 0.0
    %4393 = vmatpush2.msra.mxu0 0.0
    %4394 = vmatprep.subr.mxu0 0.0
    %4395 = vmatpush2.msra.mxu0 0.0
    %4396 = vmatprep.subr.mxu0 0.0
    %4397 = vmatpush2.msra.mxu0 0.0
    %4398 = vmatprep.subr.mxu0 0.0
    %4399 = vmatpush2.msra.mxu0 0.0
    %4400 = vmatprep.mubr.f32.mxu0 0.0
    %4401 = vmatmul.mubr.f32.gmra.mxu0 %v4324
    %v4402 = vpop.f32.mrf.mxu0
    %v4403 = vadd.f32 %v4329, %v4402
    %v4404 = vpop.f32.mrf.mxu0
    %v4405 = vadd.f32 %v4333, %v4404
    %4406 = vdwg.mxu0
    %v4407 = vmax.f32 %v4403, 0.0
    %v4408 = vmax.f32 %v4405, 0.0
    %v4409 = vlaneseq
    %v4410 = vshrl.u32 %v4409, 7
    %v4411 = vsub.s32 0, %v4410
    %v4412 = vrot.slane %v107, %v4411
    %4413 = vmatprep.subr.mxu0 0.0
    %4414 = vmatpush1.msra.mxu0 %v80
    %4415 = vmatprep.subr.mxu0 0.0
    %4416 = vmatpush1.msra.mxu0 %v79
    %4417 = vmatprep.subr.mxu0 0.0
    %4418 = vmatpush1.msra.mxu0 %v78
    %4419 = vmatprep.subr.mxu0 0.0
    %4420 = vmatpush1.msra.mxu0 %v77
    %4421 = vmatprep.subr.mxu0 0.0
    %4422 = vmatpush1.msra.mxu0 %v76
    %4423 = vmatprep.subr.mxu0 0.0
    %4424 = vmatpush1.msra.mxu0 %v75
    %4425 = vmatprep.subr.mxu0 0.0
    %4426 = vmatpush1.msra.mxu0 %v74
    %4427 = vmatprep.subr.mxu0 0.0
    %4428 = vmatpush1.msra.mxu0 %v73
    %4429 = vmatprep.subr.mxu0 0.0
    %4430 = vmatpush1.msra.mxu0 %v72
    %4431 = vmatprep.subr.mxu0 0.0
    %4432 = vmatpush1.msra.mxu0 %v71
    %4433 = vmatprep.subr.mxu0 0.0
    %4434 = vmatpush1.msra.mxu0 %v70
    %4435 = vmatprep.subr.mxu0 0.0
    %4436 = vmatpush1.msra.mxu0 %v69
    %4437 = vmatprep.subr.mxu0 0.0
    %4438 = vmatpush1.msra.mxu0 %v68
    %4439 = vmatprep.subr.mxu0 0.0
    %4440 = vmatpush1.msra.mxu0 %v67
    %4441 = vmatprep.subr.mxu0 0.0
    %4442 = vmatpush1.msra.mxu0 %v66
    %4443 = vmatprep.subr.mxu0 0.0
    %4444 = vmatpush1.msra.mxu0 %v65
    %4445 = vmatprep.subr.mxu0 0.0
    %4446 = vmatpush2.msra.mxu0 %v96
    %4447 = vmatprep.subr.mxu0 0.0
    %4448 = vmatpush2.msra.mxu0 %v95
    %4449 = vmatprep.subr.mxu0 0.0
    %4450 = vmatpush2.msra.mxu0 %v94
    %4451 = vmatprep.subr.mxu0 0.0
    %4452 = vmatpush2.msra.mxu0 %v93
    %4453 = vmatprep.subr.mxu0 0.0
    %4454 = vmatpush2.msra.mxu0 %v92
    %4455 = vmatprep.subr.mxu0 0.0
    %4456 = vmatpush2.msra.mxu0 %v91
    %4457 = vmatprep.subr.mxu0 0.0
    %4458 = vmatpush2.msra.mxu0 %v90
    %4459 = vmatprep.subr.mxu0 0.0
    %4460 = vmatpush2.msra.mxu0 %v89
    %4461 = vmatprep.subr.mxu0 0.0
    %4462 = vmatpush2.msra.mxu0 %v88
    %4463 = vmatprep.subr.mxu0 0.0
    %4464 = vmatpush2.msra.mxu0 %v87
    %4465 = vmatprep.subr.mxu0 0.0
    %4466 = vmatpush2.msra.mxu0 %v86
    %4467 = vmatprep.subr.mxu0 0.0
    %4468 = vmatpush2.msra.mxu0 %v85
    %4469 = vmatprep.subr.mxu0 0.0
    %4470 = vmatpush2.msra.mxu0 %v84
    %4471 = vmatprep.subr.mxu0 0.0
    %4472 = vmatpush2.msra.mxu0 %v83
    %4473 = vmatprep.subr.mxu0 0.0
    %4474 = vmatpush2.msra.mxu0 %v82
    %4475 = vmatprep.subr.mxu0 0.0
    %4476 = vmatpush2.msra.mxu0 %v81
    %4477 = vmatprep.mubr.f32.mxu0 %v4408
    %4478 = vmatmul.mubr.f32.gmra.mxu0 %v4407
    %v4479 = vpop.f32.mrf.mxu0
    %v4480 = vadd.f32 %v4412, %v4479
    %v4481 = vpop.f32.mrf.mxu0
    %4482 = vdwg.mxu0
    %v4483 = vadd.f32 %v4324, %v4480
    %4484 = vadd.xlane.f32.xlu0 %v4483
    %v4485 = vpop.xlane.xlu0 %4484
    %v4486 = vmul.f32 %v4485, %v2198
    %v4487 = vsub.f32 %v4483, %v4486
    %v4488 = vmul.f32 %v4487, %v4487
    %4489 = vadd.xlane.f32.xlu0 %v4488
    %v4490 = vpop.xlane.xlu0 %4489
    %v4491 = vmul.f32 %v4490, %v2198
    %v4492 = vadd.f32 %v4491, 1e-05
    %v4493 = vrsqrt.pop %v4492
    %v4494 = vmul.f32 %v4487, %v4493
    %v4495 = vlaneseq
    %v4496 = vshrl.u32 %v4495, 7
    %v4497 = vsub.s32 0, %v4496
    %v4498 = vrot.slane %v105, %v4497
    %v4499 = vmul.f32 %v4494, %v4498
    %v4500 = vlaneseq
    %v4501 = vshrl.u32 %v4500, 7
    %v4502 = vsub.s32 0, %v4501
    %v4503 = vrot.slane %v106, %v4502
    %v4504 = vadd.f32 %v4499, %v4503
    %4505 = vst [vmem:[#allocation2] sm:$0xff] %v4504
    %s4506 = scalar_lea.vmem %s0, 8
    %v4507 = vld [vmem:[%s4506] sm:$0xff]
    %s4508 = scalar_lea.vmem %s1, 8
    %v4509 = vld [vmem:[%s4508] sm:$0xff]
    %s4510 = scalar_lea.vmem %s2, 8
    %v4511 = vld [vmem:[%s4510] sm:$0xff]
    %s4512 = scalar_lea.vmem %s3, 8
    %v4513 = vld [vmem:[%s4512] sm:$0xff]
    %v4514 = vadd.f32 %v4507, %v4511
    %v4515 = vld [vmem:[%s4] sm:$0xff]
    %v4516 = vld [vmem:[%s4 + $0x8] sm:$0xff]
    %v4517 = vld [vmem:[%s4 + $0x10] sm:$0xff]
    %v4518 = vld [vmem:[%s4 + $0x18] sm:$0xff]
    %v4519 = vld [vmem:[%s4 + $0x20] sm:$0xff]
    %v4520 = vld [vmem:[%s4 + $0x28] sm:$0xff]
    %v4521 = vld [vmem:[%s4 + $0x30] sm:$0xff]
    %v4522 = vld [vmem:[%s4 + $0x38] sm:$0xff]
    %v4523 = vld [vmem:[%s4 + $0x40] sm:$0xff]
    %v4524 = vld [vmem:[%s4 + $0x48] sm:$0xff]
    %v4525 = vld [vmem:[%s4 + $0x50] sm:$0xff]
    %v4526 = vld [vmem:[%s4 + $0x58] sm:$0xff]
    %v4527 = vld [vmem:[%s4 + $0x60] sm:$0xff]
    %v4528 = vld [vmem:[%s4 + $0x68] sm:$0xff]
    %v4529 = vld [vmem:[%s4 + $0x70] sm:$0xff]
    %v4530 = vld [vmem:[%s4 + $0x78] sm:$0xff]
    %v4531 = vld [vmem:[%s4 + $0x80] sm:$0xff]
    %v4532 = vld [vmem:[%s4 + $0x88] sm:$0xff]
    %v4533 = vld [vmem:[%s4 + $0x90] sm:$0xff]
    %v4534 = vld [vmem:[%s4 + $0x98] sm:$0xff]
    %v4535 = vld [vmem:[%s4 + $0xa0] sm:$0xff]
    %v4536 = vld [vmem:[%s4 + $0xa8] sm:$0xff]
    %v4537 = vld [vmem:[%s4 + $0xb0] sm:$0xff]
    %v4538 = vld [vmem:[%s4 + $0xb8] sm:$0xff]
    %v4539 = vld [vmem:[%s4 + $0xc0] sm:$0xff]
    %v4540 = vld [vmem:[%s4 + $0xc8] sm:$0xff]
    %v4541 = vld [vmem:[%s4 + $0xd0] sm:$0xff]
    %v4542 = vld [vmem:[%s4 + $0xd8] sm:$0xff]
    %v4543 = vld [vmem:[%s4 + $0xe0] sm:$0xff]
    %v4544 = vld [vmem:[%s4 + $0xe8] sm:$0xff]
    %v4545 = vld [vmem:[%s4 + $0xf0] sm:$0xff]
    %v4546 = vld [vmem:[%s4 + $0xf8] sm:$0xff]
    %v4547 = vld [vmem:[%s4 + $0x100] sm:$0xff]
    %v4548 = vld [vmem:[%s4 + $0x108] sm:$0xff]
    %v4549 = vld [vmem:[%s4 + $0x110] sm:$0xff]
    %v4550 = vld [vmem:[%s4 + $0x118] sm:$0xff]
    %v4551 = vld [vmem:[%s4 + $0x120] sm:$0xff]
    %v4552 = vld [vmem:[%s4 + $0x128] sm:$0xff]
    %v4553 = vld [vmem:[%s4 + $0x130] sm:$0xff]
    %v4554 = vld [vmem:[%s4 + $0x138] sm:$0xff]
    %v4555 = vld [vmem:[%s4 + $0x140] sm:$0xff]
    %v4556 = vld [vmem:[%s4 + $0x148] sm:$0xff]
    %v4557 = vld [vmem:[%s4 + $0x150] sm:$0xff]
    %v4558 = vld [vmem:[%s4 + $0x158] sm:$0xff]
    %v4559 = vld [vmem:[%s4 + $0x160] sm:$0xff]
    %v4560 = vld [vmem:[%s4 + $0x168] sm:$0xff]
    %v4561 = vld [vmem:[%s4 + $0x170] sm:$0xff]
    %v4562 = vld [vmem:[%s4 + $0x178] sm:$0xff]
    %v4563 = vld [vmem:[%s4 + $0x180] sm:$0xff]
    %v4564 = vld [vmem:[%s4 + $0x188] sm:$0xff]
    %v4565 = vld [vmem:[%s4 + $0x190] sm:$0xff]
    %v4566 = vld [vmem:[%s4 + $0x198] sm:$0xff]
    %v4567 = vld [vmem:[%s4 + $0x1a0] sm:$0xff]
    %v4568 = vld [vmem:[%s4 + $0x1a8] sm:$0xff]
    %v4569 = vld [vmem:[%s4 + $0x1b0] sm:$0xff]
    %v4570 = vld [vmem:[%s4 + $0x1b8] sm:$0xff]
    %v4571 = vld [vmem:[%s4 + $0x1c0] sm:$0xff]
    %v4572 = vld [vmem:[%s4 + $0x1c8] sm:$0xff]
    %v4573 = vld [vmem:[%s4 + $0x1d0] sm:$0xff]
    %v4574 = vld [vmem:[%s4 + $0x1d8] sm:$0xff]
    %v4575 = vld [vmem:[%s4 + $0x1e0] sm:$0xff]
    %v4576 = vld [vmem:[%s4 + $0x1e8] sm:$0xff]
    %v4577 = vld [vmem:[%s4 + $0x1f0] sm:$0xff]
    %v4578 = vld [vmem:[%s4 + $0x1f8] sm:$0xff]
    %v4579 = vld [vmem:[%s177] sm:$0xff]
    %v4580 = vld [vmem:[%s177 + $0x8] sm:$0xff]
    %v4581 = vld [vmem:[%s177 + $0x10] sm:$0xff]
    %v4582 = vld [vmem:[%s177 + $0x18] sm:$0xff]
    %v4583 = vld [vmem:[%s177 + $0x20] sm:$0xff]
    %v4584 = vld [vmem:[%s177 + $0x28] sm:$0xff]
    %v4585 = vld [vmem:[%s177 + $0x30] sm:$0xff]
    %v4586 = vld [vmem:[%s177 + $0x38] sm:$0xff]
    %v4587 = vld [vmem:[%s177 + $0x40] sm:$0xff]
    %v4588 = vld [vmem:[%s177 + $0x48] sm:$0xff]
    %v4589 = vld [vmem:[%s177 + $0x50] sm:$0xff]
    %v4590 = vld [vmem:[%s177 + $0x58] sm:$0xff]
    %v4591 = vld [vmem:[%s177 + $0x60] sm:$0xff]
    %v4592 = vld [vmem:[%s177 + $0x68] sm:$0xff]
    %v4593 = vld [vmem:[%s177 + $0x70] sm:$0xff]
    %v4594 = vld [vmem:[%s177 + $0x78] sm:$0xff]
    %v4595 = vld [vmem:[%s177 + $0x80] sm:$0xff]
    %v4596 = vld [vmem:[%s177 + $0x88] sm:$0xff]
    %v4597 = vld [vmem:[%s177 + $0x90] sm:$0xff]
    %v4598 = vld [vmem:[%s177 + $0x98] sm:$0xff]
    %v4599 = vld [vmem:[%s177 + $0xa0] sm:$0xff]
    %v4600 = vld [vmem:[%s177 + $0xa8] sm:$0xff]
    %v4601 = vld [vmem:[%s177 + $0xb0] sm:$0xff]
    %v4602 = vld [vmem:[%s177 + $0xb8] sm:$0xff]
    %v4603 = vld [vmem:[%s177 + $0xc0] sm:$0xff]
    %v4604 = vld [vmem:[%s177 + $0xc8] sm:$0xff]
    %v4605 = vld [vmem:[%s177 + $0xd0] sm:$0xff]
    %v4606 = vld [vmem:[%s177 + $0xd8] sm:$0xff]
    %v4607 = vld [vmem:[%s177 + $0xe0] sm:$0xff]
    %v4608 = vld [vmem:[%s177 + $0xe8] sm:$0xff]
    %v4609 = vld [vmem:[%s177 + $0xf0] sm:$0xff]
    %v4610 = vld [vmem:[%s177 + $0xf8] sm:$0xff]
    %v4611 = vld [vmem:[%s177 + $0x100] sm:$0xff]
    %v4612 = vld [vmem:[%s177 + $0x108] sm:$0xff]
    %v4613 = vld [vmem:[%s177 + $0x110] sm:$0xff]
    %v4614 = vld [vmem:[%s177 + $0x118] sm:$0xff]
    %v4615 = vld [vmem:[%s177 + $0x120] sm:$0xff]
    %v4616 = vld [vmem:[%s177 + $0x128] sm:$0xff]
    %v4617 = vld [vmem:[%s177 + $0x130] sm:$0xff]
    %v4618 = vld [vmem:[%s177 + $0x138] sm:$0xff]
    %v4619 = vld [vmem:[%s177 + $0x140] sm:$0xff]
    %v4620 = vld [vmem:[%s177 + $0x148] sm:$0xff]
    %v4621 = vld [vmem:[%s177 + $0x150] sm:$0xff]
    %v4622 = vld [vmem:[%s177 + $0x158] sm:$0xff]
    %v4623 = vld [vmem:[%s177 + $0x160] sm:$0xff]
    %v4624 = vld [vmem:[%s177 + $0x168] sm:$0xff]
    %v4625 = vld [vmem:[%s177 + $0x170] sm:$0xff]
    %v4626 = vld [vmem:[%s177 + $0x178] sm:$0xff]
    %v4627 = vld [vmem:[%s177 + $0x180] sm:$0xff]
    %v4628 = vld [vmem:[%s177 + $0x188] sm:$0xff]
    %v4629 = vld [vmem:[%s177 + $0x190] sm:$0xff]
    %v4630 = vld [vmem:[%s177 + $0x198] sm:$0xff]
    %v4631 = vld [vmem:[%s177 + $0x1a0] sm:$0xff]
    %v4632 = vld [vmem:[%s177 + $0x1a8] sm:$0xff]
    %v4633 = vld [vmem:[%s177 + $0x1b0] sm:$0xff]
    %v4634 = vld [vmem:[%s177 + $0x1b8] sm:$0xff]
    %v4635 = vld [vmem:[%s177 + $0x1c0] sm:$0xff]
    %v4636 = vld [vmem:[%s177 + $0x1c8] sm:$0xff]
    %v4637 = vld [vmem:[%s177 + $0x1d0] sm:$0xff]
    %v4638 = vld [vmem:[%s177 + $0x1d8] sm:$0xff]
    %v4639 = vld [vmem:[%s177 + $0x1e0] sm:$0xff]
    %v4640 = vld [vmem:[%s177 + $0x1e8] sm:$0xff]
    %v4641 = vld [vmem:[%s177 + $0x1f0] sm:$0xff]
    %v4642 = vld [vmem:[%s177 + $0x1f8] sm:$0xff]
    %v4643 = vld [vmem:[%s242] sm:$0xff]
    %v4644 = vld [vmem:[%s242 + $0x8] sm:$0xff]
    %v4645 = vld [vmem:[%s242 + $0x10] sm:$0xff]
    %v4646 = vld [vmem:[%s242 + $0x18] sm:$0xff]
    %v4647 = vld [vmem:[%s242 + $0x20] sm:$0xff]
    %v4648 = vld [vmem:[%s242 + $0x28] sm:$0xff]
    %v4649 = vld [vmem:[%s242 + $0x30] sm:$0xff]
    %v4650 = vld [vmem:[%s242 + $0x38] sm:$0xff]
    %v4651 = vld [vmem:[%s242 + $0x40] sm:$0xff]
    %v4652 = vld [vmem:[%s242 + $0x48] sm:$0xff]
    %v4653 = vld [vmem:[%s242 + $0x50] sm:$0xff]
    %v4654 = vld [vmem:[%s242 + $0x58] sm:$0xff]
    %v4655 = vld [vmem:[%s242 + $0x60] sm:$0xff]
    %v4656 = vld [vmem:[%s242 + $0x68] sm:$0xff]
    %v4657 = vld [vmem:[%s242 + $0x70] sm:$0xff]
    %v4658 = vld [vmem:[%s242 + $0x78] sm:$0xff]
    %v4659 = vld [vmem:[%s242 + $0x80] sm:$0xff]
    %v4660 = vld [vmem:[%s242 + $0x88] sm:$0xff]
    %v4661 = vld [vmem:[%s242 + $0x90] sm:$0xff]
    %v4662 = vld [vmem:[%s242 + $0x98] sm:$0xff]
    %v4663 = vld [vmem:[%s242 + $0xa0] sm:$0xff]
    %v4664 = vld [vmem:[%s242 + $0xa8] sm:$0xff]
    %v4665 = vld [vmem:[%s242 + $0xb0] sm:$0xff]
    %v4666 = vld [vmem:[%s242 + $0xb8] sm:$0xff]
    %v4667 = vld [vmem:[%s242 + $0xc0] sm:$0xff]
    %v4668 = vld [vmem:[%s242 + $0xc8] sm:$0xff]
    %v4669 = vld [vmem:[%s242 + $0xd0] sm:$0xff]
    %v4670 = vld [vmem:[%s242 + $0xd8] sm:$0xff]
    %v4671 = vld [vmem:[%s242 + $0xe0] sm:$0xff]
    %v4672 = vld [vmem:[%s242 + $0xe8] sm:$0xff]
    %v4673 = vld [vmem:[%s242 + $0xf0] sm:$0xff]
    %v4674 = vld [vmem:[%s242 + $0xf8] sm:$0xff]
    %v4675 = vld [vmem:[%s242 + $0x100] sm:$0xff]
    %v4676 = vld [vmem:[%s242 + $0x108] sm:$0xff]
    %v4677 = vld [vmem:[%s242 + $0x110] sm:$0xff]
    %v4678 = vld [vmem:[%s242 + $0x118] sm:$0xff]
    %v4679 = vld [vmem:[%s242 + $0x120] sm:$0xff]
    %v4680 = vld [vmem:[%s242 + $0x128] sm:$0xff]
    %v4681 = vld [vmem:[%s242 + $0x130] sm:$0xff]
    %v4682 = vld [vmem:[%s242 + $0x138] sm:$0xff]
    %v4683 = vld [vmem:[%s242 + $0x140] sm:$0xff]
    %v4684 = vld [vmem:[%s242 + $0x148] sm:$0xff]
    %v4685 = vld [vmem:[%s242 + $0x150] sm:$0xff]
    %v4686 = vld [vmem:[%s242 + $0x158] sm:$0xff]
    %v4687 = vld [vmem:[%s242 + $0x160] sm:$0xff]
    %v4688 = vld [vmem:[%s242 + $0x168] sm:$0xff]
    %v4689 = vld [vmem:[%s242 + $0x170] sm:$0xff]
    %v4690 = vld [vmem:[%s242 + $0x178] sm:$0xff]
    %v4691 = vld [vmem:[%s242 + $0x180] sm:$0xff]
    %v4692 = vld [vmem:[%s242 + $0x188] sm:$0xff]
    %v4693 = vld [vmem:[%s242 + $0x190] sm:$0xff]
    %v4694 = vld [vmem:[%s242 + $0x198] sm:$0xff]
    %v4695 = vld [vmem:[%s242 + $0x1a0] sm:$0xff]
    %v4696 = vld [vmem:[%s242 + $0x1a8] sm:$0xff]
    %v4697 = vld [vmem:[%s242 + $0x1b0] sm:$0xff]
    %v4698 = vld [vmem:[%s242 + $0x1b8] sm:$0xff]
    %v4699 = vld [vmem:[%s242 + $0x1c0] sm:$0xff]
    %v4700 = vld [vmem:[%s242 + $0x1c8] sm:$0xff]
    %v4701 = vld [vmem:[%s242 + $0x1d0] sm:$0xff]
    %v4702 = vld [vmem:[%s242 + $0x1d8] sm:$0xff]
    %v4703 = vld [vmem:[%s242 + $0x1e0] sm:$0xff]
    %v4704 = vld [vmem:[%s242 + $0x1e8] sm:$0xff]
    %v4705 = vld [vmem:[%s242 + $0x1f0] sm:$0xff]
    %v4706 = vld [vmem:[%s242 + $0x1f8] sm:$0xff]
    %v4707 = vld [vmem:[%s5] sm:$0x1]
    %v4708 = vld [vmem:[%s5 + $0x1] sm:$0x1]
    %v4709 = vld [vmem:[%s5 + $0x2] sm:$0x1]
    %v4710 = vld [vmem:[%s5 + $0x3] sm:$0x1]
    %v4711 = vld [vmem:[%s311] sm:$0x1]
    %v4712 = vld [vmem:[%s311 + $0x1] sm:$0x1]
    %v4713 = vld [vmem:[%s311 + $0x2] sm:$0x1]
    %v4714 = vld [vmem:[%s311 + $0x3] sm:$0x1]
    %v4715 = vld [vmem:[%s316] sm:$0x1]
    %v4716 = vld [vmem:[%s316 + $0x1] sm:$0x1]
    %v4717 = vld [vmem:[%s316 + $0x2] sm:$0x1]
    %v4718 = vld [vmem:[%s316 + $0x3] sm:$0x1]
    %v4719 = vld [vmem:[%s6] sm:$0xff]
    %v4720 = vld [vmem:[%s6 + $0x8] sm:$0xff]
    %v4721 = vld [vmem:[%s6 + $0x10] sm:$0xff]
    %v4722 = vld [vmem:[%s6 + $0x18] sm:$0xff]
    %v4723 = vld [vmem:[%s6 + $0x20] sm:$0xff]
    %v4724 = vld [vmem:[%s6 + $0x28] sm:$0xff]
    %v4725 = vld [vmem:[%s6 + $0x30] sm:$0xff]
    %v4726 = vld [vmem:[%s6 + $0x38] sm:$0xff]
    %v4727 = vld [vmem:[%s6 + $0x40] sm:$0xff]
    %v4728 = vld [vmem:[%s6 + $0x48] sm:$0xff]
    %v4729 = vld [vmem:[%s6 + $0x50] sm:$0xff]
    %v4730 = vld [vmem:[%s6 + $0x58] sm:$0xff]
    %v4731 = vld [vmem:[%s6 + $0x60] sm:$0xff]
    %v4732 = vld [vmem:[%s6 + $0x68] sm:$0xff]
    %v4733 = vld [vmem:[%s6 + $0x70] sm:$0xff]
    %v4734 = vld [vmem:[%s6 + $0x78] sm:$0xff]
    %v4739 = vlaneseq
    %v4740 = vshrl.u32 %v4739, 7
    %v4741 = vsub.s32 0, %v4740
    %v4742 = vrot.slane %v4707, %v4741
    %v4743 = vlaneseq
    %v4744 = vshrl.u32 %v4743, 7
    %v4745 = vsub.s32 0, %v4744
    %v4746 = vrot.slane %v4708, %v4745
    %v4747 = vlaneseq
    %v4748 = vshrl.u32 %v4747, 7
    %v4749 = vsub.s32 0, %v4748
    %v4750 = vrot.slane %v4709, %v4749
    %v4751 = vlaneseq
    %v4752 = vshrl.u32 %v4751, 7
    %v4753 = vsub.s32 0, %v4752
    %v4754 = vrot.slane %v4710, %v4753
    %4759 = vmatprep.subr.mxu0 0.0
    %4760 = vmatpush1.msra.mxu0 %v4530
    %4761 = vmatprep.subr.mxu0 0.0
    %4762 = vmatpush1.msra.mxu0 %v4529
    %4763 = vmatprep.subr.mxu0 0.0
    %4764 = vmatpush1.msra.mxu0 %v4528
    %4765 = vmatprep.subr.mxu0 0.0
    %4766 = vmatpush1.msra.mxu0 %v4527
    %4767 = vmatprep.subr.mxu0 0.0
    %4768 = vmatpush1.msra.mxu0 %v4526
    %4769 = vmatprep.subr.mxu0 0.0
    %4770 = vmatpush1.msra.mxu0 %v4525
    %4771 = vmatprep.subr.mxu0 0.0
    %4772 = vmatpush1.msra.mxu0 %v4524
    %4773 = vmatprep.subr.mxu0 0.0
    %4774 = vmatpush1.msra.mxu0 %v4523
    %4775 = vmatprep.subr.mxu0 0.0
    %4776 = vmatpush1.msra.mxu0 %v4522
    %4777 = vmatprep.subr.mxu0 0.0
    %4778 = vmatpush1.msra.mxu0 %v4521
    %4779 = vmatprep.subr.mxu0 0.0
    %4780 = vmatpush1.msra.mxu0 %v4520
    %4781 = vmatprep.subr.mxu0 0.0
    %4782 = vmatpush1.msra.mxu0 %v4519
    %4783 = vmatprep.subr.mxu0 0.0
    %4784 = vmatpush1.msra.mxu0 %v4518
    %4785 = vmatprep.subr.mxu0 0.0
    %4786 = vmatpush1.msra.mxu0 %v4517
    %4787 = vmatprep.subr.mxu0 0.0
    %4788 = vmatpush1.msra.mxu0 %v4516
    %4789 = vmatprep.subr.mxu0 0.0
    %4790 = vmatpush1.msra.mxu0 %v4515
    %4791 = vmatprep.subr.mxu0 0.0
    %4792 = vmatpush2.msra.mxu0 0.0
    %4793 = vmatprep.subr.mxu0 0.0
    %4794 = vmatpush2.msra.mxu0 0.0
    %4795 = vmatprep.subr.mxu0 0.0
    %4796 = vmatpush2.msra.mxu0 0.0
    %4797 = vmatprep.subr.mxu0 0.0
    %4798 = vmatpush2.msra.mxu0 0.0
    %4799 = vmatprep.subr.mxu0 0.0
    %4800 = vmatpush2.msra.mxu0 0.0
    %4801 = vmatprep.subr.mxu0 0.0
    %4802 = vmatpush2.msra.mxu0 0.0
    %4803 = vmatprep.subr.mxu0 0.0
    %4804 = vmatpush2.msra.mxu0 0.0
    %4805 = vmatprep.subr.mxu0 0.0
    %4806 = vmatpush2.msra.mxu0 0.0
    %4807 = vmatprep.subr.mxu0 0.0
    %4808 = vmatpush2.msra.mxu0 0.0
    %4809 = vmatprep.subr.mxu0 0.0
    %4810 = vmatpush2.msra.mxu0 0.0
    %4811 = vmatprep.subr.mxu0 0.0
    %4812 = vmatpush2.msra.mxu0 0.0
    %4813 = vmatprep.subr.mxu0 0.0
    %4814 = vmatpush2.msra.mxu0 0.0
    %4815 = vmatprep.subr.mxu0 0.0
    %4816 = vmatpush2.msra.mxu0 0.0
    %4817 = vmatprep.subr.mxu0 0.0
    %4818 = vmatpush2.msra.mxu0 0.0
    %4819 = vmatprep.subr.mxu0 0.0
    %4820 = vmatpush2.msra.mxu0 0.0
    %4821 = vmatprep.subr.mxu0 0.0
    %4822 = vmatpush2.msra.mxu0 0.0
    %4823 = vmatprep.mubr.f32.mxu0 0.0
    %4824 = vmatmul.mubr.f32.gmra.mxu0 %v4514
    %v4825 = vpop.f32.mrf.mxu0
    %v4826 = vadd.f32 %v4742, %v4825
    %v4827 = vpop.f32.mrf.mxu0
    %4828 = vdwg.mxu0
    %4829 = vmatprep.subr.mxu0 0.0
    %4830 = vmatpush1.msra.mxu0 %v4546
    %4831 = vmatprep.subr.mxu0 0.0
    %4832 = vmatpush1.msra.mxu0 %v4545
    %4833 = vmatprep.subr.mxu0 0.0
    %4834 = vmatpush1.msra.mxu0 %v4544
    %4835 = vmatprep.subr.mxu0 0.0
    %4836 = vmatpush1.msra.mxu0 %v4543
    %4837 = vmatprep.subr.mxu0 0.0
    %4838 = vmatpush1.msra.mxu0 %v4542
    %4839 = vmatprep.subr.mxu0 0.0
    %4840 = vmatpush1.msra.mxu0 %v4541
    %4841 = vmatprep.subr.mxu0 0.0
    %4842 = vmatpush1.msra.mxu0 %v4540
    %4843 = vmatprep.subr.mxu0 0.0
    %4844 = vmatpush1.msra.mxu0 %v4539
    %4845 = vmatprep.subr.mxu0 0.0
    %4846 = vmatpush1.msra.mxu0 %v4538
    %4847 = vmatprep.subr.mxu0 0.0
    %4848 = vmatpush1.msra.mxu0 %v4537
    %4849 = vmatprep.subr.mxu0 0.0
    %4850 = vmatpush1.msra.mxu0 %v4536
    %4851 = vmatprep.subr.mxu0 0.0
    %4852 = vmatpush1.msra.mxu0 %v4535
    %4853 = vmatprep.subr.mxu0 0.0
    %4854 = vmatpush1.msra.mxu0 %v4534
    %4855 = vmatprep.subr.mxu0 0.0
    %4856 = vmatpush1.msra.mxu0 %v4533
    %4857 = vmatprep.subr.mxu0 0.0
    %4858 = vmatpush1.msra.mxu0 %v4532
    %4859 = vmatprep.subr.mxu0 0.0
    %4860 = vmatpush1.msra.mxu0 %v4531
    %4861 = vmatprep.subr.mxu0 0.0
    %4862 = vmatpush2.msra.mxu0 0.0
    %4863 = vmatprep.subr.mxu0 0.0
    %4864 = vmatpush2.msra.mxu0 0.0
    %4865 = vmatprep.subr.mxu0 0.0
    %4866 = vmatpush2.msra.mxu0 0.0
    %4867 = vmatprep.subr.mxu0 0.0
    %4868 = vmatpush2.msra.mxu0 0.0
    %4869 = vmatprep.subr.mxu0 0.0
    %4870 = vmatpush2.msra.mxu0 0.0
    %4871 = vmatprep.subr.mxu0 0.0
    %4872 = vmatpush2.msra.mxu0 0.0
    %4873 = vmatprep.subr.mxu0 0.0
    %4874 = vmatpush2.msra.mxu0 0.0
    %4875 = vmatprep.subr.mxu0 0.0
    %4876 = vmatpush2.msra.mxu0 0.0
    %4877 = vmatprep.subr.mxu0 0.0
    %4878 = vmatpush2.msra.mxu0 0.0
    %4879 = vmatprep.subr.mxu0 0.0
    %4880 = vmatpush2.msra.mxu0 0.0
    %4881 = vmatprep.subr.mxu0 0.0
    %4882 = vmatpush2.msra.mxu0 0.0
    %4883 = vmatprep.subr.mxu0 0.0
    %4884 = vmatpush2.msra.mxu0 0.0
    %4885 = vmatprep.subr.mxu0 0.0
    %4886 = vmatpush2.msra.mxu0 0.0
    %4887 = vmatprep.subr.mxu0 0.0
    %4888 = vmatpush2.msra.mxu0 0.0
    %4889 = vmatprep.subr.mxu0 0.0
    %4890 = vmatpush2.msra.mxu0 0.0
    %4891 = vmatprep.subr.mxu0 0.0
    %4892 = vmatpush2.msra.mxu0 0.0
    %4893 = vmatprep.mubr.f32.mxu0 0.0
    %4894 = vmatmul.mubr.f32.gmra.mxu0 %v4514
    %v4895 = vpop.f32.mrf.mxu0
    %v4896 = vadd.f32 %v4746, %v4895
    %v4897 = vpop.f32.mrf.mxu0
    %4898 = vdwg.mxu0
    %4899 = vmatprep.subr.mxu0 0.0
    %4900 = vmatpush1.msra.mxu0 %v4562
    %4901 = vmatprep.subr.mxu0 0.0
    %4902 = vmatpush1.msra.mxu0 %v4561
    %4903 = vmatprep.subr.mxu0 0.0
    %4904 = vmatpush1.msra.mxu0 %v4560
    %4905 = vmatprep.subr.mxu0 0.0
    %4906 = vmatpush1.msra.mxu0 %v4559
    %4907 = vmatprep.subr.mxu0 0.0
    %4908 = vmatpush1.msra.mxu0 %v4558
    %4909 = vmatprep.subr.mxu0 0.0
    %4910 = vmatpush1.msra.mxu0 %v4557
    %4911 = vmatprep.subr.mxu0 0.0
    %4912 = vmatpush1.msra.mxu0 %v4556
    %4913 = vmatprep.subr.mxu0 0.0
    %4914 = vmatpush1.msra.mxu0 %v4555
    %4915 = vmatprep.subr.mxu0 0.0
    %4916 = vmatpush1.msra.mxu0 %v4554
    %4917 = vmatprep.subr.mxu0 0.0
    %4918 = vmatpush1.msra.mxu0 %v4553
    %4919 = vmatprep.subr.mxu0 0.0
    %4920 = vmatpush1.msra.mxu0 %v4552
    %4921 = vmatprep.subr.mxu0 0.0
    %4922 = vmatpush1.msra.mxu0 %v4551
    %4923 = vmatprep.subr.mxu0 0.0
    %4924 = vmatpush1.msra.mxu0 %v4550
    %4925 = vmatprep.subr.mxu0 0.0
    %4926 = vmatpush1.msra.mxu0 %v4549
    %4927 = vmatprep.subr.mxu0 0.0
    %4928 = vmatpush1.msra.mxu0 %v4548
    %4929 = vmatprep.subr.mxu0 0.0
    %4930 = vmatpush1.msra.mxu0 %v4547
    %4931 = vmatprep.subr.mxu0 0.0
    %4932 = vmatpush2.msra.mxu0 0.0
    %4933 = vmatprep.subr.mxu0 0.0
    %4934 = vmatpush2.msra.mxu0 0.0
    %4935 = vmatprep.subr.mxu0 0.0
    %4936 = vmatpush2.msra.mxu0 0.0
    %4937 = vmatprep.subr.mxu0 0.0
    %4938 = vmatpush2.msra.mxu0 0.0
    %4939 = vmatprep.subr.mxu0 0.0
    %4940 = vmatpush2.msra.mxu0 0.0
    %4941 = vmatprep.subr.mxu0 0.0
    %4942 = vmatpush2.msra.mxu0 0.0
    %4943 = vmatprep.subr.mxu0 0.0
    %4944 = vmatpush2.msra.mxu0 0.0
    %4945 = vmatprep.subr.mxu0 0.0
    %4946 = vmatpush2.msra.mxu0 0.0
    %4947 = vmatprep.subr.mxu0 0.0
    %4948 = vmatpush2.msra.mxu0 0.0
    %4949 = vmatprep.subr.mxu0 0.0
    %4950 = vmatpush2.msra.mxu0 0.0
    %4951 = vmatprep.subr.mxu0 0.0
    %4952 = vmatpush2.msra.mxu0 0.0
    %4953 = vmatprep.subr.mxu0 0.0
    %4954 = vmatpush2.msra.mxu0 0.0
    %4955 = vmatprep.subr.mxu0 0.0
    %4956 = vmatpush2.msra.mxu0 0.0
    %4957 = vmatprep.subr.mxu0 0.0
    %4958 = vmatpush2.msra.mxu0 0.0
    %4959 = vmatprep.subr.mxu0 0.0
    %4960 = vmatpush2.msra.mxu0 0.0
    %4961 = vmatprep.subr.mxu0 0.0
    %4962 = vmatpush2.msra.mxu0 0.0
    %4963 = vmatprep.mubr.f32.mxu0 0.0
    %4964 = vmatmul.mubr.f32.gmra.mxu0 %v4514
    %v4965 = vpop.f32.mrf.mxu0
    %v4966 = vadd.f32 %v4750, %v4965
    %v4967 = vpop.f32.mrf.mxu0
    %4968 = vdwg.mxu0
    %4969 = vmatprep.subr.mxu0 0.0
    %4970 = vmatpush1.msra.mxu0 %v4578
    %4971 = vmatprep.subr.mxu0 0.0
    %4972 = vmatpush1.msra.mxu0 %v4577
    %4973 = vmatprep.subr.mxu0 0.0
    %4974 = vmatpush1.msra.mxu0 %v4576
    %4975 = vmatprep.subr.mxu0 0.0
    %4976 = vmatpush1.msra.mxu0 %v4575
    %4977 = vmatprep.subr.mxu0 0.0
    %4978 = vmatpush1.msra.mxu0 %v4574
    %4979 = vmatprep.subr.mxu0 0.0
    %4980 = vmatpush1.msra.mxu0 %v4573
    %4981 = vmatprep.subr.mxu0 0.0
    %4982 = vmatpush1.msra.mxu0 %v4572
    %4983 = vmatprep.subr.mxu0 0.0
    %4984 = vmatpush1.msra.mxu0 %v4571
    %4985 = vmatprep.subr.mxu0 0.0
    %4986 = vmatpush1.msra.mxu0 %v4570
    %4987 = vmatprep.subr.mxu0 0.0
    %4988 = vmatpush1.msra.mxu0 %v4569
    %4989 = vmatprep.subr.mxu0 0.0
    %4990 = vmatpush1.msra.mxu0 %v4568
    %4991 = vmatprep.subr.mxu0 0.0
    %4992 = vmatpush1.msra.mxu0 %v4567
    %4993 = vmatprep.subr.mxu0 0.0
    %4994 = vmatpush1.msra.mxu0 %v4566
    %4995 = vmatprep.subr.mxu0 0.0
    %4996 = vmatpush1.msra.mxu0 %v4565
    %4997 = vmatprep.subr.mxu0 0.0
    %4998 = vmatpush1.msra.mxu0 %v4564
    %4999 = vmatprep.subr.mxu0 0.0
    %5000 = vmatpush1.msra.mxu0 %v4563
    %5001 = vmatprep.subr.mxu0 0.0
    %5002 = vmatpush2.msra.mxu0 0.0
    %5003 = vmatprep.subr.mxu0 0.0
    %5004 = vmatpush2.msra.mxu0 0.0
    %5005 = vmatprep.subr.mxu0 0.0
    %5006 = vmatpush2.msra.mxu0 0.0
    %5007 = vmatprep.subr.mxu0 0.0
    %5008 = vmatpush2.msra.mxu0 0.0
    %5009 = vmatprep.subr.mxu0 0.0
    %5010 = vmatpush2.msra.mxu0 0.0
    %5011 = vmatprep.subr.mxu0 0.0
    %5012 = vmatpush2.msra.mxu0 0.0
    %5013 = vmatprep.subr.mxu0 0.0
    %5014 = vmatpush2.msra.mxu0 0.0
    %5015 = vmatprep.subr.mxu0 0.0
    %5016 = vmatpush2.msra.mxu0 0.0
    %5017 = vmatprep.subr.mxu0 0.0
    %5018 = vmatpush2.msra.mxu0 0.0
    %5019 = vmatprep.subr.mxu0 0.0
    %5020 = vmatpush2.msra.mxu0 0.0
    %5021 = vmatprep.subr.mxu0 0.0
    %5022 = vmatpush2.msra.mxu0 0.0
    %5023 = vmatprep.subr.mxu0 0.0
    %5024 = vmatpush2.msra.mxu0 0.0
    %5025 = vmatprep.subr.mxu0 0.0
    %5026 = vmatpush2.msra.mxu0 0.0
    %5027 = vmatprep.subr.mxu0 0.0
    %5028 = vmatpush2.msra.mxu0 0.0
    %5029 = vmatprep.subr.mxu0 0.0
    %5030 = vmatpush2.msra.mxu0 0.0
    %5031 = vmatprep.subr.mxu0 0.0
    %5032 = vmatpush2.msra.mxu0 0.0
    %5033 = vmatprep.mubr.f32.mxu0 0.0
    %5034 = vmatmul.mubr.f32.gmra.mxu0 %v4514
    %v5035 = vpop.f32.mrf.mxu0
    %v5036 = vadd.f32 %v4754, %v5035
    %v5037 = vpop.f32.mrf.mxu0
    %5038 = vdwg.mxu0
    %v5043 = vlaneseq
    %v5044 = vshrl.u32 %v5043, 7
    %v5045 = vsub.s32 0, %v5044
    %v5046 = vrot.slane %v4711, %v5045
    %v5047 = vlaneseq
    %v5048 = vshrl.u32 %v5047, 7
    %v5049 = vsub.s32 0, %v5048
    %v5050 = vrot.slane %v4712, %v5049
    %v5051 = vlaneseq
    %v5052 = vshrl.u32 %v5051, 7
    %v5053 = vsub.s32 0, %v5052
    %v5054 = vrot.slane %v4713, %v5053
    %v5055 = vlaneseq
    %v5056 = vshrl.u32 %v5055, 7
    %v5057 = vsub.s32 0, %v5056
    %v5058 = vrot.slane %v4714, %v5057
    %5063 = vmatprep.subr.mxu0 0.0
    %5064 = vmatpush1.msra.mxu0 %v4594
    %5065 = vmatprep.subr.mxu0 0.0
    %5066 = vmatpush1.msra.mxu0 %v4593
    %5067 = vmatprep.subr.mxu0 0.0
    %5068 = vmatpush1.msra.mxu0 %v4592
    %5069 = vmatprep.subr.mxu0 0.0
    %5070 = vmatpush1.msra.mxu0 %v4591
    %5071 = vmatprep.subr.mxu0 0.0
    %5072 = vmatpush1.msra.mxu0 %v4590
    %5073 = vmatprep.subr.mxu0 0.0
    %5074 = vmatpush1.msra.mxu0 %v4589
    %5075 = vmatprep.subr.mxu0 0.0
    %5076 = vmatpush1.msra.mxu0 %v4588
    %5077 = vmatprep.subr.mxu0 0.0
    %5078 = vmatpush1.msra.mxu0 %v4587
    %5079 = vmatprep.subr.mxu0 0.0
    %5080 = vmatpush1.msra.mxu0 %v4586
    %5081 = vmatprep.subr.mxu0 0.0
    %5082 = vmatpush1.msra.mxu0 %v4585
    %5083 = vmatprep.subr.mxu0 0.0
    %5084 = vmatpush1.msra.mxu0 %v4584
    %5085 = vmatprep.subr.mxu0 0.0
    %5086 = vmatpush1.msra.mxu0 %v4583
    %5087 = vmatprep.subr.mxu0 0.0
    %5088 = vmatpush1.msra.mxu0 %v4582
    %5089 = vmatprep.subr.mxu0 0.0
    %5090 = vmatpush1.msra.mxu0 %v4581
    %5091 = vmatprep.subr.mxu0 0.0
    %5092 = vmatpush1.msra.mxu0 %v4580
    %5093 = vmatprep.subr.mxu0 0.0
    %5094 = vmatpush1.msra.mxu0 %v4579
    %5095 = vmatprep.subr.mxu0 0.0
    %5096 = vmatpush2.msra.mxu0 0.0
    %5097 = vmatprep.subr.mxu0 0.0
    %5098 = vmatpush2.msra.mxu0 0.0
    %5099 = vmatprep.subr.mxu0 0.0
    %5100 = vmatpush2.msra.mxu0 0.0
    %5101 = vmatprep.subr.mxu0 0.0
    %5102 = vmatpush2.msra.mxu0 0.0
    %5103 = vmatprep.subr.mxu0 0.0
    %5104 = vmatpush2.msra.mxu0 0.0
    %5105 = vmatprep.subr.mxu0 0.0
    %5106 = vmatpush2.msra.mxu0 0.0
    %5107 = vmatprep.subr.mxu0 0.0
    %5108 = vmatpush2.msra.mxu0 0.0
    %5109 = vmatprep.subr.mxu0 0.0
    %5110 = vmatpush2.msra.mxu0 0.0
    %5111 = vmatprep.subr.mxu0 0.0
    %5112 = vmatpush2.msra.mxu0 0.0
    %5113 = vmatprep.subr.mxu0 0.0
    %5114 = vmatpush2.msra.mxu0 0.0
    %5115 = vmatprep.subr.mxu0 0.0
    %5116 = vmatpush2.msra.mxu0 0.0
    %5117 = vmatprep.subr.mxu0 0.0
    %5118 = vmatpush2.msra.mxu0 0.0
    %5119 = vmatprep.subr.mxu0 0.0
    %5120 = vmatpush2.msra.mxu0 0.0
    %5121 = vmatprep.subr.mxu0 0.0
    %5122 = vmatpush2.msra.mxu0 0.0
    %5123 = vmatprep.subr.mxu0 0.0
    %5124 = vmatpush2.msra.mxu0 0.0
    %5125 = vmatprep.subr.mxu0 0.0
    %5126 = vmatpush2.msra.mxu0 0.0
    %5127 = vmatprep.mubr.f32.mxu0 0.0
    %5128 = vmatmul.mubr.f32.gmra.mxu0 %v4514
    %v5129 = vpop.f32.mrf.mxu0
    %v5130 = vadd.f32 %v5046, %v5129
    %v5131 = vpop.f32.mrf.mxu0
    %5132 = vdwg.mxu0
    %5133 = vmatprep.subr.mxu0 0.0
    %5134 = vmatpush1.msra.mxu0 %v4610
    %5135 = vmatprep.subr.mxu0 0.0
    %5136 = vmatpush1.msra.mxu0 %v4609
    %5137 = vmatprep.subr.mxu0 0.0
    %5138 = vmatpush1.msra.mxu0 %v4608
    %5139 = vmatprep.subr.mxu0 0.0
    %5140 = vmatpush1.msra.mxu0 %v4607
    %5141 = vmatprep.subr.mxu0 0.0
    %5142 = vmatpush1.msra.mxu0 %v4606
    %5143 = vmatprep.subr.mxu0 0.0
    %5144 = vmatpush1.msra.mxu0 %v4605
    %5145 = vmatprep.subr.mxu0 0.0
    %5146 = vmatpush1.msra.mxu0 %v4604
    %5147 = vmatprep.subr.mxu0 0.0
    %5148 = vmatpush1.msra.mxu0 %v4603
    %5149 = vmatprep.subr.mxu0 0.0
    %5150 = vmatpush1.msra.mxu0 %v4602
    %5151 = vmatprep.subr.mxu0 0.0
    %5152 = vmatpush1.msra.mxu0 %v4601
    %5153 = vmatprep.subr.mxu0 0.0
    %5154 = vmatpush1.msra.mxu0 %v4600
    %5155 = vmatprep.subr.mxu0 0.0
    %5156 = vmatpush1.msra.mxu0 %v4599
    %5157 = vmatprep.subr.mxu0 0.0
    %5158 = vmatpush1.msra.mxu0 %v4598
    %5159 = vmatprep.subr.mxu0 0.0
    %5160 = vmatpush1.msra.mxu0 %v4597
    %5161 = vmatprep.subr.mxu0 0.0
    %5162 = vmatpush1.msra.mxu0 %v4596
    %5163 = vmatprep.subr.mxu0 0.0
    %5164 = vmatpush1.msra.mxu0 %v4595
    %5165 = vmatprep.subr.mxu0 0.0
    %5166 = vmatpush2.msra.mxu0 0.0
    %5167 = vmatprep.subr.mxu0 0.0
    %5168 = vmatpush2.msra.mxu0 0.0
    %5169 = vmatprep.subr.mxu0 0.0
    %5170 = vmatpush2.msra.mxu0 0.0
    %5171 = vmatprep.subr.mxu0 0.0
    %5172 = vmatpush2.msra.mxu0 0.0
    %5173 = vmatprep.subr.mxu0 0.0
    %5174 = vmatpush2.msra.mxu0 0.0
    %5175 = vmatprep.subr.mxu0 0.0
    %5176 = vmatpush2.msra.mxu0 0.0
    %5177 = vmatprep.subr.mxu0 0.0
    %5178 = vmatpush2.msra.mxu0 0.0
    %5179 = vmatprep.subr.mxu0 0.0
    %5180 = vmatpush2.msra.mxu0 0.0
    %5181 = vmatprep.subr.mxu0 0.0
    %5182 = vmatpush2.msra.mxu0 0.0
    %5183 = vmatprep.subr.mxu0 0.0
    %5184 = vmatpush2.msra.mxu0 0.0
    %5185 = vmatprep.subr.mxu0 0.0
    %5186 = vmatpush2.msra.mxu0 0.0
    %5187 = vmatprep.subr.mxu0 0.0
    %5188 = vmatpush2.msra.mxu0 0.0
    %5189 = vmatprep.subr.mxu0 0.0
    %5190 = vmatpush2.msra.mxu0 0.0
    %5191 = vmatprep.subr.mxu0 0.0
    %5192 = vmatpush2.msra.mxu0 0.0
    %5193 = vmatprep.subr.mxu0 0.0
    %5194 = vmatpush2.msra.mxu0 0.0
    %5195 = vmatprep.subr.mxu0 0.0
    %5196 = vmatpush2.msra.mxu0 0.0
    %5197 = vmatprep.mubr.f32.mxu0 0.0
    %5198 = vmatmul.mubr.f32.gmra.mxu0 %v4514
    %v5199 = vpop.f32.mrf.mxu0
    %v5200 = vadd.f32 %v5050, %v5199
    %v5201 = vpop.f32.mrf.mxu0
    %5202 = vdwg.mxu0
    %5203 = vmatprep.subr.mxu0 0.0
    %5204 = vmatpush1.msra.mxu0 %v4626
    %5205 = vmatprep.subr.mxu0 0.0
    %5206 = vmatpush1.msra.mxu0 %v4625
    %5207 = vmatprep.subr.mxu0 0.0
    %5208 = vmatpush1.msra.mxu0 %v4624
    %5209 = vmatprep.subr.mxu0 0.0
    %5210 = vmatpush1.msra.mxu0 %v4623
    %5211 = vmatprep.subr.mxu0 0.0
    %5212 = vmatpush1.msra.mxu0 %v4622
    %5213 = vmatprep.subr.mxu0 0.0
    %5214 = vmatpush1.msra.mxu0 %v4621
    %5215 = vmatprep.subr.mxu0 0.0
    %5216 = vmatpush1.msra.mxu0 %v4620
    %5217 = vmatprep.subr.mxu0 0.0
    %5218 = vmatpush1.msra.mxu0 %v4619
    %5219 = vmatprep.subr.mxu0 0.0
    %5220 = vmatpush1.msra.mxu0 %v4618
    %5221 = vmatprep.subr.mxu0 0.0
    %5222 = vmatpush1.msra.mxu0 %v4617
    %5223 = vmatprep.subr.mxu0 0.0
    %5224 = vmatpush1.msra.mxu0 %v4616
    %5225 = vmatprep.subr.mxu0 0.0
    %5226 = vmatpush1.msra.mxu0 %v4615
    %5227 = vmatprep.subr.mxu0 0.0
    %5228 = vmatpush1.msra.mxu0 %v4614
    %5229 = vmatprep.subr.mxu0 0.0
    %5230 = vmatpush1.msra.mxu0 %v4613
    %5231 = vmatprep.subr.mxu0 0.0
    %5232 = vmatpush1.msra.mxu0 %v4612
    %5233 = vmatprep.subr.mxu0 0.0
    %5234 = vmatpush1.msra.mxu0 %v4611
    %5235 = vmatprep.subr.mxu0 0.0
    %5236 = vmatpush2.msra.mxu0 0.0
    %5237 = vmatprep.subr.mxu0 0.0
    %5238 = vmatpush2.msra.mxu0 0.0
    %5239 = vmatprep.subr.mxu0 0.0
    %5240 = vmatpush2.msra.mxu0 0.0
    %5241 = vmatprep.subr.mxu0 0.0
    %5242 = vmatpush2.msra.mxu0 0.0
    %5243 = vmatprep.subr.mxu0 0.0
    %5244 = vmatpush2.msra.mxu0 0.0
    %5245 = vmatprep.subr.mxu0 0.0
    %5246 = vmatpush2.msra.mxu0 0.0
    %5247 = vmatprep.subr.mxu0 0.0
    %5248 = vmatpush2.msra.mxu0 0.0
    %5249 = vmatprep.subr.mxu0 0.0
    %5250 = vmatpush2.msra.mxu0 0.0
    %5251 = vmatprep.subr.mxu0 0.0
    %5252 = vmatpush2.msra.mxu0 0.0
    %5253 = vmatprep.subr.mxu0 0.0
    %5254 = vmatpush2.msra.mxu0 0.0
    %5255 = vmatprep.subr.mxu0 0.0
    %5256 = vmatpush2.msra.mxu0 0.0
    %5257 = vmatprep.subr.mxu0 0.0
    %5258 = vmatpush2.msra.mxu0 0.0
    %5259 = vmatprep.subr.mxu0 0.0
    %5260 = vmatpush2.msra.mxu0 0.0
    %5261 = vmatprep.subr.mxu0 0.0
    %5262 = vmatpush2.msra.mxu0 0.0
    %5263 = vmatprep.subr.mxu0 0.0
    %5264 = vmatpush2.msra.mxu0 0.0
    %5265 = vmatprep.subr.mxu0 0.0
    %5266 = vmatpush2.msra.mxu0 0.0
    %5267 = vmatprep.mubr.f32.mxu0 0.0
    %5268 = vmatmul.mubr.f32.gmra.mxu0 %v4514
    %v5269 = vpop.f32.mrf.mxu0
    %v5270 = vadd.f32 %v5054, %v5269
    %v5271 = vpop.f32.mrf.mxu0
    %5272 = vdwg.mxu0
    %5273 = vmatprep.subr.mxu0 0.0
    %5274 = vmatpush1.msra.mxu0 %v4642
    %5275 = vmatprep.subr.mxu0 0.0
    %5276 = vmatpush1.msra.mxu0 %v4641
    %5277 = vmatprep.subr.mxu0 0.0
    %5278 = vmatpush1.msra.mxu0 %v4640
    %5279 = vmatprep.subr.mxu0 0.0
    %5280 = vmatpush1.msra.mxu0 %v4639
    %5281 = vmatprep.subr.mxu0 0.0
    %5282 = vmatpush1.msra.mxu0 %v4638
    %5283 = vmatprep.subr.mxu0 0.0
    %5284 = vmatpush1.msra.mxu0 %v4637
    %5285 = vmatprep.subr.mxu0 0.0
    %5286 = vmatpush1.msra.mxu0 %v4636
    %5287 = vmatprep.subr.mxu0 0.0
    %5288 = vmatpush1.msra.mxu0 %v4635
    %5289 = vmatprep.subr.mxu0 0.0
    %5290 = vmatpush1.msra.mxu0 %v4634
    %5291 = vmatprep.subr.mxu0 0.0
    %5292 = vmatpush1.msra.mxu0 %v4633
    %5293 = vmatprep.subr.mxu0 0.0
    %5294 = vmatpush1.msra.mxu0 %v4632
    %5295 = vmatprep.subr.mxu0 0.0
    %5296 = vmatpush1.msra.mxu0 %v4631
    %5297 = vmatprep.subr.mxu0 0.0
    %5298 = vmatpush1.msra.mxu0 %v4630
    %5299 = vmatprep.subr.mxu0 0.0
    %5300 = vmatpush1.msra.mxu0 %v4629
    %5301 = vmatprep.subr.mxu0 0.0
    %5302 = vmatpush1.msra.mxu0 %v4628
    %5303 = vmatprep.subr.mxu0 0.0
    %5304 = vmatpush1.msra.mxu0 %v4627
    %5305 = vmatprep.subr.mxu0 0.0
    %5306 = vmatpush2.msra.mxu0 0.0
    %5307 = vmatprep.subr.mxu0 0.0
    %5308 = vmatpush2.msra.mxu0 0.0
    %5309 = vmatprep.subr.mxu0 0.0
    %5310 = vmatpush2.msra.mxu0 0.0
    %5311 = vmatprep.subr.mxu0 0.0
    %5312 = vmatpush2.msra.mxu0 0.0
    %5313 = vmatprep.subr.mxu0 0.0
    %5314 = vmatpush2.msra.mxu0 0.0
    %5315 = vmatprep.subr.mxu0 0.0
    %5316 = vmatpush2.msra.mxu0 0.0
    %5317 = vmatprep.subr.mxu0 0.0
    %5318 = vmatpush2.msra.mxu0 0.0
    %5319 = vmatprep.subr.mxu0 0.0
    %5320 = vmatpush2.msra.mxu0 0.0
    %5321 = vmatprep.subr.mxu0 0.0
    %5322 = vmatpush2.msra.mxu0 0.0
    %5323 = vmatprep.subr.mxu0 0.0
    %5324 = vmatpush2.msra.mxu0 0.0
    %5325 = vmatprep.subr.mxu0 0.0
    %5326 = vmatpush2.msra.mxu0 0.0
    %5327 = vmatprep.subr.mxu0 0.0
    %5328 = vmatpush2.msra.mxu0 0.0
    %5329 = vmatprep.subr.mxu0 0.0
    %5330 = vmatpush2.msra.mxu0 0.0
    %5331 = vmatprep.subr.mxu0 0.0
    %5332 = vmatpush2.msra.mxu0 0.0
    %5333 = vmatprep.subr.mxu0 0.0
    %5334 = vmatpush2.msra.mxu0 0.0
    %5335 = vmatprep.subr.mxu0 0.0
    %5336 = vmatpush2.msra.mxu0 0.0
    %5337 = vmatprep.mubr.f32.mxu0 0.0
    %5338 = vmatmul.mubr.f32.gmra.mxu0 %v4514
    %v5339 = vpop.f32.mrf.mxu0
    %v5340 = vadd.f32 %v5058, %v5339
    %v5341 = vpop.f32.mrf.mxu0
    %5342 = vdwg.mxu0
    %v5347 = vlaneseq
    %v5348 = vshrl.u32 %v5347, 7
    %v5349 = vsub.s32 0, %v5348
    %v5350 = vrot.slane %v4715, %v5349
    %v5351 = vlaneseq
    %v5352 = vshrl.u32 %v5351, 7
    %v5353 = vsub.s32 0, %v5352
    %v5354 = vrot.slane %v4716, %v5353
    %v5355 = vlaneseq
    %v5356 = vshrl.u32 %v5355, 7
    %v5357 = vsub.s32 0, %v5356
    %v5358 = vrot.slane %v4717, %v5357
    %v5359 = vlaneseq
    %v5360 = vshrl.u32 %v5359, 7
    %v5361 = vsub.s32 0, %v5360
    %v5362 = vrot.slane %v4718, %v5361
    %5367 = vmatprep.subr.mxu0 0.0
    %5368 = vmatpush1.msra.mxu0 %v4658
    %5369 = vmatprep.subr.mxu0 0.0
    %5370 = vmatpush1.msra.mxu0 %v4657
    %5371 = vmatprep.subr.mxu0 0.0
    %5372 = vmatpush1.msra.mxu0 %v4656
    %5373 = vmatprep.subr.mxu0 0.0
    %5374 = vmatpush1.msra.mxu0 %v4655
    %5375 = vmatprep.subr.mxu0 0.0
    %5376 = vmatpush1.msra.mxu0 %v4654
    %5377 = vmatprep.subr.mxu0 0.0
    %5378 = vmatpush1.msra.mxu0 %v4653
    %5379 = vmatprep.subr.mxu0 0.0
    %5380 = vmatpush1.msra.mxu0 %v4652
    %5381 = vmatprep.subr.mxu0 0.0
    %5382 = vmatpush1.msra.mxu0 %v4651
    %5383 = vmatprep.subr.mxu0 0.0
    %5384 = vmatpush1.msra.mxu0 %v4650
    %5385 = vmatprep.subr.mxu0 0.0
    %5386 = vmatpush1.msra.mxu0 %v4649
    %5387 = vmatprep.subr.mxu0 0.0
    %5388 = vmatpush1.msra.mxu0 %v4648
    %5389 = vmatprep.subr.mxu0 0.0
    %5390 = vmatpush1.msra.mxu0 %v4647
    %5391 = vmatprep.subr.mxu0 0.0
    %5392 = vmatpush1.msra.mxu0 %v4646
    %5393 = vmatprep.subr.mxu0 0.0
    %5394 = vmatpush1.msra.mxu0 %v4645
    %5395 = vmatprep.subr.mxu0 0.0
    %5396 = vmatpush1.msra.mxu0 %v4644
    %5397 = vmatprep.subr.mxu0 0.0
    %5398 = vmatpush1.msra.mxu0 %v4643
    %5399 = vmatprep.subr.mxu0 0.0
    %5400 = vmatpush2.msra.mxu0 0.0
    %5401 = vmatprep.subr.mxu0 0.0
    %5402 = vmatpush2.msra.mxu0 0.0
    %5403 = vmatprep.subr.mxu0 0.0
    %5404 = vmatpush2.msra.mxu0 0.0
    %5405 = vmatprep.subr.mxu0 0.0
    %5406 = vmatpush2.msra.mxu0 0.0
    %5407 = vmatprep.subr.mxu0 0.0
    %5408 = vmatpush2.msra.mxu0 0.0
    %5409 = vmatprep.subr.mxu0 0.0
    %5410 = vmatpush2.msra.mxu0 0.0
    %5411 = vmatprep.subr.mxu0 0.0
    %5412 = vmatpush2.msra.mxu0 0.0
    %5413 = vmatprep.subr.mxu0 0.0
    %5414 = vmatpush2.msra.mxu0 0.0
    %5415 = vmatprep.subr.mxu0 0.0
    %5416 = vmatpush2.msra.mxu0 0.0
    %5417 = vmatprep.subr.mxu0 0.0
    %5418 = vmatpush2.msra.mxu0 0.0
    %5419 = vmatprep.subr.mxu0 0.0
    %5420 = vmatpush2.msra.mxu0 0.0
    %5421 = vmatprep.subr.mxu0 0.0
    %5422 = vmatpush2.msra.mxu0 0.0
    %5423 = vmatprep.subr.mxu0 0.0
    %5424 = vmatpush2.msra.mxu0 0.0
    %5425 = vmatprep.subr.mxu0 0.0
    %5426 = vmatpush2.msra.mxu0 0.0
    %5427 = vmatprep.subr.mxu0 0.0
    %5428 = vmatpush2.msra.mxu0 0.0
    %5429 = vmatprep.subr.mxu0 0.0
    %5430 = vmatpush2.msra.mxu0 0.0
    %5431 = vmatprep.mubr.f32.mxu0 0.0
    %5432 = vmatmul.mubr.f32.gmra.mxu0 %v4507
    %v5433 = vpop.f32.mrf.mxu0
    %v5434 = vadd.f32 %v5350, %v5433
    %v5435 = vpop.f32.mrf.mxu0
    %5436 = vdwg.mxu0
    %5437 = vmatprep.subr.mxu0 0.0
    %5438 = vmatpush1.msra.mxu0 %v4674
    %5439 = vmatprep.subr.mxu0 0.0
    %5440 = vmatpush1.msra.mxu0 %v4673
    %5441 = vmatprep.subr.mxu0 0.0
    %5442 = vmatpush1.msra.mxu0 %v4672
    %5443 = vmatprep.subr.mxu0 0.0
    %5444 = vmatpush1.msra.mxu0 %v4671
    %5445 = vmatprep.subr.mxu0 0.0
    %5446 = vmatpush1.msra.mxu0 %v4670
    %5447 = vmatprep.subr.mxu0 0.0
    %5448 = vmatpush1.msra.mxu0 %v4669
    %5449 = vmatprep.subr.mxu0 0.0
    %5450 = vmatpush1.msra.mxu0 %v4668
    %5451 = vmatprep.subr.mxu0 0.0
    %5452 = vmatpush1.msra.mxu0 %v4667
    %5453 = vmatprep.subr.mxu0 0.0
    %5454 = vmatpush1.msra.mxu0 %v4666
    %5455 = vmatprep.subr.mxu0 0.0
    %5456 = vmatpush1.msra.mxu0 %v4665
    %5457 = vmatprep.subr.mxu0 0.0
    %5458 = vmatpush1.msra.mxu0 %v4664
    %5459 = vmatprep.subr.mxu0 0.0
    %5460 = vmatpush1.msra.mxu0 %v4663
    %5461 = vmatprep.subr.mxu0 0.0
    %5462 = vmatpush1.msra.mxu0 %v4662
    %5463 = vmatprep.subr.mxu0 0.0
    %5464 = vmatpush1.msra.mxu0 %v4661
    %5465 = vmatprep.subr.mxu0 0.0
    %5466 = vmatpush1.msra.mxu0 %v4660
    %5467 = vmatprep.subr.mxu0 0.0
    %5468 = vmatpush1.msra.mxu0 %v4659
    %5469 = vmatprep.subr.mxu0 0.0
    %5470 = vmatpush2.msra.mxu0 0.0
    %5471 = vmatprep.subr.mxu0 0.0
    %5472 = vmatpush2.msra.mxu0 0.0
    %5473 = vmatprep.subr.mxu0 0.0
    %5474 = vmatpush2.msra.mxu0 0.0
    %5475 = vmatprep.subr.mxu0 0.0
    %5476 = vmatpush2.msra.mxu0 0.0
    %5477 = vmatprep.subr.mxu0 0.0
    %5478 = vmatpush2.msra.mxu0 0.0
    %5479 = vmatprep.subr.mxu0 0.0
    %5480 = vmatpush2.msra.mxu0 0.0
    %5481 = vmatprep.subr.mxu0 0.0
    %5482 = vmatpush2.msra.mxu0 0.0
    %5483 = vmatprep.subr.mxu0 0.0
    %5484 = vmatpush2.msra.mxu0 0.0
    %5485 = vmatprep.subr.mxu0 0.0
    %5486 = vmatpush2.msra.mxu0 0.0
    %5487 = vmatprep.subr.mxu0 0.0
    %5488 = vmatpush2.msra.mxu0 0.0
    %5489 = vmatprep.subr.mxu0 0.0
    %5490 = vmatpush2.msra.mxu0 0.0
    %5491 = vmatprep.subr.mxu0 0.0
    %5492 = vmatpush2.msra.mxu0 0.0
    %5493 = vmatprep.subr.mxu0 0.0
    %5494 = vmatpush2.msra.mxu0 0.0
    %5495 = vmatprep.subr.mxu0 0.0
    %5496 = vmatpush2.msra.mxu0 0.0
    %5497 = vmatprep.subr.mxu0 0.0
    %5498 = vmatpush2.msra.mxu0 0.0
    %5499 = vmatprep.subr.mxu0 0.0
    %5500 = vmatpush2.msra.mxu0 0.0
    %5501 = vmatprep.mubr.f32.mxu0 0.0
    %5502 = vmatmul.mubr.f32.gmra.mxu0 %v4507
    %v5503 = vpop.f32.mrf.mxu0
    %v5504 = vadd.f32 %v5354, %v5503
    %v5505 = vpop.f32.mrf.mxu0
    %5506 = vdwg.mxu0
    %5507 = vmatprep.subr.mxu0 0.0
    %5508 = vmatpush1.msra.mxu0 %v4690
    %5509 = vmatprep.subr.mxu0 0.0
    %5510 = vmatpush1.msra.mxu0 %v4689
    %5511 = vmatprep.subr.mxu0 0.0
    %5512 = vmatpush1.msra.mxu0 %v4688
    %5513 = vmatprep.subr.mxu0 0.0
    %5514 = vmatpush1.msra.mxu0 %v4687
    %5515 = vmatprep.subr.mxu0 0.0
    %5516 = vmatpush1.msra.mxu0 %v4686
    %5517 = vmatprep.subr.mxu0 0.0
    %5518 = vmatpush1.msra.mxu0 %v4685
    %5519 = vmatprep.subr.mxu0 0.0
    %5520 = vmatpush1.msra.mxu0 %v4684
    %5521 = vmatprep.subr.mxu0 0.0
    %5522 = vmatpush1.msra.mxu0 %v4683
    %5523 = vmatprep.subr.mxu0 0.0
    %5524 = vmatpush1.msra.mxu0 %v4682
    %5525 = vmatprep.subr.mxu0 0.0
    %5526 = vmatpush1.msra.mxu0 %v4681
    %5527 = vmatprep.subr.mxu0 0.0
    %5528 = vmatpush1.msra.mxu0 %v4680
    %5529 = vmatprep.subr.mxu0 0.0
    %5530 = vmatpush1.msra.mxu0 %v4679
    %5531 = vmatprep.subr.mxu0 0.0
    %5532 = vmatpush1.msra.mxu0 %v4678
    %5533 = vmatprep.subr.mxu0 0.0
    %5534 = vmatpush1.msra.mxu0 %v4677
    %5535 = vmatprep.subr.mxu0 0.0
    %5536 = vmatpush1.msra.mxu0 %v4676
    %5537 = vmatprep.subr.mxu0 0.0
    %5538 = vmatpush1.msra.mxu0 %v4675
    %5539 = vmatprep.subr.mxu0 0.0
    %5540 = vmatpush2.msra.mxu0 0.0
    %5541 = vmatprep.subr.mxu0 0.0
    %5542 = vmatpush2.msra.mxu0 0.0
    %5543 = vmatprep.subr.mxu0 0.0
    %5544 = vmatpush2.msra.mxu0 0.0
    %5545 = vmatprep.subr.mxu0 0.0
    %5546 = vmatpush2.msra.mxu0 0.0
    %5547 = vmatprep.subr.mxu0 0.0
    %5548 = vmatpush2.msra.mxu0 0.0
    %5549 = vmatprep.subr.mxu0 0.0
    %5550 = vmatpush2.msra.mxu0 0.0
    %5551 = vmatprep.subr.mxu0 0.0
    %5552 = vmatpush2.msra.mxu0 0.0
    %5553 = vmatprep.subr.mxu0 0.0
    %5554 = vmatpush2.msra.mxu0 0.0
    %5555 = vmatprep.subr.mxu0 0.0
    %5556 = vmatpush2.msra.mxu0 0.0
    %5557 = vmatprep.subr.mxu0 0.0
    %5558 = vmatpush2.msra.mxu0 0.0
    %5559 = vmatprep.subr.mxu0 0.0
    %5560 = vmatpush2.msra.mxu0 0.0
    %5561 = vmatprep.subr.mxu0 0.0
    %5562 = vmatpush2.msra.mxu0 0.0
    %5563 = vmatprep.subr.mxu0 0.0
    %5564 = vmatpush2.msra.mxu0 0.0
    %5565 = vmatprep.subr.mxu0 0.0
    %5566 = vmatpush2.msra.mxu0 0.0
    %5567 = vmatprep.subr.mxu0 0.0
    %5568 = vmatpush2.msra.mxu0 0.0
    %5569 = vmatprep.subr.mxu0 0.0
    %5570 = vmatpush2.msra.mxu0 0.0
    %5571 = vmatprep.mubr.f32.mxu0 0.0
    %5572 = vmatmul.mubr.f32.gmra.mxu0 %v4507
    %v5573 = vpop.f32.mrf.mxu0
    %v5574 = vadd.f32 %v5358, %v5573
    %v5575 = vpop.f32.mrf.mxu0
    %5576 = vdwg.mxu0
    %5577 = vmatprep.subr.mxu0 0.0
    %5578 = vmatpush1.msra.mxu0 %v4706
    %5579 = vmatprep.subr.mxu0 0.0
    %5580 = vmatpush1.msra.mxu0 %v4705
    %5581 = vmatprep.subr.mxu0 0.0
    %5582 = vmatpush1.msra.mxu0 %v4704
    %5583 = vmatprep.subr.mxu0 0.0
    %5584 = vmatpush1.msra.mxu0 %v4703
    %5585 = vmatprep.subr.mxu0 0.0
    %5586 = vmatpush1.msra.mxu0 %v4702
    %5587 = vmatprep.subr.mxu0 0.0
    %5588 = vmatpush1.msra.mxu0 %v4701
    %5589 = vmatprep.subr.mxu0 0.0
    %5590 = vmatpush1.msra.mxu0 %v4700
    %5591 = vmatprep.subr.mxu0 0.0
    %5592 = vmatpush1.msra.mxu0 %v4699
    %5593 = vmatprep.subr.mxu0 0.0
    %5594 = vmatpush1.msra.mxu0 %v4698
    %5595 = vmatprep.subr.mxu0 0.0
    %5596 = vmatpush1.msra.mxu0 %v4697
    %5597 = vmatprep.subr.mxu0 0.0
    %5598 = vmatpush1.msra.mxu0 %v4696
    %5599 = vmatprep.subr.mxu0 0.0
    %5600 = vmatpush1.msra.mxu0 %v4695
    %5601 = vmatprep.subr.mxu0 0.0
    %5602 = vmatpush1.msra.mxu0 %v4694
    %5603 = vmatprep.subr.mxu0 0.0
    %5604 = vmatpush1.msra.mxu0 %v4693
    %5605 = vmatprep.subr.mxu0 0.0
    %5606 = vmatpush1.msra.mxu0 %v4692
    %5607 = vmatprep.subr.mxu0 0.0
    %5608 = vmatpush1.msra.mxu0 %v4691
    %5609 = vmatprep.subr.mxu0 0.0
    %5610 = vmatpush2.msra.mxu0 0.0
    %5611 = vmatprep.subr.mxu0 0.0
    %5612 = vmatpush2.msra.mxu0 0.0
    %5613 = vmatprep.subr.mxu0 0.0
    %5614 = vmatpush2.msra.mxu0 0.0
    %5615 = vmatprep.subr.mxu0 0.0
    %5616 = vmatpush2.msra.mxu0 0.0
    %5617 = vmatprep.subr.mxu0 0.0
    %5618 = vmatpush2.msra.mxu0 0.0
    %5619 = vmatprep.subr.mxu0 0.0
    %5620 = vmatpush2.msra.mxu0 0.0
    %5621 = vmatprep.subr.mxu0 0.0
    %5622 = vmatpush2.msra.mxu0 0.0
    %5623 = vmatprep.subr.mxu0 0.0
    %5624 = vmatpush2.msra.mxu0 0.0
    %5625 = vmatprep.subr.mxu0 0.0
    %5626 = vmatpush2.msra.mxu0 0.0
    %5627 = vmatprep.subr.mxu0 0.0
    %5628 = vmatpush2.msra.mxu0 0.0
    %5629 = vmatprep.subr.mxu0 0.0
    %5630 = vmatpush2.msra.mxu0 0.0
    %5631 = vmatprep.subr.mxu0 0.0
    %5632 = vmatpush2.msra.mxu0 0.0
    %5633 = vmatprep.subr.mxu0 0.0
    %5634 = vmatpush2.msra.mxu0 0.0
    %5635 = vmatprep.subr.mxu0 0.0
    %5636 = vmatpush2.msra.mxu0 0.0
    %5637 = vmatprep.subr.mxu0 0.0
    %5638 = vmatpush2.msra.mxu0 0.0
    %5639 = vmatprep.subr.mxu0 0.0
    %5640 = vmatpush2.msra.mxu0 0.0
    %5641 = vmatprep.mubr.f32.mxu0 0.0
    %5642 = vmatmul.mubr.f32.gmra.mxu0 %v4507
    %v5643 = vpop.f32.mrf.mxu0
    %v5644 = vadd.f32 %v5362, %v5643
    %v5645 = vpop.f32.mrf.mxu0
    %5646 = vdwg.mxu0
    %v5648 = vsel %vm1249, %v4826, 0
    %v5651 = vsel %vm1249, %v5130, 0
    %5653 = vmatprep.subr.mxu0 0.0
    %5654 = vmatpush1.xpose.msra.mxu0 0.0
    %5655 = vmatprep.subr.mxu0 0.0
    %5656 = vmatpush1.xpose.msra.mxu0 0.0
    %5657 = vmatprep.subr.mxu0 0.0
    %5658 = vmatpush1.xpose.msra.mxu0 0.0
    %5659 = vmatprep.subr.mxu0 0.0
    %5660 = vmatpush1.xpose.msra.mxu0 0.0
    %5661 = vmatprep.subr.mxu0 0.0
    %5662 = vmatpush1.xpose.msra.mxu0 0.0
    %5663 = vmatprep.subr.mxu0 0.0
    %5664 = vmatpush1.xpose.msra.mxu0 0.0
    %5665 = vmatprep.subr.mxu0 0.0
    %5666 = vmatpush1.xpose.msra.mxu0 0.0
    %5667 = vmatprep.subr.mxu0 0.0
    %5668 = vmatpush1.xpose.msra.mxu0 0.0
    %5669 = vmatprep.subr.mxu0 0.0
    %5670 = vmatpush1.xpose.msra.mxu0 0.0
    %5671 = vmatprep.subr.mxu0 0.0
    %5672 = vmatpush1.xpose.msra.mxu0 0.0
    %5673 = vmatprep.subr.mxu0 0.0
    %5674 = vmatpush1.xpose.msra.mxu0 0.0
    %5675 = vmatprep.subr.mxu0 0.0
    %5676 = vmatpush1.xpose.msra.mxu0 0.0
    %5677 = vmatprep.subr.mxu0 0.0
    %5678 = vmatpush1.xpose.msra.mxu0 0.0
    %5679 = vmatprep.subr.mxu0 0.0
    %5680 = vmatpush1.xpose.msra.mxu0 0.0
    %5681 = vmatprep.subr.mxu0 0.0
    %5682 = vmatpush1.xpose.msra.mxu0 0.0
    %5683 = vmatprep.subr.mxu0 0.0
    %5684 = vmatpush1.xpose.msra.mxu0 %v5651
    %5685 = vmatprep.subr.mxu0 0.0
    %5686 = vmatpush2.xpose.msra.mxu0 0.0
    %5687 = vmatprep.subr.mxu0 0.0
    %5688 = vmatpush2.xpose.msra.mxu0 0.0
    %5689 = vmatprep.subr.mxu0 0.0
    %5690 = vmatpush2.xpose.msra.mxu0 0.0
    %5691 = vmatprep.subr.mxu0 0.0
    %5692 = vmatpush2.xpose.msra.mxu0 0.0
    %5693 = vmatprep.subr.mxu0 0.0
    %5694 = vmatpush2.xpose.msra.mxu0 0.0
    %5695 = vmatprep.subr.mxu0 0.0
    %5696 = vmatpush2.xpose.msra.mxu0 0.0
    %5697 = vmatprep.subr.mxu0 0.0
    %5698 = vmatpush2.xpose.msra.mxu0 0.0
    %5699 = vmatprep.subr.mxu0 0.0
    %5700 = vmatpush2.xpose.msra.mxu0 0.0
    %5701 = vmatprep.subr.mxu0 0.0
    %5702 = vmatpush2.xpose.msra.mxu0 0.0
    %5703 = vmatprep.subr.mxu0 0.0
    %5704 = vmatpush2.xpose.msra.mxu0 0.0
    %5705 = vmatprep.subr.mxu0 0.0
    %5706 = vmatpush2.xpose.msra.mxu0 0.0
    %5707 = vmatprep.subr.mxu0 0.0
    %5708 = vmatpush2.xpose.msra.mxu0 0.0
    %5709 = vmatprep.subr.mxu0 0.0
    %5710 = vmatpush2.xpose.msra.mxu0 0.0
    %5711 = vmatprep.subr.mxu0 0.0
    %5712 = vmatpush2.xpose.msra.mxu0 0.0
    %5713 = vmatprep.subr.mxu0 0.0
    %5714 = vmatpush2.xpose.msra.mxu0 0.0
    %5715 = vmatprep.subr.mxu0 0.0
    %5716 = vmatpush2.xpose.msra.mxu0 0.0
    %5717 = vmatprep.mubr.f32.mxu0 0.0
    %5718 = vmatmul.mubr.f32.gmra.mxu0 %v5648
    %v5719 = vpop.f32.mrf.mxu0
    %v5720 = vadd.f32 0.0, %v5719
    %v5721 = vpop.f32.mrf.mxu0
    %5722 = vdwg.mxu0
    %v5724 = vsel %vm1249, %v4896, 0
    %v5727 = vsel %vm1249, %v5200, 0
    %5729 = vmatprep.subr.mxu0 0.0
    %5730 = vmatpush1.xpose.msra.mxu0 0.0
    %5731 = vmatprep.subr.mxu0 0.0
    %5732 = vmatpush1.xpose.msra.mxu0 0.0
    %5733 = vmatprep.subr.mxu0 0.0
    %5734 = vmatpush1.xpose.msra.mxu0 0.0
    %5735 = vmatprep.subr.mxu0 0.0
    %5736 = vmatpush1.xpose.msra.mxu0 0.0
    %5737 = vmatprep.subr.mxu0 0.0
    %5738 = vmatpush1.xpose.msra.mxu0 0.0
    %5739 = vmatprep.subr.mxu0 0.0
    %5740 = vmatpush1.xpose.msra.mxu0 0.0
    %5741 = vmatprep.subr.mxu0 0.0
    %5742 = vmatpush1.xpose.msra.mxu0 0.0
    %5743 = vmatprep.subr.mxu0 0.0
    %5744 = vmatpush1.xpose.msra.mxu0 0.0
    %5745 = vmatprep.subr.mxu0 0.0
    %5746 = vmatpush1.xpose.msra.mxu0 0.0
    %5747 = vmatprep.subr.mxu0 0.0
    %5748 = vmatpush1.xpose.msra.mxu0 0.0
    %5749 = vmatprep.subr.mxu0 0.0
    %5750 = vmatpush1.xpose.msra.mxu0 0.0
    %5751 = vmatprep.subr.mxu0 0.0
    %5752 = vmatpush1.xpose.msra.mxu0 0.0
    %5753 = vmatprep.subr.mxu0 0.0
    %5754 = vmatpush1.xpose.msra.mxu0 0.0
    %5755 = vmatprep.subr.mxu0 0.0
    %5756 = vmatpush1.xpose.msra.mxu0 0.0
    %5757 = vmatprep.subr.mxu0 0.0
    %5758 = vmatpush1.xpose.msra.mxu0 0.0
    %5759 = vmatprep.subr.mxu0 0.0
    %5760 = vmatpush1.xpose.msra.mxu0 %v5727
    %5761 = vmatprep.subr.mxu0 0.0
    %5762 = vmatpush2.xpose.msra.mxu0 0.0
    %5763 = vmatprep.subr.mxu0 0.0
    %5764 = vmatpush2.xpose.msra.mxu0 0.0
    %5765 = vmatprep.subr.mxu0 0.0
    %5766 = vmatpush2.xpose.msra.mxu0 0.0
    %5767 = vmatprep.subr.mxu0 0.0
    %5768 = vmatpush2.xpose.msra.mxu0 0.0
    %5769 = vmatprep.subr.mxu0 0.0
    %5770 = vmatpush2.xpose.msra.mxu0 0.0
    %5771 = vmatprep.subr.mxu0 0.0
    %5772 = vmatpush2.xpose.msra.mxu0 0.0
    %5773 = vmatprep.subr.mxu0 0.0
    %5774 = vmatpush2.xpose.msra.mxu0 0.0
    %5775 = vmatprep.subr.mxu0 0.0
    %5776 = vmatpush2.xpose.msra.mxu0 0.0
    %5777 = vmatprep.subr.mxu0 0.0
    %5778 = vmatpush2.xpose.msra.mxu0 0.0
    %5779 = vmatprep.subr.mxu0 0.0
    %5780 = vmatpush2.xpose.msra.mxu0 0.0
    %5781 = vmatprep.subr.mxu0 0.0
    %5782 = vmatpush2.xpose.msra.mxu0 0.0
    %5783 = vmatprep.subr.mxu0 0.0
    %5784 = vmatpush2.xpose.msra.mxu0 0.0
    %5785 = vmatprep.subr.mxu0 0.0
    %5786 = vmatpush2.xpose.msra.mxu0 0.0
    %5787 = vmatprep.subr.mxu0 0.0
    %5788 = vmatpush2.xpose.msra.mxu0 0.0
    %5789 = vmatprep.subr.mxu0 0.0
    %5790 = vmatpush2.xpose.msra.mxu0 0.0
    %5791 = vmatprep.subr.mxu0 0.0
    %5792 = vmatpush2.xpose.msra.mxu0 0.0
    %5793 = vmatprep.mubr.f32.mxu0 0.0
    %5794 = vmatmul.mubr.f32.gmra.mxu0 %v5724
    %v5795 = vpop.f32.mrf.mxu0
    %v5796 = vadd.f32 0.0, %v5795
    %v5797 = vpop.f32.mrf.mxu0
    %5798 = vdwg.mxu0
    %v5800 = vsel %vm1249, %v4966, 0
    %v5803 = vsel %vm1249, %v5270, 0
    %5805 = vmatprep.subr.mxu0 0.0
    %5806 = vmatpush1.xpose.msra.mxu0 0.0
    %5807 = vmatprep.subr.mxu0 0.0
    %5808 = vmatpush1.xpose.msra.mxu0 0.0
    %5809 = vmatprep.subr.mxu0 0.0
    %5810 = vmatpush1.xpose.msra.mxu0 0.0
    %5811 = vmatprep.subr.mxu0 0.0
    %5812 = vmatpush1.xpose.msra.mxu0 0.0
    %5813 = vmatprep.subr.mxu0 0.0
    %5814 = vmatpush1.xpose.msra.mxu0 0.0
    %5815 = vmatprep.subr.mxu0 0.0
    %5816 = vmatpush1.xpose.msra.mxu0 0.0
    %5817 = vmatprep.subr.mxu0 0.0
    %5818 = vmatpush1.xpose.msra.mxu0 0.0
    %5819 = vmatprep.subr.mxu0 0.0
    %5820 = vmatpush1.xpose.msra.mxu0 0.0
    %5821 = vmatprep.subr.mxu0 0.0
    %5822 = vmatpush1.xpose.msra.mxu0 0.0
    %5823 = vmatprep.subr.mxu0 0.0
    %5824 = vmatpush1.xpose.msra.mxu0 0.0
    %5825 = vmatprep.subr.mxu0 0.0
    %5826 = vmatpush1.xpose.msra.mxu0 0.0
    %5827 = vmatprep.subr.mxu0 0.0
    %5828 = vmatpush1.xpose.msra.mxu0 0.0
    %5829 = vmatprep.subr.mxu0 0.0
    %5830 = vmatpush1.xpose.msra.mxu0 0.0
    %5831 = vmatprep.subr.mxu0 0.0
    %5832 = vmatpush1.xpose.msra.mxu0 0.0
    %5833 = vmatprep.subr.mxu0 0.0
    %5834 = vmatpush1.xpose.msra.mxu0 0.0
    %5835 = vmatprep.subr.mxu0 0.0
    %5836 = vmatpush1.xpose.msra.mxu0 %v5803
    %5837 = vmatprep.subr.mxu0 0.0
    %5838 = vmatpush2.xpose.msra.mxu0 0.0
    %5839 = vmatprep.subr.mxu0 0.0
    %5840 = vmatpush2.xpose.msra.mxu0 0.0
    %5841 = vmatprep.subr.mxu0 0.0
    %5842 = vmatpush2.xpose.msra.mxu0 0.0
    %5843 = vmatprep.subr.mxu0 0.0
    %5844 = vmatpush2.xpose.msra.mxu0 0.0
    %5845 = vmatprep.subr.mxu0 0.0
    %5846 = vmatpush2.xpose.msra.mxu0 0.0
    %5847 = vmatprep.subr.mxu0 0.0
    %5848 = vmatpush2.xpose.msra.mxu0 0.0
    %5849 = vmatprep.subr.mxu0 0.0
    %5850 = vmatpush2.xpose.msra.mxu0 0.0
    %5851 = vmatprep.subr.mxu0 0.0
    %5852 = vmatpush2.xpose.msra.mxu0 0.0
    %5853 = vmatprep.subr.mxu0 0.0
    %5854 = vmatpush2.xpose.msra.mxu0 0.0
    %5855 = vmatprep.subr.mxu0 0.0
    %5856 = vmatpush2.xpose.msra.mxu0 0.0
    %5857 = vmatprep.subr.mxu0 0.0
    %5858 = vmatpush2.xpose.msra.mxu0 0.0
    %5859 = vmatprep.subr.mxu0 0.0
    %5860 = vmatpush2.xpose.msra.mxu0 0.0
    %5861 = vmatprep.subr.mxu0 0.0
    %5862 = vmatpush2.xpose.msra.mxu0 0.0
    %5863 = vmatprep.subr.mxu0 0.0
    %5864 = vmatpush2.xpose.msra.mxu0 0.0
    %5865 = vmatprep.subr.mxu0 0.0
    %5866 = vmatpush2.xpose.msra.mxu0 0.0
    %5867 = vmatprep.subr.mxu0 0.0
    %5868 = vmatpush2.xpose.msra.mxu0 0.0
    %5869 = vmatprep.mubr.f32.mxu0 0.0
    %5870 = vmatmul.mubr.f32.gmra.mxu0 %v5800
    %v5871 = vpop.f32.mrf.mxu0
    %v5872 = vadd.f32 0.0, %v5871
    %v5873 = vpop.f32.mrf.mxu0
    %5874 = vdwg.mxu0
    %v5876 = vsel %vm1249, %v5036, 0
    %v5879 = vsel %vm1249, %v5340, 0
    %5881 = vmatprep.subr.mxu0 0.0
    %5882 = vmatpush1.xpose.msra.mxu0 0.0
    %5883 = vmatprep.subr.mxu0 0.0
    %5884 = vmatpush1.xpose.msra.mxu0 0.0
    %5885 = vmatprep.subr.mxu0 0.0
    %5886 = vmatpush1.xpose.msra.mxu0 0.0
    %5887 = vmatprep.subr.mxu0 0.0
    %5888 = vmatpush1.xpose.msra.mxu0 0.0
    %5889 = vmatprep.subr.mxu0 0.0
    %5890 = vmatpush1.xpose.msra.mxu0 0.0
    %5891 = vmatprep.subr.mxu0 0.0
    %5892 = vmatpush1.xpose.msra.mxu0 0.0
    %5893 = vmatprep.subr.mxu0 0.0
    %5894 = vmatpush1.xpose.msra.mxu0 0.0
    %5895 = vmatprep.subr.mxu0 0.0
    %5896 = vmatpush1.xpose.msra.mxu0 0.0
    %5897 = vmatprep.subr.mxu0 0.0
    %5898 = vmatpush1.xpose.msra.mxu0 0.0
    %5899 = vmatprep.subr.mxu0 0.0
    %5900 = vmatpush1.xpose.msra.mxu0 0.0
    %5901 = vmatprep.subr.mxu0 0.0
    %5902 = vmatpush1.xpose.msra.mxu0 0.0
    %5903 = vmatprep.subr.mxu0 0.0
    %5904 = vmatpush1.xpose.msra.mxu0 0.0
    %5905 = vmatprep.subr.mxu0 0.0
    %5906 = vmatpush1.xpose.msra.mxu0 0.0
    %5907 = vmatprep.subr.mxu0 0.0
    %5908 = vmatpush1.xpose.msra.mxu0 0.0
    %5909 = vmatprep.subr.mxu0 0.0
    %5910 = vmatpush1.xpose.msra.mxu0 0.0
    %5911 = vmatprep.subr.mxu0 0.0
    %5912 = vmatpush1.xpose.msra.mxu0 %v5879
    %5913 = vmatprep.subr.mxu0 0.0
    %5914 = vmatpush2.xpose.msra.mxu0 0.0
    %5915 = vmatprep.subr.mxu0 0.0
    %5916 = vmatpush2.xpose.msra.mxu0 0.0
    %5917 = vmatprep.subr.mxu0 0.0
    %5918 = vmatpush2.xpose.msra.mxu0 0.0
    %5919 = vmatprep.subr.mxu0 0.0
    %5920 = vmatpush2.xpose.msra.mxu0 0.0
    %5921 = vmatprep.subr.mxu0 0.0
    %5922 = vmatpush2.xpose.msra.mxu0 0.0
    %5923 = vmatprep.subr.mxu0 0.0
    %5924 = vmatpush2.xpose.msra.mxu0 0.0
    %5925 = vmatprep.subr.mxu0 0.0
    %5926 = vmatpush2.xpose.msra.mxu0 0.0
    %5927 = vmatprep.subr.mxu0 0.0
    %5928 = vmatpush2.xpose.msra.mxu0 0.0
    %5929 = vmatprep.subr.mxu0 0.0
    %5930 = vmatpush2.xpose.msra.mxu0 0.0
    %5931 = vmatprep.subr.mxu0 0.0
    %5932 = vmatpush2.xpose.msra.mxu0 0.0
    %5933 = vmatprep.subr.mxu0 0.0
    %5934 = vmatpush2.xpose.msra.mxu0 0.0
    %5935 = vmatprep.subr.mxu0 0.0
    %5936 = vmatpush2.xpose.msra.mxu0 0.0
    %5937 = vmatprep.subr.mxu0 0.0
    %5938 = vmatpush2.xpose.msra.mxu0 0.0
    %5939 = vmatprep.subr.mxu0 0.0
    %5940 = vmatpush2.xpose.msra.mxu0 0.0
    %5941 = vmatprep.subr.mxu0 0.0
    %5942 = vmatpush2.xpose.msra.mxu0 0.0
    %5943 = vmatprep.subr.mxu0 0.0
    %5944 = vmatpush2.xpose.msra.mxu0 0.0
    %5945 = vmatprep.mubr.f32.mxu0 0.0
    %5946 = vmatmul.mubr.f32.gmra.mxu0 %v5876
    %v5947 = vpop.f32.mrf.mxu0
    %v5948 = vadd.f32 0.0, %v5947
    %v5949 = vpop.f32.mrf.mxu0
    %5950 = vdwg.mxu0
    %v5951 = vmul.f32 %v5720, 0.17677669
    %v5952 = vmul.f32 %v5796, 0.17677669
    %v5953 = vmul.f32 %v5872, 0.17677669
    %v5954 = vmul.f32 %v5948, 0.17677669
    %v5955 = vsel %vm1558, %v5951, -inf
    %5956 = vmax.xlane.f32.xlu0 %v5955
    %v5957 = vpop.xlane.xlu0 %5956
    %v5958 = vsel %vm1558, %v5952, -inf
    %5959 = vmax.xlane.f32.xlu0 %v5958
    %v5960 = vpop.xlane.xlu0 %5959
    %v5961 = vsel %vm1558, %v5953, -inf
    %5962 = vmax.xlane.f32.xlu0 %v5961
    %v5963 = vpop.xlane.xlu0 %5962
    %v5964 = vsel %vm1558, %v5954, -inf
    %5965 = vmax.xlane.f32.xlu0 %v5964
    %v5966 = vpop.xlane.xlu0 %5965
    %v5967 = vsub.f32 %v5951, %v5957
    %v5968 = vsub.f32 %v5952, %v5960
    %v5969 = vsub.f32 %v5953, %v5963
    %v5970 = vsub.f32 %v5954, %v5966
    %v5971 = vmul.f32 %v5967, 1.442695
    %v5972 = vpow.pop %v5971
    %v5973 = vmul.f32 %v5968, 1.442695
    %v5974 = vpow.pop %v5973
    %v5975 = vmul.f32 %v5969, 1.442695
    %v5976 = vpow.pop %v5975
    %v5977 = vmul.f32 %v5970, 1.442695
    %v5978 = vpow.pop %v5977
    %v5979 = vsel %vm1558, %v5972, 0.0
    %5980 = vadd.xlane.f32.xlu0 %v5979
    %v5981 = vpop.xlane.xlu0 %5980
    %v5982 = vsel %vm1558, %v5974, 0.0
    %5983 = vadd.xlane.f32.xlu0 %v5982
    %v5984 = vpop.xlane.xlu0 %5983
    %v5985 = vsel %vm1558, %v5976, 0.0
    %5986 = vadd.xlane.f32.xlu0 %v5985
    %v5987 = vpop.xlane.xlu0 %5986
    %v5988 = vsel %vm1558, %v5978, 0.0
    %5989 = vadd.xlane.f32.xlu0 %v5988
    %v5990 = vpop.xlane.xlu0 %5989
    %v5991 = vrcp.pop %v5981
    %v5992 = vrcp.pop %v5984
    %v5993 = vrcp.pop %v5987
    %v5994 = vrcp.pop %v5990
    %v5995 = vmul.f32 %v5972, %v5991
    %v5996 = vmul.f32 %v5974, %v5992
    %v5997 = vmul.f32 %v5976, %v5993
    %v5998 = vmul.f32 %v5978, %v5994
    %v6000 = vsel %vm1558, %v5995, 0
    %6002 = vmatprep.subr.mxu0 0.0
    %6003 = vmatpush1.msra.mxu0 0.0
    %6004 = vmatprep.subr.mxu0 0.0
    %6005 = vmatpush1.msra.mxu0 0.0
    %6006 = vmatprep.subr.mxu0 0.0
    %6007 = vmatpush1.msra.mxu0 0.0
    %6008 = vmatprep.subr.mxu0 0.0
    %6009 = vmatpush1.msra.mxu0 0.0
    %6010 = vmatprep.subr.mxu0 0.0
    %6011 = vmatpush1.msra.mxu0 0.0
    %6012 = vmatprep.subr.mxu0 0.0
    %6013 = vmatpush1.msra.mxu0 0.0
    %6014 = vmatprep.subr.mxu0 0.0
    %6015 = vmatpush1.msra.mxu0 0.0
    %6016 = vmatprep.subr.mxu0 0.0
    %6017 = vmatpush1.msra.mxu0 0.0
    %6018 = vmatprep.subr.mxu0 0.0
    %6019 = vmatpush1.msra.mxu0 0.0
    %6020 = vmatprep.subr.mxu0 0.0
    %6021 = vmatpush1.msra.mxu0 0.0
    %6022 = vmatprep.subr.mxu0 0.0
    %6023 = vmatpush1.msra.mxu0 0.0
    %6024 = vmatprep.subr.mxu0 0.0
    %6025 = vmatpush1.msra.mxu0 0.0
    %6026 = vmatprep.subr.mxu0 0.0
    %6027 = vmatpush1.msra.mxu0 0.0
    %6028 = vmatprep.subr.mxu0 0.0
    %6029 = vmatpush1.msra.mxu0 0.0
    %6030 = vmatprep.subr.mxu0 0.0
    %6031 = vmatpush1.msra.mxu0 0.0
    %6032 = vmatprep.subr.mxu0 0.0
    %6033 = vmatpush1.msra.mxu0 %v5434
    %6034 = vmatprep.subr.mxu0 0.0
    %6035 = vmatpush2.msra.mxu0 0.0
    %6036 = vmatprep.subr.mxu0 0.0
    %6037 = vmatpush2.msra.mxu0 0.0
    %6038 = vmatprep.subr.mxu0 0.0
    %6039 = vmatpush2.msra.mxu0 0.0
    %6040 = vmatprep.subr.mxu0 0.0
    %6041 = vmatpush2.msra.mxu0 0.0
    %6042 = vmatprep.subr.mxu0 0.0
    %6043 = vmatpush2.msra.mxu0 0.0
    %6044 = vmatprep.subr.mxu0 0.0
    %6045 = vmatpush2.msra.mxu0 0.0
    %6046 = vmatprep.subr.mxu0 0.0
    %6047 = vmatpush2.msra.mxu0 0.0
    %6048 = vmatprep.subr.mxu0 0.0
    %6049 = vmatpush2.msra.mxu0 0.0
    %6050 = vmatprep.subr.mxu0 0.0
    %6051 = vmatpush2.msra.mxu0 0.0
    %6052 = vmatprep.subr.mxu0 0.0
    %6053 = vmatpush2.msra.mxu0 0.0
    %6054 = vmatprep.subr.mxu0 0.0
    %6055 = vmatpush2.msra.mxu0 0.0
    %6056 = vmatprep.subr.mxu0 0.0
    %6057 = vmatpush2.msra.mxu0 0.0
    %6058 = vmatprep.subr.mxu0 0.0
    %6059 = vmatpush2.msra.mxu0 0.0
    %6060 = vmatprep.subr.mxu0 0.0
    %6061 = vmatpush2.msra.mxu0 0.0
    %6062 = vmatprep.subr.mxu0 0.0
    %6063 = vmatpush2.msra.mxu0 0.0
    %6064 = vmatprep.subr.mxu0 0.0
    %6065 = vmatpush2.msra.mxu0 0.0
    %6066 = vmatprep.mubr.f32.mxu0 0.0
    %6067 = vmatmul.mubr.f32.gmra.mxu0 %v6000
    %v6068 = vpop.f32.mrf.mxu0
    %v6069 = vadd.f32 0.0, %v6068
    %v6070 = vpop.f32.mrf.mxu0
    %6071 = vdwg.mxu0
    %v6073 = vsel %vm1558, %v5996, 0
    %6075 = vmatprep.subr.mxu0 0.0
    %6076 = vmatpush1.msra.mxu0 0.0
    %6077 = vmatprep.subr.mxu0 0.0
    %6078 = vmatpush1.msra.mxu0 0.0
    %6079 = vmatprep.subr.mxu0 0.0
    %6080 = vmatpush1.msra.mxu0 0.0
    %6081 = vmatprep.subr.mxu0 0.0
    %6082 = vmatpush1.msra.mxu0 0.0
    %6083 = vmatprep.subr.mxu0 0.0
    %6084 = vmatpush1.msra.mxu0 0.0
    %6085 = vmatprep.subr.mxu0 0.0
    %6086 = vmatpush1.msra.mxu0 0.0
    %6087 = vmatprep.subr.mxu0 0.0
    %6088 = vmatpush1.msra.mxu0 0.0
    %6089 = vmatprep.subr.mxu0 0.0
    %6090 = vmatpush1.msra.mxu0 0.0
    %6091 = vmatprep.subr.mxu0 0.0
    %6092 = vmatpush1.msra.mxu0 0.0
    %6093 = vmatprep.subr.mxu0 0.0
    %6094 = vmatpush1.msra.mxu0 0.0
    %6095 = vmatprep.subr.mxu0 0.0
    %6096 = vmatpush1.msra.mxu0 0.0
    %6097 = vmatprep.subr.mxu0 0.0
    %6098 = vmatpush1.msra.mxu0 0.0
    %6099 = vmatprep.subr.mxu0 0.0
    %6100 = vmatpush1.msra.mxu0 0.0
    %6101 = vmatprep.subr.mxu0 0.0
    %6102 = vmatpush1.msra.mxu0 0.0
    %6103 = vmatprep.subr.mxu0 0.0
    %6104 = vmatpush1.msra.mxu0 0.0
    %6105 = vmatprep.subr.mxu0 0.0
    %6106 = vmatpush1.msra.mxu0 %v5504
    %6107 = vmatprep.subr.mxu0 0.0
    %6108 = vmatpush2.msra.mxu0 0.0
    %6109 = vmatprep.subr.mxu0 0.0
    %6110 = vmatpush2.msra.mxu0 0.0
    %6111 = vmatprep.subr.mxu0 0.0
    %6112 = vmatpush2.msra.mxu0 0.0
    %6113 = vmatprep.subr.mxu0 0.0
    %6114 = vmatpush2.msra.mxu0 0.0
    %6115 = vmatprep.subr.mxu0 0.0
    %6116 = vmatpush2.msra.mxu0 0.0
    %6117 = vmatprep.subr.mxu0 0.0
    %6118 = vmatpush2.msra.mxu0 0.0
    %6119 = vmatprep.subr.mxu0 0.0
    %6120 = vmatpush2.msra.mxu0 0.0
    %6121 = vmatprep.subr.mxu0 0.0
    %6122 = vmatpush2.msra.mxu0 0.0
    %6123 = vmatprep.subr.mxu0 0.0
    %6124 = vmatpush2.msra.mxu0 0.0
    %6125 = vmatprep.subr.mxu0 0.0
    %6126 = vmatpush2.msra.mxu0 0.0
    %6127 = vmatprep.subr.mxu0 0.0
    %6128 = vmatpush2.msra.mxu0 0.0
    %6129 = vmatprep.subr.mxu0 0.0
    %6130 = vmatpush2.msra.mxu0 0.0
    %6131 = vmatprep.subr.mxu0 0.0
    %6132 = vmatpush2.msra.mxu0 0.0
    %6133 = vmatprep.subr.mxu0 0.0
    %6134 = vmatpush2.msra.mxu0 0.0
    %6135 = vmatprep.subr.mxu0 0.0
    %6136 = vmatpush2.msra.mxu0 0.0
    %6137 = vmatprep.subr.mxu0 0.0
    %6138 = vmatpush2.msra.mxu0 0.0
    %6139 = vmatprep.mubr.f32.mxu0 0.0
    %6140 = vmatmul.mubr.f32.gmra.mxu0 %v6073
    %v6141 = vpop.f32.mrf.mxu0
    %v6142 = vadd.f32 0.0, %v6141
    %v6143 = vpop.f32.mrf.mxu0
    %6144 = vdwg.mxu0
    %v6146 = vsel %vm1558, %v5997, 0
    %6148 = vmatprep.subr.mxu0 0.0
    %6149 = vmatpush1.msra.mxu0 0.0
    %6150 = vmatprep.subr.mxu0 0.0
    %6151 = vmatpush1.msra.mxu0 0.0
    %6152 = vmatprep.subr.mxu0 0.0
    %6153 = vmatpush1.msra.mxu0 0.0
    %6154 = vmatprep.subr.mxu0 0.0
    %6155 = vmatpush1.msra.mxu0 0.0
    %6156 = vmatprep.subr.mxu0 0.0
    %6157 = vmatpush1.msra.mxu0 0.0
    %6158 = vmatprep.subr.mxu0 0.0
    %6159 = vmatpush1.msra.mxu0 0.0
    %6160 = vmatprep.subr.mxu0 0.0
    %6161 = vmatpush1.msra.mxu0 0.0
    %6162 = vmatprep.subr.mxu0 0.0
    %6163 = vmatpush1.msra.mxu0 0.0
    %6164 = vmatprep.subr.mxu0 0.0
    %6165 = vmatpush1.msra.mxu0 0.0
    %6166 = vmatprep.subr.mxu0 0.0
    %6167 = vmatpush1.msra.mxu0 0.0
    %6168 = vmatprep.subr.mxu0 0.0
    %6169 = vmatpush1.msra.mxu0 0.0
    %6170 = vmatprep.subr.mxu0 0.0
    %6171 = vmatpush1.msra.mxu0 0.0
    %6172 = vmatprep.subr.mxu0 0.0
    %6173 = vmatpush1.msra.mxu0 0.0
    %6174 = vmatprep.subr.mxu0 0.0
    %6175 = vmatpush1.msra.mxu0 0.0
    %6176 = vmatprep.subr.mxu0 0.0
    %6177 = vmatpush1.msra.mxu0 0.0
    %6178 = vmatprep.subr.mxu0 0.0
    %6179 = vmatpush1.msra.mxu0 %v5574
    %6180 = vmatprep.subr.mxu0 0.0
    %6181 = vmatpush2.msra.mxu0 0.0
    %6182 = vmatprep.subr.mxu0 0.0
    %6183 = vmatpush2.msra.mxu0 0.0
    %6184 = vmatprep.subr.mxu0 0.0
    %6185 = vmatpush2.msra.mxu0 0.0
    %6186 = vmatprep.subr.mxu0 0.0
    %6187 = vmatpush2.msra.mxu0 0.0
    %6188 = vmatprep.subr.mxu0 0.0
    %6189 = vmatpush2.msra.mxu0 0.0
    %6190 = vmatprep.subr.mxu0 0.0
    %6191 = vmatpush2.msra.mxu0 0.0
    %6192 = vmatprep.subr.mxu0 0.0
    %6193 = vmatpush2.msra.mxu0 0.0
    %6194 = vmatprep.subr.mxu0 0.0
    %6195 = vmatpush2.msra.mxu0 0.0
    %6196 = vmatprep.subr.mxu0 0.0
    %6197 = vmatpush2.msra.mxu0 0.0
    %6198 = vmatprep.subr.mxu0 0.0
    %6199 = vmatpush2.msra.mxu0 0.0
    %6200 = vmatprep.subr.mxu0 0.0
    %6201 = vmatpush2.msra.mxu0 0.0
    %6202 = vmatprep.subr.mxu0 0.0
    %6203 = vmatpush2.msra.mxu0 0.0
    %6204 = vmatprep.subr.mxu0 0.0
    %6205 = vmatpush2.msra.mxu0 0.0
    %6206 = vmatprep.subr.mxu0 0.0
    %6207 = vmatpush2.msra.mxu0 0.0
    %6208 = vmatprep.subr.mxu0 0.0
    %6209 = vmatpush2.msra.mxu0 0.0
    %6210 = vmatprep.subr.mxu0 0.0
    %6211 = vmatpush2.msra.mxu0 0.0
    %6212 = vmatprep.mubr.f32.mxu0 0.0
    %6213 = vmatmul.mubr.f32.gmra.mxu0 %v6146
    %v6214 = vpop.f32.mrf.mxu0
    %v6215 = vadd.f32 0.0, %v6214
    %v6216 = vpop.f32.mrf.mxu0
    %6217 = vdwg.mxu0
    %v6219 = vsel %vm1558, %v5998, 0
    %6221 = vmatprep.subr.mxu0 0.0
    %6222 = vmatpush1.msra.mxu0 0.0
    %6223 = vmatprep.subr.mxu0 0.0
    %6224 = vmatpush1.msra.mxu0 0.0
    %6225 = vmatprep.subr.mxu0 0.0
    %6226 = vmatpush1.msra.mxu0 0.0
    %6227 = vmatprep.subr.mxu0 0.0
    %6228 = vmatpush1.msra.mxu0 0.0
    %6229 = vmatprep.subr.mxu0 0.0
    %6230 = vmatpush1.msra.mxu0 0.0
    %6231 = vmatprep.subr.mxu0 0.0
    %6232 = vmatpush1.msra.mxu0 0.0
    %6233 = vmatprep.subr.mxu0 0.0
    %6234 = vmatpush1.msra.mxu0 0.0
    %6235 = vmatprep.subr.mxu0 0.0
    %6236 = vmatpush1.msra.mxu0 0.0
    %6237 = vmatprep.subr.mxu0 0.0
    %6238 = vmatpush1.msra.mxu0 0.0
    %6239 = vmatprep.subr.mxu0 0.0
    %6240 = vmatpush1.msra.mxu0 0.0
    %6241 = vmatprep.subr.mxu0 0.0
    %6242 = vmatpush1.msra.mxu0 0.0
    %6243 = vmatprep.subr.mxu0 0.0
    %6244 = vmatpush1.msra.mxu0 0.0
    %6245 = vmatprep.subr.mxu0 0.0
    %6246 = vmatpush1.msra.mxu0 0.0
    %6247 = vmatprep.subr.mxu0 0.0
    %6248 = vmatpush1.msra.mxu0 0.0
    %6249 = vmatprep.subr.mxu0 0.0
    %6250 = vmatpush1.msra.mxu0 0.0
    %6251 = vmatprep.subr.mxu0 0.0
    %6252 = vmatpush1.msra.mxu0 %v5644
    %6253 = vmatprep.subr.mxu0 0.0
    %6254 = vmatpush2.msra.mxu0 0.0
    %6255 = vmatprep.subr.mxu0 0.0
    %6256 = vmatpush2.msra.mxu0 0.0
    %6257 = vmatprep.subr.mxu0 0.0
    %6258 = vmatpush2.msra.mxu0 0.0
    %6259 = vmatprep.subr.mxu0 0.0
    %6260 = vmatpush2.msra.mxu0 0.0
    %6261 = vmatprep.subr.mxu0 0.0
    %6262 = vmatpush2.msra.mxu0 0.0
    %6263 = vmatprep.subr.mxu0 0.0
    %6264 = vmatpush2.msra.mxu0 0.0
    %6265 = vmatprep.subr.mxu0 0.0
    %6266 = vmatpush2.msra.mxu0 0.0
    %6267 = vmatprep.subr.mxu0 0.0
    %6268 = vmatpush2.msra.mxu0 0.0
    %6269 = vmatprep.subr.mxu0 0.0
    %6270 = vmatpush2.msra.mxu0 0.0
    %6271 = vmatprep.subr.mxu0 0.0
    %6272 = vmatpush2.msra.mxu0 0.0
    %6273 = vmatprep.subr.mxu0 0.0
    %6274 = vmatpush2.msra.mxu0 0.0
    %6275 = vmatprep.subr.mxu0 0.0
    %6276 = vmatpush2.msra.mxu0 0.0
    %6277 = vmatprep.subr.mxu0 0.0
    %6278 = vmatpush2.msra.mxu0 0.0
    %6279 = vmatprep.subr.mxu0 0.0
    %6280 = vmatpush2.msra.mxu0 0.0
    %6281 = vmatprep.subr.mxu0 0.0
    %6282 = vmatpush2.msra.mxu0 0.0
    %6283 = vmatprep.subr.mxu0 0.0
    %6284 = vmatpush2.msra.mxu0 0.0
    %6285 = vmatprep.mubr.f32.mxu0 0.0
    %6286 = vmatmul.mubr.f32.gmra.mxu0 %v6219
    %v6287 = vpop.f32.mrf.mxu0
    %v6288 = vadd.f32 0.0, %v6287
    %v6289 = vpop.f32.mrf.mxu0
    %6290 = vdwg.mxu0
    %v6292 = vsel %vm1249, %v6069, 0
    %6294 = vmatprep.subr.mxu0 0.0
    %6295 = vmatpush1.msra.mxu0 0.0
    %6296 = vmatprep.subr.mxu0 0.0
    %6297 = vmatpush1.msra.mxu0 0.0
    %6298 = vmatprep.subr.mxu0 0.0
    %6299 = vmatpush1.msra.mxu0 0.0
    %6300 = vmatprep.subr.mxu0 0.0
    %6301 = vmatpush1.msra.mxu0 0.0
    %6302 = vmatprep.subr.mxu0 0.0
    %6303 = vmatpush1.msra.mxu0 0.0
    %6304 = vmatprep.subr.mxu0 0.0
    %6305 = vmatpush1.msra.mxu0 0.0
    %6306 = vmatprep.subr.mxu0 0.0
    %6307 = vmatpush1.msra.mxu0 0.0
    %6308 = vmatprep.subr.mxu0 0.0
    %6309 = vmatpush1.msra.mxu0 0.0
    %6310 = vmatprep.subr.mxu0 0.0
    %6311 = vmatpush1.msra.mxu0 0.0
    %6312 = vmatprep.subr.mxu0 0.0
    %6313 = vmatpush1.msra.mxu0 0.0
    %6314 = vmatprep.subr.mxu0 0.0
    %6315 = vmatpush1.msra.mxu0 0.0
    %6316 = vmatprep.subr.mxu0 0.0
    %6317 = vmatpush1.msra.mxu0 0.0
    %6318 = vmatprep.subr.mxu0 0.0
    %6319 = vmatpush1.msra.mxu0 %v4722
    %6320 = vmatprep.subr.mxu0 0.0
    %6321 = vmatpush1.msra.mxu0 %v4721
    %6322 = vmatprep.subr.mxu0 0.0
    %6323 = vmatpush1.msra.mxu0 %v4720
    %6324 = vmatprep.subr.mxu0 0.0
    %6325 = vmatpush1.msra.mxu0 %v4719
    %6326 = vmatprep.subr.mxu0 0.0
    %6327 = vmatpush2.msra.mxu0 0.0
    %6328 = vmatprep.subr.mxu0 0.0
    %6329 = vmatpush2.msra.mxu0 0.0
    %6330 = vmatprep.subr.mxu0 0.0
    %6331 = vmatpush2.msra.mxu0 0.0
    %6332 = vmatprep.subr.mxu0 0.0
    %6333 = vmatpush2.msra.mxu0 0.0
    %6334 = vmatprep.subr.mxu0 0.0
    %6335 = vmatpush2.msra.mxu0 0.0
    %6336 = vmatprep.subr.mxu0 0.0
    %6337 = vmatpush2.msra.mxu0 0.0
    %6338 = vmatprep.subr.mxu0 0.0
    %6339 = vmatpush2.msra.mxu0 0.0
    %6340 = vmatprep.subr.mxu0 0.0
    %6341 = vmatpush2.msra.mxu0 0.0
    %6342 = vmatprep.subr.mxu0 0.0
    %6343 = vmatpush2.msra.mxu0 0.0
    %6344 = vmatprep.subr.mxu0 0.0
    %6345 = vmatpush2.msra.mxu0 0.0
    %6346 = vmatprep.subr.mxu0 0.0
    %6347 = vmatpush2.msra.mxu0 0.0
    %6348 = vmatprep.subr.mxu0 0.0
    %6349 = vmatpush2.msra.mxu0 0.0
    %6350 = vmatprep.subr.mxu0 0.0
    %6351 = vmatpush2.msra.mxu0 0.0
    %6352 = vmatprep.subr.mxu0 0.0
    %6353 = vmatpush2.msra.mxu0 0.0
    %6354 = vmatprep.subr.mxu0 0.0
    %6355 = vmatpush2.msra.mxu0 0.0
    %6356 = vmatprep.subr.mxu0 0.0
    %6357 = vmatpush2.msra.mxu0 0.0
    %6358 = vmatprep.mubr.f32.mxu0 0.0
    %6359 = vmatmul.mubr.f32.gmra.mxu0 %v6292
    %v6360 = vpop.f32.mrf.mxu0
    %v6361 = vadd.f32 0.0, %v6360
    %v6362 = vpop.f32.mrf.mxu0
    %6363 = vdwg.mxu0
    %v6365 = vsel %vm1249, %v6142, 0
    %6367 = vmatprep.subr.mxu0 0.0
    %6368 = vmatpush1.msra.mxu0 0.0
    %6369 = vmatprep.subr.mxu0 0.0
    %6370 = vmatpush1.msra.mxu0 0.0
    %6371 = vmatprep.subr.mxu0 0.0
    %6372 = vmatpush1.msra.mxu0 0.0
    %6373 = vmatprep.subr.mxu0 0.0
    %6374 = vmatpush1.msra.mxu0 0.0
    %6375 = vmatprep.subr.mxu0 0.0
    %6376 = vmatpush1.msra.mxu0 0.0
    %6377 = vmatprep.subr.mxu0 0.0
    %6378 = vmatpush1.msra.mxu0 0.0
    %6379 = vmatprep.subr.mxu0 0.0
    %6380 = vmatpush1.msra.mxu0 0.0
    %6381 = vmatprep.subr.mxu0 0.0
    %6382 = vmatpush1.msra.mxu0 0.0
    %6383 = vmatprep.subr.mxu0 0.0
    %6384 = vmatpush1.msra.mxu0 0.0
    %6385 = vmatprep.subr.mxu0 0.0
    %6386 = vmatpush1.msra.mxu0 0.0
    %6387 = vmatprep.subr.mxu0 0.0
    %6388 = vmatpush1.msra.mxu0 0.0
    %6389 = vmatprep.subr.mxu0 0.0
    %6390 = vmatpush1.msra.mxu0 0.0
    %6391 = vmatprep.subr.mxu0 0.0
    %6392 = vmatpush1.msra.mxu0 %v4726
    %6393 = vmatprep.subr.mxu0 0.0
    %6394 = vmatpush1.msra.mxu0 %v4725
    %6395 = vmatprep.subr.mxu0 0.0
    %6396 = vmatpush1.msra.mxu0 %v4724
    %6397 = vmatprep.subr.mxu0 0.0
    %6398 = vmatpush1.msra.mxu0 %v4723
    %6399 = vmatprep.subr.mxu0 0.0
    %6400 = vmatpush2.msra.mxu0 0.0
    %6401 = vmatprep.subr.mxu0 0.0
    %6402 = vmatpush2.msra.mxu0 0.0
    %6403 = vmatprep.subr.mxu0 0.0
    %6404 = vmatpush2.msra.mxu0 0.0
    %6405 = vmatprep.subr.mxu0 0.0
    %6406 = vmatpush2.msra.mxu0 0.0
    %6407 = vmatprep.subr.mxu0 0.0
    %6408 = vmatpush2.msra.mxu0 0.0
    %6409 = vmatprep.subr.mxu0 0.0
    %6410 = vmatpush2.msra.mxu0 0.0
    %6411 = vmatprep.subr.mxu0 0.0
    %6412 = vmatpush2.msra.mxu0 0.0
    %6413 = vmatprep.subr.mxu0 0.0
    %6414 = vmatpush2.msra.mxu0 0.0
    %6415 = vmatprep.subr.mxu0 0.0
    %6416 = vmatpush2.msra.mxu0 0.0
    %6417 = vmatprep.subr.mxu0 0.0
    %6418 = vmatpush2.msra.mxu0 0.0
    %6419 = vmatprep.subr.mxu0 0.0
    %6420 = vmatpush2.msra.mxu0 0.0
    %6421 = vmatprep.subr.mxu0 0.0
    %6422 = vmatpush2.msra.mxu0 0.0
    %6423 = vmatprep.subr.mxu0 0.0
    %6424 = vmatpush2.msra.mxu0 0.0
    %6425 = vmatprep.subr.mxu0 0.0
    %6426 = vmatpush2.msra.mxu0 0.0
    %6427 = vmatprep.subr.mxu0 0.0
    %6428 = vmatpush2.msra.mxu0 0.0
    %6429 = vmatprep.subr.mxu0 0.0
    %6430 = vmatpush2.msra.mxu0 0.0
    %6431 = vmatprep.mubr.f32.mxu0 0.0
    %6432 = vmatmul.mubr.f32.gmra.mxu0 %v6365
    %v6433 = vpop.f32.mrf.mxu0
    %v6434 = vadd.f32 0.0, %v6433
    %v6435 = vpop.f32.mrf.mxu0
    %6436 = vdwg.mxu0
    %v6438 = vsel %vm1249, %v6215, 0
    %6440 = vmatprep.subr.mxu0 0.0
    %6441 = vmatpush1.msra.mxu0 0.0
    %6442 = vmatprep.subr.mxu0 0.0
    %6443 = vmatpush1.msra.mxu0 0.0
    %6444 = vmatprep.subr.mxu0 0.0
    %6445 = vmatpush1.msra.mxu0 0.0
    %6446 = vmatprep.subr.mxu0 0.0
    %6447 = vmatpush1.msra.mxu0 0.0
    %6448 = vmatprep.subr.mxu0 0.0
    %6449 = vmatpush1.msra.mxu0 0.0
    %6450 = vmatprep.subr.mxu0 0.0
    %6451 = vmatpush1.msra.mxu0 0.0
    %6452 = vmatprep.subr.mxu0 0.0
    %6453 = vmatpush1.msra.mxu0 0.0
    %6454 = vmatprep.subr.mxu0 0.0
    %6455 = vmatpush1.msra.mxu0 0.0
    %6456 = vmatprep.subr.mxu0 0.0
    %6457 = vmatpush1.msra.mxu0 0.0
    %6458 = vmatprep.subr.mxu0 0.0
    %6459 = vmatpush1.msra.mxu0 0.0
    %6460 = vmatprep.subr.mxu0 0.0
    %6461 = vmatpush1.msra.mxu0 0.0
    %6462 = vmatprep.subr.mxu0 0.0
    %6463 = vmatpush1.msra.mxu0 0.0
    %6464 = vmatprep.subr.mxu0 0.0
    %6465 = vmatpush1.msra.mxu0 %v4730
    %6466 = vmatprep.subr.mxu0 0.0
    %6467 = vmatpush1.msra.mxu0 %v4729
    %6468 = vmatprep.subr.mxu0 0.0
    %6469 = vmatpush1.msra.mxu0 %v4728
    %6470 = vmatprep.subr.mxu0 0.0
    %6471 = vmatpush1.msra.mxu0 %v4727
    %6472 = vmatprep.subr.mxu0 0.0
    %6473 = vmatpush2.msra.mxu0 0.0
    %6474 = vmatprep.subr.mxu0 0.0
    %6475 = vmatpush2.msra.mxu0 0.0
    %6476 = vmatprep.subr.mxu0 0.0
    %6477 = vmatpush2.msra.mxu0 0.0
    %6478 = vmatprep.subr.mxu0 0.0
    %6479 = vmatpush2.msra.mxu0 0.0
    %6480 = vmatprep.subr.mxu0 0.0
    %6481 = vmatpush2.msra.mxu0 0.0
    %6482 = vmatprep.subr.mxu0 0.0
    %6483 = vmatpush2.msra.mxu0 0.0
    %6484 = vmatprep.subr.mxu0 0.0
    %6485 = vmatpush2.msra.mxu0 0.0
    %6486 = vmatprep.subr.mxu0 0.0
    %6487 = vmatpush2.msra.mxu0 0.0
    %6488 = vmatprep.subr.mxu0 0.0
    %6489 = vmatpush2.msra.mxu0 0.0
    %6490 = vmatprep.subr.mxu0 0.0
    %6491 = vmatpush2.msra.mxu0 0.0
    %6492 = vmatprep.subr.mxu0 0.0
    %6493 = vmatpush2.msra.mxu0 0.0
    %6494 = vmatprep.subr.mxu0 0.0
    %6495 = vmatpush2.msra.mxu0 0.0
    %6496 = vmatprep.subr.mxu0 0.0
    %6497 = vmatpush2.msra.mxu0 0.0
    %6498 = vmatprep.subr.mxu0 0.0
    %6499 = vmatpush2.msra.mxu0 0.0
    %6500 = vmatprep.subr.mxu0 0.0
    %6501 = vmatpush2.msra.mxu0 0.0
    %6502 = vmatprep.subr.mxu0 0.0
    %6503 = vmatpush2.msra.mxu0 0.0
    %6504 = vmatprep.mubr.f32.mxu0 0.0
    %6505 = vmatmul.mubr.f32.gmra.mxu0 %v6438
    %v6506 = vpop.f32.mrf.mxu0
    %v6507 = vadd.f32 0.0, %v6506
    %v6508 = vpop.f32.mrf.mxu0
    %6509 = vdwg.mxu0
    %v6511 = vsel %vm1249, %v6288, 0
    %6513 = vmatprep.subr.mxu0 0.0
    %6514 = vmatpush1.msra.mxu0 0.0
    %6515 = vmatprep.subr.mxu0 0.0
    %6516 = vmatpush1.msra.mxu0 0.0
    %6517 = vmatprep.subr.mxu0 0.0
    %6518 = vmatpush1.msra.mxu0 0.0
    %6519 = vmatprep.subr.mxu0 0.0
    %6520 = vmatpush1.msra.mxu0 0.0
    %6521 = vmatprep.subr.mxu0 0.0
    %6522 = vmatpush1.msra.mxu0 0.0
    %6523 = vmatprep.subr.mxu0 0.0
    %6524 = vmatpush1.msra.mxu0 0.0
    %6525 = vmatprep.subr.mxu0 0.0
    %6526 = vmatpush1.msra.mxu0 0.0
    %6527 = vmatprep.subr.mxu0 0.0
    %6528 = vmatpush1.msra.mxu0 0.0
    %6529 = vmatprep.subr.mxu0 0.0
    %6530 = vmatpush1.msra.mxu0 0.0
    %6531 = vmatprep.subr.mxu0 0.0
    %6532 = vmatpush1.msra.mxu0 0.0
    %6533 = vmatprep.subr.mxu0 0.0
    %6534 = vmatpush1.msra.mxu0 0.0
    %6535 = vmatprep.subr.mxu0 0.0
    %6536 = vmatpush1.msra.mxu0 0.0
    %6537 = vmatprep.subr.mxu0 0.0
    %6538 = vmatpush1.msra.mxu0 %v4734
    %6539 = vmatprep.subr.mxu0 0.0
    %6540 = vmatpush1.msra.mxu0 %v4733
    %6541 = vmatprep.subr.mxu0 0.0
    %6542 = vmatpush1.msra.mxu0 %v4732
    %6543 = vmatprep.subr.mxu0 0.0
    %6544 = vmatpush1.msra.mxu0 %v4731
    %6545 = vmatprep.subr.mxu0 0.0
    %6546 = vmatpush2.msra.mxu0 0.0
    %6547 = vmatprep.subr.mxu0 0.0
    %6548 = vmatpush2.msra.mxu0 0.0
    %6549 = vmatprep.subr.mxu0 0.0
    %6550 = vmatpush2.msra.mxu0 0.0
    %6551 = vmatprep.subr.mxu0 0.0
    %6552 = vmatpush2.msra.mxu0 0.0
    %6553 = vmatprep.subr.mxu0 0.0
    %6554 = vmatpush2.msra.mxu0 0.0
    %6555 = vmatprep.subr.mxu0 0.0
    %6556 = vmatpush2.msra.mxu0 0.0
    %6557 = vmatprep.subr.mxu0 0.0
    %6558 = vmatpush2.msra.mxu0 0.0
    %6559 = vmatprep.subr.mxu0 0.0
    %6560 = vmatpush2.msra.mxu0 0.0
    %6561 = vmatprep.subr.mxu0 0.0
    %6562 = vmatpush2.msra.mxu0 0.0
    %6563 = vmatprep.subr.mxu0 0.0
    %6564 = vmatpush2.msra.mxu0 0.0
    %6565 = vmatprep.subr.mxu0 0.0
    %6566 = vmatpush2.msra.mxu0 0.0
    %6567 = vmatprep.subr.mxu0 0.0
    %6568 = vmatpush2.msra.mxu0 0.0
    %6569 = vmatprep.subr.mxu0 0.0
    %6570 = vmatpush2.msra.mxu0 0.0
    %6571 = vmatprep.subr.mxu0 0.0
    %6572 = vmatpush2.msra.mxu0 0.0
    %6573 = vmatprep.subr.mxu0 0.0
    %6574 = vmatpush2.msra.mxu0 0.0
    %6575 = vmatprep.subr.mxu0 0.0
    %6576 = vmatpush2.msra.mxu0 0.0
    %6577 = vmatprep.mubr.f32.mxu0 0.0
    %6578 = vmatmul.mubr.f32.gmra.mxu0 %v6511
    %v6579 = vpop.f32.mrf.mxu0
    %v6580 = vadd.f32 0.0, %v6579
    %v6581 = vpop.f32.mrf.mxu0
    %6582 = vdwg.mxu0
    %v6583 = vadd.f32 %v6361, %v6434
    %v6584 = vadd.f32 %v6583, %v6507
    %v6585 = vadd.f32 %v6584, %v6580
    %v6586 = vadd.f32 %v6585, %v2193
    %v6587 = vadd.f32 %v4507, %v6586
    %6588 = vadd.xlane.f32.xlu0 %v6587
    %v6589 = vpop.xlane.xlu0 %6588
    %v6590 = vmul.f32 %v6589, %v2198
    %v6591 = vsub.f32 %v6587, %v6590
    %v6592 = vmul.f32 %v6591, %v6591
    %6593 = vadd.xlane.f32.xlu0 %v6592
    %v6594 = vpop.xlane.xlu0 %6593
    %v6595 = vmul.f32 %v6594, %v2198
    %v6596 = vadd.f32 %v6595, 1e-05
    %v6597 = vrsqrt.pop %v6596
    %v6598 = vmul.f32 %v6591, %v6597
    %v6599 = vmul.f32 %v6598, %v2211
    %v6600 = vadd.f32 %v6599, %v2216
    %v6601 = vadd.f32 %v6600, %v4511
    %v6602 = vadd.f32 %v4509, %v4513
    %v6603 = vld [vmem:[%s2220] sm:$0xff]
    %v6604 = vld [vmem:[%s2220 + $0x8] sm:$0xff]
    %v6605 = vld [vmem:[%s2220 + $0x10] sm:$0xff]
    %v6606 = vld [vmem:[%s2220 + $0x18] sm:$0xff]
    %v6607 = vld [vmem:[%s2220 + $0x20] sm:$0xff]
    %v6608 = vld [vmem:[%s2220 + $0x28] sm:$0xff]
    %v6609 = vld [vmem:[%s2220 + $0x30] sm:$0xff]
    %v6610 = vld [vmem:[%s2220 + $0x38] sm:$0xff]
    %v6611 = vld [vmem:[%s2220 + $0x40] sm:$0xff]
    %v6612 = vld [vmem:[%s2220 + $0x48] sm:$0xff]
    %v6613 = vld [vmem:[%s2220 + $0x50] sm:$0xff]
    %v6614 = vld [vmem:[%s2220 + $0x58] sm:$0xff]
    %v6615 = vld [vmem:[%s2220 + $0x60] sm:$0xff]
    %v6616 = vld [vmem:[%s2220 + $0x68] sm:$0xff]
    %v6617 = vld [vmem:[%s2220 + $0x70] sm:$0xff]
    %v6618 = vld [vmem:[%s2220 + $0x78] sm:$0xff]
    %v6619 = vld [vmem:[%s2220 + $0x80] sm:$0xff]
    %v6620 = vld [vmem:[%s2220 + $0x88] sm:$0xff]
    %v6621 = vld [vmem:[%s2220 + $0x90] sm:$0xff]
    %v6622 = vld [vmem:[%s2220 + $0x98] sm:$0xff]
    %v6623 = vld [vmem:[%s2220 + $0xa0] sm:$0xff]
    %v6624 = vld [vmem:[%s2220 + $0xa8] sm:$0xff]
    %v6625 = vld [vmem:[%s2220 + $0xb0] sm:$0xff]
    %v6626 = vld [vmem:[%s2220 + $0xb8] sm:$0xff]
    %v6627 = vld [vmem:[%s2220 + $0xc0] sm:$0xff]
    %v6628 = vld [vmem:[%s2220 + $0xc8] sm:$0xff]
    %v6629 = vld [vmem:[%s2220 + $0xd0] sm:$0xff]
    %v6630 = vld [vmem:[%s2220 + $0xd8] sm:$0xff]
    %v6631 = vld [vmem:[%s2220 + $0xe0] sm:$0xff]
    %v6632 = vld [vmem:[%s2220 + $0xe8] sm:$0xff]
    %v6633 = vld [vmem:[%s2220 + $0xf0] sm:$0xff]
    %v6634 = vld [vmem:[%s2220 + $0xf8] sm:$0xff]
    %v6635 = vld [vmem:[%s2220 + $0x100] sm:$0xff]
    %v6636 = vld [vmem:[%s2220 + $0x108] sm:$0xff]
    %v6637 = vld [vmem:[%s2220 + $0x110] sm:$0xff]
    %v6638 = vld [vmem:[%s2220 + $0x118] sm:$0xff]
    %v6639 = vld [vmem:[%s2220 + $0x120] sm:$0xff]
    %v6640 = vld [vmem:[%s2220 + $0x128] sm:$0xff]
    %v6641 = vld [vmem:[%s2220 + $0x130] sm:$0xff]
    %v6642 = vld [vmem:[%s2220 + $0x138] sm:$0xff]
    %v6643 = vld [vmem:[%s2220 + $0x140] sm:$0xff]
    %v6644 = vld [vmem:[%s2220 + $0x148] sm:$0xff]
    %v6645 = vld [vmem:[%s2220 + $0x150] sm:$0xff]
    %v6646 = vld [vmem:[%s2220 + $0x158] sm:$0xff]
    %v6647 = vld [vmem:[%s2220 + $0x160] sm:$0xff]
    %v6648 = vld [vmem:[%s2220 + $0x168] sm:$0xff]
    %v6649 = vld [vmem:[%s2220 + $0x170] sm:$0xff]
    %v6650 = vld [vmem:[%s2220 + $0x178] sm:$0xff]
    %v6651 = vld [vmem:[%s2220 + $0x180] sm:$0xff]
    %v6652 = vld [vmem:[%s2220 + $0x188] sm:$0xff]
    %v6653 = vld [vmem:[%s2220 + $0x190] sm:$0xff]
    %v6654 = vld [vmem:[%s2220 + $0x198] sm:$0xff]
    %v6655 = vld [vmem:[%s2220 + $0x1a0] sm:$0xff]
    %v6656 = vld [vmem:[%s2220 + $0x1a8] sm:$0xff]
    %v6657 = vld [vmem:[%s2220 + $0x1b0] sm:$0xff]
    %v6658 = vld [vmem:[%s2220 + $0x1b8] sm:$0xff]
    %v6659 = vld [vmem:[%s2220 + $0x1c0] sm:$0xff]
    %v6660 = vld [vmem:[%s2220 + $0x1c8] sm:$0xff]
    %v6661 = vld [vmem:[%s2220 + $0x1d0] sm:$0xff]
    %v6662 = vld [vmem:[%s2220 + $0x1d8] sm:$0xff]
    %v6663 = vld [vmem:[%s2220 + $0x1e0] sm:$0xff]
    %v6664 = vld [vmem:[%s2220 + $0x1e8] sm:$0xff]
    %v6665 = vld [vmem:[%s2220 + $0x1f0] sm:$0xff]
    %v6666 = vld [vmem:[%s2220 + $0x1f8] sm:$0xff]
    %v6667 = vld [vmem:[%s2285] sm:$0xff]
    %v6668 = vld [vmem:[%s2285 + $0x8] sm:$0xff]
    %v6669 = vld [vmem:[%s2285 + $0x10] sm:$0xff]
    %v6670 = vld [vmem:[%s2285 + $0x18] sm:$0xff]
    %v6671 = vld [vmem:[%s2285 + $0x20] sm:$0xff]
    %v6672 = vld [vmem:[%s2285 + $0x28] sm:$0xff]
    %v6673 = vld [vmem:[%s2285 + $0x30] sm:$0xff]
    %v6674 = vld [vmem:[%s2285 + $0x38] sm:$0xff]
    %v6675 = vld [vmem:[%s2285 + $0x40] sm:$0xff]
    %v6676 = vld [vmem:[%s2285 + $0x48] sm:$0xff]
    %v6677 = vld [vmem:[%s2285 + $0x50] sm:$0xff]
    %v6678 = vld [vmem:[%s2285 + $0x58] sm:$0xff]
    %v6679 = vld [vmem:[%s2285 + $0x60] sm:$0xff]
    %v6680 = vld [vmem:[%s2285 + $0x68] sm:$0xff]
    %v6681 = vld [vmem:[%s2285 + $0x70] sm:$0xff]
    %v6682 = vld [vmem:[%s2285 + $0x78] sm:$0xff]
    %v6683 = vld [vmem:[%s2285 + $0x80] sm:$0xff]
    %v6684 = vld [vmem:[%s2285 + $0x88] sm:$0xff]
    %v6685 = vld [vmem:[%s2285 + $0x90] sm:$0xff]
    %v6686 = vld [vmem:[%s2285 + $0x98] sm:$0xff]
    %v6687 = vld [vmem:[%s2285 + $0xa0] sm:$0xff]
    %v6688 = vld [vmem:[%s2285 + $0xa8] sm:$0xff]
    %v6689 = vld [vmem:[%s2285 + $0xb0] sm:$0xff]
    %v6690 = vld [vmem:[%s2285 + $0xb8] sm:$0xff]
    %v6691 = vld [vmem:[%s2285 + $0xc0] sm:$0xff]
    %v6692 = vld [vmem:[%s2285 + $0xc8] sm:$0xff]
    %v6693 = vld [vmem:[%s2285 + $0xd0] sm:$0xff]
    %v6694 = vld [vmem:[%s2285 + $0xd8] sm:$0xff]
    %v6695 = vld [vmem:[%s2285 + $0xe0] sm:$0xff]
    %v6696 = vld [vmem:[%s2285 + $0xe8] sm:$0xff]
    %v6697 = vld [vmem:[%s2285 + $0xf0] sm:$0xff]
    %v6698 = vld [vmem:[%s2285 + $0xf8] sm:$0xff]
    %v6699 = vld [vmem:[%s2285 + $0x100] sm:$0xff]
    %v6700 = vld [vmem:[%s2285 + $0x108] sm:$0xff]
    %v6701 = vld [vmem:[%s2285 + $0x110] sm:$0xff]
    %v6702 = vld [vmem:[%s2285 + $0x118] sm:$0xff]
    %v6703 = vld [vmem:[%s2285 + $0x120] sm:$0xff]
    %v6704 = vld [vmem:[%s2285 + $0x128] sm:$0xff]
    %v6705 = vld [vmem:[%s2285 + $0x130] sm:$0xff]
    %v6706 = vld [vmem:[%s2285 + $0x138] sm:$0xff]
    %v6707 = vld [vmem:[%s2285 + $0x140] sm:$0xff]
    %v6708 = vld [vmem:[%s2285 + $0x148] sm:$0xff]
    %v6709 = vld [vmem:[%s2285 + $0x150] sm:$0xff]
    %v6710 = vld [vmem:[%s2285 + $0x158] sm:$0xff]
    %v6711 = vld [vmem:[%s2285 + $0x160] sm:$0xff]
    %v6712 = vld [vmem:[%s2285 + $0x168] sm:$0xff]
    %v6713 = vld [vmem:[%s2285 + $0x170] sm:$0xff]
    %v6714 = vld [vmem:[%s2285 + $0x178] sm:$0xff]
    %v6715 = vld [vmem:[%s2285 + $0x180] sm:$0xff]
    %v6716 = vld [vmem:[%s2285 + $0x188] sm:$0xff]
    %v6717 = vld [vmem:[%s2285 + $0x190] sm:$0xff]
    %v6718 = vld [vmem:[%s2285 + $0x198] sm:$0xff]
    %v6719 = vld [vmem:[%s2285 + $0x1a0] sm:$0xff]
    %v6720 = vld [vmem:[%s2285 + $0x1a8] sm:$0xff]
    %v6721 = vld [vmem:[%s2285 + $0x1b0] sm:$0xff]
    %v6722 = vld [vmem:[%s2285 + $0x1b8] sm:$0xff]
    %v6723 = vld [vmem:[%s2285 + $0x1c0] sm:$0xff]
    %v6724 = vld [vmem:[%s2285 + $0x1c8] sm:$0xff]
    %v6725 = vld [vmem:[%s2285 + $0x1d0] sm:$0xff]
    %v6726 = vld [vmem:[%s2285 + $0x1d8] sm:$0xff]
    %v6727 = vld [vmem:[%s2285 + $0x1e0] sm:$0xff]
    %v6728 = vld [vmem:[%s2285 + $0x1e8] sm:$0xff]
    %v6729 = vld [vmem:[%s2285 + $0x1f0] sm:$0xff]
    %v6730 = vld [vmem:[%s2285 + $0x1f8] sm:$0xff]
    %v6731 = vld [vmem:[%s2350] sm:$0xff]
    %v6732 = vld [vmem:[%s2350 + $0x8] sm:$0xff]
    %v6733 = vld [vmem:[%s2350 + $0x10] sm:$0xff]
    %v6734 = vld [vmem:[%s2350 + $0x18] sm:$0xff]
    %v6735 = vld [vmem:[%s2350 + $0x20] sm:$0xff]
    %v6736 = vld [vmem:[%s2350 + $0x28] sm:$0xff]
    %v6737 = vld [vmem:[%s2350 + $0x30] sm:$0xff]
    %v6738 = vld [vmem:[%s2350 + $0x38] sm:$0xff]
    %v6739 = vld [vmem:[%s2350 + $0x40] sm:$0xff]
    %v6740 = vld [vmem:[%s2350 + $0x48] sm:$0xff]
    %v6741 = vld [vmem:[%s2350 + $0x50] sm:$0xff]
    %v6742 = vld [vmem:[%s2350 + $0x58] sm:$0xff]
    %v6743 = vld [vmem:[%s2350 + $0x60] sm:$0xff]
    %v6744 = vld [vmem:[%s2350 + $0x68] sm:$0xff]
    %v6745 = vld [vmem:[%s2350 + $0x70] sm:$0xff]
    %v6746 = vld [vmem:[%s2350 + $0x78] sm:$0xff]
    %v6747 = vld [vmem:[%s2350 + $0x80] sm:$0xff]
    %v6748 = vld [vmem:[%s2350 + $0x88] sm:$0xff]
    %v6749 = vld [vmem:[%s2350 + $0x90] sm:$0xff]
    %v6750 = vld [vmem:[%s2350 + $0x98] sm:$0xff]
    %v6751 = vld [vmem:[%s2350 + $0xa0] sm:$0xff]
    %v6752 = vld [vmem:[%s2350 + $0xa8] sm:$0xff]
    %v6753 = vld [vmem:[%s2350 + $0xb0] sm:$0xff]
    %v6754 = vld [vmem:[%s2350 + $0xb8] sm:$0xff]
    %v6755 = vld [vmem:[%s2350 + $0xc0] sm:$0xff]
    %v6756 = vld [vmem:[%s2350 + $0xc8] sm:$0xff]
    %v6757 = vld [vmem:[%s2350 + $0xd0] sm:$0xff]
    %v6758 = vld [vmem:[%s2350 + $0xd8] sm:$0xff]
    %v6759 = vld [vmem:[%s2350 + $0xe0] sm:$0xff]
    %v6760 = vld [vmem:[%s2350 + $0xe8] sm:$0xff]
    %v6761 = vld [vmem:[%s2350 + $0xf0] sm:$0xff]
    %v6762 = vld [vmem:[%s2350 + $0xf8] sm:$0xff]
    %v6763 = vld [vmem:[%s2350 + $0x100] sm:$0xff]
    %v6764 = vld [vmem:[%s2350 + $0x108] sm:$0xff]
    %v6765 = vld [vmem:[%s2350 + $0x110] sm:$0xff]
    %v6766 = vld [vmem:[%s2350 + $0x118] sm:$0xff]
    %v6767 = vld [vmem:[%s2350 + $0x120] sm:$0xff]
    %v6768 = vld [vmem:[%s2350 + $0x128] sm:$0xff]
    %v6769 = vld [vmem:[%s2350 + $0x130] sm:$0xff]
    %v6770 = vld [vmem:[%s2350 + $0x138] sm:$0xff]
    %v6771 = vld [vmem:[%s2350 + $0x140] sm:$0xff]
    %v6772 = vld [vmem:[%s2350 + $0x148] sm:$0xff]
    %v6773 = vld [vmem:[%s2350 + $0x150] sm:$0xff]
    %v6774 = vld [vmem:[%s2350 + $0x158] sm:$0xff]
    %v6775 = vld [vmem:[%s2350 + $0x160] sm:$0xff]
    %v6776 = vld [vmem:[%s2350 + $0x168] sm:$0xff]
    %v6777 = vld [vmem:[%s2350 + $0x170] sm:$0xff]
    %v6778 = vld [vmem:[%s2350 + $0x178] sm:$0xff]
    %v6779 = vld [vmem:[%s2350 + $0x180] sm:$0xff]
    %v6780 = vld [vmem:[%s2350 + $0x188] sm:$0xff]
    %v6781 = vld [vmem:[%s2350 + $0x190] sm:$0xff]
    %v6782 = vld [vmem:[%s2350 + $0x198] sm:$0xff]
    %v6783 = vld [vmem:[%s2350 + $0x1a0] sm:$0xff]
    %v6784 = vld [vmem:[%s2350 + $0x1a8] sm:$0xff]
    %v6785 = vld [vmem:[%s2350 + $0x1b0] sm:$0xff]
    %v6786 = vld [vmem:[%s2350 + $0x1b8] sm:$0xff]
    %v6787 = vld [vmem:[%s2350 + $0x1c0] sm:$0xff]
    %v6788 = vld [vmem:[%s2350 + $0x1c8] sm:$0xff]
    %v6789 = vld [vmem:[%s2350 + $0x1d0] sm:$0xff]
    %v6790 = vld [vmem:[%s2350 + $0x1d8] sm:$0xff]
    %v6791 = vld [vmem:[%s2350 + $0x1e0] sm:$0xff]
    %v6792 = vld [vmem:[%s2350 + $0x1e8] sm:$0xff]
    %v6793 = vld [vmem:[%s2350 + $0x1f0] sm:$0xff]
    %v6794 = vld [vmem:[%s2350 + $0x1f8] sm:$0xff]
    %v6795 = vld [vmem:[%s2415] sm:$0x1]
    %v6796 = vld [vmem:[%s2415 + $0x1] sm:$0x1]
    %v6797 = vld [vmem:[%s2415 + $0x2] sm:$0x1]
    %v6798 = vld [vmem:[%s2415 + $0x3] sm:$0x1]
    %v6799 = vld [vmem:[%s2420] sm:$0x1]
    %v6800 = vld [vmem:[%s2420 + $0x1] sm:$0x1]
    %v6801 = vld [vmem:[%s2420 + $0x2] sm:$0x1]
    %v6802 = vld [vmem:[%s2420 + $0x3] sm:$0x1]
    %v6803 = vld [vmem:[%s2425] sm:$0x1]
    %v6804 = vld [vmem:[%s2425 + $0x1] sm:$0x1]
    %v6805 = vld [vmem:[%s2425 + $0x2] sm:$0x1]
    %v6806 = vld [vmem:[%s2425 + $0x3] sm:$0x1]
    %v6807 = vld [vmem:[%s2430] sm:$0xff]
    %v6808 = vld [vmem:[%s2430 + $0x8] sm:$0xff]
    %v6809 = vld [vmem:[%s2430 + $0x10] sm:$0xff]
    %v6810 = vld [vmem:[%s2430 + $0x18] sm:$0xff]
    %v6811 = vld [vmem:[%s2430 + $0x20] sm:$0xff]
    %v6812 = vld [vmem:[%s2430 + $0x28] sm:$0xff]
    %v6813 = vld [vmem:[%s2430 + $0x30] sm:$0xff]
    %v6814 = vld [vmem:[%s2430 + $0x38] sm:$0xff]
    %v6815 = vld [vmem:[%s2430 + $0x40] sm:$0xff]
    %v6816 = vld [vmem:[%s2430 + $0x48] sm:$0xff]
    %v6817 = vld [vmem:[%s2430 + $0x50] sm:$0xff]
    %v6818 = vld [vmem:[%s2430 + $0x58] sm:$0xff]
    %v6819 = vld [vmem:[%s2430 + $0x60] sm:$0xff]
    %v6820 = vld [vmem:[%s2430 + $0x68] sm:$0xff]
    %v6821 = vld [vmem:[%s2430 + $0x70] sm:$0xff]
    %v6822 = vld [vmem:[%s2430 + $0x78] sm:$0xff]
    %v6827 = vlaneseq
    %v6828 = vshrl.u32 %v6827, 7
    %v6829 = vsub.s32 0, %v6828
    %v6830 = vrot.slane %v6795, %v6829
    %v6831 = vlaneseq
    %v6832 = vshrl.u32 %v6831, 7
    %v6833 = vsub.s32 0, %v6832
    %v6834 = vrot.slane %v6796, %v6833
    %v6835 = vlaneseq
    %v6836 = vshrl.u32 %v6835, 7
    %v6837 = vsub.s32 0, %v6836
    %v6838 = vrot.slane %v6797, %v6837
    %v6839 = vlaneseq
    %v6840 = vshrl.u32 %v6839, 7
    %v6841 = vsub.s32 0, %v6840
    %v6842 = vrot.slane %v6798, %v6841
    %6847 = vmatprep.subr.mxu0 0.0
    %6848 = vmatpush1.msra.mxu0 %v6618
    %6849 = vmatprep.subr.mxu0 0.0
    %6850 = vmatpush1.msra.mxu0 %v6617
    %6851 = vmatprep.subr.mxu0 0.0
    %6852 = vmatpush1.msra.mxu0 %v6616
    %6853 = vmatprep.subr.mxu0 0.0
    %6854 = vmatpush1.msra.mxu0 %v6615
    %6855 = vmatprep.subr.mxu0 0.0
    %6856 = vmatpush1.msra.mxu0 %v6614
    %6857 = vmatprep.subr.mxu0 0.0
    %6858 = vmatpush1.msra.mxu0 %v6613
    %6859 = vmatprep.subr.mxu0 0.0
    %6860 = vmatpush1.msra.mxu0 %v6612
    %6861 = vmatprep.subr.mxu0 0.0
    %6862 = vmatpush1.msra.mxu0 %v6611
    %6863 = vmatprep.subr.mxu0 0.0
    %6864 = vmatpush1.msra.mxu0 %v6610
    %6865 = vmatprep.subr.mxu0 0.0
    %6866 = vmatpush1.msra.mxu0 %v6609
    %6867 = vmatprep.subr.mxu0 0.0
    %6868 = vmatpush1.msra.mxu0 %v6608
    %6869 = vmatprep.subr.mxu0 0.0
    %6870 = vmatpush1.msra.mxu0 %v6607
    %6871 = vmatprep.subr.mxu0 0.0
    %6872 = vmatpush1.msra.mxu0 %v6606
    %6873 = vmatprep.subr.mxu0 0.0
    %6874 = vmatpush1.msra.mxu0 %v6605
    %6875 = vmatprep.subr.mxu0 0.0
    %6876 = vmatpush1.msra.mxu0 %v6604
    %6877 = vmatprep.subr.mxu0 0.0
    %6878 = vmatpush1.msra.mxu0 %v6603
    %6879 = vmatprep.subr.mxu0 0.0
    %6880 = vmatpush2.msra.mxu0 0.0
    %6881 = vmatprep.subr.mxu0 0.0
    %6882 = vmatpush2.msra.mxu0 0.0
    %6883 = vmatprep.subr.mxu0 0.0
    %6884 = vmatpush2.msra.mxu0 0.0
    %6885 = vmatprep.subr.mxu0 0.0
    %6886 = vmatpush2.msra.mxu0 0.0
    %6887 = vmatprep.subr.mxu0 0.0
    %6888 = vmatpush2.msra.mxu0 0.0
    %6889 = vmatprep.subr.mxu0 0.0
    %6890 = vmatpush2.msra.mxu0 0.0
    %6891 = vmatprep.subr.mxu0 0.0
    %6892 = vmatpush2.msra.mxu0 0.0
    %6893 = vmatprep.subr.mxu0 0.0
    %6894 = vmatpush2.msra.mxu0 0.0
    %6895 = vmatprep.subr.mxu0 0.0
    %6896 = vmatpush2.msra.mxu0 0.0
    %6897 = vmatprep.subr.mxu0 0.0
    %6898 = vmatpush2.msra.mxu0 0.0
    %6899 = vmatprep.subr.mxu0 0.0
    %6900 = vmatpush2.msra.mxu0 0.0
    %6901 = vmatprep.subr.mxu0 0.0
    %6902 = vmatpush2.msra.mxu0 0.0
    %6903 = vmatprep.subr.mxu0 0.0
    %6904 = vmatpush2.msra.mxu0 0.0
    %6905 = vmatprep.subr.mxu0 0.0
    %6906 = vmatpush2.msra.mxu0 0.0
    %6907 = vmatprep.subr.mxu0 0.0
    %6908 = vmatpush2.msra.mxu0 0.0
    %6909 = vmatprep.subr.mxu0 0.0
    %6910 = vmatpush2.msra.mxu0 0.0
    %6911 = vmatprep.mubr.f32.mxu0 0.0
    %6912 = vmatmul.mubr.f32.gmra.mxu0 %v6601
    %v6913 = vpop.f32.mrf.mxu0
    %v6914 = vadd.f32 %v6830, %v6913
    %v6915 = vpop.f32.mrf.mxu0
    %6916 = vdwg.mxu0
    %6917 = vmatprep.subr.mxu0 0.0
    %6918 = vmatpush1.msra.mxu0 %v6634
    %6919 = vmatprep.subr.mxu0 0.0
    %6920 = vmatpush1.msra.mxu0 %v6633
    %6921 = vmatprep.subr.mxu0 0.0
    %6922 = vmatpush1.msra.mxu0 %v6632
    %6923 = vmatprep.subr.mxu0 0.0
    %6924 = vmatpush1.msra.mxu0 %v6631
    %6925 = vmatprep.subr.mxu0 0.0
    %6926 = vmatpush1.msra.mxu0 %v6630
    %6927 = vmatprep.subr.mxu0 0.0
    %6928 = vmatpush1.msra.mxu0 %v6629
    %6929 = vmatprep.subr.mxu0 0.0
    %6930 = vmatpush1.msra.mxu0 %v6628
    %6931 = vmatprep.subr.mxu0 0.0
    %6932 = vmatpush1.msra.mxu0 %v6627
    %6933 = vmatprep.subr.mxu0 0.0
    %6934 = vmatpush1.msra.mxu0 %v6626
    %6935 = vmatprep.subr.mxu0 0.0
    %6936 = vmatpush1.msra.mxu0 %v6625
    %6937 = vmatprep.subr.mxu0 0.0
    %6938 = vmatpush1.msra.mxu0 %v6624
    %6939 = vmatprep.subr.mxu0 0.0
    %6940 = vmatpush1.msra.mxu0 %v6623
    %6941 = vmatprep.subr.mxu0 0.0
    %6942 = vmatpush1.msra.mxu0 %v6622
    %6943 = vmatprep.subr.mxu0 0.0
    %6944 = vmatpush1.msra.mxu0 %v6621
    %6945 = vmatprep.subr.mxu0 0.0
    %6946 = vmatpush1.msra.mxu0 %v6620
    %6947 = vmatprep.subr.mxu0 0.0
    %6948 = vmatpush1.msra.mxu0 %v6619
    %6949 = vmatprep.subr.mxu0 0.0
    %6950 = vmatpush2.msra.mxu0 0.0
    %6951 = vmatprep.subr.mxu0 0.0
    %6952 = vmatpush2.msra.mxu0 0.0
    %6953 = vmatprep.subr.mxu0 0.0
    %6954 = vmatpush2.msra.mxu0 0.0
    %6955 = vmatprep.subr.mxu0 0.0
    %6956 = vmatpush2.msra.mxu0 0.0
    %6957 = vmatprep.subr.mxu0 0.0
    %6958 = vmatpush2.msra.mxu0 0.0
    %6959 = vmatprep.subr.mxu0 0.0
    %6960 = vmatpush2.msra.mxu0 0.0
    %6961 = vmatprep.subr.mxu0 0.0
    %6962 = vmatpush2.msra.mxu0 0.0
    %6963 = vmatprep.subr.mxu0 0.0
    %6964 = vmatpush2.msra.mxu0 0.0
    %6965 = vmatprep.subr.mxu0 0.0
    %6966 = vmatpush2.msra.mxu0 0.0
    %6967 = vmatprep.subr.mxu0 0.0
    %6968 = vmatpush2.msra.mxu0 0.0
    %6969 = vmatprep.subr.mxu0 0.0
    %6970 = vmatpush2.msra.mxu0 0.0
    %6971 = vmatprep.subr.mxu0 0.0
    %6972 = vmatpush2.msra.mxu0 0.0
    %6973 = vmatprep.subr.mxu0 0.0
    %6974 = vmatpush2.msra.mxu0 0.0
    %6975 = vmatprep.subr.mxu0 0.0
    %6976 = vmatpush2.msra.mxu0 0.0
    %6977 = vmatprep.subr.mxu0 0.0
    %6978 = vmatpush2.msra.mxu0 0.0
    %6979 = vmatprep.subr.mxu0 0.0
    %6980 = vmatpush2.msra.mxu0 0.0
    %6981 = vmatprep.mubr.f32.mxu0 0.0
    %6982 = vmatmul.mubr.f32.gmra.mxu0 %v6601
    %v6983 = vpop.f32.mrf.mxu0
    %v6984 = vadd.f32 %v6834, %v6983
    %v6985 = vpop.f32.mrf.mxu0
    %6986 = vdwg.mxu0
    %6987 = vmatprep.subr.mxu0 0.0
    %6988 = vmatpush1.msra.mxu0 %v6650
    %6989 = vmatprep.subr.mxu0 0.0
    %6990 = vmatpush1.msra.mxu0 %v6649
    %6991 = vmatprep.subr.mxu0 0.0
    %6992 = vmatpush1.msra.mxu0 %v6648
    %6993 = vmatprep.subr.mxu0 0.0
    %6994 = vmatpush1.msra.mxu0 %v6647
    %6995 = vmatprep.subr.mxu0 0.0
    %6996 = vmatpush1.msra.mxu0 %v6646
    %6997 = vmatprep.subr.mxu0 0.0
    %6998 = vmatpush1.msra.mxu0 %v6645
    %6999 = vmatprep.subr.mxu0 0.0
    %7000 = vmatpush1.msra.mxu0 %v6644
    %7001 = vmatprep.subr.mxu0 0.0
    %7002 = vmatpush1.msra.mxu0 %v6643
    %7003 = vmatprep.subr.mxu0 0.0
    %7004 = vmatpush1.msra.mxu0 %v6642
    %7005 = vmatprep.subr.mxu0 0.0
    %7006 = vmatpush1.msra.mxu0 %v6641
    %7007 = vmatprep.subr.mxu0 0.0
    %7008 = vmatpush1.msra.mxu0 %v6640
    %7009 = vmatprep.subr.mxu0 0.0
    %7010 = vmatpush1.msra.mxu0 %v6639
    %7011 = vmatprep.subr.mxu0 0.0
    %7012 = vmatpush1.msra.mxu0 %v6638
    %7013 = vmatprep.subr.mxu0 0.0
    %7014 = vmatpush1.msra.mxu0 %v6637
    %7015 = vmatprep.subr.mxu0 0.0
    %7016 = vmatpush1.msra.mxu0 %v6636
    %7017 = vmatprep.subr.mxu0 0.0
    %7018 = vmatpush1.msra.mxu0 %v6635
    %7019 = vmatprep.subr.mxu0 0.0
    %7020 = vmatpush2.msra.mxu0 0.0
    %7021 = vmatprep.subr.mxu0 0.0
    %7022 = vmatpush2.msra.mxu0 0.0
    %7023 = vmatprep.subr.mxu0 0.0
    %7024 = vmatpush2.msra.mxu0 0.0
    %7025 = vmatprep.subr.mxu0 0.0
    %7026 = vmatpush2.msra.mxu0 0.0
    %7027 = vmatprep.subr.mxu0 0.0
    %7028 = vmatpush2.msra.mxu0 0.0
    %7029 = vmatprep.subr.mxu0 0.0
    %7030 = vmatpush2.msra.mxu0 0.0
    %7031 = vmatprep.subr.mxu0 0.0
    %7032 = vmatpush2.msra.mxu0 0.0
    %7033 = vmatprep.subr.mxu0 0.0
    %7034 = vmatpush2.msra.mxu0 0.0
    %7035 = vmatprep.subr.mxu0 0.0
    %7036 = vmatpush2.msra.mxu0 0.0
    %7037 = vmatprep.subr.mxu0 0.0
    %7038 = vmatpush2.msra.mxu0 0.0
    %7039 = vmatprep.subr.mxu0 0.0
    %7040 = vmatpush2.msra.mxu0 0.0
    %7041 = vmatprep.subr.mxu0 0.0
    %7042 = vmatpush2.msra.mxu0 0.0
    %7043 = vmatprep.subr.mxu0 0.0
    %7044 = vmatpush2.msra.mxu0 0.0
    %7045 = vmatprep.subr.mxu0 0.0
    %7046 = vmatpush2.msra.mxu0 0.0
    %7047 = vmatprep.subr.mxu0 0.0
    %7048 = vmatpush2.msra.mxu0 0.0
    %7049 = vmatprep.subr.mxu0 0.0
    %7050 = vmatpush2.msra.mxu0 0.0
    %7051 = vmatprep.mubr.f32.mxu0 0.0
    %7052 = vmatmul.mubr.f32.gmra.mxu0 %v6601
    %v7053 = vpop.f32.mrf.mxu0
    %v7054 = vadd.f32 %v6838, %v7053
    %v7055 = vpop.f32.mrf.mxu0
    %7056 = vdwg.mxu0
    %7057 = vmatprep.subr.mxu0 0.0
    %7058 = vmatpush1.msra.mxu0 %v6666
    %7059 = vmatprep.subr.mxu0 0.0
    %7060 = vmatpush1.msra.mxu0 %v6665
    %7061 = vmatprep.subr.mxu0 0.0
    %7062 = vmatpush1.msra.mxu0 %v6664
    %7063 = vmatprep.subr.mxu0 0.0
    %7064 = vmatpush1.msra.mxu0 %v6663
    %7065 = vmatprep.subr.mxu0 0.0
    %7066 = vmatpush1.msra.mxu0 %v6662
    %7067 = vmatprep.subr.mxu0 0.0
    %7068 = vmatpush1.msra.mxu0 %v6661
    %7069 = vmatprep.subr.mxu0 0.0
    %7070 = vmatpush1.msra.mxu0 %v6660
    %7071 = vmatprep.subr.mxu0 0.0
    %7072 = vmatpush1.msra.mxu0 %v6659
    %7073 = vmatprep.subr.mxu0 0.0
    %7074 = vmatpush1.msra.mxu0 %v6658
    %7075 = vmatprep.subr.mxu0 0.0
    %7076 = vmatpush1.msra.mxu0 %v6657
    %7077 = vmatprep.subr.mxu0 0.0
    %7078 = vmatpush1.msra.mxu0 %v6656
    %7079 = vmatprep.subr.mxu0 0.0
    %7080 = vmatpush1.msra.mxu0 %v6655
    %7081 = vmatprep.subr.mxu0 0.0
    %7082 = vmatpush1.msra.mxu0 %v6654
    %7083 = vmatprep.subr.mxu0 0.0
    %7084 = vmatpush1.msra.mxu0 %v6653
    %7085 = vmatprep.subr.mxu0 0.0
    %7086 = vmatpush1.msra.mxu0 %v6652
    %7087 = vmatprep.subr.mxu0 0.0
    %7088 = vmatpush1.msra.mxu0 %v6651
    %7089 = vmatprep.subr.mxu0 0.0
    %7090 = vmatpush2.msra.mxu0 0.0
    %7091 = vmatprep.subr.mxu0 0.0
    %7092 = vmatpush2.msra.mxu0 0.0
    %7093 = vmatprep.subr.mxu0 0.0
    %7094 = vmatpush2.msra.mxu0 0.0
    %7095 = vmatprep.subr.mxu0 0.0
    %7096 = vmatpush2.msra.mxu0 0.0
    %7097 = vmatprep.subr.mxu0 0.0
    %7098 = vmatpush2.msra.mxu0 0.0
    %7099 = vmatprep.subr.mxu0 0.0
    %7100 = vmatpush2.msra.mxu0 0.0
    %7101 = vmatprep.subr.mxu0 0.0
    %7102 = vmatpush2.msra.mxu0 0.0
    %7103 = vmatprep.subr.mxu0 0.0
    %7104 = vmatpush2.msra.mxu0 0.0
    %7105 = vmatprep.subr.mxu0 0.0
    %7106 = vmatpush2.msra.mxu0 0.0
    %7107 = vmatprep.subr.mxu0 0.0
    %7108 = vmatpush2.msra.mxu0 0.0
    %7109 = vmatprep.subr.mxu0 0.0
    %7110 = vmatpush2.msra.mxu0 0.0
    %7111 = vmatprep.subr.mxu0 0.0
    %7112 = vmatpush2.msra.mxu0 0.0
    %7113 = vmatprep.subr.mxu0 0.0
    %7114 = vmatpush2.msra.mxu0 0.0
    %7115 = vmatprep.subr.mxu0 0.0
    %7116 = vmatpush2.msra.mxu0 0.0
    %7117 = vmatprep.subr.mxu0 0.0
    %7118 = vmatpush2.msra.mxu0 0.0
    %7119 = vmatprep.subr.mxu0 0.0
    %7120 = vmatpush2.msra.mxu0 0.0
    %7121 = vmatprep.mubr.f32.mxu0 0.0
    %7122 = vmatmul.mubr.f32.gmra.mxu0 %v6601
    %v7123 = vpop.f32.mrf.mxu0
    %v7124 = vadd.f32 %v6842, %v7123
    %v7125 = vpop.f32.mrf.mxu0
    %7126 = vdwg.mxu0
    %v7131 = vlaneseq
    %v7132 = vshrl.u32 %v7131, 7
    %v7133 = vsub.s32 0, %v7132
    %v7134 = vrot.slane %v6799, %v7133
    %v7135 = vlaneseq
    %v7136 = vshrl.u32 %v7135, 7
    %v7137 = vsub.s32 0, %v7136
    %v7138 = vrot.slane %v6800, %v7137
    %v7139 = vlaneseq
    %v7140 = vshrl.u32 %v7139, 7
    %v7141 = vsub.s32 0, %v7140
    %v7142 = vrot.slane %v6801, %v7141
    %v7143 = vlaneseq
    %v7144 = vshrl.u32 %v7143, 7
    %v7145 = vsub.s32 0, %v7144
    %v7146 = vrot.slane %v6802, %v7145
    %7151 = vmatprep.subr.mxu0 0.0
    %7152 = vmatpush1.msra.mxu0 %v6682
    %7153 = vmatprep.subr.mxu0 0.0
    %7154 = vmatpush1.msra.mxu0 %v6681
    %7155 = vmatprep.subr.mxu0 0.0
    %7156 = vmatpush1.msra.mxu0 %v6680
    %7157 = vmatprep.subr.mxu0 0.0
    %7158 = vmatpush1.msra.mxu0 %v6679
    %7159 = vmatprep.subr.mxu0 0.0
    %7160 = vmatpush1.msra.mxu0 %v6678
    %7161 = vmatprep.subr.mxu0 0.0
    %7162 = vmatpush1.msra.mxu0 %v6677
    %7163 = vmatprep.subr.mxu0 0.0
    %7164 = vmatpush1.msra.mxu0 %v6676
    %7165 = vmatprep.subr.mxu0 0.0
    %7166 = vmatpush1.msra.mxu0 %v6675
    %7167 = vmatprep.subr.mxu0 0.0
    %7168 = vmatpush1.msra.mxu0 %v6674
    %7169 = vmatprep.subr.mxu0 0.0
    %7170 = vmatpush1.msra.mxu0 %v6673
    %7171 = vmatprep.subr.mxu0 0.0
    %7172 = vmatpush1.msra.mxu0 %v6672
    %7173 = vmatprep.subr.mxu0 0.0
    %7174 = vmatpush1.msra.mxu0 %v6671
    %7175 = vmatprep.subr.mxu0 0.0
    %7176 = vmatpush1.msra.mxu0 %v6670
    %7177 = vmatprep.subr.mxu0 0.0
    %7178 = vmatpush1.msra.mxu0 %v6669
    %7179 = vmatprep.subr.mxu0 0.0
    %7180 = vmatpush1.msra.mxu0 %v6668
    %7181 = vmatprep.subr.mxu0 0.0
    %7182 = vmatpush1.msra.mxu0 %v6667
    %7183 = vmatprep.subr.mxu0 0.0
    %7184 = vmatpush2.msra.mxu0 0.0
    %7185 = vmatprep.subr.mxu0 0.0
    %7186 = vmatpush2.msra.mxu0 0.0
    %7187 = vmatprep.subr.mxu0 0.0
    %7188 = vmatpush2.msra.mxu0 0.0
    %7189 = vmatprep.subr.mxu0 0.0
    %7190 = vmatpush2.msra.mxu0 0.0
    %7191 = vmatprep.subr.mxu0 0.0
    %7192 = vmatpush2.msra.mxu0 0.0
    %7193 = vmatprep.subr.mxu0 0.0
    %7194 = vmatpush2.msra.mxu0 0.0
    %7195 = vmatprep.subr.mxu0 0.0
    %7196 = vmatpush2.msra.mxu0 0.0
    %7197 = vmatprep.subr.mxu0 0.0
    %7198 = vmatpush2.msra.mxu0 0.0
    %7199 = vmatprep.subr.mxu0 0.0
    %7200 = vmatpush2.msra.mxu0 0.0
    %7201 = vmatprep.subr.mxu0 0.0
    %7202 = vmatpush2.msra.mxu0 0.0
    %7203 = vmatprep.subr.mxu0 0.0
    %7204 = vmatpush2.msra.mxu0 0.0
    %7205 = vmatprep.subr.mxu0 0.0
    %7206 = vmatpush2.msra.mxu0 0.0
    %7207 = vmatprep.subr.mxu0 0.0
    %7208 = vmatpush2.msra.mxu0 0.0
    %7209 = vmatprep.subr.mxu0 0.0
    %7210 = vmatpush2.msra.mxu0 0.0
    %7211 = vmatprep.subr.mxu0 0.0
    %7212 = vmatpush2.msra.mxu0 0.0
    %7213 = vmatprep.subr.mxu0 0.0
    %7214 = vmatpush2.msra.mxu0 0.0
    %7215 = vmatprep.mubr.f32.mxu0 0.0
    %7216 = vmatmul.mubr.f32.gmra.mxu0 %v6602
    %v7217 = vpop.f32.mrf.mxu0
    %v7218 = vadd.f32 %v7134, %v7217
    %v7219 = vpop.f32.mrf.mxu0
    %7220 = vdwg.mxu0
    %7221 = vmatprep.subr.mxu0 0.0
    %7222 = vmatpush1.msra.mxu0 %v6698
    %7223 = vmatprep.subr.mxu0 0.0
    %7224 = vmatpush1.msra.mxu0 %v6697
    %7225 = vmatprep.subr.mxu0 0.0
    %7226 = vmatpush1.msra.mxu0 %v6696
    %7227 = vmatprep.subr.mxu0 0.0
    %7228 = vmatpush1.msra.mxu0 %v6695
    %7229 = vmatprep.subr.mxu0 0.0
    %7230 = vmatpush1.msra.mxu0 %v6694
    %7231 = vmatprep.subr.mxu0 0.0
    %7232 = vmatpush1.msra.mxu0 %v6693
    %7233 = vmatprep.subr.mxu0 0.0
    %7234 = vmatpush1.msra.mxu0 %v6692
    %7235 = vmatprep.subr.mxu0 0.0
    %7236 = vmatpush1.msra.mxu0 %v6691
    %7237 = vmatprep.subr.mxu0 0.0
    %7238 = vmatpush1.msra.mxu0 %v6690
    %7239 = vmatprep.subr.mxu0 0.0
    %7240 = vmatpush1.msra.mxu0 %v6689
    %7241 = vmatprep.subr.mxu0 0.0
    %7242 = vmatpush1.msra.mxu0 %v6688
    %7243 = vmatprep.subr.mxu0 0.0
    %7244 = vmatpush1.msra.mxu0 %v6687
    %7245 = vmatprep.subr.mxu0 0.0
    %7246 = vmatpush1.msra.mxu0 %v6686
    %7247 = vmatprep.subr.mxu0 0.0
    %7248 = vmatpush1.msra.mxu0 %v6685
    %7249 = vmatprep.subr.mxu0 0.0
    %7250 = vmatpush1.msra.mxu0 %v6684
    %7251 = vmatprep.subr.mxu0 0.0
    %7252 = vmatpush1.msra.mxu0 %v6683
    %7253 = vmatprep.subr.mxu0 0.0
    %7254 = vmatpush2.msra.mxu0 0.0
    %7255 = vmatprep.subr.mxu0 0.0
    %7256 = vmatpush2.msra.mxu0 0.0
    %7257 = vmatprep.subr.mxu0 0.0
    %7258 = vmatpush2.msra.mxu0 0.0
    %7259 = vmatprep.subr.mxu0 0.0
    %7260 = vmatpush2.msra.mxu0 0.0
    %7261 = vmatprep.subr.mxu0 0.0
    %7262 = vmatpush2.msra.mxu0 0.0
    %7263 = vmatprep.subr.mxu0 0.0
    %7264 = vmatpush2.msra.mxu0 0.0
    %7265 = vmatprep.subr.mxu0 0.0
    %7266 = vmatpush2.msra.mxu0 0.0
    %7267 = vmatprep.subr.mxu0 0.0
    %7268 = vmatpush2.msra.mxu0 0.0
    %7269 = vmatprep.subr.mxu0 0.0
    %7270 = vmatpush2.msra.mxu0 0.0
    %7271 = vmatprep.subr.mxu0 0.0
    %7272 = vmatpush2.msra.mxu0 0.0
    %7273 = vmatprep.subr.mxu0 0.0
    %7274 = vmatpush2.msra.mxu0 0.0
    %7275 = vmatprep.subr.mxu0 0.0
    %7276 = vmatpush2.msra.mxu0 0.0
    %7277 = vmatprep.subr.mxu0 0.0
    %7278 = vmatpush2.msra.mxu0 0.0
    %7279 = vmatprep.subr.mxu0 0.0
    %7280 = vmatpush2.msra.mxu0 0.0
    %7281 = vmatprep.subr.mxu0 0.0
    %7282 = vmatpush2.msra.mxu0 0.0
    %7283 = vmatprep.subr.mxu0 0.0
    %7284 = vmatpush2.msra.mxu0 0.0
    %7285 = vmatprep.mubr.f32.mxu0 0.0
    %7286 = vmatmul.mubr.f32.gmra.mxu0 %v6602
    %v7287 = vpop.f32.mrf.mxu0
    %v7288 = vadd.f32 %v7138, %v7287
    %v7289 = vpop.f32.mrf.mxu0
    %7290 = vdwg.mxu0
    %7291 = vmatprep.subr.mxu0 0.0
    %7292 = vmatpush1.msra.mxu0 %v6714
    %7293 = vmatprep.subr.mxu0 0.0
    %7294 = vmatpush1.msra.mxu0 %v6713
    %7295 = vmatprep.subr.mxu0 0.0
    %7296 = vmatpush1.msra.mxu0 %v6712
    %7297 = vmatprep.subr.mxu0 0.0
    %7298 = vmatpush1.msra.mxu0 %v6711
    %7299 = vmatprep.subr.mxu0 0.0
    %7300 = vmatpush1.msra.mxu0 %v6710
    %7301 = vmatprep.subr.mxu0 0.0
    %7302 = vmatpush1.msra.mxu0 %v6709
    %7303 = vmatprep.subr.mxu0 0.0
    %7304 = vmatpush1.msra.mxu0 %v6708
    %7305 = vmatprep.subr.mxu0 0.0
    %7306 = vmatpush1.msra.mxu0 %v6707
    %7307 = vmatprep.subr.mxu0 0.0
    %7308 = vmatpush1.msra.mxu0 %v6706
    %7309 = vmatprep.subr.mxu0 0.0
    %7310 = vmatpush1.msra.mxu0 %v6705
    %7311 = vmatprep.subr.mxu0 0.0
    %7312 = vmatpush1.msra.mxu0 %v6704
    %7313 = vmatprep.subr.mxu0 0.0
    %7314 = vmatpush1.msra.mxu0 %v6703
    %7315 = vmatprep.subr.mxu0 0.0
    %7316 = vmatpush1.msra.mxu0 %v6702
    %7317 = vmatprep.subr.mxu0 0.0
    %7318 = vmatpush1.msra.mxu0 %v6701
    %7319 = vmatprep.subr.mxu0 0.0
    %7320 = vmatpush1.msra.mxu0 %v6700
    %7321 = vmatprep.subr.mxu0 0.0
    %7322 = vmatpush1.msra.mxu0 %v6699
    %7323 = vmatprep.subr.mxu0 0.0
    %7324 = vmatpush2.msra.mxu0 0.0
    %7325 = vmatprep.subr.mxu0 0.0
    %7326 = vmatpush2.msra.mxu0 0.0
    %7327 = vmatprep.subr.mxu0 0.0
    %7328 = vmatpush2.msra.mxu0 0.0
    %7329 = vmatprep.subr.mxu0 0.0
    %7330 = vmatpush2.msra.mxu0 0.0
    %7331 = vmatprep.subr.mxu0 0.0
    %7332 = vmatpush2.msra.mxu0 0.0
    %7333 = vmatprep.subr.mxu0 0.0
    %7334 = vmatpush2.msra.mxu0 0.0
    %7335 = vmatprep.subr.mxu0 0.0
    %7336 = vmatpush2.msra.mxu0 0.0
    %7337 = vmatprep.subr.mxu0 0.0
    %7338 = vmatpush2.msra.mxu0 0.0
    %7339 = vmatprep.subr.mxu0 0.0
    %7340 = vmatpush2.msra.mxu0 0.0
    %7341 = vmatprep.subr.mxu0 0.0
    %7342 = vmatpush2.msra.mxu0 0.0
    %7343 = vmatprep.subr.mxu0 0.0
    %7344 = vmatpush2.msra.mxu0 0.0
    %7345 = vmatprep.subr.mxu0 0.0
    %7346 = vmatpush2.msra.mxu0 0.0
    %7347 = vmatprep.subr.mxu0 0.0
    %7348 = vmatpush2.msra.mxu0 0.0
    %7349 = vmatprep.subr.mxu0 0.0
    %7350 = vmatpush2.msra.mxu0 0.0
    %7351 = vmatprep.subr.mxu0 0.0
    %7352 = vmatpush2.msra.mxu0 0.0
    %7353 = vmatprep.subr.mxu0 0.0
    %7354 = vmatpush2.msra.mxu0 0.0
    %7355 = vmatprep.mubr.f32.mxu0 0.0
    %7356 = vmatmul.mubr.f32.gmra.mxu0 %v6602
    %v7357 = vpop.f32.mrf.mxu0
    %v7358 = vadd.f32 %v7142, %v7357
    %v7359 = vpop.f32.mrf.mxu0
    %7360 = vdwg.mxu0
    %7361 = vmatprep.subr.mxu0 0.0
    %7362 = vmatpush1.msra.mxu0 %v6730
    %7363 = vmatprep.subr.mxu0 0.0
    %7364 = vmatpush1.msra.mxu0 %v6729
    %7365 = vmatprep.subr.mxu0 0.0
    %7366 = vmatpush1.msra.mxu0 %v6728
    %7367 = vmatprep.subr.mxu0 0.0
    %7368 = vmatpush1.msra.mxu0 %v6727
    %7369 = vmatprep.subr.mxu0 0.0
    %7370 = vmatpush1.msra.mxu0 %v6726
    %7371 = vmatprep.subr.mxu0 0.0
    %7372 = vmatpush1.msra.mxu0 %v6725
    %7373 = vmatprep.subr.mxu0 0.0
    %7374 = vmatpush1.msra.mxu0 %v6724
    %7375 = vmatprep.subr.mxu0 0.0
    %7376 = vmatpush1.msra.mxu0 %v6723
    %7377 = vmatprep.subr.mxu0 0.0
    %7378 = vmatpush1.msra.mxu0 %v6722
    %7379 = vmatprep.subr.mxu0 0.0
    %7380 = vmatpush1.msra.mxu0 %v6721
    %7381 = vmatprep.subr.mxu0 0.0
    %7382 = vmatpush1.msra.mxu0 %v6720
    %7383 = vmatprep.subr.mxu0 0.0
    %7384 = vmatpush1.msra.mxu0 %v6719
    %7385 = vmatprep.subr.mxu0 0.0
    %7386 = vmatpush1.msra.mxu0 %v6718
    %7387 = vmatprep.subr.mxu0 0.0
    %7388 = vmatpush1.msra.mxu0 %v6717
    %7389 = vmatprep.subr.mxu0 0.0
    %7390 = vmatpush1.msra.mxu0 %v6716
    %7391 = vmatprep.subr.mxu0 0.0
    %7392 = vmatpush1.msra.mxu0 %v6715
    %7393 = vmatprep.subr.mxu0 0.0
    %7394 = vmatpush2.msra.mxu0 0.0
    %7395 = vmatprep.subr.mxu0 0.0
    %7396 = vmatpush2.msra.mxu0 0.0
    %7397 = vmatprep.subr.mxu0 0.0
    %7398 = vmatpush2.msra.mxu0 0.0
    %7399 = vmatprep.subr.mxu0 0.0
    %7400 = vmatpush2.msra.mxu0 0.0
    %7401 = vmatprep.subr.mxu0 0.0
    %7402 = vmatpush2.msra.mxu0 0.0
    %7403 = vmatprep.subr.mxu0 0.0
    %7404 = vmatpush2.msra.mxu0 0.0
    %7405 = vmatprep.subr.mxu0 0.0
    %7406 = vmatpush2.msra.mxu0 0.0
    %7407 = vmatprep.subr.mxu0 0.0
    %7408 = vmatpush2.msra.mxu0 0.0
    %7409 = vmatprep.subr.mxu0 0.0
    %7410 = vmatpush2.msra.mxu0 0.0
    %7411 = vmatprep.subr.mxu0 0.0
    %7412 = vmatpush2.msra.mxu0 0.0
    %7413 = vmatprep.subr.mxu0 0.0
    %7414 = vmatpush2.msra.mxu0 0.0
    %7415 = vmatprep.subr.mxu0 0.0
    %7416 = vmatpush2.msra.mxu0 0.0
    %7417 = vmatprep.subr.mxu0 0.0
    %7418 = vmatpush2.msra.mxu0 0.0
    %7419 = vmatprep.subr.mxu0 0.0
    %7420 = vmatpush2.msra.mxu0 0.0
    %7421 = vmatprep.subr.mxu0 0.0
    %7422 = vmatpush2.msra.mxu0 0.0
    %7423 = vmatprep.subr.mxu0 0.0
    %7424 = vmatpush2.msra.mxu0 0.0
    %7425 = vmatprep.mubr.f32.mxu0 0.0
    %7426 = vmatmul.mubr.f32.gmra.mxu0 %v6602
    %v7427 = vpop.f32.mrf.mxu0
    %v7428 = vadd.f32 %v7146, %v7427
    %v7429 = vpop.f32.mrf.mxu0
    %7430 = vdwg.mxu0
    %v7435 = vlaneseq
    %v7436 = vshrl.u32 %v7435, 7
    %v7437 = vsub.s32 0, %v7436
    %v7438 = vrot.slane %v6803, %v7437
    %v7439 = vlaneseq
    %v7440 = vshrl.u32 %v7439, 7
    %v7441 = vsub.s32 0, %v7440
    %v7442 = vrot.slane %v6804, %v7441
    %v7443 = vlaneseq
    %v7444 = vshrl.u32 %v7443, 7
    %v7445 = vsub.s32 0, %v7444
    %v7446 = vrot.slane %v6805, %v7445
    %v7447 = vlaneseq
    %v7448 = vshrl.u32 %v7447, 7
    %v7449 = vsub.s32 0, %v7448
    %v7450 = vrot.slane %v6806, %v7449
    %7455 = vmatprep.subr.mxu0 0.0
    %7456 = vmatpush1.msra.mxu0 %v6746
    %7457 = vmatprep.subr.mxu0 0.0
    %7458 = vmatpush1.msra.mxu0 %v6745
    %7459 = vmatprep.subr.mxu0 0.0
    %7460 = vmatpush1.msra.mxu0 %v6744
    %7461 = vmatprep.subr.mxu0 0.0
    %7462 = vmatpush1.msra.mxu0 %v6743
    %7463 = vmatprep.subr.mxu0 0.0
    %7464 = vmatpush1.msra.mxu0 %v6742
    %7465 = vmatprep.subr.mxu0 0.0
    %7466 = vmatpush1.msra.mxu0 %v6741
    %7467 = vmatprep.subr.mxu0 0.0
    %7468 = vmatpush1.msra.mxu0 %v6740
    %7469 = vmatprep.subr.mxu0 0.0
    %7470 = vmatpush1.msra.mxu0 %v6739
    %7471 = vmatprep.subr.mxu0 0.0
    %7472 = vmatpush1.msra.mxu0 %v6738
    %7473 = vmatprep.subr.mxu0 0.0
    %7474 = vmatpush1.msra.mxu0 %v6737
    %7475 = vmatprep.subr.mxu0 0.0
    %7476 = vmatpush1.msra.mxu0 %v6736
    %7477 = vmatprep.subr.mxu0 0.0
    %7478 = vmatpush1.msra.mxu0 %v6735
    %7479 = vmatprep.subr.mxu0 0.0
    %7480 = vmatpush1.msra.mxu0 %v6734
    %7481 = vmatprep.subr.mxu0 0.0
    %7482 = vmatpush1.msra.mxu0 %v6733
    %7483 = vmatprep.subr.mxu0 0.0
    %7484 = vmatpush1.msra.mxu0 %v6732
    %7485 = vmatprep.subr.mxu0 0.0
    %7486 = vmatpush1.msra.mxu0 %v6731
    %7487 = vmatprep.subr.mxu0 0.0
    %7488 = vmatpush2.msra.mxu0 0.0
    %7489 = vmatprep.subr.mxu0 0.0
    %7490 = vmatpush2.msra.mxu0 0.0
    %7491 = vmatprep.subr.mxu0 0.0
    %7492 = vmatpush2.msra.mxu0 0.0
    %7493 = vmatprep.subr.mxu0 0.0
    %7494 = vmatpush2.msra.mxu0 0.0
    %7495 = vmatprep.subr.mxu0 0.0
    %7496 = vmatpush2.msra.mxu0 0.0
    %7497 = vmatprep.subr.mxu0 0.0
    %7498 = vmatpush2.msra.mxu0 0.0
    %7499 = vmatprep.subr.mxu0 0.0
    %7500 = vmatpush2.msra.mxu0 0.0
    %7501 = vmatprep.subr.mxu0 0.0
    %7502 = vmatpush2.msra.mxu0 0.0
    %7503 = vmatprep.subr.mxu0 0.0
    %7504 = vmatpush2.msra.mxu0 0.0
    %7505 = vmatprep.subr.mxu0 0.0
    %7506 = vmatpush2.msra.mxu0 0.0
    %7507 = vmatprep.subr.mxu0 0.0
    %7508 = vmatpush2.msra.mxu0 0.0
    %7509 = vmatprep.subr.mxu0 0.0
    %7510 = vmatpush2.msra.mxu0 0.0
    %7511 = vmatprep.subr.mxu0 0.0
    %7512 = vmatpush2.msra.mxu0 0.0
    %7513 = vmatprep.subr.mxu0 0.0
    %7514 = vmatpush2.msra.mxu0 0.0
    %7515 = vmatprep.subr.mxu0 0.0
    %7516 = vmatpush2.msra.mxu0 0.0
    %7517 = vmatprep.subr.mxu0 0.0
    %7518 = vmatpush2.msra.mxu0 0.0
    %7519 = vmatprep.mubr.f32.mxu0 0.0
    %7520 = vmatmul.mubr.f32.gmra.mxu0 %v4509
    %v7521 = vpop.f32.mrf.mxu0
    %v7522 = vadd.f32 %v7438, %v7521
    %v7523 = vpop.f32.mrf.mxu0
    %7524 = vdwg.mxu0
    %7525 = vmatprep.subr.mxu0 0.0
    %7526 = vmatpush1.msra.mxu0 %v6762
    %7527 = vmatprep.subr.mxu0 0.0
    %7528 = vmatpush1.msra.mxu0 %v6761
    %7529 = vmatprep.subr.mxu0 0.0
    %7530 = vmatpush1.msra.mxu0 %v6760
    %7531 = vmatprep.subr.mxu0 0.0
    %7532 = vmatpush1.msra.mxu0 %v6759
    %7533 = vmatprep.subr.mxu0 0.0
    %7534 = vmatpush1.msra.mxu0 %v6758
    %7535 = vmatprep.subr.mxu0 0.0
    %7536 = vmatpush1.msra.mxu0 %v6757
    %7537 = vmatprep.subr.mxu0 0.0
    %7538 = vmatpush1.msra.mxu0 %v6756
    %7539 = vmatprep.subr.mxu0 0.0
    %7540 = vmatpush1.msra.mxu0 %v6755
    %7541 = vmatprep.subr.mxu0 0.0
    %7542 = vmatpush1.msra.mxu0 %v6754
    %7543 = vmatprep.subr.mxu0 0.0
    %7544 = vmatpush1.msra.mxu0 %v6753
    %7545 = vmatprep.subr.mxu0 0.0
    %7546 = vmatpush1.msra.mxu0 %v6752
    %7547 = vmatprep.subr.mxu0 0.0
    %7548 = vmatpush1.msra.mxu0 %v6751
    %7549 = vmatprep.subr.mxu0 0.0
    %7550 = vmatpush1.msra.mxu0 %v6750
    %7551 = vmatprep.subr.mxu0 0.0
    %7552 = vmatpush1.msra.mxu0 %v6749
    %7553 = vmatprep.subr.mxu0 0.0
    %7554 = vmatpush1.msra.mxu0 %v6748
    %7555 = vmatprep.subr.mxu0 0.0
    %7556 = vmatpush1.msra.mxu0 %v6747
    %7557 = vmatprep.subr.mxu0 0.0
    %7558 = vmatpush2.msra.mxu0 0.0
    %7559 = vmatprep.subr.mxu0 0.0
    %7560 = vmatpush2.msra.mxu0 0.0
    %7561 = vmatprep.subr.mxu0 0.0
    %7562 = vmatpush2.msra.mxu0 0.0
    %7563 = vmatprep.subr.mxu0 0.0
    %7564 = vmatpush2.msra.mxu0 0.0
    %7565 = vmatprep.subr.mxu0 0.0
    %7566 = vmatpush2.msra.mxu0 0.0
    %7567 = vmatprep.subr.mxu0 0.0
    %7568 = vmatpush2.msra.mxu0 0.0
    %7569 = vmatprep.subr.mxu0 0.0
    %7570 = vmatpush2.msra.mxu0 0.0
    %7571 = vmatprep.subr.mxu0 0.0
    %7572 = vmatpush2.msra.mxu0 0.0
    %7573 = vmatprep.subr.mxu0 0.0
    %7574 = vmatpush2.msra.mxu0 0.0
    %7575 = vmatprep.subr.mxu0 0.0
    %7576 = vmatpush2.msra.mxu0 0.0
    %7577 = vmatprep.subr.mxu0 0.0
    %7578 = vmatpush2.msra.mxu0 0.0
    %7579 = vmatprep.subr.mxu0 0.0
    %7580 = vmatpush2.msra.mxu0 0.0
    %7581 = vmatprep.subr.mxu0 0.0
    %7582 = vmatpush2.msra.mxu0 0.0
    %7583 = vmatprep.subr.mxu0 0.0
    %7584 = vmatpush2.msra.mxu0 0.0
    %7585 = vmatprep.subr.mxu0 0.0
    %7586 = vmatpush2.msra.mxu0 0.0
    %7587 = vmatprep.subr.mxu0 0.0
    %7588 = vmatpush2.msra.mxu0 0.0
    %7589 = vmatprep.mubr.f32.mxu0 0.0
    %7590 = vmatmul.mubr.f32.gmra.mxu0 %v4509
    %v7591 = vpop.f32.mrf.mxu0
    %v7592 = vadd.f32 %v7442, %v7591
    %v7593 = vpop.f32.mrf.mxu0
    %7594 = vdwg.mxu0
    %7595 = vmatprep.subr.mxu0 0.0
    %7596 = vmatpush1.msra.mxu0 %v6778
    %7597 = vmatprep.subr.mxu0 0.0
    %7598 = vmatpush1.msra.mxu0 %v6777
    %7599 = vmatprep.subr.mxu0 0.0
    %7600 = vmatpush1.msra.mxu0 %v6776
    %7601 = vmatprep.subr.mxu0 0.0
    %7602 = vmatpush1.msra.mxu0 %v6775
    %7603 = vmatprep.subr.mxu0 0.0
    %7604 = vmatpush1.msra.mxu0 %v6774
    %7605 = vmatprep.subr.mxu0 0.0
    %7606 = vmatpush1.msra.mxu0 %v6773
    %7607 = vmatprep.subr.mxu0 0.0
    %7608 = vmatpush1.msra.mxu0 %v6772
    %7609 = vmatprep.subr.mxu0 0.0
    %7610 = vmatpush1.msra.mxu0 %v6771
    %7611 = vmatprep.subr.mxu0 0.0
    %7612 = vmatpush1.msra.mxu0 %v6770
    %7613 = vmatprep.subr.mxu0 0.0
    %7614 = vmatpush1.msra.mxu0 %v6769
    %7615 = vmatprep.subr.mxu0 0.0
    %7616 = vmatpush1.msra.mxu0 %v6768
    %7617 = vmatprep.subr.mxu0 0.0
    %7618 = vmatpush1.msra.mxu0 %v6767
    %7619 = vmatprep.subr.mxu0 0.0
    %7620 = vmatpush1.msra.mxu0 %v6766
    %7621 = vmatprep.subr.mxu0 0.0
    %7622 = vmatpush1.msra.mxu0 %v6765
    %7623 = vmatprep.subr.mxu0 0.0
    %7624 = vmatpush1.msra.mxu0 %v6764
    %7625 = vmatprep.subr.mxu0 0.0
    %7626 = vmatpush1.msra.mxu0 %v6763
    %7627 = vmatprep.subr.mxu0 0.0
    %7628 = vmatpush2.msra.mxu0 0.0
    %7629 = vmatprep.subr.mxu0 0.0
    %7630 = vmatpush2.msra.mxu0 0.0
    %7631 = vmatprep.subr.mxu0 0.0
    %7632 = vmatpush2.msra.mxu0 0.0
    %7633 = vmatprep.subr.mxu0 0.0
    %7634 = vmatpush2.msra.mxu0 0.0
    %7635 = vmatprep.subr.mxu0 0.0
    %7636 = vmatpush2.msra.mxu0 0.0
    %7637 = vmatprep.subr.mxu0 0.0
    %7638 = vmatpush2.msra.mxu0 0.0
    %7639 = vmatprep.subr.mxu0 0.0
    %7640 = vmatpush2.msra.mxu0 0.0
    %7641 = vmatprep.subr.mxu0 0.0
    %7642 = vmatpush2.msra.mxu0 0.0
    %7643 = vmatprep.subr.mxu0 0.0
    %7644 = vmatpush2.msra.mxu0 0.0
    %7645 = vmatprep.subr.mxu0 0.0
    %7646 = vmatpush2.msra.mxu0 0.0
    %7647 = vmatprep.subr.mxu0 0.0
    %7648 = vmatpush2.msra.mxu0 0.0
    %7649 = vmatprep.subr.mxu0 0.0
    %7650 = vmatpush2.msra.mxu0 0.0
    %7651 = vmatprep.subr.mxu0 0.0
    %7652 = vmatpush2.msra.mxu0 0.0
    %7653 = vmatprep.subr.mxu0 0.0
    %7654 = vmatpush2.msra.mxu0 0.0
    %7655 = vmatprep.subr.mxu0 0.0
    %7656 = vmatpush2.msra.mxu0 0.0
    %7657 = vmatprep.subr.mxu0 0.0
    %7658 = vmatpush2.msra.mxu0 0.0
    %7659 = vmatprep.mubr.f32.mxu0 0.0
    %7660 = vmatmul.mubr.f32.gmra.mxu0 %v4509
    %v7661 = vpop.f32.mrf.mxu0
    %v7662 = vadd.f32 %v7446, %v7661
    %v7663 = vpop.f32.mrf.mxu0
    %7664 = vdwg.mxu0
    %7665 = vmatprep.subr.mxu0 0.0
    %7666 = vmatpush1.msra.mxu0 %v6794
    %7667 = vmatprep.subr.mxu0 0.0
    %7668 = vmatpush1.msra.mxu0 %v6793
    %7669 = vmatprep.subr.mxu0 0.0
    %7670 = vmatpush1.msra.mxu0 %v6792
    %7671 = vmatprep.subr.mxu0 0.0
    %7672 = vmatpush1.msra.mxu0 %v6791
    %7673 = vmatprep.subr.mxu0 0.0
    %7674 = vmatpush1.msra.mxu0 %v6790
    %7675 = vmatprep.subr.mxu0 0.0
    %7676 = vmatpush1.msra.mxu0 %v6789
    %7677 = vmatprep.subr.mxu0 0.0
    %7678 = vmatpush1.msra.mxu0 %v6788
    %7679 = vmatprep.subr.mxu0 0.0
    %7680 = vmatpush1.msra.mxu0 %v6787
    %7681 = vmatprep.subr.mxu0 0.0
    %7682 = vmatpush1.msra.mxu0 %v6786
    %7683 = vmatprep.subr.mxu0 0.0
    %7684 = vmatpush1.msra.mxu0 %v6785
    %7685 = vmatprep.subr.mxu0 0.0
    %7686 = vmatpush1.msra.mxu0 %v6784
    %7687 = vmatprep.subr.mxu0 0.0
    %7688 = vmatpush1.msra.mxu0 %v6783
    %7689 = vmatprep.subr.mxu0 0.0
    %7690 = vmatpush1.msra.mxu0 %v6782
    %7691 = vmatprep.subr.mxu0 0.0
    %7692 = vmatpush1.msra.mxu0 %v6781
    %7693 = vmatprep.subr.mxu0 0.0
    %7694 = vmatpush1.msra.mxu0 %v6780
    %7695 = vmatprep.subr.mxu0 0.0
    %7696 = vmatpush1.msra.mxu0 %v6779
    %7697 = vmatprep.subr.mxu0 0.0
    %7698 = vmatpush2.msra.mxu0 0.0
    %7699 = vmatprep.subr.mxu0 0.0
    %7700 = vmatpush2.msra.mxu0 0.0
    %7701 = vmatprep.subr.mxu0 0.0
    %7702 = vmatpush2.msra.mxu0 0.0
    %7703 = vmatprep.subr.mxu0 0.0
    %7704 = vmatpush2.msra.mxu0 0.0
    %7705 = vmatprep.subr.mxu0 0.0
    %7706 = vmatpush2.msra.mxu0 0.0
    %7707 = vmatprep.subr.mxu0 0.0
    %7708 = vmatpush2.msra.mxu0 0.0
    %7709 = vmatprep.subr.mxu0 0.0
    %7710 = vmatpush2.msra.mxu0 0.0
    %7711 = vmatprep.subr.mxu0 0.0
    %7712 = vmatpush2.msra.mxu0 0.0
    %7713 = vmatprep.subr.mxu0 0.0
    %7714 = vmatpush2.msra.mxu0 0.0
    %7715 = vmatprep.subr.mxu0 0.0
    %7716 = vmatpush2.msra.mxu0 0.0
    %7717 = vmatprep.subr.mxu0 0.0
    %7718 = vmatpush2.msra.mxu0 0.0
    %7719 = vmatprep.subr.mxu0 0.0
    %7720 = vmatpush2.msra.mxu0 0.0
    %7721 = vmatprep.subr.mxu0 0.0
    %7722 = vmatpush2.msra.mxu0 0.0
    %7723 = vmatprep.subr.mxu0 0.0
    %7724 = vmatpush2.msra.mxu0 0.0
    %7725 = vmatprep.subr.mxu0 0.0
    %7726 = vmatpush2.msra.mxu0 0.0
    %7727 = vmatprep.subr.mxu0 0.0
    %7728 = vmatpush2.msra.mxu0 0.0
    %7729 = vmatprep.mubr.f32.mxu0 0.0
    %7730 = vmatmul.mubr.f32.gmra.mxu0 %v4509
    %v7731 = vpop.f32.mrf.mxu0
    %v7732 = vadd.f32 %v7450, %v7731
    %v7733 = vpop.f32.mrf.mxu0
    %7734 = vdwg.mxu0
    %v7736 = vsel %vm1249, %v6914, 0
    %v7739 = vsel %vm1249, %v7218, 0
    %7741 = vmatprep.subr.mxu0 0.0
    %7742 = vmatpush1.xpose.msra.mxu0 0.0
    %7743 = vmatprep.subr.mxu0 0.0
    %7744 = vmatpush1.xpose.msra.mxu0 0.0
    %7745 = vmatprep.subr.mxu0 0.0
    %7746 = vmatpush1.xpose.msra.mxu0 0.0
    %7747 = vmatprep.subr.mxu0 0.0
    %7748 = vmatpush1.xpose.msra.mxu0 0.0
    %7749 = vmatprep.subr.mxu0 0.0
    %7750 = vmatpush1.xpose.msra.mxu0 0.0
    %7751 = vmatprep.subr.mxu0 0.0
    %7752 = vmatpush1.xpose.msra.mxu0 0.0
    %7753 = vmatprep.subr.mxu0 0.0
    %7754 = vmatpush1.xpose.msra.mxu0 0.0
    %7755 = vmatprep.subr.mxu0 0.0
    %7756 = vmatpush1.xpose.msra.mxu0 0.0
    %7757 = vmatprep.subr.mxu0 0.0
    %7758 = vmatpush1.xpose.msra.mxu0 0.0
    %7759 = vmatprep.subr.mxu0 0.0
    %7760 = vmatpush1.xpose.msra.mxu0 0.0
    %7761 = vmatprep.subr.mxu0 0.0
    %7762 = vmatpush1.xpose.msra.mxu0 0.0
    %7763 = vmatprep.subr.mxu0 0.0
    %7764 = vmatpush1.xpose.msra.mxu0 0.0
    %7765 = vmatprep.subr.mxu0 0.0
    %7766 = vmatpush1.xpose.msra.mxu0 0.0
    %7767 = vmatprep.subr.mxu0 0.0
    %7768 = vmatpush1.xpose.msra.mxu0 0.0
    %7769 = vmatprep.subr.mxu0 0.0
    %7770 = vmatpush1.xpose.msra.mxu0 0.0
    %7771 = vmatprep.subr.mxu0 0.0
    %7772 = vmatpush1.xpose.msra.mxu0 %v7739
    %7773 = vmatprep.subr.mxu0 0.0
    %7774 = vmatpush2.xpose.msra.mxu0 0.0
    %7775 = vmatprep.subr.mxu0 0.0
    %7776 = vmatpush2.xpose.msra.mxu0 0.0
    %7777 = vmatprep.subr.mxu0 0.0
    %7778 = vmatpush2.xpose.msra.mxu0 0.0
    %7779 = vmatprep.subr.mxu0 0.0
    %7780 = vmatpush2.xpose.msra.mxu0 0.0
    %7781 = vmatprep.subr.mxu0 0.0
    %7782 = vmatpush2.xpose.msra.mxu0 0.0
    %7783 = vmatprep.subr.mxu0 0.0
    %7784 = vmatpush2.xpose.msra.mxu0 0.0
    %7785 = vmatprep.subr.mxu0 0.0
    %7786 = vmatpush2.xpose.msra.mxu0 0.0
    %7787 = vmatprep.subr.mxu0 0.0
    %7788 = vmatpush2.xpose.msra.mxu0 0.0
    %7789 = vmatprep.subr.mxu0 0.0
    %7790 = vmatpush2.xpose.msra.mxu0 0.0
    %7791 = vmatprep.subr.mxu0 0.0
    %7792 = vmatpush2.xpose.msra.mxu0 0.0
    %7793 = vmatprep.subr.mxu0 0.0
    %7794 = vmatpush2.xpose.msra.mxu0 0.0
    %7795 = vmatprep.subr.mxu0 0.0
    %7796 = vmatpush2.xpose.msra.mxu0 0.0
    %7797 = vmatprep.subr.mxu0 0.0
    %7798 = vmatpush2.xpose.msra.mxu0 0.0
    %7799 = vmatprep.subr.mxu0 0.0
    %7800 = vmatpush2.xpose.msra.mxu0 0.0
    %7801 = vmatprep.subr.mxu0 0.0
    %7802 = vmatpush2.xpose.msra.mxu0 0.0
    %7803 = vmatprep.subr.mxu0 0.0
    %7804 = vmatpush2.xpose.msra.mxu0 0.0
    %7805 = vmatprep.mubr.f32.mxu0 0.0
    %7806 = vmatmul.mubr.f32.gmra.mxu0 %v7736
    %v7807 = vpop.f32.mrf.mxu0
    %v7808 = vadd.f32 0.0, %v7807
    %v7809 = vpop.f32.mrf.mxu0
    %7810 = vdwg.mxu0
    %v7812 = vsel %vm1249, %v6984, 0
    %v7815 = vsel %vm1249, %v7288, 0
    %7817 = vmatprep.subr.mxu0 0.0
    %7818 = vmatpush1.xpose.msra.mxu0 0.0
    %7819 = vmatprep.subr.mxu0 0.0
    %7820 = vmatpush1.xpose.msra.mxu0 0.0
    %7821 = vmatprep.subr.mxu0 0.0
    %7822 = vmatpush1.xpose.msra.mxu0 0.0
    %7823 = vmatprep.subr.mxu0 0.0
    %7824 = vmatpush1.xpose.msra.mxu0 0.0
    %7825 = vmatprep.subr.mxu0 0.0
    %7826 = vmatpush1.xpose.msra.mxu0 0.0
    %7827 = vmatprep.subr.mxu0 0.0
    %7828 = vmatpush1.xpose.msra.mxu0 0.0
    %7829 = vmatprep.subr.mxu0 0.0
    %7830 = vmatpush1.xpose.msra.mxu0 0.0
    %7831 = vmatprep.subr.mxu0 0.0
    %7832 = vmatpush1.xpose.msra.mxu0 0.0
    %7833 = vmatprep.subr.mxu0 0.0
    %7834 = vmatpush1.xpose.msra.mxu0 0.0
    %7835 = vmatprep.subr.mxu0 0.0
    %7836 = vmatpush1.xpose.msra.mxu0 0.0
    %7837 = vmatprep.subr.mxu0 0.0
    %7838 = vmatpush1.xpose.msra.mxu0 0.0
    %7839 = vmatprep.subr.mxu0 0.0
    %7840 = vmatpush1.xpose.msra.mxu0 0.0
    %7841 = vmatprep.subr.mxu0 0.0
    %7842 = vmatpush1.xpose.msra.mxu0 0.0
    %7843 = vmatprep.subr.mxu0 0.0
    %7844 = vmatpush1.xpose.msra.mxu0 0.0
    %7845 = vmatprep.subr.mxu0 0.0
    %7846 = vmatpush1.xpose.msra.mxu0 0.0
    %7847 = vmatprep.subr.mxu0 0.0
    %7848 = vmatpush1.xpose.msra.mxu0 %v7815
    %7849 = vmatprep.subr.mxu0 0.0
    %7850 = vmatpush2.xpose.msra.mxu0 0.0
    %7851 = vmatprep.subr.mxu0 0.0
    %7852 = vmatpush2.xpose.msra.mxu0 0.0
    %7853 = vmatprep.subr.mxu0 0.0
    %7854 = vmatpush2.xpose.msra.mxu0 0.0
    %7855 = vmatprep.subr.mxu0 0.0
    %7856 = vmatpush2.xpose.msra.mxu0 0.0
    %7857 = vmatprep.subr.mxu0 0.0
    %7858 = vmatpush2.xpose.msra.mxu0 0.0
    %7859 = vmatprep.subr.mxu0 0.0
    %7860 = vmatpush2.xpose.msra.mxu0 0.0
    %7861 = vmatprep.subr.mxu0 0.0
    %7862 = vmatpush2.xpose.msra.mxu0 0.0
    %7863 = vmatprep.subr.mxu0 0.0
    %7864 = vmatpush2.xpose.msra.mxu0 0.0
    %7865 = vmatprep.subr.mxu0 0.0
    %7866 = vmatpush2.xpose.msra.mxu0 0.0
    %7867 = vmatprep.subr.mxu0 0.0
    %7868 = vmatpush2.xpose.msra.mxu0 0.0
    %7869 = vmatprep.subr.mxu0 0.0
    %7870 = vmatpush2.xpose.msra.mxu0 0.0
    %7871 = vmatprep.subr.mxu0 0.0
    %7872 = vmatpush2.xpose.msra.mxu0 0.0
    %7873 = vmatprep.subr.mxu0 0.0
    %7874 = vmatpush2.xpose.msra.mxu0 0.0
    %7875 = vmatprep.subr.mxu0 0.0
    %7876 = vmatpush2.xpose.msra.mxu0 0.0
    %7877 = vmatprep.subr.mxu0 0.0
    %7878 = vmatpush2.xpose.msra.mxu0 0.0
    %7879 = vmatprep.subr.mxu0 0.0
    %7880 = vmatpush2.xpose.msra.mxu0 0.0
    %7881 = vmatprep.mubr.f32.mxu0 0.0
    %7882 = vmatmul.mubr.f32.gmra.mxu0 %v7812
    %v7883 = vpop.f32.mrf.mxu0
    %v7884 = vadd.f32 0.0, %v7883
    %v7885 = vpop.f32.mrf.mxu0
    %7886 = vdwg.mxu0
    %v7888 = vsel %vm1249, %v7054, 0
    %v7891 = vsel %vm1249, %v7358, 0
    %7893 = vmatprep.subr.mxu0 0.0
    %7894 = vmatpush1.xpose.msra.mxu0 0.0
    %7895 = vmatprep.subr.mxu0 0.0
    %7896 = vmatpush1.xpose.msra.mxu0 0.0
    %7897 = vmatprep.subr.mxu0 0.0
    %7898 = vmatpush1.xpose.msra.mxu0 0.0
    %7899 = vmatprep.subr.mxu0 0.0
    %7900 = vmatpush1.xpose.msra.mxu0 0.0
    %7901 = vmatprep.subr.mxu0 0.0
    %7902 = vmatpush1.xpose.msra.mxu0 0.0
    %7903 = vmatprep.subr.mxu0 0.0
    %7904 = vmatpush1.xpose.msra.mxu0 0.0
    %7905 = vmatprep.subr.mxu0 0.0
    %7906 = vmatpush1.xpose.msra.mxu0 0.0
    %7907 = vmatprep.subr.mxu0 0.0
    %7908 = vmatpush1.xpose.msra.mxu0 0.0
    %7909 = vmatprep.subr.mxu0 0.0
    %7910 = vmatpush1.xpose.msra.mxu0 0.0
    %7911 = vmatprep.subr.mxu0 0.0
    %7912 = vmatpush1.xpose.msra.mxu0 0.0
    %7913 = vmatprep.subr.mxu0 0.0
    %7914 = vmatpush1.xpose.msra.mxu0 0.0
    %7915 = vmatprep.subr.mxu0 0.0
    %7916 = vmatpush1.xpose.msra.mxu0 0.0
    %7917 = vmatprep.subr.mxu0 0.0
    %7918 = vmatpush1.xpose.msra.mxu0 0.0
    %7919 = vmatprep.subr.mxu0 0.0
    %7920 = vmatpush1.xpose.msra.mxu0 0.0
    %7921 = vmatprep.subr.mxu0 0.0
    %7922 = vmatpush1.xpose.msra.mxu0 0.0
    %7923 = vmatprep.subr.mxu0 0.0
    %7924 = vmatpush1.xpose.msra.mxu0 %v7891
    %7925 = vmatprep.subr.mxu0 0.0
    %7926 = vmatpush2.xpose.msra.mxu0 0.0
    %7927 = vmatprep.subr.mxu0 0.0
    %7928 = vmatpush2.xpose.msra.mxu0 0.0
    %7929 = vmatprep.subr.mxu0 0.0
    %7930 = vmatpush2.xpose.msra.mxu0 0.0
    %7931 = vmatprep.subr.mxu0 0.0
    %7932 = vmatpush2.xpose.msra.mxu0 0.0
    %7933 = vmatprep.subr.mxu0 0.0
    %7934 = vmatpush2.xpose.msra.mxu0 0.0
    %7935 = vmatprep.subr.mxu0 0.0
    %7936 = vmatpush2.xpose.msra.mxu0 0.0
    %7937 = vmatprep.subr.mxu0 0.0
    %7938 = vmatpush2.xpose.msra.mxu0 0.0
    %7939 = vmatprep.subr.mxu0 0.0
    %7940 = vmatpush2.xpose.msra.mxu0 0.0
    %7941 = vmatprep.subr.mxu0 0.0
    %7942 = vmatpush2.xpose.msra.mxu0 0.0
    %7943 = vmatprep.subr.mxu0 0.0
    %7944 = vmatpush2.xpose.msra.mxu0 0.0
    %7945 = vmatprep.subr.mxu0 0.0
    %7946 = vmatpush2.xpose.msra.mxu0 0.0
    %7947 = vmatprep.subr.mxu0 0.0
    %7948 = vmatpush2.xpose.msra.mxu0 0.0
    %7949 = vmatprep.subr.mxu0 0.0
    %7950 = vmatpush2.xpose.msra.mxu0 0.0
    %7951 = vmatprep.subr.mxu0 0.0
    %7952 = vmatpush2.xpose.msra.mxu0 0.0
    %7953 = vmatprep.subr.mxu0 0.0
    %7954 = vmatpush2.xpose.msra.mxu0 0.0
    %7955 = vmatprep.subr.mxu0 0.0
    %7956 = vmatpush2.xpose.msra.mxu0 0.0
    %7957 = vmatprep.mubr.f32.mxu0 0.0
    %7958 = vmatmul.mubr.f32.gmra.mxu0 %v7888
    %v7959 = vpop.f32.mrf.mxu0
    %v7960 = vadd.f32 0.0, %v7959
    %v7961 = vpop.f32.mrf.mxu0
    %7962 = vdwg.mxu0
    %v7964 = vsel %vm1249, %v7124, 0
    %v7967 = vsel %vm1249, %v7428, 0
    %7969 = vmatprep.subr.mxu0 0.0
    %7970 = vmatpush1.xpose.msra.mxu0 0.0
    %7971 = vmatprep.subr.mxu0 0.0
    %7972 = vmatpush1.xpose.msra.mxu0 0.0
    %7973 = vmatprep.subr.mxu0 0.0
    %7974 = vmatpush1.xpose.msra.mxu0 0.0
    %7975 = vmatprep.subr.mxu0 0.0
    %7976 = vmatpush1.xpose.msra.mxu0 0.0
    %7977 = vmatprep.subr.mxu0 0.0
    %7978 = vmatpush1.xpose.msra.mxu0 0.0
    %7979 = vmatprep.subr.mxu0 0.0
    %7980 = vmatpush1.xpose.msra.mxu0 0.0
    %7981 = vmatprep.subr.mxu0 0.0
    %7982 = vmatpush1.xpose.msra.mxu0 0.0
    %7983 = vmatprep.subr.mxu0 0.0
    %7984 = vmatpush1.xpose.msra.mxu0 0.0
    %7985 = vmatprep.subr.mxu0 0.0
    %7986 = vmatpush1.xpose.msra.mxu0 0.0
    %7987 = vmatprep.subr.mxu0 0.0
    %7988 = vmatpush1.xpose.msra.mxu0 0.0
    %7989 = vmatprep.subr.mxu0 0.0
    %7990 = vmatpush1.xpose.msra.mxu0 0.0
    %7991 = vmatprep.subr.mxu0 0.0
    %7992 = vmatpush1.xpose.msra.mxu0 0.0
    %7993 = vmatprep.subr.mxu0 0.0
    %7994 = vmatpush1.xpose.msra.mxu0 0.0
    %7995 = vmatprep.subr.mxu0 0.0
    %7996 = vmatpush1.xpose.msra.mxu0 0.0
    %7997 = vmatprep.subr.mxu0 0.0
    %7998 = vmatpush1.xpose.msra.mxu0 0.0
    %7999 = vmatprep.subr.mxu0 0.0
    %8000 = vmatpush1.xpose.msra.mxu0 %v7967
    %8001 = vmatprep.subr.mxu0 0.0
    %8002 = vmatpush2.xpose.msra.mxu0 0.0
    %8003 = vmatprep.subr.mxu0 0.0
    %8004 = vmatpush2.xpose.msra.mxu0 0.0
    %8005 = vmatprep.subr.mxu0 0.0
    %8006 = vmatpush2.xpose.msra.mxu0 0.0
    %8007 = vmatprep.subr.mxu0 0.0
    %8008 = vmatpush2.xpose.msra.mxu0 0.0
    %8009 = vmatprep.subr.mxu0 0.0
    %8010 = vmatpush2.xpose.msra.mxu0 0.0
    %8011 = vmatprep.subr.mxu0 0.0
    %8012 = vmatpush2.xpose.msra.mxu0 0.0
    %8013 = vmatprep.subr.mxu0 0.0
    %8014 = vmatpush2.xpose.msra.mxu0 0.0
    %8015 = vmatprep.subr.mxu0 0.0
    %8016 = vmatpush2.xpose.msra.mxu0 0.0
    %8017 = vmatprep.subr.mxu0 0.0
    %8018 = vmatpush2.xpose.msra.mxu0 0.0
    %8019 = vmatprep.subr.mxu0 0.0
    %8020 = vmatpush2.xpose.msra.mxu0 0.0
    %8021 = vmatprep.subr.mxu0 0.0
    %8022 = vmatpush2.xpose.msra.mxu0 0.0
    %8023 = vmatprep.subr.mxu0 0.0
    %8024 = vmatpush2.xpose.msra.mxu0 0.0
    %8025 = vmatprep.subr.mxu0 0.0
    %8026 = vmatpush2.xpose.msra.mxu0 0.0
    %8027 = vmatprep.subr.mxu0 0.0
    %8028 = vmatpush2.xpose.msra.mxu0 0.0
    %8029 = vmatprep.subr.mxu0 0.0
    %8030 = vmatpush2.xpose.msra.mxu0 0.0
    %8031 = vmatprep.subr.mxu0 0.0
    %8032 = vmatpush2.xpose.msra.mxu0 0.0
    %8033 = vmatprep.mubr.f32.mxu0 0.0
    %8034 = vmatmul.mubr.f32.gmra.mxu0 %v7964
    %v8035 = vpop.f32.mrf.mxu0
    %v8036 = vadd.f32 0.0, %v8035
    %v8037 = vpop.f32.mrf.mxu0
    %8038 = vdwg.mxu0
    %v8039 = vmul.f32 %v7808, 0.17677669
    %v8040 = vmul.f32 %v7884, 0.17677669
    %v8041 = vmul.f32 %v7960, 0.17677669
    %v8042 = vmul.f32 %v8036, 0.17677669
    %v8043 = vsel %vm1558, %v8039, -inf
    %8044 = vmax.xlane.f32.xlu0 %v8043
    %v8045 = vpop.xlane.xlu0 %8044
    %v8046 = vsel %vm1558, %v8040, -inf
    %8047 = vmax.xlane.f32.xlu0 %v8046
    %v8048 = vpop.xlane.xlu0 %8047
    %v8049 = vsel %vm1558, %v8041, -inf
    %8050 = vmax.xlane.f32.xlu0 %v8049
    %v8051 = vpop.xlane.xlu0 %8050
    %v8052 = vsel %vm1558, %v8042, -inf
    %8053 = vmax.xlane.f32.xlu0 %v8052
    %v8054 = vpop.xlane.xlu0 %8053
    %v8055 = vsub.f32 %v8039, %v8045
    %v8056 = vsub.f32 %v8040, %v8048
    %v8057 = vsub.f32 %v8041, %v8051
    %v8058 = vsub.f32 %v8042, %v8054
    %v8059 = vmul.f32 %v8055, 1.442695
    %v8060 = vpow.pop %v8059
    %v8061 = vmul.f32 %v8056, 1.442695
    %v8062 = vpow.pop %v8061
    %v8063 = vmul.f32 %v8057, 1.442695
    %v8064 = vpow.pop %v8063
    %v8065 = vmul.f32 %v8058, 1.442695
    %v8066 = vpow.pop %v8065
    %v8067 = vsel %vm1558, %v8060, 0.0
    %8068 = vadd.xlane.f32.xlu0 %v8067
    %v8069 = vpop.xlane.xlu0 %8068
    %v8070 = vsel %vm1558, %v8062, 0.0
    %8071 = vadd.xlane.f32.xlu0 %v8070
    %v8072 = vpop.xlane.xlu0 %8071
    %v8073 = vsel %vm1558, %v8064, 0.0
    %8074 = vadd.xlane.f32.xlu0 %v8073
    %v8075 = vpop.xlane.xlu0 %8074
    %v8076 = vsel %vm1558, %v8066, 0.0
    %8077 = vadd.xlane.f32.xlu0 %v8076
    %v8078 = vpop.xlane.xlu0 %8077
    %v8079 = vrcp.pop %v8069
    %v8080 = vrcp.pop %v8072
    %v8081 = vrcp.pop %v8075
    %v8082 = vrcp.pop %v8078
    %v8083 = vmul.f32 %v8060, %v8079
    %v8084 = vmul.f32 %v8062, %v8080
    %v8085 = vmul.f32 %v8064, %v8081
    %v8086 = vmul.f32 %v8066, %v8082
    %v8088 = vsel %vm1558, %v8083, 0
    %8090 = vmatprep.subr.mxu0 0.0
    %8091 = vmatpush1.msra.mxu0 0.0
    %8092 = vmatprep.subr.mxu0 0.0
    %8093 = vmatpush1.msra.mxu0 0.0
    %8094 = vmatprep.subr.mxu0 0.0
    %8095 = vmatpush1.msra.mxu0 0.0
    %8096 = vmatprep.subr.mxu0 0.0
    %8097 = vmatpush1.msra.mxu0 0.0
    %8098 = vmatprep.subr.mxu0 0.0
    %8099 = vmatpush1.msra.mxu0 0.0
    %8100 = vmatprep.subr.mxu0 0.0
    %8101 = vmatpush1.msra.mxu0 0.0
    %8102 = vmatprep.subr.mxu0 0.0
    %8103 = vmatpush1.msra.mxu0 0.0
    %8104 = vmatprep.subr.mxu0 0.0
    %8105 = vmatpush1.msra.mxu0 0.0
    %8106 = vmatprep.subr.mxu0 0.0
    %8107 = vmatpush1.msra.mxu0 0.0
    %8108 = vmatprep.subr.mxu0 0.0
    %8109 = vmatpush1.msra.mxu0 0.0
    %8110 = vmatprep.subr.mxu0 0.0
    %8111 = vmatpush1.msra.mxu0 0.0
    %8112 = vmatprep.subr.mxu0 0.0
    %8113 = vmatpush1.msra.mxu0 0.0
    %8114 = vmatprep.subr.mxu0 0.0
    %8115 = vmatpush1.msra.mxu0 0.0
    %8116 = vmatprep.subr.mxu0 0.0
    %8117 = vmatpush1.msra.mxu0 0.0
    %8118 = vmatprep.subr.mxu0 0.0
    %8119 = vmatpush1.msra.mxu0 0.0
    %8120 = vmatprep.subr.mxu0 0.0
    %8121 = vmatpush1.msra.mxu0 %v7522
    %8122 = vmatprep.subr.mxu0 0.0
    %8123 = vmatpush2.msra.mxu0 0.0
    %8124 = vmatprep.subr.mxu0 0.0
    %8125 = vmatpush2.msra.mxu0 0.0
    %8126 = vmatprep.subr.mxu0 0.0
    %8127 = vmatpush2.msra.mxu0 0.0
    %8128 = vmatprep.subr.mxu0 0.0
    %8129 = vmatpush2.msra.mxu0 0.0
    %8130 = vmatprep.subr.mxu0 0.0
    %8131 = vmatpush2.msra.mxu0 0.0
    %8132 = vmatprep.subr.mxu0 0.0
    %8133 = vmatpush2.msra.mxu0 0.0
    %8134 = vmatprep.subr.mxu0 0.0
    %8135 = vmatpush2.msra.mxu0 0.0
    %8136 = vmatprep.subr.mxu0 0.0
    %8137 = vmatpush2.msra.mxu0 0.0
    %8138 = vmatprep.subr.mxu0 0.0
    %8139 = vmatpush2.msra.mxu0 0.0
    %8140 = vmatprep.subr.mxu0 0.0
    %8141 = vmatpush2.msra.mxu0 0.0
    %8142 = vmatprep.subr.mxu0 0.0
    %8143 = vmatpush2.msra.mxu0 0.0
    %8144 = vmatprep.subr.mxu0 0.0
    %8145 = vmatpush2.msra.mxu0 0.0
    %8146 = vmatprep.subr.mxu0 0.0
    %8147 = vmatpush2.msra.mxu0 0.0
    %8148 = vmatprep.subr.mxu0 0.0
    %8149 = vmatpush2.msra.mxu0 0.0
    %8150 = vmatprep.subr.mxu0 0.0
    %8151 = vmatpush2.msra.mxu0 0.0
    %8152 = vmatprep.subr.mxu0 0.0
    %8153 = vmatpush2.msra.mxu0 0.0
    %8154 = vmatprep.mubr.f32.mxu0 0.0
    %8155 = vmatmul.mubr.f32.gmra.mxu0 %v8088
    %v8156 = vpop.f32.mrf.mxu0
    %v8157 = vadd.f32 0.0, %v8156
    %v8158 = vpop.f32.mrf.mxu0
    %8159 = vdwg.mxu0
    %v8161 = vsel %vm1558, %v8084, 0
    %8163 = vmatprep.subr.mxu0 0.0
    %8164 = vmatpush1.msra.mxu0 0.0
    %8165 = vmatprep.subr.mxu0 0.0
    %8166 = vmatpush1.msra.mxu0 0.0
    %8167 = vmatprep.subr.mxu0 0.0
    %8168 = vmatpush1.msra.mxu0 0.0
    %8169 = vmatprep.subr.mxu0 0.0
    %8170 = vmatpush1.msra.mxu0 0.0
    %8171 = vmatprep.subr.mxu0 0.0
    %8172 = vmatpush1.msra.mxu0 0.0
    %8173 = vmatprep.subr.mxu0 0.0
    %8174 = vmatpush1.msra.mxu0 0.0
    %8175 = vmatprep.subr.mxu0 0.0
    %8176 = vmatpush1.msra.mxu0 0.0
    %8177 = vmatprep.subr.mxu0 0.0
    %8178 = vmatpush1.msra.mxu0 0.0
    %8179 = vmatprep.subr.mxu0 0.0
    %8180 = vmatpush1.msra.mxu0 0.0
    %8181 = vmatprep.subr.mxu0 0.0
    %8182 = vmatpush1.msra.mxu0 0.0
    %8183 = vmatprep.subr.mxu0 0.0
    %8184 = vmatpush1.msra.mxu0 0.0
    %8185 = vmatprep.subr.mxu0 0.0
    %8186 = vmatpush1.msra.mxu0 0.0
    %8187 = vmatprep.subr.mxu0 0.0
    %8188 = vmatpush1.msra.mxu0 0.0
    %8189 = vmatprep.subr.mxu0 0.0
    %8190 = vmatpush1.msra.mxu0 0.0
    %8191 = vmatprep.subr.mxu0 0.0
    %8192 = vmatpush1.msra.mxu0 0.0
    %8193 = vmatprep.subr.mxu0 0.0
    %8194 = vmatpush1.msra.mxu0 %v7592
    %8195 = vmatprep.subr.mxu0 0.0
    %8196 = vmatpush2.msra.mxu0 0.0
    %8197 = vmatprep.subr.mxu0 0.0
    %8198 = vmatpush2.msra.mxu0 0.0
    %8199 = vmatprep.subr.mxu0 0.0
    %8200 = vmatpush2.msra.mxu0 0.0
    %8201 = vmatprep.subr.mxu0 0.0
    %8202 = vmatpush2.msra.mxu0 0.0
    %8203 = vmatprep.subr.mxu0 0.0
    %8204 = vmatpush2.msra.mxu0 0.0
    %8205 = vmatprep.subr.mxu0 0.0
    %8206 = vmatpush2.msra.mxu0 0.0
    %8207 = vmatprep.subr.mxu0 0.0
    %8208 = vmatpush2.msra.mxu0 0.0
    %8209 = vmatprep.subr.mxu0 0.0
    %8210 = vmatpush2.msra.mxu0 0.0
    %8211 = vmatprep.subr.mxu0 0.0
    %8212 = vmatpush2.msra.mxu0 0.0
    %8213 = vmatprep.subr.mxu0 0.0
    %8214 = vmatpush2.msra.mxu0 0.0
    %8215 = vmatprep.subr.mxu0 0.0
    %8216 = vmatpush2.msra.mxu0 0.0
    %8217 = vmatprep.subr.mxu0 0.0
    %8218 = vmatpush2.msra.mxu0 0.0
    %8219 = vmatprep.subr.mxu0 0.0
    %8220 = vmatpush2.msra.mxu0 0.0
    %8221 = vmatprep.subr.mxu0 0.0
    %8222 = vmatpush2.msra.mxu0 0.0
    %8223 = vmatprep.subr.mxu0 0.0
    %8224 = vmatpush2.msra.mxu0 0.0
    %8225 = vmatprep.subr.mxu0 0.0
    %8226 = vmatpush2.msra.mxu0 0.0
    %8227 = vmatprep.mubr.f32.mxu0 0.0
    %8228 = vmatmul.mubr.f32.gmra.mxu0 %v8161
    %v8229 = vpop.f32.mrf.mxu0
    %v8230 = vadd.f32 0.0, %v8229
    %v8231 = vpop.f32.mrf.mxu0
    %8232 = vdwg.mxu0
    %v8234 = vsel %vm1558, %v8085, 0
    %8236 = vmatprep.subr.mxu0 0.0
    %8237 = vmatpush1.msra.mxu0 0.0
    %8238 = vmatprep.subr.mxu0 0.0
    %8239 = vmatpush1.msra.mxu0 0.0
    %8240 = vmatprep.subr.mxu0 0.0
    %8241 = vmatpush1.msra.mxu0 0.0
    %8242 = vmatprep.subr.mxu0 0.0
    %8243 = vmatpush1.msra.mxu0 0.0
    %8244 = vmatprep.subr.mxu0 0.0
    %8245 = vmatpush1.msra.mxu0 0.0
    %8246 = vmatprep.subr.mxu0 0.0
    %8247 = vmatpush1.msra.mxu0 0.0
    %8248 = vmatprep.subr.mxu0 0.0
    %8249 = vmatpush1.msra.mxu0 0.0
    %8250 = vmatprep.subr.mxu0 0.0
    %8251 = vmatpush1.msra.mxu0 0.0
    %8252 = vmatprep.subr.mxu0 0.0
    %8253 = vmatpush1.msra.mxu0 0.0
    %8254 = vmatprep.subr.mxu0 0.0
    %8255 = vmatpush1.msra.mxu0 0.0
    %8256 = vmatprep.subr.mxu0 0.0
    %8257 = vmatpush1.msra.mxu0 0.0
    %8258 = vmatprep.subr.mxu0 0.0
    %8259 = vmatpush1.msra.mxu0 0.0
    %8260 = vmatprep.subr.mxu0 0.0
    %8261 = vmatpush1.msra.mxu0 0.0
    %8262 = vmatprep.subr.mxu0 0.0
    %8263 = vmatpush1.msra.mxu0 0.0
    %8264 = vmatprep.subr.mxu0 0.0
    %8265 = vmatpush1.msra.mxu0 0.0
    %8266 = vmatprep.subr.mxu0 0.0
    %8267 = vmatpush1.msra.mxu0 %v7662
    %8268 = vmatprep.subr.mxu0 0.0
    %8269 = vmatpush2.msra.mxu0 0.0
    %8270 = vmatprep.subr.mxu0 0.0
    %8271 = vmatpush2.msra.mxu0 0.0
    %8272 = vmatprep.subr.mxu0 0.0
    %8273 = vmatpush2.msra.mxu0 0.0
    %8274 = vmatprep.subr.mxu0 0.0
    %8275 = vmatpush2.msra.mxu0 0.0
    %8276 = vmatprep.subr.mxu0 0.0
    %8277 = vmatpush2.msra.mxu0 0.0
    %8278 = vmatprep.subr.mxu0 0.0
    %8279 = vmatpush2.msra.mxu0 0.0
    %8280 = vmatprep.subr.mxu0 0.0
    %8281 = vmatpush2.msra.mxu0 0.0
    %8282 = vmatprep.subr.mxu0 0.0
    %8283 = vmatpush2.msra.mxu0 0.0
    %8284 = vmatprep.subr.mxu0 0.0
    %8285 = vmatpush2.msra.mxu0 0.0
    %8286 = vmatprep.subr.mxu0 0.0
    %8287 = vmatpush2.msra.mxu0 0.0
    %8288 = vmatprep.subr.mxu0 0.0
    %8289 = vmatpush2.msra.mxu0 0.0
    %8290 = vmatprep.subr.mxu0 0.0
    %8291 = vmatpush2.msra.mxu0 0.0
    %8292 = vmatprep.subr.mxu0 0.0
    %8293 = vmatpush2.msra.mxu0 0.0
    %8294 = vmatprep.subr.mxu0 0.0
    %8295 = vmatpush2.msra.mxu0 0.0
    %8296 = vmatprep.subr.mxu0 0.0
    %8297 = vmatpush2.msra.mxu0 0.0
    %8298 = vmatprep.subr.mxu0 0.0
    %8299 = vmatpush2.msra.mxu0 0.0
    %8300 = vmatprep.mubr.f32.mxu0 0.0
    %8301 = vmatmul.mubr.f32.gmra.mxu0 %v8234
    %v8302 = vpop.f32.mrf.mxu0
    %v8303 = vadd.f32 0.0, %v8302
    %v8304 = vpop.f32.mrf.mxu0
    %8305 = vdwg.mxu0
    %v8307 = vsel %vm1558, %v8086, 0
    %8309 = vmatprep.subr.mxu0 0.0
    %8310 = vmatpush1.msra.mxu0 0.0
    %8311 = vmatprep.subr.mxu0 0.0
    %8312 = vmatpush1.msra.mxu0 0.0
    %8313 = vmatprep.subr.mxu0 0.0
    %8314 = vmatpush1.msra.mxu0 0.0
    %8315 = vmatprep.subr.mxu0 0.0
    %8316 = vmatpush1.msra.mxu0 0.0
    %8317 = vmatprep.subr.mxu0 0.0
    %8318 = vmatpush1.msra.mxu0 0.0
    %8319 = vmatprep.subr.mxu0 0.0
    %8320 = vmatpush1.msra.mxu0 0.0
    %8321 = vmatprep.subr.mxu0 0.0
    %8322 = vmatpush1.msra.mxu0 0.0
    %8323 = vmatprep.subr.mxu0 0.0
    %8324 = vmatpush1.msra.mxu0 0.0
    %8325 = vmatprep.subr.mxu0 0.0
    %8326 = vmatpush1.msra.mxu0 0.0
    %8327 = vmatprep.subr.mxu0 0.0
    %8328 = vmatpush1.msra.mxu0 0.0
    %8329 = vmatprep.subr.mxu0 0.0
    %8330 = vmatpush1.msra.mxu0 0.0
    %8331 = vmatprep.subr.mxu0 0.0
    %8332 = vmatpush1.msra.mxu0 0.0
    %8333 = vmatprep.subr.mxu0 0.0
    %8334 = vmatpush1.msra.mxu0 0.0
    %8335 = vmatprep.subr.mxu0 0.0
    %8336 = vmatpush1.msra.mxu0 0.0
    %8337 = vmatprep.subr.mxu0 0.0
    %8338 = vmatpush1.msra.mxu0 0.0
    %8339 = vmatprep.subr.mxu0 0.0
    %8340 = vmatpush1.msra.mxu0 %v7732
    %8341 = vmatprep.subr.mxu0 0.0
    %8342 = vmatpush2.msra.mxu0 0.0
    %8343 = vmatprep.subr.mxu0 0.0
    %8344 = vmatpush2.msra.mxu0 0.0
    %8345 = vmatprep.subr.mxu0 0.0
    %8346 = vmatpush2.msra.mxu0 0.0
    %8347 = vmatprep.subr.mxu0 0.0
    %8348 = vmatpush2.msra.mxu0 0.0
    %8349 = vmatprep.subr.mxu0 0.0
    %8350 = vmatpush2.msra.mxu0 0.0
    %8351 = vmatprep.subr.mxu0 0.0
    %8352 = vmatpush2.msra.mxu0 0.0
    %8353 = vmatprep.subr.mxu0 0.0
    %8354 = vmatpush2.msra.mxu0 0.0
    %8355 = vmatprep.subr.mxu0 0.0
    %8356 = vmatpush2.msra.mxu0 0.0
    %8357 = vmatprep.subr.mxu0 0.0
    %8358 = vmatpush2.msra.mxu0 0.0
    %8359 = vmatprep.subr.mxu0 0.0
    %8360 = vmatpush2.msra.mxu0 0.0
    %8361 = vmatprep.subr.mxu0 0.0
    %8362 = vmatpush2.msra.mxu0 0.0
    %8363 = vmatprep.subr.mxu0 0.0
    %8364 = vmatpush2.msra.mxu0 0.0
    %8365 = vmatprep.subr.mxu0 0.0
    %8366 = vmatpush2.msra.mxu0 0.0
    %8367 = vmatprep.subr.mxu0 0.0
    %8368 = vmatpush2.msra.mxu0 0.0
    %8369 = vmatprep.subr.mxu0 0.0
    %8370 = vmatpush2.msra.mxu0 0.0
    %8371 = vmatprep.subr.mxu0 0.0
    %8372 = vmatpush2.msra.mxu0 0.0
    %8373 = vmatprep.mubr.f32.mxu0 0.0
    %8374 = vmatmul.mubr.f32.gmra.mxu0 %v8307
    %v8375 = vpop.f32.mrf.mxu0
    %v8376 = vadd.f32 0.0, %v8375
    %v8377 = vpop.f32.mrf.mxu0
    %8378 = vdwg.mxu0
    %v8380 = vsel %vm1249, %v8157, 0
    %8382 = vmatprep.subr.mxu0 0.0
    %8383 = vmatpush1.msra.mxu0 0.0
    %8384 = vmatprep.subr.mxu0 0.0
    %8385 = vmatpush1.msra.mxu0 0.0
    %8386 = vmatprep.subr.mxu0 0.0
    %8387 = vmatpush1.msra.mxu0 0.0
    %8388 = vmatprep.subr.mxu0 0.0
    %8389 = vmatpush1.msra.mxu0 0.0
    %8390 = vmatprep.subr.mxu0 0.0
    %8391 = vmatpush1.msra.mxu0 0.0
    %8392 = vmatprep.subr.mxu0 0.0
    %8393 = vmatpush1.msra.mxu0 0.0
    %8394 = vmatprep.subr.mxu0 0.0
    %8395 = vmatpush1.msra.mxu0 0.0
    %8396 = vmatprep.subr.mxu0 0.0
    %8397 = vmatpush1.msra.mxu0 0.0
    %8398 = vmatprep.subr.mxu0 0.0
    %8399 = vmatpush1.msra.mxu0 0.0
    %8400 = vmatprep.subr.mxu0 0.0
    %8401 = vmatpush1.msra.mxu0 0.0
    %8402 = vmatprep.subr.mxu0 0.0
    %8403 = vmatpush1.msra.mxu0 0.0
    %8404 = vmatprep.subr.mxu0 0.0
    %8405 = vmatpush1.msra.mxu0 0.0
    %8406 = vmatprep.subr.mxu0 0.0
    %8407 = vmatpush1.msra.mxu0 %v6810
    %8408 = vmatprep.subr.mxu0 0.0
    %8409 = vmatpush1.msra.mxu0 %v6809
    %8410 = vmatprep.subr.mxu0 0.0
    %8411 = vmatpush1.msra.mxu0 %v6808
    %8412 = vmatprep.subr.mxu0 0.0
    %8413 = vmatpush1.msra.mxu0 %v6807
    %8414 = vmatprep.subr.mxu0 0.0
    %8415 = vmatpush2.msra.mxu0 0.0
    %8416 = vmatprep.subr.mxu0 0.0
    %8417 = vmatpush2.msra.mxu0 0.0
    %8418 = vmatprep.subr.mxu0 0.0
    %8419 = vmatpush2.msra.mxu0 0.0
    %8420 = vmatprep.subr.mxu0 0.0
    %8421 = vmatpush2.msra.mxu0 0.0
    %8422 = vmatprep.subr.mxu0 0.0
    %8423 = vmatpush2.msra.mxu0 0.0
    %8424 = vmatprep.subr.mxu0 0.0
    %8425 = vmatpush2.msra.mxu0 0.0
    %8426 = vmatprep.subr.mxu0 0.0
    %8427 = vmatpush2.msra.mxu0 0.0
    %8428 = vmatprep.subr.mxu0 0.0
    %8429 = vmatpush2.msra.mxu0 0.0
    %8430 = vmatprep.subr.mxu0 0.0
    %8431 = vmatpush2.msra.mxu0 0.0
    %8432 = vmatprep.subr.mxu0 0.0
    %8433 = vmatpush2.msra.mxu0 0.0
    %8434 = vmatprep.subr.mxu0 0.0
    %8435 = vmatpush2.msra.mxu0 0.0
    %8436 = vmatprep.subr.mxu0 0.0
    %8437 = vmatpush2.msra.mxu0 0.0
    %8438 = vmatprep.subr.mxu0 0.0
    %8439 = vmatpush2.msra.mxu0 0.0
    %8440 = vmatprep.subr.mxu0 0.0
    %8441 = vmatpush2.msra.mxu0 0.0
    %8442 = vmatprep.subr.mxu0 0.0
    %8443 = vmatpush2.msra.mxu0 0.0
    %8444 = vmatprep.subr.mxu0 0.0
    %8445 = vmatpush2.msra.mxu0 0.0
    %8446 = vmatprep.mubr.f32.mxu0 0.0
    %8447 = vmatmul.mubr.f32.gmra.mxu0 %v8380
    %v8448 = vpop.f32.mrf.mxu0
    %v8449 = vadd.f32 0.0, %v8448
    %v8450 = vpop.f32.mrf.mxu0
    %8451 = vdwg.mxu0
    %v8453 = vsel %vm1249, %v8230, 0
    %8455 = vmatprep.subr.mxu0 0.0
    %8456 = vmatpush1.msra.mxu0 0.0
    %8457 = vmatprep.subr.mxu0 0.0
    %8458 = vmatpush1.msra.mxu0 0.0
    %8459 = vmatprep.subr.mxu0 0.0
    %8460 = vmatpush1.msra.mxu0 0.0
    %8461 = vmatprep.subr.mxu0 0.0
    %8462 = vmatpush1.msra.mxu0 0.0
    %8463 = vmatprep.subr.mxu0 0.0
    %8464 = vmatpush1.msra.mxu0 0.0
    %8465 = vmatprep.subr.mxu0 0.0
    %8466 = vmatpush1.msra.mxu0 0.0
    %8467 = vmatprep.subr.mxu0 0.0
    %8468 = vmatpush1.msra.mxu0 0.0
    %8469 = vmatprep.subr.mxu0 0.0
    %8470 = vmatpush1.msra.mxu0 0.0
    %8471 = vmatprep.subr.mxu0 0.0
    %8472 = vmatpush1.msra.mxu0 0.0
    %8473 = vmatprep.subr.mxu0 0.0
    %8474 = vmatpush1.msra.mxu0 0.0
    %8475 = vmatprep.subr.mxu0 0.0
    %8476 = vmatpush1.msra.mxu0 0.0
    %8477 = vmatprep.subr.mxu0 0.0
    %8478 = vmatpush1.msra.mxu0 0.0
    %8479 = vmatprep.subr.mxu0 0.0
    %8480 = vmatpush1.msra.mxu0 %v6814
    %8481 = vmatprep.subr.mxu0 0.0
    %8482 = vmatpush1.msra.mxu0 %v6813
    %8483 = vmatprep.subr.mxu0 0.0
    %8484 = vmatpush1.msra.mxu0 %v6812
    %8485 = vmatprep.subr.mxu0 0.0
    %8486 = vmatpush1.msra.mxu0 %v6811
    %8487 = vmatprep.subr.mxu0 0.0
    %8488 = vmatpush2.msra.mxu0 0.0
    %8489 = vmatprep.subr.mxu0 0.0
    %8490 = vmatpush2.msra.mxu0 0.0
    %8491 = vmatprep.subr.mxu0 0.0
    %8492 = vmatpush2.msra.mxu0 0.0
    %8493 = vmatprep.subr.mxu0 0.0
    %8494 = vmatpush2.msra.mxu0 0.0
    %8495 = vmatprep.subr.mxu0 0.0
    %8496 = vmatpush2.msra.mxu0 0.0
    %8497 = vmatprep.subr.mxu0 0.0
    %8498 = vmatpush2.msra.mxu0 0.0
    %8499 = vmatprep.subr.mxu0 0.0
    %8500 = vmatpush2.msra.mxu0 0.0
    %8501 = vmatprep.subr.mxu0 0.0
    %8502 = vmatpush2.msra.mxu0 0.0
    %8503 = vmatprep.subr.mxu0 0.0
    %8504 = vmatpush2.msra.mxu0 0.0
    %8505 = vmatprep.subr.mxu0 0.0
    %8506 = vmatpush2.msra.mxu0 0.0
    %8507 = vmatprep.subr.mxu0 0.0
    %8508 = vmatpush2.msra.mxu0 0.0
    %8509 = vmatprep.subr.mxu0 0.0
    %8510 = vmatpush2.msra.mxu0 0.0
    %8511 = vmatprep.subr.mxu0 0.0
    %8512 = vmatpush2.msra.mxu0 0.0
    %8513 = vmatprep.subr.mxu0 0.0
    %8514 = vmatpush2.msra.mxu0 0.0
    %8515 = vmatprep.subr.mxu0 0.0
    %8516 = vmatpush2.msra.mxu0 0.0
    %8517 = vmatprep.subr.mxu0 0.0
    %8518 = vmatpush2.msra.mxu0 0.0
    %8519 = vmatprep.mubr.f32.mxu0 0.0
    %8520 = vmatmul.mubr.f32.gmra.mxu0 %v8453
    %v8521 = vpop.f32.mrf.mxu0
    %v8522 = vadd.f32 0.0, %v8521
    %v8523 = vpop.f32.mrf.mxu0
    %8524 = vdwg.mxu0
    %v8526 = vsel %vm1249, %v8303, 0
    %8528 = vmatprep.subr.mxu0 0.0
    %8529 = vmatpush1.msra.mxu0 0.0
    %8530 = vmatprep.subr.mxu0 0.0
    %8531 = vmatpush1.msra.mxu0 0.0
    %8532 = vmatprep.subr.mxu0 0.0
    %8533 = vmatpush1.msra.mxu0 0.0
    %8534 = vmatprep.subr.mxu0 0.0
    %8535 = vmatpush1.msra.mxu0 0.0
    %8536 = vmatprep.subr.mxu0 0.0
    %8537 = vmatpush1.msra.mxu0 0.0
    %8538 = vmatprep.subr.mxu0 0.0
    %8539 = vmatpush1.msra.mxu0 0.0
    %8540 = vmatprep.subr.mxu0 0.0
    %8541 = vmatpush1.msra.mxu0 0.0
    %8542 = vmatprep.subr.mxu0 0.0
    %8543 = vmatpush1.msra.mxu0 0.0
    %8544 = vmatprep.subr.mxu0 0.0
    %8545 = vmatpush1.msra.mxu0 0.0
    %8546 = vmatprep.subr.mxu0 0.0
    %8547 = vmatpush1.msra.mxu0 0.0
    %8548 = vmatprep.subr.mxu0 0.0
    %8549 = vmatpush1.msra.mxu0 0.0
    %8550 = vmatprep.subr.mxu0 0.0
    %8551 = vmatpush1.msra.mxu0 0.0
    %8552 = vmatprep.subr.mxu0 0.0
    %8553 = vmatpush1.msra.mxu0 %v6818
    %8554 = vmatprep.subr.mxu0 0.0
    %8555 = vmatpush1.msra.mxu0 %v6817
    %8556 = vmatprep.subr.mxu0 0.0
    %8557 = vmatpush1.msra.mxu0 %v6816
    %8558 = vmatprep.subr.mxu0 0.0
    %8559 = vmatpush1.msra.mxu0 %v6815
    %8560 = vmatprep.subr.mxu0 0.0
    %8561 = vmatpush2.msra.mxu0 0.0
    %8562 = vmatprep.subr.mxu0 0.0
    %8563 = vmatpush2.msra.mxu0 0.0
    %8564 = vmatprep.subr.mxu0 0.0
    %8565 = vmatpush2.msra.mxu0 0.0
    %8566 = vmatprep.subr.mxu0 0.0
    %8567 = vmatpush2.msra.mxu0 0.0
    %8568 = vmatprep.subr.mxu0 0.0
    %8569 = vmatpush2.msra.mxu0 0.0
    %8570 = vmatprep.subr.mxu0 0.0
    %8571 = vmatpush2.msra.mxu0 0.0
    %8572 = vmatprep.subr.mxu0 0.0
    %8573 = vmatpush2.msra.mxu0 0.0
    %8574 = vmatprep.subr.mxu0 0.0
    %8575 = vmatpush2.msra.mxu0 0.0
    %8576 = vmatprep.subr.mxu0 0.0
    %8577 = vmatpush2.msra.mxu0 0.0
    %8578 = vmatprep.subr.mxu0 0.0
    %8579 = vmatpush2.msra.mxu0 0.0
    %8580 = vmatprep.subr.mxu0 0.0
    %8581 = vmatpush2.msra.mxu0 0.0
    %8582 = vmatprep.subr.mxu0 0.0
    %8583 = vmatpush2.msra.mxu0 0.0
    %8584 = vmatprep.subr.mxu0 0.0
    %8585 = vmatpush2.msra.mxu0 0.0
    %8586 = vmatprep.subr.mxu0 0.0
    %8587 = vmatpush2.msra.mxu0 0.0
    %8588 = vmatprep.subr.mxu0 0.0
    %8589 = vmatpush2.msra.mxu0 0.0
    %8590 = vmatprep.subr.mxu0 0.0
    %8591 = vmatpush2.msra.mxu0 0.0
    %8592 = vmatprep.mubr.f32.mxu0 0.0
    %8593 = vmatmul.mubr.f32.gmra.mxu0 %v8526
    %v8594 = vpop.f32.mrf.mxu0
    %v8595 = vadd.f32 0.0, %v8594
    %v8596 = vpop.f32.mrf.mxu0
    %8597 = vdwg.mxu0
    %v8599 = vsel %vm1249, %v8376, 0
    %8601 = vmatprep.subr.mxu0 0.0
    %8602 = vmatpush1.msra.mxu0 0.0
    %8603 = vmatprep.subr.mxu0 0.0
    %8604 = vmatpush1.msra.mxu0 0.0
    %8605 = vmatprep.subr.mxu0 0.0
    %8606 = vmatpush1.msra.mxu0 0.0
    %8607 = vmatprep.subr.mxu0 0.0
    %8608 = vmatpush1.msra.mxu0 0.0
    %8609 = vmatprep.subr.mxu0 0.0
    %8610 = vmatpush1.msra.mxu0 0.0
    %8611 = vmatprep.subr.mxu0 0.0
    %8612 = vmatpush1.msra.mxu0 0.0
    %8613 = vmatprep.subr.mxu0 0.0
    %8614 = vmatpush1.msra.mxu0 0.0
    %8615 = vmatprep.subr.mxu0 0.0
    %8616 = vmatpush1.msra.mxu0 0.0
    %8617 = vmatprep.subr.mxu0 0.0
    %8618 = vmatpush1.msra.mxu0 0.0
    %8619 = vmatprep.subr.mxu0 0.0
    %8620 = vmatpush1.msra.mxu0 0.0
    %8621 = vmatprep.subr.mxu0 0.0
    %8622 = vmatpush1.msra.mxu0 0.0
    %8623 = vmatprep.subr.mxu0 0.0
    %8624 = vmatpush1.msra.mxu0 0.0
    %8625 = vmatprep.subr.mxu0 0.0
    %8626 = vmatpush1.msra.mxu0 %v6822
    %8627 = vmatprep.subr.mxu0 0.0
    %8628 = vmatpush1.msra.mxu0 %v6821
    %8629 = vmatprep.subr.mxu0 0.0
    %8630 = vmatpush1.msra.mxu0 %v6820
    %8631 = vmatprep.subr.mxu0 0.0
    %8632 = vmatpush1.msra.mxu0 %v6819
    %8633 = vmatprep.subr.mxu0 0.0
    %8634 = vmatpush2.msra.mxu0 0.0
    %8635 = vmatprep.subr.mxu0 0.0
    %8636 = vmatpush2.msra.mxu0 0.0
    %8637 = vmatprep.subr.mxu0 0.0
    %8638 = vmatpush2.msra.mxu0 0.0
    %8639 = vmatprep.subr.mxu0 0.0
    %8640 = vmatpush2.msra.mxu0 0.0
    %8641 = vmatprep.subr.mxu0 0.0
    %8642 = vmatpush2.msra.mxu0 0.0
    %8643 = vmatprep.subr.mxu0 0.0
    %8644 = vmatpush2.msra.mxu0 0.0
    %8645 = vmatprep.subr.mxu0 0.0
    %8646 = vmatpush2.msra.mxu0 0.0
    %8647 = vmatprep.subr.mxu0 0.0
    %8648 = vmatpush2.msra.mxu0 0.0
    %8649 = vmatprep.subr.mxu0 0.0
    %8650 = vmatpush2.msra.mxu0 0.0
    %8651 = vmatprep.subr.mxu0 0.0
    %8652 = vmatpush2.msra.mxu0 0.0
    %8653 = vmatprep.subr.mxu0 0.0
    %8654 = vmatpush2.msra.mxu0 0.0
    %8655 = vmatprep.subr.mxu0 0.0
    %8656 = vmatpush2.msra.mxu0 0.0
    %8657 = vmatprep.subr.mxu0 0.0
    %8658 = vmatpush2.msra.mxu0 0.0
    %8659 = vmatprep.subr.mxu0 0.0
    %8660 = vmatpush2.msra.mxu0 0.0
    %8661 = vmatprep.subr.mxu0 0.0
    %8662 = vmatpush2.msra.mxu0 0.0
    %8663 = vmatprep.subr.mxu0 0.0
    %8664 = vmatpush2.msra.mxu0 0.0
    %8665 = vmatprep.mubr.f32.mxu0 0.0
    %8666 = vmatmul.mubr.f32.gmra.mxu0 %v8599
    %v8667 = vpop.f32.mrf.mxu0
    %v8668 = vadd.f32 0.0, %v8667
    %v8669 = vpop.f32.mrf.mxu0
    %8670 = vdwg.mxu0
    %v8671 = vadd.f32 %v8449, %v8522
    %v8672 = vadd.f32 %v8671, %v8595
    %v8673 = vadd.f32 %v8672, %v8668
    %v8674 = vadd.f32 %v8673, %v4301
    %v8675 = vadd.f32 %v6600, %v8674
    %8676 = vadd.xlane.f32.xlu0 %v8675
    %v8677 = vpop.xlane.xlu0 %8676
    %v8678 = vmul.f32 %v8677, %v2198
    %v8679 = vsub.f32 %v8675, %v8678
    %v8680 = vmul.f32 %v8679, %v8679
    %8681 = vadd.xlane.f32.xlu0 %v8680
    %v8682 = vpop.xlane.xlu0 %8681
    %v8683 = vmul.f32 %v8682, %v2198
    %v8684 = vadd.f32 %v8683, 1e-05
    %v8685 = vrsqrt.pop %v8684
    %v8686 = vmul.f32 %v8679, %v8685
    %v8687 = vmul.f32 %v8686, %v4318
    %v8688 = vadd.f32 %v8687, %v4323
    %8689 = vmatprep.subr.mxu0 %v64
    %8690 = vmatpush1.msra.mxu0 %v63
    %8691 = vmatprep.subr.mxu0 %v62
    %8692 = vmatpush1.msra.mxu0 %v61
    %8693 = vmatprep.subr.mxu0 %v60
    %8694 = vmatpush1.msra.mxu0 %v59
    %8695 = vmatprep.subr.mxu0 %v58
    %8696 = vmatpush1.msra.mxu0 %v57
    %8697 = vmatprep.subr.mxu0 %v56
    %8698 = vmatpush1.msra.mxu0 %v55
    %8699 = vmatprep.subr.mxu0 %v54
    %8700 = vmatpush1.msra.mxu0 %v53
    %8701 = vmatprep.subr.mxu0 %v52
    %8702 = vmatpush1.msra.mxu0 %v51
    %8703 = vmatprep.subr.mxu0 %v50
    %8704 = vmatpush1.msra.mxu0 %v49
    %8705 = vmatprep.subr.mxu0 %v48
    %8706 = vmatpush1.msra.mxu0 %v47
    %8707 = vmatprep.subr.mxu0 %v46
    %8708 = vmatpush1.msra.mxu0 %v45
    %8709 = vmatprep.subr.mxu0 %v44
    %8710 = vmatpush1.msra.mxu0 %v43
    %8711 = vmatprep.subr.mxu0 %v42
    %8712 = vmatpush1.msra.mxu0 %v41
    %8713 = vmatprep.subr.mxu0 %v40
    %8714 = vmatpush1.msra.mxu0 %v39
    %8715 = vmatprep.subr.mxu0 %v38
    %8716 = vmatpush1.msra.mxu0 %v37
    %8717 = vmatprep.subr.mxu0 %v36
    %8718 = vmatpush1.msra.mxu0 %v35
    %8719 = vmatprep.subr.mxu0 %v34
    %8720 = vmatpush1.msra.mxu0 %v33
    %8721 = vmatprep.subr.mxu0 0.0
    %8722 = vmatpush2.msra.mxu0 0.0
    %8723 = vmatprep.subr.mxu0 0.0
    %8724 = vmatpush2.msra.mxu0 0.0
    %8725 = vmatprep.subr.mxu0 0.0
    %8726 = vmatpush2.msra.mxu0 0.0
    %8727 = vmatprep.subr.mxu0 0.0
    %8728 = vmatpush2.msra.mxu0 0.0
    %8729 = vmatprep.subr.mxu0 0.0
    %8730 = vmatpush2.msra.mxu0 0.0
    %8731 = vmatprep.subr.mxu0 0.0
    %8732 = vmatpush2.msra.mxu0 0.0
    %8733 = vmatprep.subr.mxu0 0.0
    %8734 = vmatpush2.msra.mxu0 0.0
    %8735 = vmatprep.subr.mxu0 0.0
    %8736 = vmatpush2.msra.mxu0 0.0
    %8737 = vmatprep.subr.mxu0 0.0
    %8738 = vmatpush2.msra.mxu0 0.0
    %8739 = vmatprep.subr.mxu0 0.0
    %8740 = vmatpush2.msra.mxu0 0.0
    %8741 = vmatprep.subr.mxu0 0.0
    %8742 = vmatpush2.msra.mxu0 0.0
    %8743 = vmatprep.subr.mxu0 0.0
    %8744 = vmatpush2.msra.mxu0 0.0
    %8745 = vmatprep.subr.mxu0 0.0
    %8746 = vmatpush2.msra.mxu0 0.0
    %8747 = vmatprep.subr.mxu0 0.0
    %8748 = vmatpush2.msra.mxu0 0.0
    %8749 = vmatprep.subr.mxu0 0.0
    %8750 = vmatpush2.msra.mxu0 0.0
    %8751 = vmatprep.subr.mxu0 0.0
    %8752 = vmatpush2.msra.mxu0 0.0
    %8753 = vmatprep.mubr.f32.mxu0 0.0
    %8754 = vmatmul.mubr.f32.gmra.mxu0 %v8688
    %v8755 = vpop.f32.mrf.mxu0
    %v8756 = vadd.f32 %v4329, %v8755
    %v8757 = vpop.f32.mrf.mxu0
    %v8758 = vadd.f32 %v4333, %v8757
    %8759 = vdwg.mxu0
    %v8760 = vmax.f32 %v8756, 0.0
    %v8761 = vmax.f32 %v8758, 0.0
    %8762 = vmatprep.subr.mxu0 0.0
    %8763 = vmatpush1.msra.mxu0 %v80
    %8764 = vmatprep.subr.mxu0 0.0
    %8765 = vmatpush1.msra.mxu0 %v79
    %8766 = vmatprep.subr.mxu0 0.0
    %8767 = vmatpush1.msra.mxu0 %v78
    %8768 = vmatprep.subr.mxu0 0.0
    %8769 = vmatpush1.msra.mxu0 %v77
    %8770 = vmatprep.subr.mxu0 0.0
    %8771 = vmatpush1.msra.mxu0 %v76
    %8772 = vmatprep.subr.mxu0 0.0
    %8773 = vmatpush1.msra.mxu0 %v75
    %8774 = vmatprep.subr.mxu0 0.0
    %8775 = vmatpush1.msra.mxu0 %v74
    %8776 = vmatprep.subr.mxu0 0.0
    %8777 = vmatpush1.msra.mxu0 %v73
    %8778 = vmatprep.subr.mxu0 0.0
    %8779 = vmatpush1.msra.mxu0 %v72
    %8780 = vmatprep.subr.mxu0 0.0
    %8781 = vmatpush1.msra.mxu0 %v71
    %8782 = vmatprep.subr.mxu0 0.0
    %8783 = vmatpush1.msra.mxu0 %v70
    %8784 = vmatprep.subr.mxu0 0.0
    %8785 = vmatpush1.msra.mxu0 %v69
    %8786 = vmatprep.subr.mxu0 0.0
    %8787 = vmatpush1.msra.mxu0 %v68
    %8788 = vmatprep.subr.mxu0 0.0
    %8789 = vmatpush1.msra.mxu0 %v67
    %8790 = vmatprep.subr.mxu0 0.0
    %8791 = vmatpush1.msra.mxu0 %v66
    %8792 = vmatprep.subr.mxu0 0.0
    %8793 = vmatpush1.msra.mxu0 %v65
    %8794 = vmatprep.subr.mxu0 0.0
    %8795 = vmatpush2.msra.mxu0 %v96
    %8796 = vmatprep.subr.mxu0 0.0
    %8797 = vmatpush2.msra.mxu0 %v95
    %8798 = vmatprep.subr.mxu0 0.0
    %8799 = vmatpush2.msra.mxu0 %v94
    %8800 = vmatprep.subr.mxu0 0.0
    %8801 = vmatpush2.msra.mxu0 %v93
    %8802 = vmatprep.subr.mxu0 0.0
    %8803 = vmatpush2.msra.mxu0 %v92
    %8804 = vmatprep.subr.mxu0 0.0
    %8805 = vmatpush2.msra.mxu0 %v91
    %8806 = vmatprep.subr.mxu0 0.0
    %8807 = vmatpush2.msra.mxu0 %v90
    %8808 = vmatprep.subr.mxu0 0.0
    %8809 = vmatpush2.msra.mxu0 %v89
    %8810 = vmatprep.subr.mxu0 0.0
    %8811 = vmatpush2.msra.mxu0 %v88
    %8812 = vmatprep.subr.mxu0 0.0
    %8813 = vmatpush2.msra.mxu0 %v87
    %8814 = vmatprep.subr.mxu0 0.0
    %8815 = vmatpush2.msra.mxu0 %v86
    %8816 = vmatprep.subr.mxu0 0.0
    %8817 = vmatpush2.msra.mxu0 %v85
    %8818 = vmatprep.subr.mxu0 0.0
    %8819 = vmatpush2.msra.mxu0 %v84
    %8820 = vmatprep.subr.mxu0 0.0
    %8821 = vmatpush2.msra.mxu0 %v83
    %8822 = vmatprep.subr.mxu0 0.0
    %8823 = vmatpush2.msra.mxu0 %v82
    %8824 = vmatprep.subr.mxu0 0.0
    %8825 = vmatpush2.msra.mxu0 %v81
    %8826 = vmatprep.mubr.f32.mxu0 %v8761
    %8827 = vmatmul.mubr.f32.gmra.mxu0 %v8760
    %v8828 = vpop.f32.mrf.mxu0
    %v8829 = vadd.f32 %v4412, %v8828
    %v8830 = vpop.f32.mrf.mxu0
    %8831 = vdwg.mxu0
    %v8832 = vadd.f32 %v8688, %v8829
    %8833 = vadd.xlane.f32.xlu0 %v8832
    %v8834 = vpop.xlane.xlu0 %8833
    %v8835 = vmul.f32 %v8834, %v2198
    %v8836 = vsub.f32 %v8832, %v8835
    %v8837 = vmul.f32 %v8836, %v8836
    %8838 = vadd.xlane.f32.xlu0 %v8837
    %v8839 = vpop.xlane.xlu0 %8838
    %v8840 = vmul.f32 %v8839, %v2198
    %v8841 = vadd.f32 %v8840, 1e-05
    %v8842 = vrsqrt.pop %v8841
    %v8843 = vmul.f32 %v8836, %v8842
    %v8844 = vmul.f32 %v8843, %v4498
    %v8845 = vadd.f32 %v8844, %v4503
    %s8846 = scalar_lea.vmem [#allocation2], 8
    %8847 = vst [vmem:[%s8846] sm:$0xff] %v8845
    // Predicated region
    $region38: #{tpu_custom_call.1} parent=1 // pred_check
      _
    $region39: #{tpu_custom_call.1} parent=1 // pred_check_branch
      %8849 = sbr.rel (0) target = $region41
    $region40: #{tpu_custom_call.1} parent=1 // pred_region
      %s8851 = ssub.s32 256, 256
      %8852 = vsyncadd [#allocation3], %s8851
      %s8853 = sshll.u32 [#allocation2], 4
      %s8854 = int_to_ptr.vmem [resolvable:$true] %s8853
      %8859 = dma.vmem_to_hbm [thread:$0]  %s8854, 256, %s9, [#allocation3], 128, 128, 8
    $region41: #{tpu_custom_call.1} parent=1 // pred_fallthru
      _
    // Predicated region
    $region42: #{tpu_custom_call.1} parent=1 // pred_check
      _
    $region43: #{tpu_custom_call.1} parent=1 // pred_check_branch
      %8861 = sbr.rel (0) target = $region45
    $region44: #{tpu_custom_call.1} parent=1 // pred_region
      %8862 = dma.done [#allocation3], 256
    $region45: #{tpu_custom_call.1} parent=1 // pred_fallthru
      _
    %8863 = vsyncpa [#allocation3], 1

</llo_original>
